<compile_context>
chip_gen: v7x
topology: tpu7x:2x2x1
jax: 0.10.0
libtpu: 0.0.40
codegen_flags: <defaults>
</compile_context>

<pallas_src>
import functools

import jax
import jax.numpy as jnp
import numpy as np
from jax.experimental import pallas as pl
from jax.experimental.pallas import tpu as pltpu


def _round_up(x, m):
    return (x + m - 1) // m * m


# ------------------------------ Pallas kernel --------------------------------

def _basic_block_kernel(xp_ref, w1_ref, b1_ref, w2_ref, wsc_ref, b2_ref,
                        o_ref, y1_ref, *, H, W):
    """Fused BasicBlock forward for one image.

    xp_ref : (1, H+2, W+2, Cin_p) bf16  spatially zero-padded, channel-padded x
    w1_ref : (9, Cin_p, C_p)      bf16  conv1 weights, BN1 scale folded in
    b1_ref : (1, C_p)             f32   folded BN1 bias
    w2_ref : (9, C_p, C_p)        bf16  conv2 weights, BN2 scale folded in
    wsc_ref: (Cin_p, C_p)         bf16  1x1 shortcut weight
    b2_ref : (1, C_p)             f32   folded BN2 bias + shortcut bias
    o_ref  : (1, H, W, C_p)       f32   output
    y1_ref : (H+2, W+2, C_p)      bf16  VMEM scratch (padded conv1 output)
    """
    cin_p = xp_ref.shape[-1]
    c_p = w1_ref.shape[-1]
    m = H * W

    # ---- conv1 (3x3, stride 1, pad 1) + BN1 + ReLU via 9 shifted dots -------
    acc1 = jnp.zeros((m, c_p), jnp.float32)
    for t in range(9):
        dh, dw = t // 3, t % 3
        patch = xp_ref[0, dh:dh + H, dw:dw + W, :].reshape(m, cin_p)
        acc1 = acc1 + jnp.dot(patch, w1_ref[t],
                              preferred_element_type=jnp.float32)
    y1 = jnp.maximum(acc1 + b1_ref[...], 0.0)

    # Stage padded conv1 output in VMEM (bf16): conv2's halo reads stay
    # on-chip, the intermediate never touches HBM.
    y1_ref[...] = jnp.zeros_like(y1_ref)
    y1_ref[1:H + 1, 1:W + 1, :] = y1.reshape(H, W, c_p).astype(y1_ref.dtype)

    # ---- conv2 (3x3) + BN2, fused 1x1 shortcut, residual add, ReLU ----------
    acc2 = jnp.zeros((m, c_p), jnp.float32)
    for t in range(9):
        dh, dw = t // 3, t % 3
        patch = y1_ref[dh:dh + H, dw:dw + W, :].reshape(m, c_p)
        acc2 = acc2 + jnp.dot(patch, w2_ref[t],
                              preferred_element_type=jnp.float32)
    x_int = xp_ref[0, 1:H + 1, 1:W + 1, :].reshape(m, cin_p)
    acc2 = acc2 + jnp.dot(x_int, wsc_ref[...],
                          preferred_element_type=jnp.float32)

    out = jnp.maximum(acc2 + b2_ref[...], 0.0)
    o_ref[0] = out.reshape(H, W, c_p).astype(o_ref.dtype)


# --------------------------------- wrapper -----------------------------------

def fold_bn(conv_bias, gamma, beta, mean, var, eps=1e-5):
    scale = gamma / jnp.sqrt(var + eps)
    bias = (conv_bias - mean) * scale + beta
    return scale, bias


def basic_block_forward(x_nchw, params, *, eps=1e-5):
    """x_nchw: (N, Cin, H, W) f32; params from init_params. Returns NCHW f32."""
    N, Cin, H, W = x_nchw.shape
    Cch = params["w1"].shape[-1]
    cin_p = _round_up(Cin, 128)   # lane-dense inputs / full MXU lanes
    c_p = _round_up(Cch, 128)     # lane-dense (unmasked) output stores

    # Fold BN scale into the conv weights, BN shift into the bias (host side).
    s1, b1 = fold_bn(params["b1"], params["g1"], params["be1"],
                     params["m1"], params["v1"], eps)
    s2, b2 = fold_bn(params["b2"], params["g2"], params["be2"],
                     params["m2"], params["v2"], eps)

    w1 = (params["w1"] * s1).reshape(9, Cin, Cch)   # HWIO, tap order dh*3+dw
    w2 = (params["w2"] * s2).reshape(9, Cch, Cch)
    wsc = params["wsc"]
    b2c = b2 + params["bsc"]                        # merge shortcut bias

    def padc(a, tgt, axes):
        pad = [(0, 0)] * a.ndim
        for ax, t in zip(axes, tgt):
            pad[ax] = (0, t - a.shape[ax])
        return jnp.pad(a, pad)

    w1_p = padc(w1, (cin_p, c_p), (1, 2)).astype(jnp.bfloat16)
    w2_p = padc(w2, (c_p, c_p), (1, 2)).astype(jnp.bfloat16)
    wsc_p = padc(wsc, (cin_p, c_p), (0, 1)).astype(jnp.bfloat16)
    b1_p = padc(b1.reshape(1, Cch), (c_p,), (1,)).astype(jnp.float32)
    b2_p = padc(b2c.reshape(1, Cch), (c_p,), (1,)).astype(jnp.float32)

    # NCHW -> NHWC, spatial zero-pad by 1 (conv halo), channel-pad, cast bf16.
    x = jnp.transpose(x_nchw, (0, 2, 3, 1)).astype(jnp.float32)
    xp = jnp.pad(x, ((0, 0), (1, 1), (1, 1), (0, cin_p - Cin))).astype(jnp.bfloat16)

    kernel = functools.partial(_basic_block_kernel, H=H, W=W)
    out_p = pl.pallas_call(
        kernel,
        out_shape=jax.ShapeDtypeStruct((N, H, W, c_p), jnp.float32),
        grid=(N,),
        in_specs=[
            pl.BlockSpec((1, H + 2, W + 2, cin_p), lambda n: (n, 0, 0, 0)),
            pl.BlockSpec((9, cin_p, c_p), lambda n: (0, 0, 0)),
            pl.BlockSpec((1, c_p), lambda n: (0, 0)),
            pl.BlockSpec((9, c_p, c_p), lambda n: (0, 0, 0)),
            pl.BlockSpec((cin_p, c_p), lambda n: (0, 0)),
            pl.BlockSpec((1, c_p), lambda n: (0, 0)),
        ],
        out_specs=pl.BlockSpec((1, H, W, c_p), lambda n: (n, 0, 0, 0)),
        scratch_shapes=[pltpu.VMEM((H + 2, W + 2, c_p), jnp.bfloat16)],
        compiler_params=pltpu.CompilerParams(
            dimension_semantics=("parallel",)),
    )(xp, w1_p, b1_p, w2_p, wsc_p, b2_p)

    out = out_p[:, :, :, :Cch]                 # drop channel padding
    return jnp.transpose(out, (0, 3, 1, 2))    # back to NCHW


# ----------------------------- parameter init ---------------------------------

def init_params(key, in_channels, channels):
    ks = jax.random.split(key, 14)
    f32 = jnp.float32
    return {
        # conv weights stored HWIO (kh, kw, Cin, Cout)
        "w1": 0.1 * jax.random.normal(ks[0], (3, 3, in_channels, channels), f32),
        "b1": 0.1 * jax.random.normal(ks[1], (channels,), f32),
        "g1": 1.0 + 0.1 * jax.random.normal(ks[2], (channels,), f32),
        "be1": 0.1 * jax.random.normal(ks[3], (channels,), f32),
        "m1": 0.1 * jax.random.normal(ks[4], (channels,), f32),
        "v1": 1.0 + 0.1 * jnp.abs(jax.random.normal(ks[5], (channels,), f32)),
        "w2": 0.1 * jax.random.normal(ks[6], (3, 3, channels, channels), f32),
        "b2": 0.1 * jax.random.normal(ks[7], (channels,), f32),
        "g2": 1.0 + 0.1 * jax.random.normal(ks[8], (channels,), f32),
        "be2": 0.1 * jax.random.normal(ks[9], (channels,), f32),
        "m2": 0.1 * jax.random.normal(ks[10], (channels,), f32),
        "v2": 1.0 + 0.1 * jnp.abs(jax.random.normal(ks[11], (channels,), f32)),
        "wsc": 0.1 * jax.random.normal(ks[12], (in_channels, channels), f32),
        "bsc": 0.1 * jax.random.normal(ks[13], (channels,), f32),
    }


# -------------------------------- reference -----------------------------------

def reference(x_nchw, params, eps=1e-5):
    x = jnp.transpose(x_nchw, (0, 2, 3, 1)).astype(jnp.float32)

    def conv3x3(v, w, b):
        y = jax.lax.conv_general_dilated(
            v, w, (1, 1), ((1, 1), (1, 1)),
            dimension_numbers=("NHWC", "HWIO", "NHWC"))
        return y + b

    def bn(v, g, be, m, var):
        return (v - m) / jnp.sqrt(var + eps) * g + be

    y = conv3x3(x, params["w1"], params["b1"])
    y = jnp.maximum(bn(y, params["g1"], params["be1"], params["m1"], params["v1"]), 0.0)
    y = conv3x3(y, params["w2"], params["b2"])
    y = bn(y, params["g2"], params["be2"], params["m2"], params["v2"])
    sc = jnp.einsum("nhwc,cd->nhwd", x, params["wsc"]) + params["bsc"]
    out = jnp.maximum(y + sc, 0.0)
    return jnp.transpose(out, (0, 3, 1, 2))


if __name__ == "__main__":
    key = jax.random.PRNGKey(0)
    k_x, k_p = jax.random.split(key)

    N, Cin, H, W = 2, 4, 16, 16
    Cch = 8
    x = jax.random.normal(k_x, (N, Cin, H, W), jnp.float32)
    params = init_params(k_p, Cin, Cch)

    out = jax.jit(basic_block_forward)(x, params)
    jax.block_until_ready(out)

    ref = reference(x, params)
    # bf16 operands with f32 accumulation vs an all-f32 reference.
    np.testing.assert_allclose(np.asarray(out), np.asarray(ref),
                               atol=3e-2, rtol=3e-2)

    print("KERNEL_OK")
</pallas_src>

<mosaic_0001>
module attributes {stable_mosaic.version = 11 : i64} {
  func.func @_basic_block_kernel(%arg0: i32, %arg1: memref<1x18x18x128xbf16, #tpu.memory_space<vmem>>, %arg2: memref<9x128x128xbf16, #tpu.memory_space<vmem>>, %arg3: memref<1x128xf32, #tpu.memory_space<vmem>>, %arg4: memref<9x128x128xbf16, #tpu.memory_space<vmem>>, %arg5: memref<128x128xbf16, #tpu.memory_space<vmem>>, %arg6: memref<1x128xf32, #tpu.memory_space<vmem>>, %arg7: memref<1x16x16x128xf32, #tpu.memory_space<vmem>>, %arg8: memref<18x18x128xbf16, #tpu.memory_space<vmem>>) attributes {dimension_semantics = [#tpu.dimension_semantics<parallel>], iteration_bounds = array<i64: 2>, scalar_prefetch = 0 : i64, scratch_operands = 1 : i64, tpu.core_type = #tpu.core_type<tc>, window_params = [{transform_indices = @transform_0, window_bounds = array<i64: 1, 18, 18, 128>}, {pipeline_mode = #tpu.pipeline_mode<synchronous>, transform_indices = @transform_1, window_bounds = array<i64: 9, 128, 128>}, {pipeline_mode = #tpu.pipeline_mode<synchronous>, transform_indices = @transform_2, window_bounds = array<i64: 1, 128>}, {pipeline_mode = #tpu.pipeline_mode<synchronous>, transform_indices = @transform_3, window_bounds = array<i64: 9, 128, 128>}, {pipeline_mode = #tpu.pipeline_mode<synchronous>, transform_indices = @transform_4, window_bounds = array<i64: 128, 128>}, {pipeline_mode = #tpu.pipeline_mode<synchronous>, transform_indices = @transform_5, window_bounds = array<i64: 1, 128>}, {transform_indices = @transform_6, window_bounds = array<i64: 1, 16, 16, 128>}]} {
    %cst = arith.constant 0.000000e+00 : f32
    %0 = vector.broadcast %cst : f32 to vector<256x128xf32>
    %c0 = arith.constant 0 : index
    %c0_0 = arith.constant 0 : index
    %c0_1 = arith.constant 0 : index
    %c0_2 = arith.constant 0 : index
    %1 = vector.load %arg1[%c0, %c0_0, %c0_1, %c0_2] : memref<1x18x18x128xbf16, #tpu.memory_space<vmem>>, vector<1x16x16x128xbf16>
    %2 = vector.shape_cast %1 : vector<1x16x16x128xbf16> to vector<16x16x128xbf16>
    %3 = vector.shape_cast %2 : vector<16x16x128xbf16> to vector<256x128xbf16>
    %c0_3 = arith.constant 0 : index
    %c0_4 = arith.constant 0 : index
    %c0_5 = arith.constant 0 : index
    %4 = vector.load %arg2[%c0_3, %c0_4, %c0_5] : memref<9x128x128xbf16, #tpu.memory_space<vmem>>, vector<1x128x128xbf16>
    %5 = vector.shape_cast %4 : vector<1x128x128xbf16> to vector<128x128xbf16>
    %cst_6 = arith.constant dense<0.000000e+00> : vector<256x128xf32>
    %6 = tpu.matmul %3, %5, %cst_6 {dimension_numbers = #tpu.dot_dimension_numbers<[1], [0], [0], [1], [0, 0, 1, 1], [], []>} : vector<256x128xbf16>, vector<128x128xbf16>, vector<256x128xf32> -> vector<256x128xf32>
    %7 = arith.addf %0, %6 : vector<256x128xf32>
    %c0_7 = arith.constant 0 : index
    %c0_8 = arith.constant 0 : index
    %c1 = arith.constant 1 : index
    %c0_9 = arith.constant 0 : index
    %8 = vector.load %arg1[%c0_7, %c0_8, %c1, %c0_9] : memref<1x18x18x128xbf16, #tpu.memory_space<vmem>>, vector<1x16x16x128xbf16>
    %9 = vector.shape_cast %8 : vector<1x16x16x128xbf16> to vector<16x16x128xbf16>
    %10 = vector.shape_cast %9 : vector<16x16x128xbf16> to vector<256x128xbf16>
    %c1_10 = arith.constant 1 : index
    %c0_11 = arith.constant 0 : index
    %c0_12 = arith.constant 0 : index
    %11 = vector.load %arg2[%c1_10, %c0_11, %c0_12] : memref<9x128x128xbf16, #tpu.memory_space<vmem>>, vector<1x128x128xbf16>
    %12 = vector.shape_cast %11 : vector<1x128x128xbf16> to vector<128x128xbf16>
    %cst_13 = arith.constant dense<0.000000e+00> : vector<256x128xf32>
    %13 = tpu.matmul %10, %12, %cst_13 {dimension_numbers = #tpu.dot_dimension_numbers<[1], [0], [0], [1], [0, 0, 1, 1], [], []>} : vector<256x128xbf16>, vector<128x128xbf16>, vector<256x128xf32> -> vector<256x128xf32>
    %14 = arith.addf %7, %13 : vector<256x128xf32>
    %c0_14 = arith.constant 0 : index
    %c0_15 = arith.constant 0 : index
    %c2 = arith.constant 2 : index
    %c0_16 = arith.constant 0 : index
    %15 = vector.load %arg1[%c0_14, %c0_15, %c2, %c0_16] : memref<1x18x18x128xbf16, #tpu.memory_space<vmem>>, vector<1x16x16x128xbf16>
    %16 = vector.shape_cast %15 : vector<1x16x16x128xbf16> to vector<16x16x128xbf16>
    %17 = vector.shape_cast %16 : vector<16x16x128xbf16> to vector<256x128xbf16>
    %c2_17 = arith.constant 2 : index
    %c0_18 = arith.constant 0 : index
    %c0_19 = arith.constant 0 : index
    %18 = vector.load %arg2[%c2_17, %c0_18, %c0_19] : memref<9x128x128xbf16, #tpu.memory_space<vmem>>, vector<1x128x128xbf16>
    %19 = vector.shape_cast %18 : vector<1x128x128xbf16> to vector<128x128xbf16>
    %cst_20 = arith.constant dense<0.000000e+00> : vector<256x128xf32>
    %20 = tpu.matmul %17, %19, %cst_20 {dimension_numbers = #tpu.dot_dimension_numbers<[1], [0], [0], [1], [0, 0, 1, 1], [], []>} : vector<256x128xbf16>, vector<128x128xbf16>, vector<256x128xf32> -> vector<256x128xf32>
    %21 = arith.addf %14, %20 : vector<256x128xf32>
    %c0_21 = arith.constant 0 : index
    %c1_22 = arith.constant 1 : index
    %c0_23 = arith.constant 0 : index
    %c0_24 = arith.constant 0 : index
    %22 = vector.load %arg1[%c0_21, %c1_22, %c0_23, %c0_24] : memref<1x18x18x128xbf16, #tpu.memory_space<vmem>>, vector<1x16x16x128xbf16>
    %23 = vector.shape_cast %22 : vector<1x16x16x128xbf16> to vector<16x16x128xbf16>
    %24 = vector.shape_cast %23 : vector<16x16x128xbf16> to vector<256x128xbf16>
    %c3 = arith.constant 3 : index
    %c0_25 = arith.constant 0 : index
    %c0_26 = arith.constant 0 : index
    %25 = vector.load %arg2[%c3, %c0_25, %c0_26] : memref<9x128x128xbf16, #tpu.memory_space<vmem>>, vector<1x128x128xbf16>
    %26 = vector.shape_cast %25 : vector<1x128x128xbf16> to vector<128x128xbf16>
    %cst_27 = arith.constant dense<0.000000e+00> : vector<256x128xf32>
    %27 = tpu.matmul %24, %26, %cst_27 {dimension_numbers = #tpu.dot_dimension_numbers<[1], [0], [0], [1], [0, 0, 1, 1], [], []>} : vector<256x128xbf16>, vector<128x128xbf16>, vector<256x128xf32> -> vector<256x128xf32>
    %28 = arith.addf %21, %27 : vector<256x128xf32>
    %c0_28 = arith.constant 0 : index
    %c1_29 = arith.constant 1 : index
    %c1_30 = arith.constant 1 : index
    %c0_31 = arith.constant 0 : index
    %29 = vector.load %arg1[%c0_28, %c1_29, %c1_30, %c0_31] : memref<1x18x18x128xbf16, #tpu.memory_space<vmem>>, vector<1x16x16x128xbf16>
    %30 = vector.shape_cast %29 : vector<1x16x16x128xbf16> to vector<16x16x128xbf16>
    %31 = vector.shape_cast %30 : vector<16x16x128xbf16> to vector<256x128xbf16>
    %c4 = arith.constant 4 : index
    %c0_32 = arith.constant 0 : index
    %c0_33 = arith.constant 0 : index
    %32 = vector.load %arg2[%c4, %c0_32, %c0_33] : memref<9x128x128xbf16, #tpu.memory_space<vmem>>, vector<1x128x128xbf16>
    %33 = vector.shape_cast %32 : vector<1x128x128xbf16> to vector<128x128xbf16>
    %cst_34 = arith.constant dense<0.000000e+00> : vector<256x128xf32>
    %34 = tpu.matmul %31, %33, %cst_34 {dimension_numbers = #tpu.dot_dimension_numbers<[1], [0], [0], [1], [0, 0, 1, 1], [], []>} : vector<256x128xbf16>, vector<128x128xbf16>, vector<256x128xf32> -> vector<256x128xf32>
    %35 = arith.addf %28, %34 : vector<256x128xf32>
    %c0_35 = arith.constant 0 : index
    %c1_36 = arith.constant 1 : index
    %c2_37 = arith.constant 2 : index
    %c0_38 = arith.constant 0 : index
    %36 = vector.load %arg1[%c0_35, %c1_36, %c2_37, %c0_38] : memref<1x18x18x128xbf16, #tpu.memory_space<vmem>>, vector<1x16x16x128xbf16>
    %37 = vector.shape_cast %36 : vector<1x16x16x128xbf16> to vector<16x16x128xbf16>
    %38 = vector.shape_cast %37 : vector<16x16x128xbf16> to vector<256x128xbf16>
    %c5 = arith.constant 5 : index
    %c0_39 = arith.constant 0 : index
    %c0_40 = arith.constant 0 : index
    %39 = vector.load %arg2[%c5, %c0_39, %c0_40] : memref<9x128x128xbf16, #tpu.memory_space<vmem>>, vector<1x128x128xbf16>
    %40 = vector.shape_cast %39 : vector<1x128x128xbf16> to vector<128x128xbf16>
    %cst_41 = arith.constant dense<0.000000e+00> : vector<256x128xf32>
    %41 = tpu.matmul %38, %40, %cst_41 {dimension_numbers = #tpu.dot_dimension_numbers<[1], [0], [0], [1], [0, 0, 1, 1], [], []>} : vector<256x128xbf16>, vector<128x128xbf16>, vector<256x128xf32> -> vector<256x128xf32>
    %42 = arith.addf %35, %41 : vector<256x128xf32>
    %c0_42 = arith.constant 0 : index
    %c2_43 = arith.constant 2 : index
    %c0_44 = arith.constant 0 : index
    %c0_45 = arith.constant 0 : index
    %43 = vector.load %arg1[%c0_42, %c2_43, %c0_44, %c0_45] : memref<1x18x18x128xbf16, #tpu.memory_space<vmem>>, vector<1x16x16x128xbf16>
    %44 = vector.shape_cast %43 : vector<1x16x16x128xbf16> to vector<16x16x128xbf16>
    %45 = vector.shape_cast %44 : vector<16x16x128xbf16> to vector<256x128xbf16>
    %c6 = arith.constant 6 : index
    %c0_46 = arith.constant 0 : index
    %c0_47 = arith.constant 0 : index
    %46 = vector.load %arg2[%c6, %c0_46, %c0_47] : memref<9x128x128xbf16, #tpu.memory_space<vmem>>, vector<1x128x128xbf16>
    %47 = vector.shape_cast %46 : vector<1x128x128xbf16> to vector<128x128xbf16>
    %cst_48 = arith.constant dense<0.000000e+00> : vector<256x128xf32>
    %48 = tpu.matmul %45, %47, %cst_48 {dimension_numbers = #tpu.dot_dimension_numbers<[1], [0], [0], [1], [0, 0, 1, 1], [], []>} : vector<256x128xbf16>, vector<128x128xbf16>, vector<256x128xf32> -> vector<256x128xf32>
    %49 = arith.addf %42, %48 : vector<256x128xf32>
    %c0_49 = arith.constant 0 : index
    %c2_50 = arith.constant 2 : index
    %c1_51 = arith.constant 1 : index
    %c0_52 = arith.constant 0 : index
    %50 = vector.load %arg1[%c0_49, %c2_50, %c1_51, %c0_52] : memref<1x18x18x128xbf16, #tpu.memory_space<vmem>>, vector<1x16x16x128xbf16>
    %51 = vector.shape_cast %50 : vector<1x16x16x128xbf16> to vector<16x16x128xbf16>
    %52 = vector.shape_cast %51 : vector<16x16x128xbf16> to vector<256x128xbf16>
    %c7 = arith.constant 7 : index
    %c0_53 = arith.constant 0 : index
    %c0_54 = arith.constant 0 : index
    %53 = vector.load %arg2[%c7, %c0_53, %c0_54] : memref<9x128x128xbf16, #tpu.memory_space<vmem>>, vector<1x128x128xbf16>
    %54 = vector.shape_cast %53 : vector<1x128x128xbf16> to vector<128x128xbf16>
    %cst_55 = arith.constant dense<0.000000e+00> : vector<256x128xf32>
    %55 = tpu.matmul %52, %54, %cst_55 {dimension_numbers = #tpu.dot_dimension_numbers<[1], [0], [0], [1], [0, 0, 1, 1], [], []>} : vector<256x128xbf16>, vector<128x128xbf16>, vector<256x128xf32> -> vector<256x128xf32>
    %56 = arith.addf %49, %55 : vector<256x128xf32>
    %c0_56 = arith.constant 0 : index
    %c2_57 = arith.constant 2 : index
    %c2_58 = arith.constant 2 : index
    %c0_59 = arith.constant 0 : index
    %57 = vector.load %arg1[%c0_56, %c2_57, %c2_58, %c0_59] : memref<1x18x18x128xbf16, #tpu.memory_space<vmem>>, vector<1x16x16x128xbf16>
    %58 = vector.shape_cast %57 : vector<1x16x16x128xbf16> to vector<16x16x128xbf16>
    %59 = vector.shape_cast %58 : vector<16x16x128xbf16> to vector<256x128xbf16>
    %c8 = arith.constant 8 : index
    %c0_60 = arith.constant 0 : index
    %c0_61 = arith.constant 0 : index
    %60 = vector.load %arg2[%c8, %c0_60, %c0_61] : memref<9x128x128xbf16, #tpu.memory_space<vmem>>, vector<1x128x128xbf16>
    %61 = vector.shape_cast %60 : vector<1x128x128xbf16> to vector<128x128xbf16>
    %cst_62 = arith.constant dense<0.000000e+00> : vector<256x128xf32>
    %62 = tpu.matmul %59, %61, %cst_62 {dimension_numbers = #tpu.dot_dimension_numbers<[1], [0], [0], [1], [0, 0, 1, 1], [], []>} : vector<256x128xbf16>, vector<128x128xbf16>, vector<256x128xf32> -> vector<256x128xf32>
    %63 = arith.addf %56, %62 : vector<256x128xf32>
    %c0_63 = arith.constant 0 : index
    %c0_64 = arith.constant 0 : index
    %64 = vector.load %arg3[%c0_63, %c0_64] : memref<1x128xf32, #tpu.memory_space<vmem>>, vector<1x128xf32>
    %65 = vector.broadcast %64 : vector<1x128xf32> to vector<256x128xf32>
    %66 = arith.addf %63, %65 : vector<256x128xf32>
    %cst_65 = arith.constant 0.000000e+00 : f32
    %67 = vector.broadcast %cst_65 : f32 to vector<256x128xf32>
    %68 = arith.maximumf %66, %67 : vector<256x128xf32>
    %cst_66 = arith.constant 0.000000e+00 : bf16
    %69 = vector.broadcast %cst_66 : bf16 to vector<18x18x128xbf16>
    %c0_67 = arith.constant 0 : index
    %c0_68 = arith.constant 0 : index
    %c0_69 = arith.constant 0 : index
    %70 = vector.load %arg8[%c0_67, %c0_68, %c0_69] : memref<18x18x128xbf16, #tpu.memory_space<vmem>>, vector<18x18x128xbf16>
    tpu.vector_store %arg8[%c0_67, %c0_68, %c0_69], %69 {strides = array<i32>} : memref<18x18x128xbf16, #tpu.memory_space<vmem>>, vector<18x18x128xbf16>,
    %71 = vector.shape_cast %68 : vector<256x128xf32> to vector<16x16x128xf32>
    %72 = arith.truncf %71 : vector<16x16x128xf32> to vector<16x16x128xbf16>
    %c1_70 = arith.constant 1 : index
    %c1_71 = arith.constant 1 : index
    %c0_72 = arith.constant 0 : index
    %73 = vector.load %arg8[%c1_70, %c1_71, %c0_72] : memref<18x18x128xbf16, #tpu.memory_space<vmem>>, vector<16x16x128xbf16>
    tpu.vector_store %arg8[%c1_70, %c1_71, %c0_72], %72 {strides = array<i32>} : memref<18x18x128xbf16, #tpu.memory_space<vmem>>, vector<16x16x128xbf16>,
    %cst_73 = arith.constant 0.000000e+00 : f32
    %74 = vector.broadcast %cst_73 : f32 to vector<256x128xf32>
    %c0_74 = arith.constant 0 : index
    %c0_75 = arith.constant 0 : index
    %c0_76 = arith.constant 0 : index
    %75 = vector.load %arg8[%c0_74, %c0_75, %c0_76] : memref<18x18x128xbf16, #tpu.memory_space<vmem>>, vector<16x16x128xbf16>
    %76 = vector.shape_cast %75 : vector<16x16x128xbf16> to vector<256x128xbf16>
    %c0_77 = arith.constant 0 : index
    %c0_78 = arith.constant 0 : index
    %c0_79 = arith.constant 0 : index
    %77 = vector.load %arg4[%c0_77, %c0_78, %c0_79] : memref<9x128x128xbf16, #tpu.memory_space<vmem>>, vector<1x128x128xbf16>
    %78 = vector.shape_cast %77 : vector<1x128x128xbf16> to vector<128x128xbf16>
    %cst_80 = arith.constant dense<0.000000e+00> : vector<256x128xf32>
    %79 = tpu.matmul %76, %78, %cst_80 {dimension_numbers = #tpu.dot_dimension_numbers<[1], [0], [0], [1], [0, 0, 1, 1], [], []>} : vector<256x128xbf16>, vector<128x128xbf16>, vector<256x128xf32> -> vector<256x128xf32>
    %80 = arith.addf %74, %79 : vector<256x128xf32>
    %c0_81 = arith.constant 0 : index
    %c1_82 = arith.constant 1 : index
    %c0_83 = arith.constant 0 : index
    %81 = vector.load %arg8[%c0_81, %c1_82, %c0_83] : memref<18x18x128xbf16, #tpu.memory_space<vmem>>, vector<16x16x128xbf16>
    %82 = vector.shape_cast %81 : vector<16x16x128xbf16> to vector<256x128xbf16>
    %c1_84 = arith.constant 1 : index
    %c0_85 = arith.constant 0 : index
    %c0_86 = arith.constant 0 : index
    %83 = vector.load %arg4[%c1_84, %c0_85, %c0_86] : memref<9x128x128xbf16, #tpu.memory_space<vmem>>, vector<1x128x128xbf16>
    %84 = vector.shape_cast %83 : vector<1x128x128xbf16> to vector<128x128xbf16>
    %cst_87 = arith.constant dense<0.000000e+00> : vector<256x128xf32>
    %85 = tpu.matmul %82, %84, %cst_87 {dimension_numbers = #tpu.dot_dimension_numbers<[1], [0], [0], [1], [0, 0, 1, 1], [], []>} : vector<256x128xbf16>, vector<128x128xbf16>, vector<256x128xf32> -> vector<256x128xf32>
    %86 = arith.addf %80, %85 : vector<256x128xf32>
    %c0_88 = arith.constant 0 : index
    %c2_89 = arith.constant 2 : index
    %c0_90 = arith.constant 0 : index
    %87 = vector.load %arg8[%c0_88, %c2_89, %c0_90] : memref<18x18x128xbf16, #tpu.memory_space<vmem>>, vector<16x16x128xbf16>
    %88 = vector.shape_cast %87 : vector<16x16x128xbf16> to vector<256x128xbf16>
    %c2_91 = arith.constant 2 : index
    %c0_92 = arith.constant 0 : index
    %c0_93 = arith.constant 0 : index
    %89 = vector.load %arg4[%c2_91, %c0_92, %c0_93] : memref<9x128x128xbf16, #tpu.memory_space<vmem>>, vector<1x128x128xbf16>
    %90 = vector.shape_cast %89 : vector<1x128x128xbf16> to vector<128x128xbf16>
    %cst_94 = arith.constant dense<0.000000e+00> : vector<256x128xf32>
    %91 = tpu.matmul %88, %90, %cst_94 {dimension_numbers = #tpu.dot_dimension_numbers<[1], [0], [0], [1], [0, 0, 1, 1], [], []>} : vector<256x128xbf16>, vector<128x128xbf16>, vector<256x128xf32> -> vector<256x128xf32>
    %92 = arith.addf %86, %91 : vector<256x128xf32>
    %c1_95 = arith.constant 1 : index
    %c0_96 = arith.constant 0 : index
    %c0_97 = arith.constant 0 : index
    %93 = vector.load %arg8[%c1_95, %c0_96, %c0_97] : memref<18x18x128xbf16, #tpu.memory_space<vmem>>, vector<16x16x128xbf16>
    %94 = vector.shape_cast %93 : vector<16x16x128xbf16> to vector<256x128xbf16>
    %c3_98 = arith.constant 3 : index
    %c0_99 = arith.constant 0 : index
    %c0_100 = arith.constant 0 : index
    %95 = vector.load %arg4[%c3_98, %c0_99, %c0_100] : memref<9x128x128xbf16, #tpu.memory_space<vmem>>, vector<1x128x128xbf16>
    %96 = vector.shape_cast %95 : vector<1x128x128xbf16> to vector<128x128xbf16>
    %cst_101 = arith.constant dense<0.000000e+00> : vector<256x128xf32>
    %97 = tpu.matmul %94, %96, %cst_101 {dimension_numbers = #tpu.dot_dimension_numbers<[1], [0], [0], [1], [0, 0, 1, 1], [], []>} : vector<256x128xbf16>, vector<128x128xbf16>, vector<256x128xf32> -> vector<256x128xf32>
    %98 = arith.addf %92, %97 : vector<256x128xf32>
    %c1_102 = arith.constant 1 : index
    %c1_103 = arith.constant 1 : index
    %c0_104 = arith.constant 0 : index
    %99 = vector.load %arg8[%c1_102, %c1_103, %c0_104] : memref<18x18x128xbf16, #tpu.memory_space<vmem>>, vector<16x16x128xbf16>
    %100 = vector.shape_cast %99 : vector<16x16x128xbf16> to vector<256x128xbf16>
    %c4_105 = arith.constant 4 : index
    %c0_106 = arith.constant 0 : index
    %c0_107 = arith.constant 0 : index
    %101 = vector.load %arg4[%c4_105, %c0_106, %c0_107] : memref<9x128x128xbf16, #tpu.memory_space<vmem>>, vector<1x128x128xbf16>
    %102 = vector.shape_cast %101 : vector<1x128x128xbf16> to vector<128x128xbf16>
    %cst_108 = arith.constant dense<0.000000e+00> : vector<256x128xf32>
    %103 = tpu.matmul %100, %102, %cst_108 {dimension_numbers = #tpu.dot_dimension_numbers<[1], [0], [0], [1], [0, 0, 1, 1], [], []>} : vector<256x128xbf16>, vector<128x128xbf16>, vector<256x128xf32> -> vector<256x128xf32>
    %104 = arith.addf %98, %103 : vector<256x128xf32>
    %c1_109 = arith.constant 1 : index
    %c2_110 = arith.constant 2 : index
    %c0_111 = arith.constant 0 : index
    %105 = vector.load %arg8[%c1_109, %c2_110, %c0_111] : memref<18x18x128xbf16, #tpu.memory_space<vmem>>, vector<16x16x128xbf16>
    %106 = vector.shape_cast %105 : vector<16x16x128xbf16> to vector<256x128xbf16>
    %c5_112 = arith.constant 5 : index
    %c0_113 = arith.constant 0 : index
    %c0_114 = arith.constant 0 : index
    %107 = vector.load %arg4[%c5_112, %c0_113, %c0_114] : memref<9x128x128xbf16, #tpu.memory_space<vmem>>, vector<1x128x128xbf16>
    %108 = vector.shape_cast %107 : vector<1x128x128xbf16> to vector<128x128xbf16>
    %cst_115 = arith.constant dense<0.000000e+00> : vector<256x128xf32>
    %109 = tpu.matmul %106, %108, %cst_115 {dimension_numbers = #tpu.dot_dimension_numbers<[1], [0], [0], [1], [0, 0, 1, 1], [], []>} : vector<256x128xbf16>, vector<128x128xbf16>, vector<256x128xf32> -> vector<256x128xf32>
    %110 = arith.addf %104, %109 : vector<256x128xf32>
    %c2_116 = arith.constant 2 : index
    %c0_117 = arith.constant 0 : index
    %c0_118 = arith.constant 0 : index
    %111 = vector.load %arg8[%c2_116, %c0_117, %c0_118] : memref<18x18x128xbf16, #tpu.memory_space<vmem>>, vector<16x16x128xbf16>
    %112 = vector.shape_cast %111 : vector<16x16x128xbf16> to vector<256x128xbf16>
    %c6_119 = arith.constant 6 : index
    %c0_120 = arith.constant 0 : index
    %c0_121 = arith.constant 0 : index
    %113 = vector.load %arg4[%c6_119, %c0_120, %c0_121] : memref<9x128x128xbf16, #tpu.memory_space<vmem>>, vector<1x128x128xbf16>
    %114 = vector.shape_cast %113 : vector<1x128x128xbf16> to vector<128x128xbf16>
    %cst_122 = arith.constant dense<0.000000e+00> : vector<256x128xf32>
    %115 = tpu.matmul %112, %114, %cst_122 {dimension_numbers = #tpu.dot_dimension_numbers<[1], [0], [0], [1], [0, 0, 1, 1], [], []>} : vector<256x128xbf16>, vector<128x128xbf16>, vector<256x128xf32> -> vector<256x128xf32>
    %116 = arith.addf %110, %115 : vector<256x128xf32>
    %c2_123 = arith.constant 2 : index
    %c1_124 = arith.constant 1 : index
    %c0_125 = arith.constant 0 : index
    %117 = vector.load %arg8[%c2_123, %c1_124, %c0_125] : memref<18x18x128xbf16, #tpu.memory_space<vmem>>, vector<16x16x128xbf16>
    %118 = vector.shape_cast %117 : vector<16x16x128xbf16> to vector<256x128xbf16>
    %c7_126 = arith.constant 7 : index
    %c0_127 = arith.constant 0 : index
    %c0_128 = arith.constant 0 : index
    %119 = vector.load %arg4[%c7_126, %c0_127, %c0_128] : memref<9x128x128xbf16, #tpu.memory_space<vmem>>, vector<1x128x128xbf16>
    %120 = vector.shape_cast %119 : vector<1x128x128xbf16> to vector<128x128xbf16>
    %cst_129 = arith.constant dense<0.000000e+00> : vector<256x128xf32>
    %121 = tpu.matmul %118, %120, %cst_129 {dimension_numbers = #tpu.dot_dimension_numbers<[1], [0], [0], [1], [0, 0, 1, 1], [], []>} : vector<256x128xbf16>, vector<128x128xbf16>, vector<256x128xf32> -> vector<256x128xf32>
    %122 = arith.addf %116, %121 : vector<256x128xf32>
    %c2_130 = arith.constant 2 : index
    %c2_131 = arith.constant 2 : index
    %c0_132 = arith.constant 0 : index
    %123 = vector.load %arg8[%c2_130, %c2_131, %c0_132] : memref<18x18x128xbf16, #tpu.memory_space<vmem>>, vector<16x16x128xbf16>
    %124 = vector.shape_cast %123 : vector<16x16x128xbf16> to vector<256x128xbf16>
    %c8_133 = arith.constant 8 : index
    %c0_134 = arith.constant 0 : index
    %c0_135 = arith.constant 0 : index
    %125 = vector.load %arg4[%c8_133, %c0_134, %c0_135] : memref<9x128x128xbf16, #tpu.memory_space<vmem>>, vector<1x128x128xbf16>
    %126 = vector.shape_cast %125 : vector<1x128x128xbf16> to vector<128x128xbf16>
    %cst_136 = arith.constant dense<0.000000e+00> : vector<256x128xf32>
    %127 = tpu.matmul %124, %126, %cst_136 {dimension_numbers = #tpu.dot_dimension_numbers<[1], [0], [0], [1], [0, 0, 1, 1], [], []>} : vector<256x128xbf16>, vector<128x128xbf16>, vector<256x128xf32> -> vector<256x128xf32>
    %128 = arith.addf %122, %127 : vector<256x128xf32>
    %c0_137 = arith.constant 0 : index
    %c1_138 = arith.constant 1 : index
    %c1_139 = arith.constant 1 : index
    %c0_140 = arith.constant 0 : index
    %129 = vector.load %arg1[%c0_137, %c1_138, %c1_139, %c0_140] : memref<1x18x18x128xbf16, #tpu.memory_space<vmem>>, vector<1x16x16x128xbf16>
    %130 = vector.shape_cast %129 : vector<1x16x16x128xbf16> to vector<16x16x128xbf16>
    %131 = vector.shape_cast %130 : vector<16x16x128xbf16> to vector<256x128xbf16>
    %c0_141 = arith.constant 0 : index
    %c0_142 = arith.constant 0 : index
    %132 = vector.load %arg5[%c0_141, %c0_142] : memref<128x128xbf16, #tpu.memory_space<vmem>>, vector<128x128xbf16>
    %cst_143 = arith.constant dense<0.000000e+00> : vector<256x128xf32>
    %133 = tpu.matmul %131, %132, %cst_143 {dimension_numbers = #tpu.dot_dimension_numbers<[1], [0], [0], [1], [0, 0, 1, 1], [], []>} : vector<256x128xbf16>, vector<128x128xbf16>, vector<256x128xf32> -> vector<256x128xf32>
    %134 = arith.addf %128, %133 : vector<256x128xf32>
    %c0_144 = arith.constant 0 : index
    %c0_145 = arith.constant 0 : index
    %135 = vector.load %arg6[%c0_144, %c0_145] : memref<1x128xf32, #tpu.memory_space<vmem>>, vector<1x128xf32>
    %136 = vector.broadcast %135 : vector<1x128xf32> to vector<256x128xf32>
    %137 = arith.addf %134, %136 : vector<256x128xf32>
    %cst_146 = arith.constant 0.000000e+00 : f32
    %138 = vector.broadcast %cst_146 : f32 to vector<256x128xf32>
    %139 = arith.maximumf %137, %138 : vector<256x128xf32>
    %140 = vector.shape_cast %139 : vector<256x128xf32> to vector<16x16x128xf32>
    %c0_147 = arith.constant 0 : index
    %c0_148 = arith.constant 0 : index
    %c0_149 = arith.constant 0 : index
    %c0_150 = arith.constant 0 : index
    %141 = vector.load %arg7[%c0_147, %c0_148, %c0_149, %c0_150] : memref<1x16x16x128xf32, #tpu.memory_space<vmem>>, vector<1x16x16x128xf32>
    %142 = vector.shape_cast %141 : vector<1x16x16x128xf32> to vector<16x16x128xf32>
    %143 = vector.shape_cast %140 : vector<16x16x128xf32> to vector<1x16x16x128xf32>
    tpu.vector_store %arg7[%c0_147, %c0_148, %c0_149, %c0_150], %143 {strides = array<i32>} : memref<1x16x16x128xf32, #tpu.memory_space<vmem>>, vector<1x16x16x128xf32>,
    return
  }
  func.func @transform_0(%arg0: i32) -> (i32, i32, i32, i32) {
    %c0_i32 = arith.constant 0 : i32
    %c0_i32_0 = arith.constant 0 : i32
    %c0_i32_1 = arith.constant 0 : i32
    %c0_i32_2 = arith.constant 0 : i32
    return %arg0, %c0_i32, %c0_i32_0, %c0_i32_1 : i32, i32, i32, i32
  }
  func.func @transform_1(%arg0: i32) -> (i32, i32, i32) {
    %c0_i32 = arith.constant 0 : i32
    %c0_i32_0 = arith.constant 0 : i32
    %c0_i32_1 = arith.constant 0 : i32
    %c0_i32_2 = arith.constant 0 : i32
    return %c0_i32, %c0_i32_0, %c0_i32_1 : i32, i32, i32
  }
  func.func @transform_2(%arg0: i32) -> (i32, i32) {
    %c0_i32 = arith.constant 0 : i32
    %c0_i32_0 = arith.constant 0 : i32
    %c0_i32_1 = arith.constant 0 : i32
    return %c0_i32, %c0_i32_0 : i32, i32
  }
  func.func @transform_3(%arg0: i32) -> (i32, i32, i32) {
    %c0_i32 = arith.constant 0 : i32
    %c0_i32_0 = arith.constant 0 : i32
    %c0_i32_1 = arith.constant 0 : i32
    %c0_i32_2 = arith.constant 0 : i32
    return %c0_i32, %c0_i32_0, %c0_i32_1 : i32, i32, i32
  }
  func.func @transform_4(%arg0: i32) -> (i32, i32) {
    %c0_i32 = arith.constant 0 : i32
    %c0_i32_0 = arith.constant 0 : i32
    %c0_i32_1 = arith.constant 0 : i32
    return %c0_i32, %c0_i32_0 : i32, i32
  }
  func.func @transform_5(%arg0: i32) -> (i32, i32) {
    %c0_i32 = arith.constant 0 : i32
    %c0_i32_0 = arith.constant 0 : i32
    %c0_i32_1 = arith.constant 0 : i32
    return %c0_i32, %c0_i32_0 : i32, i32
  }
  func.func @transform_6(%arg0: i32) -> (i32, i32, i32, i32) {
    %c0_i32 = arith.constant 0 : i32
    %c0_i32_0 = arith.constant 0 : i32
    %c0_i32_1 = arith.constant 0 : i32
    %c0_i32_2 = arith.constant 0 : i32
    return %arg0, %c0_i32, %c0_i32_0, %c0_i32_1 : i32, i32, i32, i32
  }
}

</mosaic_0001>

<llo_original>
// kernel: basic_block_forward.1
$region0: #{basic_block_forward.1}
  #allocation0 [shape = 'u32[]', space=smem, size = 0x4, offset = 0x4, fixed_abs, tag = 'smem constant byte address 0x4 - core index']
  #allocation1 [shape = 'u32[144,128]{1,0:T(1,128)}', space=vmem, size = 0x12000, scoped, tag = 'internal scratch']
  #allocation2 [shape = 'bf16[18,18,128]{2,1,0:T(8,128)(2,1)}', space=vmem, size = 0x1b000, scoped, tag = 'scratch operand']
  %s0 = inlined_call_operand.vmem [shape: bf16[2,18,18,128], index: 0, kind: input, shape index: {}]
  %s1 = inlined_call_operand.vmem [shape: bf16[9,128,128], index: 1, kind: input, shape index: {}]
  %s2 = inlined_call_operand.vmem [shape: f32[1,128], index: 2, kind: input, shape index: {}]
  %s3 = inlined_call_operand.vmem [shape: bf16[9,128,128], index: 3, kind: input, shape index: {}]
  %s4 = inlined_call_operand.vmem [shape: bf16[128,128], index: 4, kind: input, shape index: {}]
  %s5 = inlined_call_operand.vmem [shape: f32[1,128], index: 5, kind: input, shape index: {}]
  %s6 = inlined_call_operand.vmem [shape: f32[2,16,16,128], index: 6, kind: output, shape index: {}]
  %s7 = sld [smem:[#allocation0]]
  $region57: #{basic_block_forward.1} parent=0
    _
  %s9 = ssub.s32 1, %s7
  %s10 = scalar_select 0, %s9, %s7
  loop: start=0, step=1, limit=4
  $region2: #{basic_block_forward.1} parent=0 // loop_pre_header
    _
  $region3: #{basic_block_forward.1} parent=0 // loop_header
    %s12 = sphi 0, %s16
    %p13 = scmp.ge.s32.totalorder %s12, 4
    %s22 = sphi 0, %s24
    %s25 = sphi 0, %s22
    %s26 = sphi 0, %s25
    %s42 = sphi 0, %s26
    %s46 = sphi 0, %s46
    %s48 = sphi 0, %s46
    %s49 = sphi 0, %s48
    %s63 = sphi 0, %s49
    %s67 = sphi 0, %s67
    %s69 = sphi 0, %s67
    %s70 = sphi 0, %s69
    %s84 = sphi 0, %s70
    %s88 = sphi 0, %s88
    %s90 = sphi 0, %s88
    %s91 = sphi 0, %s90
    %s105 = sphi 0, %s91
    %s109 = sphi 0, %s109
    %s111 = sphi 0, %s109
    %s112 = sphi 0, %s111
    %s126 = sphi 0, %s112
    %s130 = sphi 0, %s130
    %s132 = sphi 0, %s130
    %s133 = sphi 0, %s132
    %s147 = sphi 0, %s133
    %s153 = sphi 0, %s155
    %s156 = sphi 0, %s153
    %s157 = sphi 0, %s156
    %s173 = sphi 0, %s157
  $region4: #{basic_block_forward.1} parent=0 // loop_header_branch
    %15 = sbr.rel (%p13) target = $region8
  $region5: #{basic_block_forward.1} parent=0 // loop_body
    %s17 = ssub.s32 %s12, 1
    %s18 = ssub.s32 %s12, 2
    %s19 = sadd.s32 %s12, 1
    %s20 = ssub.s32 %s12, %s19
    %p21 = scmp.eq.s32.totalorder %s20, 0
    %s23 = sadd.s32 %s22, 1
    %s24 = scalar_select %p21, %s22, %s23
    %p27 = pneg %p21
    %p28 = scmp.eq.s32.totalorder %s12, 1
    %p29 = por %p27, %p28
    %p30 = scmp.ne.s32.totalorder %s22, %s25
    %p31 = scmp.eq.s32.totalorder %s12, 0
    %p32 = por %p30, %p31
    %p33 = scmp.ne.s32.totalorder %s22, %s25
    %p34 = scmp.eq.s32.totalorder %s17, 1
    %p35 = por %p33, %p34
    %p36 = scmp.ne.s32.totalorder %s25, %s26
    %p37 = scmp.eq.s32.totalorder %s17, 0
    %p38 = por %p36, %p37
    %p39 = scmp.ne.s32.totalorder %s25, %s26
    %p40 = scmp.eq.s32.totalorder %s18, 1
    %p41 = por %p39, %p40
    %p43 = scmp.ne.s32.totalorder %s26, %s42
    %p44 = scmp.eq.s32.totalorder %s18, 0
    %p45 = por %p43, %p44
    %s47 = sadd.s32 %s46, 1
    %p50 = scmp.eq.s32.totalorder %s12, 1
    %p51 = scmp.ne.s32.totalorder %s46, %s48
    %p52 = scmp.eq.s32.totalorder %s12, 0
    %p53 = por %p51, %p52
    %p54 = scmp.ne.s32.totalorder %s46, %s48
    %p55 = scmp.eq.s32.totalorder %s17, 1
    %p56 = por %p54, %p55
    %p57 = scmp.ne.s32.totalorder %s48, %s49
    %p58 = scmp.eq.s32.totalorder %s17, 0
    %p59 = por %p57, %p58
    %p60 = scmp.ne.s32.totalorder %s48, %s49
    %p61 = scmp.eq.s32.totalorder %s18, 1
    %p62 = por %p60, %p61
    %p64 = scmp.ne.s32.totalorder %s49, %s63
    %p65 = scmp.eq.s32.totalorder %s18, 0
    %p66 = por %p64, %p65
    %s68 = sadd.s32 %s67, 1
    %p71 = scmp.eq.s32.totalorder %s12, 1
    %p72 = scmp.ne.s32.totalorder %s67, %s69
    %p73 = scmp.eq.s32.totalorder %s12, 0
    %p74 = por %p72, %p73
    %p75 = scmp.ne.s32.totalorder %s67, %s69
    %p76 = scmp.eq.s32.totalorder %s17, 1
    %p77 = por %p75, %p76
    %p78 = scmp.ne.s32.totalorder %s69, %s70
    %p79 = scmp.eq.s32.totalorder %s17, 0
    %p80 = por %p78, %p79
    %p81 = scmp.ne.s32.totalorder %s69, %s70
    %p82 = scmp.eq.s32.totalorder %s18, 1
    %p83 = por %p81, %p82
    %p85 = scmp.ne.s32.totalorder %s70, %s84
    %p86 = scmp.eq.s32.totalorder %s18, 0
    %p87 = por %p85, %p86
    %s89 = sadd.s32 %s88, 1
    %p92 = scmp.eq.s32.totalorder %s12, 1
    %p93 = scmp.ne.s32.totalorder %s88, %s90
    %p94 = scmp.eq.s32.totalorder %s12, 0
    %p95 = por %p93, %p94
    %p96 = scmp.ne.s32.totalorder %s88, %s90
    %p97 = scmp.eq.s32.totalorder %s17, 1
    %p98 = por %p96, %p97
    %p99 = scmp.ne.s32.totalorder %s90, %s91
    %p100 = scmp.eq.s32.totalorder %s17, 0
    %p101 = por %p99, %p100
    %p102 = scmp.ne.s32.totalorder %s90, %s91
    %p103 = scmp.eq.s32.totalorder %s18, 1
    %p104 = por %p102, %p103
    %p106 = scmp.ne.s32.totalorder %s91, %s105
    %p107 = scmp.eq.s32.totalorder %s18, 0
    %p108 = por %p106, %p107
    %s110 = sadd.s32 %s109, 1
    %p113 = scmp.eq.s32.totalorder %s12, 1
    %p114 = scmp.ne.s32.totalorder %s109, %s111
    %p115 = scmp.eq.s32.totalorder %s12, 0
    %p116 = por %p114, %p115
    %p117 = scmp.ne.s32.totalorder %s109, %s111
    %p118 = scmp.eq.s32.totalorder %s17, 1
    %p119 = por %p117, %p118
    %p120 = scmp.ne.s32.totalorder %s111, %s112
    %p121 = scmp.eq.s32.totalorder %s17, 0
    %p122 = por %p120, %p121
    %p123 = scmp.ne.s32.totalorder %s111, %s112
    %p124 = scmp.eq.s32.totalorder %s18, 1
    %p125 = por %p123, %p124
    %p127 = scmp.ne.s32.totalorder %s112, %s126
    %p128 = scmp.eq.s32.totalorder %s18, 0
    %p129 = por %p127, %p128
    %s131 = sadd.s32 %s130, 1
    %p134 = scmp.eq.s32.totalorder %s12, 1
    %p135 = scmp.ne.s32.totalorder %s130, %s132
    %p136 = scmp.eq.s32.totalorder %s12, 0
    %p137 = por %p135, %p136
    %p138 = scmp.ne.s32.totalorder %s130, %s132
    %p139 = scmp.eq.s32.totalorder %s17, 1
    %p140 = por %p138, %p139
    %p141 = scmp.ne.s32.totalorder %s132, %s133
    %p142 = scmp.eq.s32.totalorder %s17, 0
    %p143 = por %p141, %p142
    %p144 = scmp.ne.s32.totalorder %s132, %s133
    %p145 = scmp.eq.s32.totalorder %s18, 1
    %p146 = por %p144, %p145
    %p148 = scmp.ne.s32.totalorder %s133, %s147
    %p149 = scmp.eq.s32.totalorder %s18, 0
    %p150 = por %p148, %p149
    %s151 = ssub.s32 %s12, %s19
    %p152 = scmp.eq.s32.totalorder %s151, 0
    %s154 = sadd.s32 %s153, 1
    %s155 = scalar_select %p152, %s153, %s154
    %p158 = pneg %p152
    %p159 = scmp.eq.s32.totalorder %s12, 1
    %p160 = por %p158, %p159
    %p161 = scmp.ne.s32.totalorder %s153, %s156
    %p162 = scmp.eq.s32.totalorder %s12, 0
    %p163 = por %p161, %p162
    %p164 = scmp.ne.s32.totalorder %s153, %s156
    %p165 = scmp.eq.s32.totalorder %s17, 1
    %p166 = por %p164, %p165
    %p167 = scmp.ne.s32.totalorder %s156, %s157
    %p168 = scmp.eq.s32.totalorder %s17, 0
    %p169 = por %p167, %p168
    %p170 = scmp.ne.s32.totalorder %s156, %s157
    %p171 = scmp.eq.s32.totalorder %s18, 1
    %p172 = por %p170, %p171
    %p174 = scmp.ne.s32.totalorder %s157, %s173
    %p175 = scmp.eq.s32.totalorder %s18, 0
    %p176 = por %p174, %p175
    %p177 = scmp.le.s32.totalorder 1, %s12
    %p178 = scmp.lt.s32.totalorder %s12, 3
    %p179 = pnand %p177, %p178
    %p180 = pneg %p179
    // Predicated region
    $region9: #{basic_block_forward.1} parent=5 // pred_check
      _
    $region10: #{basic_block_forward.1} parent=5 // pred_check_branch
      %182 = sbr.rel (%p179) target = $region12
    $region11: #{basic_block_forward.1} parent=5 // pred_region
      %s183 = ssub.s32 %s12, 1
      // Predicated region
      $region13: #{basic_block_forward.1} parent=11 // pred_check
        %p184 = pneg %p59
      $region14: #{basic_block_forward.1} parent=11 // pred_check_branch
        %186 = sbr.rel (%p184) target = $region16
      $region15: #{basic_block_forward.1} parent=11 // pred_region
        _
      $region16: #{basic_block_forward.1} parent=11 // pred_fallthru
        _
      // Predicated region
      $region17: #{basic_block_forward.1} parent=11 // pred_check
        %p187 = pneg %p80
      $region18: #{basic_block_forward.1} parent=11 // pred_check_branch
        %189 = sbr.rel (%p187) target = $region20
      $region19: #{basic_block_forward.1} parent=11 // pred_region
        _
      $region20: #{basic_block_forward.1} parent=11 // pred_fallthru
        _
      // Predicated region
      $region21: #{basic_block_forward.1} parent=11 // pred_check
        %p190 = pneg %p101
      $region22: #{basic_block_forward.1} parent=11 // pred_check_branch
        %192 = sbr.rel (%p190) target = $region24
      $region23: #{basic_block_forward.1} parent=11 // pred_region
        _
      $region24: #{basic_block_forward.1} parent=11 // pred_fallthru
        _
      // Predicated region
      $region25: #{basic_block_forward.1} parent=11 // pred_check
        %p193 = pneg %p122
      $region26: #{basic_block_forward.1} parent=11 // pred_check_branch
        %195 = sbr.rel (%p193) target = $region28
      $region27: #{basic_block_forward.1} parent=11 // pred_region
        _
      $region28: #{basic_block_forward.1} parent=11 // pred_fallthru
        _
      // Predicated region
      $region29: #{basic_block_forward.1} parent=11 // pred_check
        %p196 = pneg %p143
      $region30: #{basic_block_forward.1} parent=11 // pred_check_branch
        %198 = sbr.rel (%p196) target = $region32
      $region31: #{basic_block_forward.1} parent=11 // pred_region
        _
      $region32: #{basic_block_forward.1} parent=11 // pred_fallthru
        _
    $region12: #{basic_block_forward.1} parent=5 // pred_fallthru
      _
    %p199 = scmp.lt.s32.totalorder %s12, 2
    // Predicated region
    $region33: #{basic_block_forward.1} parent=5 // pred_check
      %p200 = pneg %p199
    $region34: #{basic_block_forward.1} parent=5 // pred_check_branch
      %202 = sbr.rel (%p200) target = $region36
    $region35: #{basic_block_forward.1} parent=5 // pred_region
      // Predicated region
      $region37: #{basic_block_forward.1} parent=35 // pred_check
        %p203 = pneg %p32
      $region38: #{basic_block_forward.1} parent=35 // pred_check_branch
        %205 = sbr.rel (%p203) target = $region40
      $region39: #{basic_block_forward.1} parent=35 // pred_region
        %p206 = scmp.lt.s32.totalorder %s12, 1
        %s207 = scalar_select %p206, %s12, 1
        %s208 = smul.addr %s207, 54
        %s209 = smul.addr %s208, 4
        %s210 = scalar_lea.vmem %s0, %s209
      $region40: #{basic_block_forward.1} parent=35 // pred_fallthru
        _
    $region36: #{basic_block_forward.1} parent=5 // pred_fallthru
      _
    %p211 = scmp.le.s32.totalorder 1, %s12
    %p212 = scmp.lt.s32.totalorder %s12, 3
    %p213 = pnand %p211, %p212
    %p214 = pneg %p213
    // Predicated region
    $region41: #{basic_block_forward.1} parent=5 // pred_check
      _
    $region42: #{basic_block_forward.1} parent=5 // pred_check_branch
      %216 = sbr.rel (%p213) target = $region44
    $region43: #{basic_block_forward.1} parent=5 // pred_region
      %s217 = ssub.s32 %s12, 1
      %p218 = scmp.lt.s32.totalorder %s17, 1
      %s219 = scalar_select %p218, %s17, 1
      %s220 = smul.addr %s219, 54
      %s221 = smul.addr %s220, 4
      %s222 = scalar_lea.vmem %s0, %s221
      %p223 = pneg %p38
      %p224 = pneg %p35
      %p225 = pneg %p59
      %p226 = pneg %p56
      %p227 = pneg %p80
      %p228 = pneg %p77
      %p229 = pneg %p101
      %p230 = pneg %p98
      %p231 = pneg %p122
      %p232 = pneg %p119
      %p233 = pneg %p143
      %p234 = pneg %p140
      %p235 = pneg %p169
      %p236 = pneg %p166
      %p237 = scmp.lt.s32.totalorder %s17, 1
      %s238 = scalar_select %p237, %s17, 1
      %s239 = smul.addr %s238, 32
      %s240 = smul.addr %s239, 8
      %s241 = scalar_lea.vmem %s6, %s240
      %p242 = scmp.lt.s32.totalorder %s17, 1
      %s243 = scalar_select %p242, %s17, 1
      %s244 = smul.addr %s243, 54
      %s245 = smul.addr %s244, 4
      %s246 = scalar_lea.vmem %s0, %s245
      %p247 = scmp.lt.s32.totalorder %s17, 1
      %s248 = scalar_select %p247, %s17, 1
      %s249 = smul.addr %s248, 32
      %s250 = smul.addr %s249, 8
      %s251 = scalar_lea.vmem %s6, %s250
      %v253 = vld [vmem:[%s246] sm:$0xf]
      %v254 = vld [vmem:[%s246 + $0x4] sm:$0xf]
      %v255 = vld [vmem:[%s246 + $0xc] sm:$0xf]
      %v256 = vld [vmem:[%s246 + $0x10] sm:$0xf]
      %v257 = vld [vmem:[%s246 + $0x18] sm:$0xf]
      %v258 = vld [vmem:[%s246 + $0x1c] sm:$0xf]
      %v259 = vld [vmem:[%s246 + $0x24] sm:$0xf]
      %v260 = vld [vmem:[%s246 + $0x28] sm:$0xf]
      %v261 = vld [vmem:[%s246 + $0x30] sm:$0xf]
      %v262 = vld [vmem:[%s246 + $0x34] sm:$0xf]
      %v263 = vld [vmem:[%s246 + $0x3c] sm:$0xf]
      %v264 = vld [vmem:[%s246 + $0x40] sm:$0xf]
      %v265 = vld [vmem:[%s246 + $0x48] sm:$0xf]
      %v266 = vld [vmem:[%s246 + $0x4c] sm:$0xf]
      %v267 = vld [vmem:[%s246 + $0x54] sm:$0xf]
      %v268 = vld [vmem:[%s246 + $0x58] sm:$0xf]
      %v269 = vld [vmem:[%s246 + $0x60] sm:$0xf]
      %v270 = vld [vmem:[%s246 + $0x64] sm:$0xf]
      %v271 = vld [vmem:[%s246 + $0x6c] sm:$0xf]
      %v272 = vld [vmem:[%s246 + $0x70] sm:$0xf]
      %v273 = vld [vmem:[%s246 + $0x78] sm:$0xf]
      %v274 = vld [vmem:[%s246 + $0x7c] sm:$0xf]
      %v275 = vld [vmem:[%s246 + $0x84] sm:$0xf]
      %v276 = vld [vmem:[%s246 + $0x88] sm:$0xf]
      %v277 = vld [vmem:[%s246 + $0x90] sm:$0xf]
      %v278 = vld [vmem:[%s246 + $0x94] sm:$0xf]
      %v279 = vld [vmem:[%s246 + $0x9c] sm:$0xf]
      %v280 = vld [vmem:[%s246 + $0xa0] sm:$0xf]
      %v281 = vld [vmem:[%s246 + $0xa8] sm:$0xf]
      %v282 = vld [vmem:[%s246 + $0xac] sm:$0xf]
      %v283 = vld [vmem:[%s246 + $0xb4] sm:$0xf]
      %v284 = vld [vmem:[%s246 + $0xb8] sm:$0xf]
      %v285 = vld [vmem:[%s1] sm:$0xf]
      %v286 = vld [vmem:[%s1 + $0x4] sm:$0xf]
      %v287 = vld [vmem:[%s1 + $0x8] sm:$0xf]
      %v288 = vld [vmem:[%s1 + $0xc] sm:$0xf]
      %v289 = vld [vmem:[%s1 + $0x10] sm:$0xf]
      %v290 = vld [vmem:[%s1 + $0x14] sm:$0xf]
      %v291 = vld [vmem:[%s1 + $0x18] sm:$0xf]
      %v292 = vld [vmem:[%s1 + $0x1c] sm:$0xf]
      %v293 = vld [vmem:[%s1 + $0x20] sm:$0xf]
      %v294 = vld [vmem:[%s1 + $0x24] sm:$0xf]
      %v295 = vld [vmem:[%s1 + $0x28] sm:$0xf]
      %v296 = vld [vmem:[%s1 + $0x2c] sm:$0xf]
      %v297 = vld [vmem:[%s1 + $0x30] sm:$0xf]
      %v298 = vld [vmem:[%s1 + $0x34] sm:$0xf]
      %v299 = vld [vmem:[%s1 + $0x38] sm:$0xf]
      %v300 = vld [vmem:[%s1 + $0x3c] sm:$0xf]
      %v301 = vld [vmem:[%s246 + $0x8] sm:$0x1]
      %v302 = vld [vmem:[%s246 + $0x14] sm:$0x1]
      %v303 = vld [vmem:[%s246 + $0x20] sm:$0x1]
      %v304 = vld [vmem:[%s246 + $0x2c] sm:$0x1]
      %v305 = vld [vmem:[%s246 + $0x38] sm:$0x1]
      %v306 = vld [vmem:[%s246 + $0x44] sm:$0x1]
      %v307 = vld [vmem:[%s246 + $0x50] sm:$0x1]
      %v308 = vld [vmem:[%s246 + $0x5c] sm:$0x1]
      %v309 = vld [vmem:[%s246 + $0x68] sm:$0x1]
      %v310 = vld [vmem:[%s246 + $0x74] sm:$0x1]
      %v311 = vld [vmem:[%s246 + $0x80] sm:$0x1]
      %v312 = vld [vmem:[%s246 + $0x8c] sm:$0x1]
      %v313 = vld [vmem:[%s246 + $0x98] sm:$0x1]
      %v314 = vld [vmem:[%s246 + $0xa4] sm:$0x1]
      %v315 = vld [vmem:[%s246 + $0xb0] sm:$0x1]
      %v316 = vld [vmem:[%s246 + $0xbc] sm:$0x1]
      %vm317 = vsmask.f32 3328
      %vm318 = vsmask.f32 7440
      %vm319 = vmor %vm317, %vm318
      %v321 = vshrl.u32 %v253, 16
      %v323 = vrot.slane %v321, 4
      %v324 = vshll.u32 %v253, 16
      %v326 = vrot.slane %v324, 5
      %v327 = vor.u32 %v323, %v326
      %v328 = vrot.slane %v327, 4
      %v330 = vshll.u32 %v254, 16
      %v332 = vrot.slane %v330, 5
      %v333 = vsel %vm319, %v328, %v332
      %v334 = vshrl.u32 %v254, 16
      %v336 = vrot.slane %v334, 4
      %v337 = vor.u32 %v336, %v332
      %v338 = vrot.slane %v337, 4
      %v340 = vshll.u32 %v301, 16
      %v342 = vrot.slane %v340, 5
      %v343 = vsel %vm319, %v338, %v342
      %v345 = vshrl.u32 %v255, 16
      %v347 = vrot.slane %v345, 4
      %v348 = vshll.u32 %v255, 16
      %v350 = vrot.slane %v348, 5
      %v351 = vor.u32 %v347, %v350
      %v352 = vrot.slane %v351, 4
      %v354 = vshll.u32 %v256, 16
      %v356 = vrot.slane %v354, 5
      %v357 = vsel %vm319, %v352, %v356
      %v358 = vshrl.u32 %v256, 16
      %v360 = vrot.slane %v358, 4
      %v361 = vor.u32 %v360, %v356
      %v362 = vrot.slane %v361, 4
      %v364 = vshll.u32 %v302, 16
      %v366 = vrot.slane %v364, 5
      %v367 = vsel %vm319, %v362, %v366
      %v369 = vshrl.u32 %v257, 16
      %v371 = vrot.slane %v369, 4
      %v372 = vshll.u32 %v257, 16
      %v374 = vrot.slane %v372, 5
      %v375 = vor.u32 %v371, %v374
      %v376 = vrot.slane %v375, 4
      %v378 = vshll.u32 %v258, 16
      %v380 = vrot.slane %v378, 5
      %v381 = vsel %vm319, %v376, %v380
      %v382 = vshrl.u32 %v258, 16
      %v384 = vrot.slane %v382, 4
      %v385 = vor.u32 %v384, %v380
      %v386 = vrot.slane %v385, 4
      %v388 = vshll.u32 %v303, 16
      %v390 = vrot.slane %v388, 5
      %v391 = vsel %vm319, %v386, %v390
      %v393 = vshrl.u32 %v259, 16
      %v395 = vrot.slane %v393, 4
      %v396 = vshll.u32 %v259, 16
      %v398 = vrot.slane %v396, 5
      %v399 = vor.u32 %v395, %v398
      %v400 = vrot.slane %v399, 4
      %v402 = vshll.u32 %v260, 16
      %v404 = vrot.slane %v402, 5
      %v405 = vsel %vm319, %v400, %v404
      %v406 = vshrl.u32 %v260, 16
      %v408 = vrot.slane %v406, 4
      %v409 = vor.u32 %v408, %v404
      %v410 = vrot.slane %v409, 4
      %v412 = vshll.u32 %v304, 16
      %v414 = vrot.slane %v412, 5
      %v415 = vsel %vm319, %v410, %v414
      %v417 = vshrl.u32 %v261, 16
      %v419 = vrot.slane %v417, 4
      %v420 = vshll.u32 %v261, 16
      %v422 = vrot.slane %v420, 5
      %v423 = vor.u32 %v419, %v422
      %v424 = vrot.slane %v423, 4
      %v426 = vshll.u32 %v262, 16
      %v428 = vrot.slane %v426, 5
      %v429 = vsel %vm319, %v424, %v428
      %v430 = vshrl.u32 %v262, 16
      %v432 = vrot.slane %v430, 4
      %v433 = vor.u32 %v432, %v428
      %v434 = vrot.slane %v433, 4
      %v436 = vshll.u32 %v305, 16
      %v438 = vrot.slane %v436, 5
      %v439 = vsel %vm319, %v434, %v438
      %v441 = vshrl.u32 %v263, 16
      %v443 = vrot.slane %v441, 4
      %v444 = vshll.u32 %v263, 16
      %v446 = vrot.slane %v444, 5
      %v447 = vor.u32 %v443, %v446
      %v448 = vrot.slane %v447, 4
      %v450 = vshll.u32 %v264, 16
      %v452 = vrot.slane %v450, 5
      %v453 = vsel %vm319, %v448, %v452
      %v454 = vshrl.u32 %v264, 16
      %v456 = vrot.slane %v454, 4
      %v457 = vor.u32 %v456, %v452
      %v458 = vrot.slane %v457, 4
      %v460 = vshll.u32 %v306, 16
      %v462 = vrot.slane %v460, 5
      %v463 = vsel %vm319, %v458, %v462
      %v465 = vshrl.u32 %v265, 16
      %v467 = vrot.slane %v465, 4
      %v468 = vshll.u32 %v265, 16
      %v470 = vrot.slane %v468, 5
      %v471 = vor.u32 %v467, %v470
      %v472 = vrot.slane %v471, 4
      %v474 = vshll.u32 %v266, 16
      %v476 = vrot.slane %v474, 5
      %v477 = vsel %vm319, %v472, %v476
      %v478 = vshrl.u32 %v266, 16
      %v480 = vrot.slane %v478, 4
      %v481 = vor.u32 %v480, %v476
      %v482 = vrot.slane %v481, 4
      %v484 = vshll.u32 %v307, 16
      %v486 = vrot.slane %v484, 5
      %v487 = vsel %vm319, %v482, %v486
      %v489 = vshrl.u32 %v267, 16
      %v491 = vrot.slane %v489, 4
      %v492 = vshll.u32 %v267, 16
      %v494 = vrot.slane %v492, 5
      %v495 = vor.u32 %v491, %v494
      %v496 = vrot.slane %v495, 4
      %v498 = vshll.u32 %v268, 16
      %v500 = vrot.slane %v498, 5
      %v501 = vsel %vm319, %v496, %v500
      %v502 = vshrl.u32 %v268, 16
      %v504 = vrot.slane %v502, 4
      %v505 = vor.u32 %v504, %v500
      %v506 = vrot.slane %v505, 4
      %v508 = vshll.u32 %v308, 16
      %v510 = vrot.slane %v508, 5
      %v511 = vsel %vm319, %v506, %v510
      %v513 = vshrl.u32 %v269, 16
      %v515 = vrot.slane %v513, 4
      %v516 = vshll.u32 %v269, 16
      %v518 = vrot.slane %v516, 5
      %v519 = vor.u32 %v515, %v518
      %v520 = vrot.slane %v519, 4
      %v522 = vshll.u32 %v270, 16
      %v524 = vrot.slane %v522, 5
      %v525 = vsel %vm319, %v520, %v524
      %v526 = vshrl.u32 %v270, 16
      %v528 = vrot.slane %v526, 4
      %v529 = vor.u32 %v528, %v524
      %v530 = vrot.slane %v529, 4
      %v532 = vshll.u32 %v309, 16
      %v534 = vrot.slane %v532, 5
      %v535 = vsel %vm319, %v530, %v534
      %v537 = vshrl.u32 %v271, 16
      %v539 = vrot.slane %v537, 4
      %v540 = vshll.u32 %v271, 16
      %v542 = vrot.slane %v540, 5
      %v543 = vor.u32 %v539, %v542
      %v544 = vrot.slane %v543, 4
      %v546 = vshll.u32 %v272, 16
      %v548 = vrot.slane %v546, 5
      %v549 = vsel %vm319, %v544, %v548
      %v550 = vshrl.u32 %v272, 16
      %v552 = vrot.slane %v550, 4
      %v553 = vor.u32 %v552, %v548
      %v554 = vrot.slane %v553, 4
      %v556 = vshll.u32 %v310, 16
      %v558 = vrot.slane %v556, 5
      %v559 = vsel %vm319, %v554, %v558
      %v561 = vshrl.u32 %v273, 16
      %v563 = vrot.slane %v561, 4
      %v564 = vshll.u32 %v273, 16
      %v566 = vrot.slane %v564, 5
      %v567 = vor.u32 %v563, %v566
      %v568 = vrot.slane %v567, 4
      %v570 = vshll.u32 %v274, 16
      %v572 = vrot.slane %v570, 5
      %v573 = vsel %vm319, %v568, %v572
      %v574 = vshrl.u32 %v274, 16
      %v576 = vrot.slane %v574, 4
      %v577 = vor.u32 %v576, %v572
      %v578 = vrot.slane %v577, 4
      %v580 = vshll.u32 %v311, 16
      %v582 = vrot.slane %v580, 5
      %v583 = vsel %vm319, %v578, %v582
      %v585 = vshrl.u32 %v275, 16
      %v587 = vrot.slane %v585, 4
      %v588 = vshll.u32 %v275, 16
      %v590 = vrot.slane %v588, 5
      %v591 = vor.u32 %v587, %v590
      %v592 = vrot.slane %v591, 4
      %v594 = vshll.u32 %v276, 16
      %v596 = vrot.slane %v594, 5
      %v597 = vsel %vm319, %v592, %v596
      %v598 = vshrl.u32 %v276, 16
      %v600 = vrot.slane %v598, 4
      %v601 = vor.u32 %v600, %v596
      %v602 = vrot.slane %v601, 4
      %v604 = vshll.u32 %v312, 16
      %v606 = vrot.slane %v604, 5
      %v607 = vsel %vm319, %v602, %v606
      %v609 = vshrl.u32 %v277, 16
      %v611 = vrot.slane %v609, 4
      %v612 = vshll.u32 %v277, 16
      %v614 = vrot.slane %v612, 5
      %v615 = vor.u32 %v611, %v614
      %v616 = vrot.slane %v615, 4
      %v618 = vshll.u32 %v278, 16
      %v620 = vrot.slane %v618, 5
      %v621 = vsel %vm319, %v616, %v620
      %v622 = vshrl.u32 %v278, 16
      %v624 = vrot.slane %v622, 4
      %v625 = vor.u32 %v624, %v620
      %v626 = vrot.slane %v625, 4
      %v628 = vshll.u32 %v313, 16
      %v630 = vrot.slane %v628, 5
      %v631 = vsel %vm319, %v626, %v630
      %v633 = vshrl.u32 %v279, 16
      %v635 = vrot.slane %v633, 4
      %v636 = vshll.u32 %v279, 16
      %v638 = vrot.slane %v636, 5
      %v639 = vor.u32 %v635, %v638
      %v640 = vrot.slane %v639, 4
      %v642 = vshll.u32 %v280, 16
      %v644 = vrot.slane %v642, 5
      %v645 = vsel %vm319, %v640, %v644
      %v646 = vshrl.u32 %v280, 16
      %v648 = vrot.slane %v646, 4
      %v649 = vor.u32 %v648, %v644
      %v650 = vrot.slane %v649, 4
      %v652 = vshll.u32 %v314, 16
      %v654 = vrot.slane %v652, 5
      %v655 = vsel %vm319, %v650, %v654
      %v657 = vshrl.u32 %v281, 16
      %v659 = vrot.slane %v657, 4
      %v660 = vshll.u32 %v281, 16
      %v662 = vrot.slane %v660, 5
      %v663 = vor.u32 %v659, %v662
      %v664 = vrot.slane %v663, 4
      %v666 = vshll.u32 %v282, 16
      %v668 = vrot.slane %v666, 5
      %v669 = vsel %vm319, %v664, %v668
      %v670 = vshrl.u32 %v282, 16
      %v672 = vrot.slane %v670, 4
      %v673 = vor.u32 %v672, %v668
      %v674 = vrot.slane %v673, 4
      %v676 = vshll.u32 %v315, 16
      %v678 = vrot.slane %v676, 5
      %v679 = vsel %vm319, %v674, %v678
      %v681 = vshrl.u32 %v283, 16
      %v683 = vrot.slane %v681, 4
      %v684 = vshll.u32 %v283, 16
      %v686 = vrot.slane %v684, 5
      %v687 = vor.u32 %v683, %v686
      %v688 = vrot.slane %v687, 4
      %v690 = vshll.u32 %v284, 16
      %v692 = vrot.slane %v690, 5
      %v693 = vsel %vm319, %v688, %v692
      %v694 = vshrl.u32 %v284, 16
      %v696 = vrot.slane %v694, 4
      %v697 = vor.u32 %v696, %v692
      %v698 = vrot.slane %v697, 4
      %v700 = vshll.u32 %v316, 16
      %v702 = vrot.slane %v700, 5
      %v703 = vsel %vm319, %v698, %v702
      %s704 = scalar_lea.vmem %s1, 64
      %v705 = vld [vmem:[%s704] sm:$0xf]
      %v706 = vld [vmem:[%s704 + $0x4] sm:$0xf]
      %v707 = vld [vmem:[%s704 + $0x8] sm:$0xf]
      %v708 = vld [vmem:[%s704 + $0xc] sm:$0xf]
      %v709 = vld [vmem:[%s704 + $0x10] sm:$0xf]
      %v710 = vld [vmem:[%s704 + $0x14] sm:$0xf]
      %v711 = vld [vmem:[%s704 + $0x18] sm:$0xf]
      %v712 = vld [vmem:[%s704 + $0x1c] sm:$0xf]
      %v713 = vld [vmem:[%s704 + $0x20] sm:$0xf]
      %v714 = vld [vmem:[%s704 + $0x24] sm:$0xf]
      %v715 = vld [vmem:[%s704 + $0x28] sm:$0xf]
      %v716 = vld [vmem:[%s704 + $0x2c] sm:$0xf]
      %v717 = vld [vmem:[%s704 + $0x30] sm:$0xf]
      %v718 = vld [vmem:[%s704 + $0x34] sm:$0xf]
      %v719 = vld [vmem:[%s704 + $0x38] sm:$0xf]
      %v720 = vld [vmem:[%s704 + $0x3c] sm:$0xf]
      %v721 = vunpack.c.l.b16 %v333
      %v722 = vunpack.c.l.b16 %v343
      %v723 = vunpack.c.l.b16 %v357
      %v724 = vunpack.c.l.b16 %v367
      %v725 = vunpack.c.l.b16 %v381
      %v726 = vunpack.c.l.b16 %v391
      %v727 = vunpack.c.l.b16 %v405
      %v728 = vunpack.c.l.b16 %v415
      %v729 = vunpack.c.l.b16 %v429
      %v730 = vunpack.c.l.b16 %v439
      %v731 = vunpack.c.l.b16 %v453
      %v732 = vunpack.c.l.b16 %v463
      %v733 = vunpack.c.l.b16 %v477
      %v734 = vunpack.c.l.b16 %v487
      %v735 = vunpack.c.l.b16 %v501
      %v736 = vunpack.c.l.b16 %v511
      %v737 = vunpack.c.l.b16 %v525
      %v738 = vunpack.c.l.b16 %v535
      %v739 = vunpack.c.l.b16 %v549
      %v740 = vunpack.c.l.b16 %v559
      %v741 = vunpack.c.l.b16 %v573
      %v742 = vunpack.c.l.b16 %v583
      %v743 = vunpack.c.l.b16 %v597
      %v744 = vunpack.c.l.b16 %v607
      %v745 = vunpack.c.l.b16 %v621
      %v746 = vunpack.c.l.b16 %v631
      %v747 = vunpack.c.l.b16 %v645
      %v748 = vunpack.c.l.b16 %v655
      %v749 = vunpack.c.l.b16 %v669
      %v750 = vunpack.c.l.b16 %v679
      %v751 = vunpack.c.l.b16 %v693
      %v752 = vunpack.c.l.b16 %v703
      %v753 = vpack.c.b16 %v722, %v721
      %v754 = vpack.c.b16 %v724, %v723
      %v755 = vpack.c.b16 %v726, %v725
      %v756 = vpack.c.b16 %v728, %v727
      %v757 = vpack.c.b16 %v730, %v729
      %v758 = vpack.c.b16 %v732, %v731
      %v759 = vpack.c.b16 %v734, %v733
      %v760 = vpack.c.b16 %v736, %v735
      %v761 = vpack.c.b16 %v738, %v737
      %v762 = vpack.c.b16 %v740, %v739
      %v763 = vpack.c.b16 %v742, %v741
      %v764 = vpack.c.b16 %v744, %v743
      %v765 = vpack.c.b16 %v746, %v745
      %v766 = vpack.c.b16 %v748, %v747
      %v767 = vpack.c.b16 %v750, %v749
      %v768 = vpack.c.b16 %v752, %v751
      %v801 = vunpack.c.l.b16 %v705
      %v802 = vunpack.c.l.b16 %v706
      %v803 = vunpack.c.l.b16 %v707
      %v804 = vunpack.c.l.b16 %v708
      %v805 = vunpack.c.l.b16 %v709
      %v806 = vunpack.c.l.b16 %v710
      %v807 = vunpack.c.l.b16 %v711
      %v808 = vunpack.c.l.b16 %v712
      %v809 = vunpack.c.l.b16 %v713
      %v810 = vunpack.c.l.b16 %v714
      %v811 = vunpack.c.l.b16 %v715
      %v812 = vunpack.c.l.b16 %v716
      %v813 = vunpack.c.l.b16 %v717
      %v814 = vunpack.c.l.b16 %v718
      %v815 = vunpack.c.l.b16 %v719
      %v816 = vunpack.c.l.b16 %v720
      %v817 = vpack.c.b16 %v802, %v801
      %v818 = vpack.c.b16 %v804, %v803
      %v819 = vpack.c.b16 %v806, %v805
      %v820 = vpack.c.b16 %v808, %v807
      %v821 = vpack.c.b16 %v810, %v809
      %v822 = vpack.c.b16 %v812, %v811
      %v823 = vpack.c.b16 %v814, %v813
      %v824 = vpack.c.b16 %v816, %v815
      %833 = vmatprep.subr.bf16.mxu0 0
      %834 = vmatpush1.bf16.msra.mxu0 %v817
      %835 = vmatprep.subr.bf16.mxu0 0
      %836 = vmatpush1.bf16.msra.mxu0 %v818
      %837 = vmatprep.subr.bf16.mxu0 0
      %838 = vmatpush1.bf16.msra.mxu0 %v819
      %839 = vmatprep.subr.bf16.mxu0 0
      %840 = vmatpush1.bf16.msra.mxu0 %v820
      %841 = vmatprep.subr.bf16.mxu0 0
      %842 = vmatpush1.bf16.msra.mxu0 %v821
      %843 = vmatprep.subr.bf16.mxu0 0
      %844 = vmatpush1.bf16.msra.mxu0 %v822
      %845 = vmatprep.subr.bf16.mxu0 0
      %846 = vmatpush1.bf16.msra.mxu0 %v823
      %847 = vmatprep.subr.bf16.mxu0 0
      %848 = vmatpush1.bf16.msra.mxu0 %v824
      %849 = vmatprep.subr.bf16.mxu0 0
      %850 = vmatpush1.bf16.msra.mxu0 0
      %851 = vmatprep.subr.bf16.mxu0 0
      %852 = vmatpush1.bf16.msra.mxu0 0
      %853 = vmatprep.subr.bf16.mxu0 0
      %854 = vmatpush1.bf16.msra.mxu0 0
      %855 = vmatprep.subr.bf16.mxu0 0
      %856 = vmatpush1.bf16.msra.mxu0 0
      %857 = vmatprep.subr.bf16.mxu0 0
      %858 = vmatpush1.bf16.msra.mxu0 0
      %859 = vmatprep.subr.bf16.mxu0 0
      %860 = vmatpush1.bf16.msra.mxu0 0
      %861 = vmatprep.subr.bf16.mxu0 0
      %862 = vmatpush1.bf16.msra.mxu0 0
      %863 = vmatprep.subr.bf16.mxu0 0
      %864 = vmatpush1.bf16.msra.mxu0 0
      %865 = vmatprep.mubr.bf16.mxu0 0
      %866 = vmatmul.mubr.bf16.gmra.mrb[0].mxu0 %v753
      %v867 = vpop.f32.mrb[0].mxu0
      %v868 = vadd.f32 0.0, %v867
      %v869 = vpop.f32.mrb[0].mxu0
      %v870 = vpop.f32.mrb[0].mxu0
      %v871 = vadd.f32 0.0, %v870
      %v872 = vpop.f32.mrb[0].mxu0
      %873 = vmatprep.mubr.bf16.mxu0 0
      %874 = vmatmul.mubr.bf16.gmra.mrb[0].mxu0 %v754
      %v875 = vpop.f32.mrb[0].mxu0
      %v876 = vadd.f32 0.0, %v875
      %v877 = vpop.f32.mrb[0].mxu0
      %v878 = vpop.f32.mrb[0].mxu0
      %v879 = vadd.f32 0.0, %v878
      %v880 = vpop.f32.mrb[0].mxu0
      %881 = vmatprep.mubr.bf16.mxu0 0
      %882 = vmatmul.mubr.bf16.gmra.mrb[0].mxu0 %v755
      %v883 = vpop.f32.mrb[0].mxu0
      %v884 = vadd.f32 0.0, %v883
      %v885 = vpop.f32.mrb[0].mxu0
      %v886 = vpop.f32.mrb[0].mxu0
      %v887 = vadd.f32 0.0, %v886
      %v888 = vpop.f32.mrb[0].mxu0
      %889 = vmatprep.mubr.bf16.mxu0 0
      %890 = vmatmul.mubr.bf16.gmra.mrb[0].mxu0 %v756
      %v891 = vpop.f32.mrb[0].mxu0
      %v892 = vadd.f32 0.0, %v891
      %v893 = vpop.f32.mrb[0].mxu0
      %v894 = vpop.f32.mrb[0].mxu0
      %v895 = vadd.f32 0.0, %v894
      %v896 = vpop.f32.mrb[0].mxu0
      %897 = vmatprep.mubr.bf16.mxu0 0
      %898 = vmatmul.mubr.bf16.gmra.mrb[0].mxu0 %v757
      %v899 = vpop.f32.mrb[0].mxu0
      %v900 = vadd.f32 0.0, %v899
      %v901 = vpop.f32.mrb[0].mxu0
      %v902 = vpop.f32.mrb[0].mxu0
      %v903 = vadd.f32 0.0, %v902
      %v904 = vpop.f32.mrb[0].mxu0
      %905 = vmatprep.mubr.bf16.mxu0 0
      %906 = vmatmul.mubr.bf16.gmra.mrb[0].mxu0 %v758
      %v907 = vpop.f32.mrb[0].mxu0
      %v908 = vadd.f32 0.0, %v907
      %v909 = vpop.f32.mrb[0].mxu0
      %v910 = vpop.f32.mrb[0].mxu0
      %v911 = vadd.f32 0.0, %v910
      %v912 = vpop.f32.mrb[0].mxu0
      %913 = vmatprep.mubr.bf16.mxu0 0
      %914 = vmatmul.mubr.bf16.gmra.mrb[0].mxu0 %v759
      %v915 = vpop.f32.mrb[0].mxu0
      %v916 = vadd.f32 0.0, %v915
      %v917 = vpop.f32.mrb[0].mxu0
      %v918 = vpop.f32.mrb[0].mxu0
      %v919 = vadd.f32 0.0, %v918
      %v920 = vpop.f32.mrb[0].mxu0
      %921 = vmatprep.mubr.bf16.mxu0 0
      %922 = vmatmul.mubr.bf16.gmra.mrb[0].mxu0 %v760
      %v923 = vpop.f32.mrb[0].mxu0
      %v924 = vadd.f32 0.0, %v923
      %v925 = vpop.f32.mrb[0].mxu0
      %v926 = vpop.f32.mrb[0].mxu0
      %v927 = vadd.f32 0.0, %v926
      %v928 = vpop.f32.mrb[0].mxu0
      %929 = vmatprep.mubr.bf16.mxu0 0
      %930 = vmatmul.mubr.bf16.gmra.mrb[0].mxu0 %v761
      %v931 = vpop.f32.mrb[0].mxu0
      %v932 = vadd.f32 0.0, %v931
      %v933 = vpop.f32.mrb[0].mxu0
      %v934 = vpop.f32.mrb[0].mxu0
      %v935 = vadd.f32 0.0, %v934
      %v936 = vpop.f32.mrb[0].mxu0
      %937 = vmatprep.mubr.bf16.mxu0 0
      %938 = vmatmul.mubr.bf16.gmra.mrb[0].mxu0 %v762
      %v939 = vpop.f32.mrb[0].mxu0
      %v940 = vadd.f32 0.0, %v939
      %v941 = vpop.f32.mrb[0].mxu0
      %v942 = vpop.f32.mrb[0].mxu0
      %v943 = vadd.f32 0.0, %v942
      %v944 = vpop.f32.mrb[0].mxu0
      %945 = vmatprep.mubr.bf16.mxu0 0
      %946 = vmatmul.mubr.bf16.gmra.mrb[0].mxu0 %v763
      %v947 = vpop.f32.mrb[0].mxu0
      %v948 = vadd.f32 0.0, %v947
      %v949 = vpop.f32.mrb[0].mxu0
      %v950 = vpop.f32.mrb[0].mxu0
      %v951 = vadd.f32 0.0, %v950
      %v952 = vpop.f32.mrb[0].mxu0
      %953 = vmatprep.mubr.bf16.mxu0 0
      %954 = vmatmul.mubr.bf16.gmra.mrb[0].mxu0 %v764
      %v955 = vpop.f32.mrb[0].mxu0
      %v956 = vadd.f32 0.0, %v955
      %v957 = vpop.f32.mrb[0].mxu0
      %v958 = vpop.f32.mrb[0].mxu0
      %v959 = vadd.f32 0.0, %v958
      %v960 = vpop.f32.mrb[0].mxu0
      %961 = vmatprep.mubr.bf16.mxu0 0
      %962 = vmatmul.mubr.bf16.gmra.mrb[0].mxu0 %v765
      %v963 = vpop.f32.mrb[0].mxu0
      %v964 = vadd.f32 0.0, %v963
      %v965 = vpop.f32.mrb[0].mxu0
      %v966 = vpop.f32.mrb[0].mxu0
      %v967 = vadd.f32 0.0, %v966
      %v968 = vpop.f32.mrb[0].mxu0
      %969 = vmatprep.mubr.bf16.mxu0 0
      %970 = vmatmul.mubr.bf16.gmra.mrb[0].mxu0 %v766
      %v971 = vpop.f32.mrb[0].mxu0
      %v972 = vadd.f32 0.0, %v971
      %v973 = vpop.f32.mrb[0].mxu0
      %v974 = vpop.f32.mrb[0].mxu0
      %v975 = vadd.f32 0.0, %v974
      %v976 = vpop.f32.mrb[0].mxu0
      %977 = vmatprep.mubr.bf16.mxu0 0
      %978 = vmatmul.mubr.bf16.gmra.mrb[0].mxu0 %v767
      %v979 = vpop.f32.mrb[0].mxu0
      %v980 = vadd.f32 0.0, %v979
      %v981 = vpop.f32.mrb[0].mxu0
      %v982 = vpop.f32.mrb[0].mxu0
      %v983 = vadd.f32 0.0, %v982
      %v984 = vpop.f32.mrb[0].mxu0
      %985 = vmatprep.mubr.bf16.mxu0 0
      %986 = vmatmul.mubr.bf16.gmra.mrb[0].mxu0 %v768
      %v987 = vpop.f32.mrb[0].mxu0
      %v988 = vadd.f32 0.0, %v987
      %v989 = vpop.f32.mrb[0].mxu0
      %v990 = vpop.f32.mrb[0].mxu0
      %v991 = vadd.f32 0.0, %v990
      %v992 = vpop.f32.mrb[0].mxu0
      %993 = vdwg.mxu0
      %v1026 = vunpack.c.l.b16 %v253
      %v1027 = vunpack.c.l.b16 %v254
      %v1028 = vunpack.c.l.b16 %v255
      %v1029 = vunpack.c.l.b16 %v256
      %v1030 = vunpack.c.l.b16 %v257
      %v1031 = vunpack.c.l.b16 %v258
      %v1032 = vunpack.c.l.b16 %v259
      %v1033 = vunpack.c.l.b16 %v260
      %v1034 = vunpack.c.l.b16 %v261
      %v1035 = vunpack.c.l.b16 %v262
      %v1036 = vunpack.c.l.b16 %v263
      %v1037 = vunpack.c.l.b16 %v264
      %v1038 = vunpack.c.l.b16 %v265
      %v1039 = vunpack.c.l.b16 %v266
      %v1040 = vunpack.c.l.b16 %v267
      %v1041 = vunpack.c.l.b16 %v268
      %v1042 = vunpack.c.l.b16 %v269
      %v1043 = vunpack.c.l.b16 %v270
      %v1044 = vunpack.c.l.b16 %v271
      %v1045 = vunpack.c.l.b16 %v272
      %v1046 = vunpack.c.l.b16 %v273
      %v1047 = vunpack.c.l.b16 %v274
      %v1048 = vunpack.c.l.b16 %v275
      %v1049 = vunpack.c.l.b16 %v276
      %v1050 = vunpack.c.l.b16 %v277
      %v1051 = vunpack.c.l.b16 %v278
      %v1052 = vunpack.c.l.b16 %v279
      %v1053 = vunpack.c.l.b16 %v280
      %v1054 = vunpack.c.l.b16 %v281
      %v1055 = vunpack.c.l.b16 %v282
      %v1056 = vunpack.c.l.b16 %v283
      %v1057 = vunpack.c.l.b16 %v284
      %v1058 = vpack.c.b16 %v1027, %v1026
      %v1059 = vpack.c.b16 %v1029, %v1028
      %v1060 = vpack.c.b16 %v1031, %v1030
      %v1061 = vpack.c.b16 %v1033, %v1032
      %v1062 = vpack.c.b16 %v1035, %v1034
      %v1063 = vpack.c.b16 %v1037, %v1036
      %v1064 = vpack.c.b16 %v1039, %v1038
      %v1065 = vpack.c.b16 %v1041, %v1040
      %v1066 = vpack.c.b16 %v1043, %v1042
      %v1067 = vpack.c.b16 %v1045, %v1044
      %v1068 = vpack.c.b16 %v1047, %v1046
      %v1069 = vpack.c.b16 %v1049, %v1048
      %v1070 = vpack.c.b16 %v1051, %v1050
      %v1071 = vpack.c.b16 %v1053, %v1052
      %v1072 = vpack.c.b16 %v1055, %v1054
      %v1073 = vpack.c.b16 %v1057, %v1056
      %v1106 = vunpack.c.l.b16 %v285
      %v1107 = vunpack.c.l.b16 %v286
      %v1108 = vunpack.c.l.b16 %v287
      %v1109 = vunpack.c.l.b16 %v288
      %v1110 = vunpack.c.l.b16 %v289
      %v1111 = vunpack.c.l.b16 %v290
      %v1112 = vunpack.c.l.b16 %v291
      %v1113 = vunpack.c.l.b16 %v292
      %v1114 = vunpack.c.l.b16 %v293
      %v1115 = vunpack.c.l.b16 %v294
      %v1116 = vunpack.c.l.b16 %v295
      %v1117 = vunpack.c.l.b16 %v296
      %v1118 = vunpack.c.l.b16 %v297
      %v1119 = vunpack.c.l.b16 %v298
      %v1120 = vunpack.c.l.b16 %v299
      %v1121 = vunpack.c.l.b16 %v300
      %v1122 = vpack.c.b16 %v1107, %v1106
      %v1123 = vpack.c.b16 %v1109, %v1108
      %v1124 = vpack.c.b16 %v1111, %v1110
      %v1125 = vpack.c.b16 %v1113, %v1112
      %v1126 = vpack.c.b16 %v1115, %v1114
      %v1127 = vpack.c.b16 %v1117, %v1116
      %v1128 = vpack.c.b16 %v1119, %v1118
      %v1129 = vpack.c.b16 %v1121, %v1120
      %1138 = vmatprep.subr.bf16.mxu0 0
      %1139 = vmatpush1.bf16.msra.mxu0 %v1122
      %1140 = vmatprep.subr.bf16.mxu0 0
      %1141 = vmatpush1.bf16.msra.mxu0 %v1123
      %1142 = vmatprep.subr.bf16.mxu0 0
      %1143 = vmatpush1.bf16.msra.mxu0 %v1124
      %1144 = vmatprep.subr.bf16.mxu0 0
      %1145 = vmatpush1.bf16.msra.mxu0 %v1125
      %1146 = vmatprep.subr.bf16.mxu0 0
      %1147 = vmatpush1.bf16.msra.mxu0 %v1126
      %1148 = vmatprep.subr.bf16.mxu0 0
      %1149 = vmatpush1.bf16.msra.mxu0 %v1127
      %1150 = vmatprep.subr.bf16.mxu0 0
      %1151 = vmatpush1.bf16.msra.mxu0 %v1128
      %1152 = vmatprep.subr.bf16.mxu0 0
      %1153 = vmatpush1.bf16.msra.mxu0 %v1129
      %1154 = vmatprep.subr.bf16.mxu0 0
      %1155 = vmatpush1.bf16.msra.mxu0 0
      %1156 = vmatprep.subr.bf16.mxu0 0
      %1157 = vmatpush1.bf16.msra.mxu0 0
      %1158 = vmatprep.subr.bf16.mxu0 0
      %1159 = vmatpush1.bf16.msra.mxu0 0
      %1160 = vmatprep.subr.bf16.mxu0 0
      %1161 = vmatpush1.bf16.msra.mxu0 0
      %1162 = vmatprep.subr.bf16.mxu0 0
      %1163 = vmatpush1.bf16.msra.mxu0 0
      %1164 = vmatprep.subr.bf16.mxu0 0
      %1165 = vmatpush1.bf16.msra.mxu0 0
      %1166 = vmatprep.subr.bf16.mxu0 0
      %1167 = vmatpush1.bf16.msra.mxu0 0
      %1168 = vmatprep.subr.bf16.mxu0 0
      %1169 = vmatpush1.bf16.msra.mxu0 0
      %1170 = vmatprep.mubr.bf16.mxu0 0
      %1171 = vmatmul.mubr.bf16.gmra.mrb[0].mxu0 %v1058
      %v1172 = vpop.f32.mrb[0].mxu0
      %v1173 = vadd.f32 %v868, %v1172
      %v1174 = vpop.f32.mrb[0].mxu0
      %v1175 = vpop.f32.mrb[0].mxu0
      %v1176 = vadd.f32 %v871, %v1175
      %v1177 = vpop.f32.mrb[0].mxu0
      %1178 = vmatprep.mubr.bf16.mxu0 0
      %1179 = vmatmul.mubr.bf16.gmra.mrb[0].mxu0 %v1059
      %v1180 = vpop.f32.mrb[0].mxu0
      %v1181 = vadd.f32 %v876, %v1180
      %v1182 = vpop.f32.mrb[0].mxu0
      %v1183 = vpop.f32.mrb[0].mxu0
      %v1184 = vadd.f32 %v879, %v1183
      %v1185 = vpop.f32.mrb[0].mxu0
      %1186 = vmatprep.mubr.bf16.mxu0 0
      %1187 = vmatmul.mubr.bf16.gmra.mrb[0].mxu0 %v1060
      %v1188 = vpop.f32.mrb[0].mxu0
      %v1189 = vadd.f32 %v884, %v1188
      %v1190 = vpop.f32.mrb[0].mxu0
      %v1191 = vpop.f32.mrb[0].mxu0
      %v1192 = vadd.f32 %v887, %v1191
      %v1193 = vpop.f32.mrb[0].mxu0
      %1194 = vmatprep.mubr.bf16.mxu0 0
      %1195 = vmatmul.mubr.bf16.gmra.mrb[0].mxu0 %v1061
      %v1196 = vpop.f32.mrb[0].mxu0
      %v1197 = vadd.f32 %v892, %v1196
      %v1198 = vpop.f32.mrb[0].mxu0
      %v1199 = vpop.f32.mrb[0].mxu0
      %v1200 = vadd.f32 %v895, %v1199
      %v1201 = vpop.f32.mrb[0].mxu0
      %1202 = vmatprep.mubr.bf16.mxu0 0
      %1203 = vmatmul.mubr.bf16.gmra.mrb[0].mxu0 %v1062
      %v1204 = vpop.f32.mrb[0].mxu0
      %v1205 = vadd.f32 %v900, %v1204
      %v1206 = vpop.f32.mrb[0].mxu0
      %v1207 = vpop.f32.mrb[0].mxu0
      %v1208 = vadd.f32 %v903, %v1207
      %v1209 = vpop.f32.mrb[0].mxu0
      %1210 = vmatprep.mubr.bf16.mxu0 0
      %1211 = vmatmul.mubr.bf16.gmra.mrb[0].mxu0 %v1063
      %v1212 = vpop.f32.mrb[0].mxu0
      %v1213 = vadd.f32 %v908, %v1212
      %v1214 = vpop.f32.mrb[0].mxu0
      %v1215 = vpop.f32.mrb[0].mxu0
      %v1216 = vadd.f32 %v911, %v1215
      %v1217 = vpop.f32.mrb[0].mxu0
      %1218 = vmatprep.mubr.bf16.mxu0 0
      %1219 = vmatmul.mubr.bf16.gmra.mrb[0].mxu0 %v1064
      %v1220 = vpop.f32.mrb[0].mxu0
      %v1221 = vadd.f32 %v916, %v1220
      %v1222 = vpop.f32.mrb[0].mxu0
      %v1223 = vpop.f32.mrb[0].mxu0
      %v1224 = vadd.f32 %v919, %v1223
      %v1225 = vpop.f32.mrb[0].mxu0
      %1226 = vmatprep.mubr.bf16.mxu0 0
      %1227 = vmatmul.mubr.bf16.gmra.mrb[0].mxu0 %v1065
      %v1228 = vpop.f32.mrb[0].mxu0
      %v1229 = vadd.f32 %v924, %v1228
      %v1230 = vpop.f32.mrb[0].mxu0
      %v1231 = vpop.f32.mrb[0].mxu0
      %v1232 = vadd.f32 %v927, %v1231
      %v1233 = vpop.f32.mrb[0].mxu0
      %1234 = vmatprep.mubr.bf16.mxu0 0
      %1235 = vmatmul.mubr.bf16.gmra.mrb[0].mxu0 %v1066
      %v1236 = vpop.f32.mrb[0].mxu0
      %v1237 = vadd.f32 %v932, %v1236
      %v1238 = vpop.f32.mrb[0].mxu0
      %v1239 = vpop.f32.mrb[0].mxu0
      %v1240 = vadd.f32 %v935, %v1239
      %v1241 = vpop.f32.mrb[0].mxu0
      %1242 = vmatprep.mubr.bf16.mxu0 0
      %1243 = vmatmul.mubr.bf16.gmra.mrb[0].mxu0 %v1067
      %v1244 = vpop.f32.mrb[0].mxu0
      %v1245 = vadd.f32 %v940, %v1244
      %v1246 = vpop.f32.mrb[0].mxu0
      %v1247 = vpop.f32.mrb[0].mxu0
      %v1248 = vadd.f32 %v943, %v1247
      %v1249 = vpop.f32.mrb[0].mxu0
      %1250 = vmatprep.mubr.bf16.mxu0 0
      %1251 = vmatmul.mubr.bf16.gmra.mrb[0].mxu0 %v1068
      %v1252 = vpop.f32.mrb[0].mxu0
      %v1253 = vadd.f32 %v948, %v1252
      %v1254 = vpop.f32.mrb[0].mxu0
      %v1255 = vpop.f32.mrb[0].mxu0
      %v1256 = vadd.f32 %v951, %v1255
      %v1257 = vpop.f32.mrb[0].mxu0
      %1258 = vmatprep.mubr.bf16.mxu0 0
      %1259 = vmatmul.mubr.bf16.gmra.mrb[0].mxu0 %v1069
      %v1260 = vpop.f32.mrb[0].mxu0
      %v1261 = vadd.f32 %v956, %v1260
      %v1262 = vpop.f32.mrb[0].mxu0
      %v1263 = vpop.f32.mrb[0].mxu0
      %v1264 = vadd.f32 %v959, %v1263
      %v1265 = vpop.f32.mrb[0].mxu0
      %1266 = vmatprep.mubr.bf16.mxu0 0
      %1267 = vmatmul.mubr.bf16.gmra.mrb[0].mxu0 %v1070
      %v1268 = vpop.f32.mrb[0].mxu0
      %v1269 = vadd.f32 %v964, %v1268
      %v1270 = vpop.f32.mrb[0].mxu0
      %v1271 = vpop.f32.mrb[0].mxu0
      %v1272 = vadd.f32 %v967, %v1271
      %v1273 = vpop.f32.mrb[0].mxu0
      %1274 = vmatprep.mubr.bf16.mxu0 0
      %1275 = vmatmul.mubr.bf16.gmra.mrb[0].mxu0 %v1071
      %v1276 = vpop.f32.mrb[0].mxu0
      %v1277 = vadd.f32 %v972, %v1276
      %v1278 = vpop.f32.mrb[0].mxu0
      %v1279 = vpop.f32.mrb[0].mxu0
      %v1280 = vadd.f32 %v975, %v1279
      %v1281 = vpop.f32.mrb[0].mxu0
      %1282 = vmatprep.mubr.bf16.mxu0 0
      %1283 = vmatmul.mubr.bf16.gmra.mrb[0].mxu0 %v1072
      %v1284 = vpop.f32.mrb[0].mxu0
      %v1285 = vadd.f32 %v980, %v1284
      %v1286 = vpop.f32.mrb[0].mxu0
      %v1287 = vpop.f32.mrb[0].mxu0
      %v1288 = vadd.f32 %v983, %v1287
      %v1289 = vpop.f32.mrb[0].mxu0
      %1290 = vmatprep.mubr.bf16.mxu0 0
      %1291 = vmatmul.mubr.bf16.gmra.mrb[0].mxu0 %v1073
      %v1292 = vpop.f32.mrb[0].mxu0
      %v1293 = vadd.f32 %v988, %v1292
      %v1294 = vpop.f32.mrb[0].mxu0
      %v1295 = vpop.f32.mrb[0].mxu0
      %v1296 = vadd.f32 %v991, %v1295
      %v1297 = vpop.f32.mrb[0].mxu0
      %1298 = vdwg.mxu0
      %v1299 = vld [vmem:[%s246] sm:$0xe]
      %v1300 = vld [vmem:[%s246 + $0xc] sm:$0xe]
      %v1301 = vld [vmem:[%s246 + $0x18] sm:$0xe]
      %v1302 = vld [vmem:[%s246 + $0x24] sm:$0xe]
      %v1303 = vld [vmem:[%s246 + $0x30] sm:$0xe]
      %v1304 = vld [vmem:[%s246 + $0x3c] sm:$0xe]
      %v1305 = vld [vmem:[%s246 + $0x48] sm:$0xe]
      %v1306 = vld [vmem:[%s246 + $0x54] sm:$0xe]
      %v1307 = vld [vmem:[%s246 + $0x60] sm:$0xe]
      %v1308 = vld [vmem:[%s246 + $0x6c] sm:$0xe]
      %v1309 = vld [vmem:[%s246 + $0x78] sm:$0xe]
      %v1310 = vld [vmem:[%s246 + $0x84] sm:$0xe]
      %v1311 = vld [vmem:[%s246 + $0x90] sm:$0xe]
      %v1312 = vld [vmem:[%s246 + $0x9c] sm:$0xe]
      %v1313 = vld [vmem:[%s246 + $0xa8] sm:$0xe]
      %v1314 = vld [vmem:[%s246 + $0xb4] sm:$0xe]
      %vm1347 = vcmask 1042432
      %vm1348 = vcmask 1046532
      %vm1349 = vmor %vm1347, %vm1348
      %v1350 = vrot.slane %v1299, 5
      %v1351 = vrot.slane %v1350, 4
      %v1352 = vrot.slane %v254, 5
      %v1353 = vsel %vm1349, %v1351, %v1352
      %v1354 = vrot.slane %v1352, 4
      %v1355 = vrot.slane %v301, 5
      %v1356 = vsel %vm1349, %v1354, %v1355
      %v1357 = vrot.slane %v1300, 5
      %v1358 = vrot.slane %v1357, 4
      %v1359 = vrot.slane %v256, 5
      %v1360 = vsel %vm1349, %v1358, %v1359
      %v1361 = vrot.slane %v1359, 4
      %v1362 = vrot.slane %v302, 5
      %v1363 = vsel %vm1349, %v1361, %v1362
      %v1364 = vrot.slane %v1301, 5
      %v1365 = vrot.slane %v1364, 4
      %v1366 = vrot.slane %v258, 5
      %v1367 = vsel %vm1349, %v1365, %v1366
      %v1368 = vrot.slane %v1366, 4
      %v1369 = vrot.slane %v303, 5
      %v1370 = vsel %vm1349, %v1368, %v1369
      %v1371 = vrot.slane %v1302, 5
      %v1372 = vrot.slane %v1371, 4
      %v1373 = vrot.slane %v260, 5
      %v1374 = vsel %vm1349, %v1372, %v1373
      %v1375 = vrot.slane %v1373, 4
      %v1376 = vrot.slane %v304, 5
      %v1377 = vsel %vm1349, %v1375, %v1376
      %v1378 = vrot.slane %v1303, 5
      %v1379 = vrot.slane %v1378, 4
      %v1380 = vrot.slane %v262, 5
      %v1381 = vsel %vm1349, %v1379, %v1380
      %v1382 = vrot.slane %v1380, 4
      %v1383 = vrot.slane %v305, 5
      %v1384 = vsel %vm1349, %v1382, %v1383
      %v1385 = vrot.slane %v1304, 5
      %v1386 = vrot.slane %v1385, 4
      %v1387 = vrot.slane %v264, 5
      %v1388 = vsel %vm1349, %v1386, %v1387
      %v1389 = vrot.slane %v1387, 4
      %v1390 = vrot.slane %v306, 5
      %v1391 = vsel %vm1349, %v1389, %v1390
      %v1392 = vrot.slane %v1305, 5
      %v1393 = vrot.slane %v1392, 4
      %v1394 = vrot.slane %v266, 5
      %v1395 = vsel %vm1349, %v1393, %v1394
      %v1396 = vrot.slane %v1394, 4
      %v1397 = vrot.slane %v307, 5
      %v1398 = vsel %vm1349, %v1396, %v1397
      %v1399 = vrot.slane %v1306, 5
      %v1400 = vrot.slane %v1399, 4
      %v1401 = vrot.slane %v268, 5
      %v1402 = vsel %vm1349, %v1400, %v1401
      %v1403 = vrot.slane %v1401, 4
      %v1404 = vrot.slane %v308, 5
      %v1405 = vsel %vm1349, %v1403, %v1404
      %v1406 = vrot.slane %v1307, 5
      %v1407 = vrot.slane %v1406, 4
      %v1408 = vrot.slane %v270, 5
      %v1409 = vsel %vm1349, %v1407, %v1408
      %v1410 = vrot.slane %v1408, 4
      %v1411 = vrot.slane %v309, 5
      %v1412 = vsel %vm1349, %v1410, %v1411
      %v1413 = vrot.slane %v1308, 5
      %v1414 = vrot.slane %v1413, 4
      %v1415 = vrot.slane %v272, 5
      %v1416 = vsel %vm1349, %v1414, %v1415
      %v1417 = vrot.slane %v1415, 4
      %v1418 = vrot.slane %v310, 5
      %v1419 = vsel %vm1349, %v1417, %v1418
      %v1420 = vrot.slane %v1309, 5
      %v1421 = vrot.slane %v1420, 4
      %v1422 = vrot.slane %v274, 5
      %v1423 = vsel %vm1349, %v1421, %v1422
      %v1424 = vrot.slane %v1422, 4
      %v1425 = vrot.slane %v311, 5
      %v1426 = vsel %vm1349, %v1424, %v1425
      %v1427 = vrot.slane %v1310, 5
      %v1428 = vrot.slane %v1427, 4
      %v1429 = vrot.slane %v276, 5
      %v1430 = vsel %vm1349, %v1428, %v1429
      %v1431 = vrot.slane %v1429, 4
      %v1432 = vrot.slane %v312, 5
      %v1433 = vsel %vm1349, %v1431, %v1432
      %v1434 = vrot.slane %v1311, 5
      %v1435 = vrot.slane %v1434, 4
      %v1436 = vrot.slane %v278, 5
      %v1437 = vsel %vm1349, %v1435, %v1436
      %v1438 = vrot.slane %v1436, 4
      %v1439 = vrot.slane %v313, 5
      %v1440 = vsel %vm1349, %v1438, %v1439
      %v1441 = vrot.slane %v1312, 5
      %v1442 = vrot.slane %v1441, 4
      %v1443 = vrot.slane %v280, 5
      %v1444 = vsel %vm1349, %v1442, %v1443
      %v1445 = vrot.slane %v1443, 4
      %v1446 = vrot.slane %v314, 5
      %v1447 = vsel %vm1349, %v1445, %v1446
      %v1448 = vrot.slane %v1313, 5
      %v1449 = vrot.slane %v1448, 4
      %v1450 = vrot.slane %v282, 5
      %v1451 = vsel %vm1349, %v1449, %v1450
      %v1452 = vrot.slane %v1450, 4
      %v1453 = vrot.slane %v315, 5
      %v1454 = vsel %vm1349, %v1452, %v1453
      %v1455 = vrot.slane %v1314, 5
      %v1456 = vrot.slane %v1455, 4
      %v1457 = vrot.slane %v284, 5
      %v1458 = vsel %vm1349, %v1456, %v1457
      %v1459 = vrot.slane %v1457, 4
      %v1460 = vrot.slane %v316, 5
      %v1461 = vsel %vm1349, %v1459, %v1460
      %s1462 = scalar_lea.vmem %s1, 128
      %v1463 = vld [vmem:[%s1462] sm:$0xf]
      %v1464 = vld [vmem:[%s1462 + $0x4] sm:$0xf]
      %v1465 = vld [vmem:[%s1462 + $0x8] sm:$0xf]
      %v1466 = vld [vmem:[%s1462 + $0xc] sm:$0xf]
      %v1467 = vld [vmem:[%s1462 + $0x10] sm:$0xf]
      %v1468 = vld [vmem:[%s1462 + $0x14] sm:$0xf]
      %v1469 = vld [vmem:[%s1462 + $0x18] sm:$0xf]
      %v1470 = vld [vmem:[%s1462 + $0x1c] sm:$0xf]
      %v1471 = vld [vmem:[%s1462 + $0x20] sm:$0xf]
      %v1472 = vld [vmem:[%s1462 + $0x24] sm:$0xf]
      %v1473 = vld [vmem:[%s1462 + $0x28] sm:$0xf]
      %v1474 = vld [vmem:[%s1462 + $0x2c] sm:$0xf]
      %v1475 = vld [vmem:[%s1462 + $0x30] sm:$0xf]
      %v1476 = vld [vmem:[%s1462 + $0x34] sm:$0xf]
      %v1477 = vld [vmem:[%s1462 + $0x38] sm:$0xf]
      %v1478 = vld [vmem:[%s1462 + $0x3c] sm:$0xf]
      %v1479 = vunpack.c.l.b16 %v1353
      %v1480 = vunpack.c.l.b16 %v1356
      %v1481 = vunpack.c.l.b16 %v1360
      %v1482 = vunpack.c.l.b16 %v1363
      %v1483 = vunpack.c.l.b16 %v1367
      %v1484 = vunpack.c.l.b16 %v1370
      %v1485 = vunpack.c.l.b16 %v1374
      %v1486 = vunpack.c.l.b16 %v1377
      %v1487 = vunpack.c.l.b16 %v1381
      %v1488 = vunpack.c.l.b16 %v1384
      %v1489 = vunpack.c.l.b16 %v1388
      %v1490 = vunpack.c.l.b16 %v1391
      %v1491 = vunpack.c.l.b16 %v1395
      %v1492 = vunpack.c.l.b16 %v1398
      %v1493 = vunpack.c.l.b16 %v1402
      %v1494 = vunpack.c.l.b16 %v1405
      %v1495 = vunpack.c.l.b16 %v1409
      %v1496 = vunpack.c.l.b16 %v1412
      %v1497 = vunpack.c.l.b16 %v1416
      %v1498 = vunpack.c.l.b16 %v1419
      %v1499 = vunpack.c.l.b16 %v1423
      %v1500 = vunpack.c.l.b16 %v1426
      %v1501 = vunpack.c.l.b16 %v1430
      %v1502 = vunpack.c.l.b16 %v1433
      %v1503 = vunpack.c.l.b16 %v1437
      %v1504 = vunpack.c.l.b16 %v1440
      %v1505 = vunpack.c.l.b16 %v1444
      %v1506 = vunpack.c.l.b16 %v1447
      %v1507 = vunpack.c.l.b16 %v1451
      %v1508 = vunpack.c.l.b16 %v1454
      %v1509 = vunpack.c.l.b16 %v1458
      %v1510 = vunpack.c.l.b16 %v1461
      %v1511 = vpack.c.b16 %v1480, %v1479
      %v1512 = vpack.c.b16 %v1482, %v1481
      %v1513 = vpack.c.b16 %v1484, %v1483
      %v1514 = vpack.c.b16 %v1486, %v1485
      %v1515 = vpack.c.b16 %v1488, %v1487
      %v1516 = vpack.c.b16 %v1490, %v1489
      %v1517 = vpack.c.b16 %v1492, %v1491
      %v1518 = vpack.c.b16 %v1494, %v1493
      %v1519 = vpack.c.b16 %v1496, %v1495
      %v1520 = vpack.c.b16 %v1498, %v1497
      %v1521 = vpack.c.b16 %v1500, %v1499
      %v1522 = vpack.c.b16 %v1502, %v1501
      %v1523 = vpack.c.b16 %v1504, %v1503
      %v1524 = vpack.c.b16 %v1506, %v1505
      %v1525 = vpack.c.b16 %v1508, %v1507
      %v1526 = vpack.c.b16 %v1510, %v1509
      %v1559 = vunpack.c.l.b16 %v1463
      %v1560 = vunpack.c.l.b16 %v1464
      %v1561 = vunpack.c.l.b16 %v1465
      %v1562 = vunpack.c.l.b16 %v1466
      %v1563 = vunpack.c.l.b16 %v1467
      %v1564 = vunpack.c.l.b16 %v1468
      %v1565 = vunpack.c.l.b16 %v1469
      %v1566 = vunpack.c.l.b16 %v1470
      %v1567 = vunpack.c.l.b16 %v1471
      %v1568 = vunpack.c.l.b16 %v1472
      %v1569 = vunpack.c.l.b16 %v1473
      %v1570 = vunpack.c.l.b16 %v1474
      %v1571 = vunpack.c.l.b16 %v1475
      %v1572 = vunpack.c.l.b16 %v1476
      %v1573 = vunpack.c.l.b16 %v1477
      %v1574 = vunpack.c.l.b16 %v1478
      %v1575 = vpack.c.b16 %v1560, %v1559
      %v1576 = vpack.c.b16 %v1562, %v1561
      %v1577 = vpack.c.b16 %v1564, %v1563
      %v1578 = vpack.c.b16 %v1566, %v1565
      %v1579 = vpack.c.b16 %v1568, %v1567
      %v1580 = vpack.c.b16 %v1570, %v1569
      %v1581 = vpack.c.b16 %v1572, %v1571
      %v1582 = vpack.c.b16 %v1574, %v1573
      %1591 = vmatprep.subr.bf16.mxu0 0
      %1592 = vmatpush1.bf16.msra.mxu0 %v1575
      %1593 = vmatprep.subr.bf16.mxu0 0
      %1594 = vmatpush1.bf16.msra.mxu0 %v1576
      %1595 = vmatprep.subr.bf16.mxu0 0
      %1596 = vmatpush1.bf16.msra.mxu0 %v1577
      %1597 = vmatprep.subr.bf16.mxu0 0
      %1598 = vmatpush1.bf16.msra.mxu0 %v1578
      %1599 = vmatprep.subr.bf16.mxu0 0
      %1600 = vmatpush1.bf16.msra.mxu0 %v1579
      %1601 = vmatprep.subr.bf16.mxu0 0
      %1602 = vmatpush1.bf16.msra.mxu0 %v1580
      %1603 = vmatprep.subr.bf16.mxu0 0
      %1604 = vmatpush1.bf16.msra.mxu0 %v1581
      %1605 = vmatprep.subr.bf16.mxu0 0
      %1606 = vmatpush1.bf16.msra.mxu0 %v1582
      %1607 = vmatprep.subr.bf16.mxu0 0
      %1608 = vmatpush1.bf16.msra.mxu0 0
      %1609 = vmatprep.subr.bf16.mxu0 0
      %1610 = vmatpush1.bf16.msra.mxu0 0
      %1611 = vmatprep.subr.bf16.mxu0 0
      %1612 = vmatpush1.bf16.msra.mxu0 0
      %1613 = vmatprep.subr.bf16.mxu0 0
      %1614 = vmatpush1.bf16.msra.mxu0 0
      %1615 = vmatprep.subr.bf16.mxu0 0
      %1616 = vmatpush1.bf16.msra.mxu0 0
      %1617 = vmatprep.subr.bf16.mxu0 0
      %1618 = vmatpush1.bf16.msra.mxu0 0
      %1619 = vmatprep.subr.bf16.mxu0 0
      %1620 = vmatpush1.bf16.msra.mxu0 0
      %1621 = vmatprep.subr.bf16.mxu0 0
      %1622 = vmatpush1.bf16.msra.mxu0 0
      %1623 = vmatprep.mubr.bf16.mxu0 0
      %1624 = vmatmul.mubr.bf16.gmra.mrb[0].mxu0 %v1511
      %v1625 = vpop.f32.mrb[0].mxu0
      %v1626 = vadd.f32 0.0, %v1625
      %v1627 = vpop.f32.mrb[0].mxu0
      %v1628 = vpop.f32.mrb[0].mxu0
      %v1629 = vadd.f32 0.0, %v1628
      %v1630 = vpop.f32.mrb[0].mxu0
      %1631 = vmatprep.mubr.bf16.mxu0 0
      %1632 = vmatmul.mubr.bf16.gmra.mrb[0].mxu0 %v1512
      %v1633 = vpop.f32.mrb[0].mxu0
      %v1634 = vadd.f32 0.0, %v1633
      %v1635 = vpop.f32.mrb[0].mxu0
      %v1636 = vpop.f32.mrb[0].mxu0
      %v1637 = vadd.f32 0.0, %v1636
      %v1638 = vpop.f32.mrb[0].mxu0
      %1639 = vmatprep.mubr.bf16.mxu0 0
      %1640 = vmatmul.mubr.bf16.gmra.mrb[0].mxu0 %v1513
      %v1641 = vpop.f32.mrb[0].mxu0
      %v1642 = vadd.f32 0.0, %v1641
      %v1643 = vpop.f32.mrb[0].mxu0
      %v1644 = vpop.f32.mrb[0].mxu0
      %v1645 = vadd.f32 0.0, %v1644
      %v1646 = vpop.f32.mrb[0].mxu0
      %1647 = vmatprep.mubr.bf16.mxu0 0
      %1648 = vmatmul.mubr.bf16.gmra.mrb[0].mxu0 %v1514
      %v1649 = vpop.f32.mrb[0].mxu0
      %v1650 = vadd.f32 0.0, %v1649
      %v1651 = vpop.f32.mrb[0].mxu0
      %v1652 = vpop.f32.mrb[0].mxu0
      %v1653 = vadd.f32 0.0, %v1652
      %v1654 = vpop.f32.mrb[0].mxu0
      %1655 = vmatprep.mubr.bf16.mxu0 0
      %1656 = vmatmul.mubr.bf16.gmra.mrb[0].mxu0 %v1515
      %v1657 = vpop.f32.mrb[0].mxu0
      %v1658 = vadd.f32 0.0, %v1657
      %v1659 = vpop.f32.mrb[0].mxu0
      %v1660 = vpop.f32.mrb[0].mxu0
      %v1661 = vadd.f32 0.0, %v1660
      %v1662 = vpop.f32.mrb[0].mxu0
      %1663 = vmatprep.mubr.bf16.mxu0 0
      %1664 = vmatmul.mubr.bf16.gmra.mrb[0].mxu0 %v1516
      %v1665 = vpop.f32.mrb[0].mxu0
      %v1666 = vadd.f32 0.0, %v1665
      %v1667 = vpop.f32.mrb[0].mxu0
      %v1668 = vpop.f32.mrb[0].mxu0
      %v1669 = vadd.f32 0.0, %v1668
      %v1670 = vpop.f32.mrb[0].mxu0
      %1671 = vmatprep.mubr.bf16.mxu0 0
      %1672 = vmatmul.mubr.bf16.gmra.mrb[0].mxu0 %v1517
      %v1673 = vpop.f32.mrb[0].mxu0
      %v1674 = vadd.f32 0.0, %v1673
      %v1675 = vpop.f32.mrb[0].mxu0
      %v1676 = vpop.f32.mrb[0].mxu0
      %v1677 = vadd.f32 0.0, %v1676
      %v1678 = vpop.f32.mrb[0].mxu0
      %1679 = vmatprep.mubr.bf16.mxu0 0
      %1680 = vmatmul.mubr.bf16.gmra.mrb[0].mxu0 %v1518
      %v1681 = vpop.f32.mrb[0].mxu0
      %v1682 = vadd.f32 0.0, %v1681
      %v1683 = vpop.f32.mrb[0].mxu0
      %v1684 = vpop.f32.mrb[0].mxu0
      %v1685 = vadd.f32 0.0, %v1684
      %v1686 = vpop.f32.mrb[0].mxu0
      %1687 = vmatprep.mubr.bf16.mxu0 0
      %1688 = vmatmul.mubr.bf16.gmra.mrb[0].mxu0 %v1519
      %v1689 = vpop.f32.mrb[0].mxu0
      %v1690 = vadd.f32 0.0, %v1689
      %v1691 = vpop.f32.mrb[0].mxu0
      %v1692 = vpop.f32.mrb[0].mxu0
      %v1693 = vadd.f32 0.0, %v1692
      %v1694 = vpop.f32.mrb[0].mxu0
      %1695 = vmatprep.mubr.bf16.mxu0 0
      %1696 = vmatmul.mubr.bf16.gmra.mrb[0].mxu0 %v1520
      %v1697 = vpop.f32.mrb[0].mxu0
      %v1698 = vadd.f32 0.0, %v1697
      %v1699 = vpop.f32.mrb[0].mxu0
      %v1700 = vpop.f32.mrb[0].mxu0
      %v1701 = vadd.f32 0.0, %v1700
      %v1702 = vpop.f32.mrb[0].mxu0
      %1703 = vmatprep.mubr.bf16.mxu0 0
      %1704 = vmatmul.mubr.bf16.gmra.mrb[0].mxu0 %v1521
      %v1705 = vpop.f32.mrb[0].mxu0
      %v1706 = vadd.f32 0.0, %v1705
      %v1707 = vpop.f32.mrb[0].mxu0
      %v1708 = vpop.f32.mrb[0].mxu0
      %v1709 = vadd.f32 0.0, %v1708
      %v1710 = vpop.f32.mrb[0].mxu0
      %1711 = vmatprep.mubr.bf16.mxu0 0
      %1712 = vmatmul.mubr.bf16.gmra.mrb[0].mxu0 %v1522
      %v1713 = vpop.f32.mrb[0].mxu0
      %v1714 = vadd.f32 0.0, %v1713
      %v1715 = vpop.f32.mrb[0].mxu0
      %v1716 = vpop.f32.mrb[0].mxu0
      %v1717 = vadd.f32 0.0, %v1716
      %v1718 = vpop.f32.mrb[0].mxu0
      %1719 = vmatprep.mubr.bf16.mxu0 0
      %1720 = vmatmul.mubr.bf16.gmra.mrb[0].mxu0 %v1523
      %v1721 = vpop.f32.mrb[0].mxu0
      %v1722 = vadd.f32 0.0, %v1721
      %v1723 = vpop.f32.mrb[0].mxu0
      %v1724 = vpop.f32.mrb[0].mxu0
      %v1725 = vadd.f32 0.0, %v1724
      %v1726 = vpop.f32.mrb[0].mxu0
      %1727 = vmatprep.mubr.bf16.mxu0 0
      %1728 = vmatmul.mubr.bf16.gmra.mrb[0].mxu0 %v1524
      %v1729 = vpop.f32.mrb[0].mxu0
      %v1730 = vadd.f32 0.0, %v1729
      %v1731 = vpop.f32.mrb[0].mxu0
      %v1732 = vpop.f32.mrb[0].mxu0
      %v1733 = vadd.f32 0.0, %v1732
      %v1734 = vpop.f32.mrb[0].mxu0
      %1735 = vmatprep.mubr.bf16.mxu0 0
      %1736 = vmatmul.mubr.bf16.gmra.mrb[0].mxu0 %v1525
      %v1737 = vpop.f32.mrb[0].mxu0
      %v1738 = vadd.f32 0.0, %v1737
      %v1739 = vpop.f32.mrb[0].mxu0
      %v1740 = vpop.f32.mrb[0].mxu0
      %v1741 = vadd.f32 0.0, %v1740
      %v1742 = vpop.f32.mrb[0].mxu0
      %1743 = vmatprep.mubr.bf16.mxu0 0
      %1744 = vmatmul.mubr.bf16.gmra.mrb[0].mxu0 %v1526
      %v1745 = vpop.f32.mrb[0].mxu0
      %v1746 = vadd.f32 0.0, %v1745
      %v1747 = vpop.f32.mrb[0].mxu0
      %v1748 = vpop.f32.mrb[0].mxu0
      %v1749 = vadd.f32 0.0, %v1748
      %v1750 = vpop.f32.mrb[0].mxu0
      %1751 = vdwg.mxu0
      %v1752 = vadd.f32 %v1173, %v1626
      %v1753 = vadd.f32 %v1176, %v1629
      %v1754 = vadd.f32 %v1181, %v1634
      %v1755 = vadd.f32 %v1184, %v1637
      %v1756 = vadd.f32 %v1189, %v1642
      %v1757 = vadd.f32 %v1192, %v1645
      %v1758 = vadd.f32 %v1197, %v1650
      %v1759 = vadd.f32 %v1200, %v1653
      %v1760 = vadd.f32 %v1205, %v1658
      %v1761 = vadd.f32 %v1208, %v1661
      %v1762 = vadd.f32 %v1213, %v1666
      %v1763 = vadd.f32 %v1216, %v1669
      %v1764 = vadd.f32 %v1221, %v1674
      %v1765 = vadd.f32 %v1224, %v1677
      %v1766 = vadd.f32 %v1229, %v1682
      %v1767 = vadd.f32 %v1232, %v1685
      %v1768 = vadd.f32 %v1237, %v1690
      %v1769 = vadd.f32 %v1240, %v1693
      %v1770 = vadd.f32 %v1245, %v1698
      %v1771 = vadd.f32 %v1248, %v1701
      %v1772 = vadd.f32 %v1253, %v1706
      %v1773 = vadd.f32 %v1256, %v1709
      %v1774 = vadd.f32 %v1261, %v1714
      %v1775 = vadd.f32 %v1264, %v1717
      %v1776 = vadd.f32 %v1269, %v1722
      %v1777 = vadd.f32 %v1272, %v1725
      %v1778 = vadd.f32 %v1277, %v1730
      %v1779 = vadd.f32 %v1280, %v1733
      %v1780 = vadd.f32 %v1285, %v1738
      %v1781 = vadd.f32 %v1288, %v1741
      %v1782 = vadd.f32 %v1293, %v1746
      %v1783 = vadd.f32 %v1296, %v1749
      %s1784 = scalar_lea.vmem %s246, 12
      %v1785 = vld [vmem:[%s1784] sm:$0xf]
      %v1786 = vld [vmem:[%s1784 + $0x4] sm:$0xf]
      %v1787 = vld [vmem:[%s1784 + $0xc] sm:$0xf]
      %v1788 = vld [vmem:[%s1784 + $0x10] sm:$0xf]
      %v1789 = vld [vmem:[%s1784 + $0x18] sm:$0xf]
      %v1790 = vld [vmem:[%s1784 + $0x1c] sm:$0xf]
      %v1791 = vld [vmem:[%s1784 + $0x24] sm:$0xf]
      %v1792 = vld [vmem:[%s1784 + $0x28] sm:$0xf]
      %v1793 = vld [vmem:[%s1784 + $0x30] sm:$0xf]
      %v1794 = vld [vmem:[%s1784 + $0x34] sm:$0xf]
      %v1795 = vld [vmem:[%s1784 + $0x3c] sm:$0xf]
      %v1796 = vld [vmem:[%s1784 + $0x40] sm:$0xf]
      %v1797 = vld [vmem:[%s1784 + $0x48] sm:$0xf]
      %v1798 = vld [vmem:[%s1784 + $0x4c] sm:$0xf]
      %v1799 = vld [vmem:[%s1784 + $0x54] sm:$0xf]
      %v1800 = vld [vmem:[%s1784 + $0x58] sm:$0xf]
      %v1801 = vld [vmem:[%s1784 + $0x60] sm:$0xf]
      %v1802 = vld [vmem:[%s1784 + $0x64] sm:$0xf]
      %v1803 = vld [vmem:[%s1784 + $0x6c] sm:$0xf]
      %v1804 = vld [vmem:[%s1784 + $0x70] sm:$0xf]
      %v1805 = vld [vmem:[%s1784 + $0x78] sm:$0xf]
      %v1806 = vld [vmem:[%s1784 + $0x7c] sm:$0xf]
      %v1807 = vld [vmem:[%s1784 + $0x84] sm:$0xf]
      %v1808 = vld [vmem:[%s1784 + $0x88] sm:$0xf]
      %v1809 = vld [vmem:[%s1784 + $0x90] sm:$0xf]
      %v1810 = vld [vmem:[%s1784 + $0x94] sm:$0xf]
      %v1811 = vld [vmem:[%s1784 + $0x9c] sm:$0xf]
      %v1812 = vld [vmem:[%s1784 + $0xa0] sm:$0xf]
      %v1813 = vld [vmem:[%s1784 + $0xa8] sm:$0xf]
      %v1814 = vld [vmem:[%s1784 + $0xac] sm:$0xf]
      %v1815 = vld [vmem:[%s1784 + $0xb4] sm:$0xf]
      %v1816 = vld [vmem:[%s1784 + $0xb8] sm:$0xf]
      %s1817 = scalar_lea.vmem %s1, 192
      %v1818 = vld [vmem:[%s1817] sm:$0xf]
      %v1819 = vld [vmem:[%s1817 + $0x4] sm:$0xf]
      %v1820 = vld [vmem:[%s1817 + $0x8] sm:$0xf]
      %v1821 = vld [vmem:[%s1817 + $0xc] sm:$0xf]
      %v1822 = vld [vmem:[%s1817 + $0x10] sm:$0xf]
      %v1823 = vld [vmem:[%s1817 + $0x14] sm:$0xf]
      %v1824 = vld [vmem:[%s1817 + $0x18] sm:$0xf]
      %v1825 = vld [vmem:[%s1817 + $0x1c] sm:$0xf]
      %v1826 = vld [vmem:[%s1817 + $0x20] sm:$0xf]
      %v1827 = vld [vmem:[%s1817 + $0x24] sm:$0xf]
      %v1828 = vld [vmem:[%s1817 + $0x28] sm:$0xf]
      %v1829 = vld [vmem:[%s1817 + $0x2c] sm:$0xf]
      %v1830 = vld [vmem:[%s1817 + $0x30] sm:$0xf]
      %v1831 = vld [vmem:[%s1817 + $0x34] sm:$0xf]
      %v1832 = vld [vmem:[%s1817 + $0x38] sm:$0xf]
      %v1833 = vld [vmem:[%s1817 + $0x3c] sm:$0xf]
      %v1866 = vunpack.c.l.b16 %v1785
      %v1867 = vunpack.c.l.b16 %v1786
      %v1868 = vunpack.c.l.b16 %v1787
      %v1869 = vunpack.c.l.b16 %v1788
      %v1870 = vunpack.c.l.b16 %v1789
      %v1871 = vunpack.c.l.b16 %v1790
      %v1872 = vunpack.c.l.b16 %v1791
      %v1873 = vunpack.c.l.b16 %v1792
      %v1874 = vunpack.c.l.b16 %v1793
      %v1875 = vunpack.c.l.b16 %v1794
      %v1876 = vunpack.c.l.b16 %v1795
      %v1877 = vunpack.c.l.b16 %v1796
      %v1878 = vunpack.c.l.b16 %v1797
      %v1879 = vunpack.c.l.b16 %v1798
      %v1880 = vunpack.c.l.b16 %v1799
      %v1881 = vunpack.c.l.b16 %v1800
      %v1882 = vunpack.c.l.b16 %v1801
      %v1883 = vunpack.c.l.b16 %v1802
      %v1884 = vunpack.c.l.b16 %v1803
      %v1885 = vunpack.c.l.b16 %v1804
      %v1886 = vunpack.c.l.b16 %v1805
      %v1887 = vunpack.c.l.b16 %v1806
      %v1888 = vunpack.c.l.b16 %v1807
      %v1889 = vunpack.c.l.b16 %v1808
      %v1890 = vunpack.c.l.b16 %v1809
      %v1891 = vunpack.c.l.b16 %v1810
      %v1892 = vunpack.c.l.b16 %v1811
      %v1893 = vunpack.c.l.b16 %v1812
      %v1894 = vunpack.c.l.b16 %v1813
      %v1895 = vunpack.c.l.b16 %v1814
      %v1896 = vunpack.c.l.b16 %v1815
      %v1897 = vunpack.c.l.b16 %v1816
      %v1898 = vpack.c.b16 %v1867, %v1866
      %v1899 = vpack.c.b16 %v1869, %v1868
      %v1900 = vpack.c.b16 %v1871, %v1870
      %v1901 = vpack.c.b16 %v1873, %v1872
      %v1902 = vpack.c.b16 %v1875, %v1874
      %v1903 = vpack.c.b16 %v1877, %v1876
      %v1904 = vpack.c.b16 %v1879, %v1878
      %v1905 = vpack.c.b16 %v1881, %v1880
      %v1906 = vpack.c.b16 %v1883, %v1882
      %v1907 = vpack.c.b16 %v1885, %v1884
      %v1908 = vpack.c.b16 %v1887, %v1886
      %v1909 = vpack.c.b16 %v1889, %v1888
      %v1910 = vpack.c.b16 %v1891, %v1890
      %v1911 = vpack.c.b16 %v1893, %v1892
      %v1912 = vpack.c.b16 %v1895, %v1894
      %v1913 = vpack.c.b16 %v1897, %v1896
      %v1946 = vunpack.c.l.b16 %v1818
      %v1947 = vunpack.c.l.b16 %v1819
      %v1948 = vunpack.c.l.b16 %v1820
      %v1949 = vunpack.c.l.b16 %v1821
      %v1950 = vunpack.c.l.b16 %v1822
      %v1951 = vunpack.c.l.b16 %v1823
      %v1952 = vunpack.c.l.b16 %v1824
      %v1953 = vunpack.c.l.b16 %v1825
      %v1954 = vunpack.c.l.b16 %v1826
      %v1955 = vunpack.c.l.b16 %v1827
      %v1956 = vunpack.c.l.b16 %v1828
      %v1957 = vunpack.c.l.b16 %v1829
      %v1958 = vunpack.c.l.b16 %v1830
      %v1959 = vunpack.c.l.b16 %v1831
      %v1960 = vunpack.c.l.b16 %v1832
      %v1961 = vunpack.c.l.b16 %v1833
      %v1962 = vpack.c.b16 %v1947, %v1946
      %v1963 = vpack.c.b16 %v1949, %v1948
      %v1964 = vpack.c.b16 %v1951, %v1950
      %v1965 = vpack.c.b16 %v1953, %v1952
      %v1966 = vpack.c.b16 %v1955, %v1954
      %v1967 = vpack.c.b16 %v1957, %v1956
      %v1968 = vpack.c.b16 %v1959, %v1958
      %v1969 = vpack.c.b16 %v1961, %v1960
      %1978 = vmatprep.subr.bf16.mxu0 0
      %1979 = vmatpush1.bf16.msra.mxu0 %v1962
      %1980 = vmatprep.subr.bf16.mxu0 0
      %1981 = vmatpush1.bf16.msra.mxu0 %v1963
      %1982 = vmatprep.subr.bf16.mxu0 0
      %1983 = vmatpush1.bf16.msra.mxu0 %v1964
      %1984 = vmatprep.subr.bf16.mxu0 0
      %1985 = vmatpush1.bf16.msra.mxu0 %v1965
      %1986 = vmatprep.subr.bf16.mxu0 0
      %1987 = vmatpush1.bf16.msra.mxu0 %v1966
      %1988 = vmatprep.subr.bf16.mxu0 0
      %1989 = vmatpush1.bf16.msra.mxu0 %v1967
      %1990 = vmatprep.subr.bf16.mxu0 0
      %1991 = vmatpush1.bf16.msra.mxu0 %v1968
      %1992 = vmatprep.subr.bf16.mxu0 0
      %1993 = vmatpush1.bf16.msra.mxu0 %v1969
      %1994 = vmatprep.subr.bf16.mxu0 0
      %1995 = vmatpush1.bf16.msra.mxu0 0
      %1996 = vmatprep.subr.bf16.mxu0 0
      %1997 = vmatpush1.bf16.msra.mxu0 0
      %1998 = vmatprep.subr.bf16.mxu0 0
      %1999 = vmatpush1.bf16.msra.mxu0 0
      %2000 = vmatprep.subr.bf16.mxu0 0
      %2001 = vmatpush1.bf16.msra.mxu0 0
      %2002 = vmatprep.subr.bf16.mxu0 0
      %2003 = vmatpush1.bf16.msra.mxu0 0
      %2004 = vmatprep.subr.bf16.mxu0 0
      %2005 = vmatpush1.bf16.msra.mxu0 0
      %2006 = vmatprep.subr.bf16.mxu0 0
      %2007 = vmatpush1.bf16.msra.mxu0 0
      %2008 = vmatprep.subr.bf16.mxu0 0
      %2009 = vmatpush1.bf16.msra.mxu0 0
      %2010 = vmatprep.mubr.bf16.mxu0 0
      %2011 = vmatmul.mubr.bf16.gmra.mrb[0].mxu0 %v1898
      %v2012 = vpop.f32.mrb[0].mxu0
      %v2013 = vadd.f32 0.0, %v2012
      %v2014 = vpop.f32.mrb[0].mxu0
      %v2015 = vpop.f32.mrb[0].mxu0
      %v2016 = vadd.f32 0.0, %v2015
      %v2017 = vpop.f32.mrb[0].mxu0
      %2018 = vmatprep.mubr.bf16.mxu0 0
      %2019 = vmatmul.mubr.bf16.gmra.mrb[0].mxu0 %v1899
      %v2020 = vpop.f32.mrb[0].mxu0
      %v2021 = vadd.f32 0.0, %v2020
      %v2022 = vpop.f32.mrb[0].mxu0
      %v2023 = vpop.f32.mrb[0].mxu0
      %v2024 = vadd.f32 0.0, %v2023
      %v2025 = vpop.f32.mrb[0].mxu0
      %2026 = vmatprep.mubr.bf16.mxu0 0
      %2027 = vmatmul.mubr.bf16.gmra.mrb[0].mxu0 %v1900
      %v2028 = vpop.f32.mrb[0].mxu0
      %v2029 = vadd.f32 0.0, %v2028
      %v2030 = vpop.f32.mrb[0].mxu0
      %v2031 = vpop.f32.mrb[0].mxu0
      %v2032 = vadd.f32 0.0, %v2031
      %v2033 = vpop.f32.mrb[0].mxu0
      %2034 = vmatprep.mubr.bf16.mxu0 0
      %2035 = vmatmul.mubr.bf16.gmra.mrb[0].mxu0 %v1901
      %v2036 = vpop.f32.mrb[0].mxu0
      %v2037 = vadd.f32 0.0, %v2036
      %v2038 = vpop.f32.mrb[0].mxu0
      %v2039 = vpop.f32.mrb[0].mxu0
      %v2040 = vadd.f32 0.0, %v2039
      %v2041 = vpop.f32.mrb[0].mxu0
      %2042 = vmatprep.mubr.bf16.mxu0 0
      %2043 = vmatmul.mubr.bf16.gmra.mrb[0].mxu0 %v1902
      %v2044 = vpop.f32.mrb[0].mxu0
      %v2045 = vadd.f32 0.0, %v2044
      %v2046 = vpop.f32.mrb[0].mxu0
      %v2047 = vpop.f32.mrb[0].mxu0
      %v2048 = vadd.f32 0.0, %v2047
      %v2049 = vpop.f32.mrb[0].mxu0
      %2050 = vmatprep.mubr.bf16.mxu0 0
      %2051 = vmatmul.mubr.bf16.gmra.mrb[0].mxu0 %v1903
      %v2052 = vpop.f32.mrb[0].mxu0
      %v2053 = vadd.f32 0.0, %v2052
      %v2054 = vpop.f32.mrb[0].mxu0
      %v2055 = vpop.f32.mrb[0].mxu0
      %v2056 = vadd.f32 0.0, %v2055
      %v2057 = vpop.f32.mrb[0].mxu0
      %2058 = vmatprep.mubr.bf16.mxu0 0
      %2059 = vmatmul.mubr.bf16.gmra.mrb[0].mxu0 %v1904
      %v2060 = vpop.f32.mrb[0].mxu0
      %v2061 = vadd.f32 0.0, %v2060
      %v2062 = vpop.f32.mrb[0].mxu0
      %v2063 = vpop.f32.mrb[0].mxu0
      %v2064 = vadd.f32 0.0, %v2063
      %v2065 = vpop.f32.mrb[0].mxu0
      %2066 = vmatprep.mubr.bf16.mxu0 0
      %2067 = vmatmul.mubr.bf16.gmra.mrb[0].mxu0 %v1905
      %v2068 = vpop.f32.mrb[0].mxu0
      %v2069 = vadd.f32 0.0, %v2068
      %v2070 = vpop.f32.mrb[0].mxu0
      %v2071 = vpop.f32.mrb[0].mxu0
      %v2072 = vadd.f32 0.0, %v2071
      %v2073 = vpop.f32.mrb[0].mxu0
      %2074 = vmatprep.mubr.bf16.mxu0 0
      %2075 = vmatmul.mubr.bf16.gmra.mrb[0].mxu0 %v1906
      %v2076 = vpop.f32.mrb[0].mxu0
      %v2077 = vadd.f32 0.0, %v2076
      %v2078 = vpop.f32.mrb[0].mxu0
      %v2079 = vpop.f32.mrb[0].mxu0
      %v2080 = vadd.f32 0.0, %v2079
      %v2081 = vpop.f32.mrb[0].mxu0
      %2082 = vmatprep.mubr.bf16.mxu0 0
      %2083 = vmatmul.mubr.bf16.gmra.mrb[0].mxu0 %v1907
      %v2084 = vpop.f32.mrb[0].mxu0
      %v2085 = vadd.f32 0.0, %v2084
      %v2086 = vpop.f32.mrb[0].mxu0
      %v2087 = vpop.f32.mrb[0].mxu0
      %v2088 = vadd.f32 0.0, %v2087
      %v2089 = vpop.f32.mrb[0].mxu0
      %2090 = vmatprep.mubr.bf16.mxu0 0
      %2091 = vmatmul.mubr.bf16.gmra.mrb[0].mxu0 %v1908
      %v2092 = vpop.f32.mrb[0].mxu0
      %v2093 = vadd.f32 0.0, %v2092
      %v2094 = vpop.f32.mrb[0].mxu0
      %v2095 = vpop.f32.mrb[0].mxu0
      %v2096 = vadd.f32 0.0, %v2095
      %v2097 = vpop.f32.mrb[0].mxu0
      %2098 = vmatprep.mubr.bf16.mxu0 0
      %2099 = vmatmul.mubr.bf16.gmra.mrb[0].mxu0 %v1909
      %v2100 = vpop.f32.mrb[0].mxu0
      %v2101 = vadd.f32 0.0, %v2100
      %v2102 = vpop.f32.mrb[0].mxu0
      %v2103 = vpop.f32.mrb[0].mxu0
      %v2104 = vadd.f32 0.0, %v2103
      %v2105 = vpop.f32.mrb[0].mxu0
      %2106 = vmatprep.mubr.bf16.mxu0 0
      %2107 = vmatmul.mubr.bf16.gmra.mrb[0].mxu0 %v1910
      %v2108 = vpop.f32.mrb[0].mxu0
      %v2109 = vadd.f32 0.0, %v2108
      %v2110 = vpop.f32.mrb[0].mxu0
      %v2111 = vpop.f32.mrb[0].mxu0
      %v2112 = vadd.f32 0.0, %v2111
      %v2113 = vpop.f32.mrb[0].mxu0
      %2114 = vmatprep.mubr.bf16.mxu0 0
      %2115 = vmatmul.mubr.bf16.gmra.mrb[0].mxu0 %v1911
      %v2116 = vpop.f32.mrb[0].mxu0
      %v2117 = vadd.f32 0.0, %v2116
      %v2118 = vpop.f32.mrb[0].mxu0
      %v2119 = vpop.f32.mrb[0].mxu0
      %v2120 = vadd.f32 0.0, %v2119
      %v2121 = vpop.f32.mrb[0].mxu0
      %2122 = vmatprep.mubr.bf16.mxu0 0
      %2123 = vmatmul.mubr.bf16.gmra.mrb[0].mxu0 %v1912
      %v2124 = vpop.f32.mrb[0].mxu0
      %v2125 = vadd.f32 0.0, %v2124
      %v2126 = vpop.f32.mrb[0].mxu0
      %v2127 = vpop.f32.mrb[0].mxu0
      %v2128 = vadd.f32 0.0, %v2127
      %v2129 = vpop.f32.mrb[0].mxu0
      %2130 = vmatprep.mubr.bf16.mxu0 0
      %2131 = vmatmul.mubr.bf16.gmra.mrb[0].mxu0 %v1913
      %v2132 = vpop.f32.mrb[0].mxu0
      %v2133 = vadd.f32 0.0, %v2132
      %v2134 = vpop.f32.mrb[0].mxu0
      %v2135 = vpop.f32.mrb[0].mxu0
      %v2136 = vadd.f32 0.0, %v2135
      %v2137 = vpop.f32.mrb[0].mxu0
      %2138 = vdwg.mxu0
      %v2139 = vadd.f32 %v1752, %v2013
      %v2140 = vadd.f32 %v1753, %v2016
      %v2141 = vadd.f32 %v1754, %v2021
      %v2142 = vadd.f32 %v1755, %v2024
      %v2143 = vadd.f32 %v1756, %v2029
      %v2144 = vadd.f32 %v1757, %v2032
      %v2145 = vadd.f32 %v1758, %v2037
      %v2146 = vadd.f32 %v1759, %v2040
      %v2147 = vadd.f32 %v1760, %v2045
      %v2148 = vadd.f32 %v1761, %v2048
      %v2149 = vadd.f32 %v1762, %v2053
      %v2150 = vadd.f32 %v1763, %v2056
      %v2151 = vadd.f32 %v1764, %v2061
      %v2152 = vadd.f32 %v1765, %v2064
      %v2153 = vadd.f32 %v1766, %v2069
      %v2154 = vadd.f32 %v1767, %v2072
      %v2155 = vadd.f32 %v1768, %v2077
      %v2156 = vadd.f32 %v1769, %v2080
      %v2157 = vadd.f32 %v1770, %v2085
      %v2158 = vadd.f32 %v1771, %v2088
      %v2159 = vadd.f32 %v1772, %v2093
      %v2160 = vadd.f32 %v1773, %v2096
      %v2161 = vadd.f32 %v1774, %v2101
      %v2162 = vadd.f32 %v1775, %v2104
      %v2163 = vadd.f32 %v1776, %v2109
      %v2164 = vadd.f32 %v1777, %v2112
      %v2165 = vadd.f32 %v1778, %v2117
      %v2166 = vadd.f32 %v1779, %v2120
      %v2167 = vadd.f32 %v1780, %v2125
      %v2168 = vadd.f32 %v1781, %v2128
      %v2169 = vadd.f32 %v1782, %v2133
      %v2170 = vadd.f32 %v1783, %v2136
      %v2171 = vld [vmem:[%s1784] sm:$0xf]
      %v2172 = vld [vmem:[%s1784 + $0x4] sm:$0xf]
      %v2173 = vld [vmem:[%s1784 + $0x8] sm:$0x1]
      %v2174 = vld [vmem:[%s1784 + $0xc] sm:$0xf]
      %v2175 = vld [vmem:[%s1784 + $0x10] sm:$0xf]
      %v2176 = vld [vmem:[%s1784 + $0x14] sm:$0x1]
      %v2177 = vld [vmem:[%s1784 + $0x18] sm:$0xf]
      %v2178 = vld [vmem:[%s1784 + $0x1c] sm:$0xf]
      %v2179 = vld [vmem:[%s1784 + $0x20] sm:$0x1]
      %v2180 = vld [vmem:[%s1784 + $0x24] sm:$0xf]
      %v2181 = vld [vmem:[%s1784 + $0x28] sm:$0xf]
      %v2182 = vld [vmem:[%s1784 + $0x2c] sm:$0x1]
      %v2183 = vld [vmem:[%s1784 + $0x30] sm:$0xf]
      %v2184 = vld [vmem:[%s1784 + $0x34] sm:$0xf]
      %v2185 = vld [vmem:[%s1784 + $0x38] sm:$0x1]
      %v2186 = vld [vmem:[%s1784 + $0x3c] sm:$0xf]
      %v2187 = vld [vmem:[%s1784 + $0x40] sm:$0xf]
      %v2188 = vld [vmem:[%s1784 + $0x44] sm:$0x1]
      %v2189 = vld [vmem:[%s1784 + $0x48] sm:$0xf]
      %v2190 = vld [vmem:[%s1784 + $0x4c] sm:$0xf]
      %v2191 = vld [vmem:[%s1784 + $0x50] sm:$0x1]
      %v2192 = vld [vmem:[%s1784 + $0x54] sm:$0xf]
      %v2193 = vld [vmem:[%s1784 + $0x58] sm:$0xf]
      %v2194 = vld [vmem:[%s1784 + $0x5c] sm:$0x1]
      %v2195 = vld [vmem:[%s1784 + $0x60] sm:$0xf]
      %v2196 = vld [vmem:[%s1784 + $0x64] sm:$0xf]
      %v2197 = vld [vmem:[%s1784 + $0x68] sm:$0x1]
      %v2198 = vld [vmem:[%s1784 + $0x6c] sm:$0xf]
      %v2199 = vld [vmem:[%s1784 + $0x70] sm:$0xf]
      %v2200 = vld [vmem:[%s1784 + $0x74] sm:$0x1]
      %v2201 = vld [vmem:[%s1784 + $0x78] sm:$0xf]
      %v2202 = vld [vmem:[%s1784 + $0x7c] sm:$0xf]
      %v2203 = vld [vmem:[%s1784 + $0x80] sm:$0x1]
      %v2204 = vld [vmem:[%s1784 + $0x84] sm:$0xf]
      %v2205 = vld [vmem:[%s1784 + $0x88] sm:$0xf]
      %v2206 = vld [vmem:[%s1784 + $0x8c] sm:$0x1]
      %v2207 = vld [vmem:[%s1784 + $0x90] sm:$0xf]
      %v2208 = vld [vmem:[%s1784 + $0x94] sm:$0xf]
      %v2209 = vld [vmem:[%s1784 + $0x98] sm:$0x1]
      %v2210 = vld [vmem:[%s1784 + $0x9c] sm:$0xf]
      %v2211 = vld [vmem:[%s1784 + $0xa0] sm:$0xf]
      %v2212 = vld [vmem:[%s1784 + $0xa4] sm:$0x1]
      %v2213 = vld [vmem:[%s1784 + $0xa8] sm:$0xf]
      %v2214 = vld [vmem:[%s1784 + $0xac] sm:$0xf]
      %v2215 = vld [vmem:[%s1784 + $0xb0] sm:$0x1]
      %v2216 = vld [vmem:[%s1784 + $0xb4] sm:$0xf]
      %v2217 = vld [vmem:[%s1784 + $0xb8] sm:$0xf]
      %v2218 = vld [vmem:[%s1784 + $0xbc] sm:$0x1]
      %v2220 = vshrl.u32 %v2171, 16
      %v2222 = vrot.slane %v2220, 4
      %v2223 = vshll.u32 %v2171, 16
      %v2225 = vrot.slane %v2223, 5
      %v2226 = vor.u32 %v2222, %v2225
      %v2227 = vrot.slane %v2226, 4
      %v2229 = vshll.u32 %v2172, 16
      %v2231 = vrot.slane %v2229, 5
      %v2232 = vsel %vm319, %v2227, %v2231
      %v2233 = vshrl.u32 %v2172, 16
      %v2235 = vrot.slane %v2233, 4
      %v2236 = vor.u32 %v2235, %v2231
      %v2237 = vrot.slane %v2236, 4
      %v2239 = vshll.u32 %v2173, 16
      %v2241 = vrot.slane %v2239, 5
      %v2242 = vsel %vm319, %v2237, %v2241
      %v2244 = vshrl.u32 %v2174, 16
      %v2246 = vrot.slane %v2244, 4
      %v2247 = vshll.u32 %v2174, 16
      %v2249 = vrot.slane %v2247, 5
      %v2250 = vor.u32 %v2246, %v2249
      %v2251 = vrot.slane %v2250, 4
      %v2253 = vshll.u32 %v2175, 16
      %v2255 = vrot.slane %v2253, 5
      %v2256 = vsel %vm319, %v2251, %v2255
      %v2257 = vshrl.u32 %v2175, 16
      %v2259 = vrot.slane %v2257, 4
      %v2260 = vor.u32 %v2259, %v2255
      %v2261 = vrot.slane %v2260, 4
      %v2263 = vshll.u32 %v2176, 16
      %v2265 = vrot.slane %v2263, 5
      %v2266 = vsel %vm319, %v2261, %v2265
      %v2268 = vshrl.u32 %v2177, 16
      %v2270 = vrot.slane %v2268, 4
      %v2271 = vshll.u32 %v2177, 16
      %v2273 = vrot.slane %v2271, 5
      %v2274 = vor.u32 %v2270, %v2273
      %v2275 = vrot.slane %v2274, 4
      %v2277 = vshll.u32 %v2178, 16
      %v2279 = vrot.slane %v2277, 5
      %v2280 = vsel %vm319, %v2275, %v2279
      %v2281 = vshrl.u32 %v2178, 16
      %v2283 = vrot.slane %v2281, 4
      %v2284 = vor.u32 %v2283, %v2279
      %v2285 = vrot.slane %v2284, 4
      %v2287 = vshll.u32 %v2179, 16
      %v2289 = vrot.slane %v2287, 5
      %v2290 = vsel %vm319, %v2285, %v2289
      %v2292 = vshrl.u32 %v2180, 16
      %v2294 = vrot.slane %v2292, 4
      %v2295 = vshll.u32 %v2180, 16
      %v2297 = vrot.slane %v2295, 5
      %v2298 = vor.u32 %v2294, %v2297
      %v2299 = vrot.slane %v2298, 4
      %v2301 = vshll.u32 %v2181, 16
      %v2303 = vrot.slane %v2301, 5
      %v2304 = vsel %vm319, %v2299, %v2303
      %v2305 = vshrl.u32 %v2181, 16
      %v2307 = vrot.slane %v2305, 4
      %v2308 = vor.u32 %v2307, %v2303
      %v2309 = vrot.slane %v2308, 4
      %v2311 = vshll.u32 %v2182, 16
      %v2313 = vrot.slane %v2311, 5
      %v2314 = vsel %vm319, %v2309, %v2313
      %v2316 = vshrl.u32 %v2183, 16
      %v2318 = vrot.slane %v2316, 4
      %v2319 = vshll.u32 %v2183, 16
      %v2321 = vrot.slane %v2319, 5
      %v2322 = vor.u32 %v2318, %v2321
      %v2323 = vrot.slane %v2322, 4
      %v2325 = vshll.u32 %v2184, 16
      %v2327 = vrot.slane %v2325, 5
      %v2328 = vsel %vm319, %v2323, %v2327
      %v2329 = vshrl.u32 %v2184, 16
      %v2331 = vrot.slane %v2329, 4
      %v2332 = vor.u32 %v2331, %v2327
      %v2333 = vrot.slane %v2332, 4
      %v2335 = vshll.u32 %v2185, 16
      %v2337 = vrot.slane %v2335, 5
      %v2338 = vsel %vm319, %v2333, %v2337
      %v2340 = vshrl.u32 %v2186, 16
      %v2342 = vrot.slane %v2340, 4
      %v2343 = vshll.u32 %v2186, 16
      %v2345 = vrot.slane %v2343, 5
      %v2346 = vor.u32 %v2342, %v2345
      %v2347 = vrot.slane %v2346, 4
      %v2349 = vshll.u32 %v2187, 16
      %v2351 = vrot.slane %v2349, 5
      %v2352 = vsel %vm319, %v2347, %v2351
      %v2353 = vshrl.u32 %v2187, 16
      %v2355 = vrot.slane %v2353, 4
      %v2356 = vor.u32 %v2355, %v2351
      %v2357 = vrot.slane %v2356, 4
      %v2359 = vshll.u32 %v2188, 16
      %v2361 = vrot.slane %v2359, 5
      %v2362 = vsel %vm319, %v2357, %v2361
      %v2364 = vshrl.u32 %v2189, 16
      %v2366 = vrot.slane %v2364, 4
      %v2367 = vshll.u32 %v2189, 16
      %v2369 = vrot.slane %v2367, 5
      %v2370 = vor.u32 %v2366, %v2369
      %v2371 = vrot.slane %v2370, 4
      %v2373 = vshll.u32 %v2190, 16
      %v2375 = vrot.slane %v2373, 5
      %v2376 = vsel %vm319, %v2371, %v2375
      %v2377 = vshrl.u32 %v2190, 16
      %v2379 = vrot.slane %v2377, 4
      %v2380 = vor.u32 %v2379, %v2375
      %v2381 = vrot.slane %v2380, 4
      %v2383 = vshll.u32 %v2191, 16
      %v2385 = vrot.slane %v2383, 5
      %v2386 = vsel %vm319, %v2381, %v2385
      %v2388 = vshrl.u32 %v2192, 16
      %v2390 = vrot.slane %v2388, 4
      %v2391 = vshll.u32 %v2192, 16
      %v2393 = vrot.slane %v2391, 5
      %v2394 = vor.u32 %v2390, %v2393
      %v2395 = vrot.slane %v2394, 4
      %v2397 = vshll.u32 %v2193, 16
      %v2399 = vrot.slane %v2397, 5
      %v2400 = vsel %vm319, %v2395, %v2399
      %v2401 = vshrl.u32 %v2193, 16
      %v2403 = vrot.slane %v2401, 4
      %v2404 = vor.u32 %v2403, %v2399
      %v2405 = vrot.slane %v2404, 4
      %v2407 = vshll.u32 %v2194, 16
      %v2409 = vrot.slane %v2407, 5
      %v2410 = vsel %vm319, %v2405, %v2409
      %v2412 = vshrl.u32 %v2195, 16
      %v2414 = vrot.slane %v2412, 4
      %v2415 = vshll.u32 %v2195, 16
      %v2417 = vrot.slane %v2415, 5
      %v2418 = vor.u32 %v2414, %v2417
      %v2419 = vrot.slane %v2418, 4
      %v2421 = vshll.u32 %v2196, 16
      %v2423 = vrot.slane %v2421, 5
      %v2424 = vsel %vm319, %v2419, %v2423
      %v2425 = vshrl.u32 %v2196, 16
      %v2427 = vrot.slane %v2425, 4
      %v2428 = vor.u32 %v2427, %v2423
      %v2429 = vrot.slane %v2428, 4
      %v2431 = vshll.u32 %v2197, 16
      %v2433 = vrot.slane %v2431, 5
      %v2434 = vsel %vm319, %v2429, %v2433
      %v2436 = vshrl.u32 %v2198, 16
      %v2438 = vrot.slane %v2436, 4
      %v2439 = vshll.u32 %v2198, 16
      %v2441 = vrot.slane %v2439, 5
      %v2442 = vor.u32 %v2438, %v2441
      %v2443 = vrot.slane %v2442, 4
      %v2445 = vshll.u32 %v2199, 16
      %v2447 = vrot.slane %v2445, 5
      %v2448 = vsel %vm319, %v2443, %v2447
      %v2449 = vshrl.u32 %v2199, 16
      %v2451 = vrot.slane %v2449, 4
      %v2452 = vor.u32 %v2451, %v2447
      %v2453 = vrot.slane %v2452, 4
      %v2455 = vshll.u32 %v2200, 16
      %v2457 = vrot.slane %v2455, 5
      %v2458 = vsel %vm319, %v2453, %v2457
      %v2460 = vshrl.u32 %v2201, 16
      %v2462 = vrot.slane %v2460, 4
      %v2463 = vshll.u32 %v2201, 16
      %v2465 = vrot.slane %v2463, 5
      %v2466 = vor.u32 %v2462, %v2465
      %v2467 = vrot.slane %v2466, 4
      %v2469 = vshll.u32 %v2202, 16
      %v2471 = vrot.slane %v2469, 5
      %v2472 = vsel %vm319, %v2467, %v2471
      %v2473 = vshrl.u32 %v2202, 16
      %v2475 = vrot.slane %v2473, 4
      %v2476 = vor.u32 %v2475, %v2471
      %v2477 = vrot.slane %v2476, 4
      %v2479 = vshll.u32 %v2203, 16
      %v2481 = vrot.slane %v2479, 5
      %v2482 = vsel %vm319, %v2477, %v2481
      %v2484 = vshrl.u32 %v2204, 16
      %v2486 = vrot.slane %v2484, 4
      %v2487 = vshll.u32 %v2204, 16
      %v2489 = vrot.slane %v2487, 5
      %v2490 = vor.u32 %v2486, %v2489
      %v2491 = vrot.slane %v2490, 4
      %v2493 = vshll.u32 %v2205, 16
      %v2495 = vrot.slane %v2493, 5
      %v2496 = vsel %vm319, %v2491, %v2495
      %v2497 = vshrl.u32 %v2205, 16
      %v2499 = vrot.slane %v2497, 4
      %v2500 = vor.u32 %v2499, %v2495
      %v2501 = vrot.slane %v2500, 4
      %v2503 = vshll.u32 %v2206, 16
      %v2505 = vrot.slane %v2503, 5
      %v2506 = vsel %vm319, %v2501, %v2505
      %v2508 = vshrl.u32 %v2207, 16
      %v2510 = vrot.slane %v2508, 4
      %v2511 = vshll.u32 %v2207, 16
      %v2513 = vrot.slane %v2511, 5
      %v2514 = vor.u32 %v2510, %v2513
      %v2515 = vrot.slane %v2514, 4
      %v2517 = vshll.u32 %v2208, 16
      %v2519 = vrot.slane %v2517, 5
      %v2520 = vsel %vm319, %v2515, %v2519
      %v2521 = vshrl.u32 %v2208, 16
      %v2523 = vrot.slane %v2521, 4
      %v2524 = vor.u32 %v2523, %v2519
      %v2525 = vrot.slane %v2524, 4
      %v2527 = vshll.u32 %v2209, 16
      %v2529 = vrot.slane %v2527, 5
      %v2530 = vsel %vm319, %v2525, %v2529
      %v2532 = vshrl.u32 %v2210, 16
      %v2534 = vrot.slane %v2532, 4
      %v2535 = vshll.u32 %v2210, 16
      %v2537 = vrot.slane %v2535, 5
      %v2538 = vor.u32 %v2534, %v2537
      %v2539 = vrot.slane %v2538, 4
      %v2541 = vshll.u32 %v2211, 16
      %v2543 = vrot.slane %v2541, 5
      %v2544 = vsel %vm319, %v2539, %v2543
      %v2545 = vshrl.u32 %v2211, 16
      %v2547 = vrot.slane %v2545, 4
      %v2548 = vor.u32 %v2547, %v2543
      %v2549 = vrot.slane %v2548, 4
      %v2551 = vshll.u32 %v2212, 16
      %v2553 = vrot.slane %v2551, 5
      %v2554 = vsel %vm319, %v2549, %v2553
      %v2556 = vshrl.u32 %v2213, 16
      %v2558 = vrot.slane %v2556, 4
      %v2559 = vshll.u32 %v2213, 16
      %v2561 = vrot.slane %v2559, 5
      %v2562 = vor.u32 %v2558, %v2561
      %v2563 = vrot.slane %v2562, 4
      %v2565 = vshll.u32 %v2214, 16
      %v2567 = vrot.slane %v2565, 5
      %v2568 = vsel %vm319, %v2563, %v2567
      %v2569 = vshrl.u32 %v2214, 16
      %v2571 = vrot.slane %v2569, 4
      %v2572 = vor.u32 %v2571, %v2567
      %v2573 = vrot.slane %v2572, 4
      %v2575 = vshll.u32 %v2215, 16
      %v2577 = vrot.slane %v2575, 5
      %v2578 = vsel %vm319, %v2573, %v2577
      %v2580 = vshrl.u32 %v2216, 16
      %v2582 = vrot.slane %v2580, 4
      %v2583 = vshll.u32 %v2216, 16
      %v2585 = vrot.slane %v2583, 5
      %v2586 = vor.u32 %v2582, %v2585
      %v2587 = vrot.slane %v2586, 4
      %v2589 = vshll.u32 %v2217, 16
      %v2591 = vrot.slane %v2589, 5
      %v2592 = vsel %vm319, %v2587, %v2591
      %v2593 = vshrl.u32 %v2217, 16
      %v2595 = vrot.slane %v2593, 4
      %v2596 = vor.u32 %v2595, %v2591
      %v2597 = vrot.slane %v2596, 4
      %v2599 = vshll.u32 %v2218, 16
      %v2601 = vrot.slane %v2599, 5
      %v2602 = vsel %vm319, %v2597, %v2601
      %s2603 = scalar_lea.vmem %s1, 256
      %v2604 = vld [vmem:[%s2603] sm:$0xf]
      %v2605 = vld [vmem:[%s2603 + $0x4] sm:$0xf]
      %v2606 = vld [vmem:[%s2603 + $0x8] sm:$0xf]
      %v2607 = vld [vmem:[%s2603 + $0xc] sm:$0xf]
      %v2608 = vld [vmem:[%s2603 + $0x10] sm:$0xf]
      %v2609 = vld [vmem:[%s2603 + $0x14] sm:$0xf]
      %v2610 = vld [vmem:[%s2603 + $0x18] sm:$0xf]
      %v2611 = vld [vmem:[%s2603 + $0x1c] sm:$0xf]
      %v2612 = vld [vmem:[%s2603 + $0x20] sm:$0xf]
      %v2613 = vld [vmem:[%s2603 + $0x24] sm:$0xf]
      %v2614 = vld [vmem:[%s2603 + $0x28] sm:$0xf]
      %v2615 = vld [vmem:[%s2603 + $0x2c] sm:$0xf]
      %v2616 = vld [vmem:[%s2603 + $0x30] sm:$0xf]
      %v2617 = vld [vmem:[%s2603 + $0x34] sm:$0xf]
      %v2618 = vld [vmem:[%s2603 + $0x38] sm:$0xf]
      %v2619 = vld [vmem:[%s2603 + $0x3c] sm:$0xf]
      %v2620 = vunpack.c.l.b16 %v2232
      %v2621 = vunpack.c.l.b16 %v2242
      %v2622 = vunpack.c.l.b16 %v2256
      %v2623 = vunpack.c.l.b16 %v2266
      %v2624 = vunpack.c.l.b16 %v2280
      %v2625 = vunpack.c.l.b16 %v2290
      %v2626 = vunpack.c.l.b16 %v2304
      %v2627 = vunpack.c.l.b16 %v2314
      %v2628 = vunpack.c.l.b16 %v2328
      %v2629 = vunpack.c.l.b16 %v2338
      %v2630 = vunpack.c.l.b16 %v2352
      %v2631 = vunpack.c.l.b16 %v2362
      %v2632 = vunpack.c.l.b16 %v2376
      %v2633 = vunpack.c.l.b16 %v2386
      %v2634 = vunpack.c.l.b16 %v2400
      %v2635 = vunpack.c.l.b16 %v2410
      %v2636 = vunpack.c.l.b16 %v2424
      %v2637 = vunpack.c.l.b16 %v2434
      %v2638 = vunpack.c.l.b16 %v2448
      %v2639 = vunpack.c.l.b16 %v2458
      %v2640 = vunpack.c.l.b16 %v2472
      %v2641 = vunpack.c.l.b16 %v2482
      %v2642 = vunpack.c.l.b16 %v2496
      %v2643 = vunpack.c.l.b16 %v2506
      %v2644 = vunpack.c.l.b16 %v2520
      %v2645 = vunpack.c.l.b16 %v2530
      %v2646 = vunpack.c.l.b16 %v2544
      %v2647 = vunpack.c.l.b16 %v2554
      %v2648 = vunpack.c.l.b16 %v2568
      %v2649 = vunpack.c.l.b16 %v2578
      %v2650 = vunpack.c.l.b16 %v2592
      %v2651 = vunpack.c.l.b16 %v2602
      %v2652 = vpack.c.b16 %v2621, %v2620
      %v2653 = vpack.c.b16 %v2623, %v2622
      %v2654 = vpack.c.b16 %v2625, %v2624
      %v2655 = vpack.c.b16 %v2627, %v2626
      %v2656 = vpack.c.b16 %v2629, %v2628
      %v2657 = vpack.c.b16 %v2631, %v2630
      %v2658 = vpack.c.b16 %v2633, %v2632
      %v2659 = vpack.c.b16 %v2635, %v2634
      %v2660 = vpack.c.b16 %v2637, %v2636
      %v2661 = vpack.c.b16 %v2639, %v2638
      %v2662 = vpack.c.b16 %v2641, %v2640
      %v2663 = vpack.c.b16 %v2643, %v2642
      %v2664 = vpack.c.b16 %v2645, %v2644
      %v2665 = vpack.c.b16 %v2647, %v2646
      %v2666 = vpack.c.b16 %v2649, %v2648
      %v2667 = vpack.c.b16 %v2651, %v2650
      %v2700 = vunpack.c.l.b16 %v2604
      %v2701 = vunpack.c.l.b16 %v2605
      %v2702 = vunpack.c.l.b16 %v2606
      %v2703 = vunpack.c.l.b16 %v2607
      %v2704 = vunpack.c.l.b16 %v2608
      %v2705 = vunpack.c.l.b16 %v2609
      %v2706 = vunpack.c.l.b16 %v2610
      %v2707 = vunpack.c.l.b16 %v2611
      %v2708 = vunpack.c.l.b16 %v2612
      %v2709 = vunpack.c.l.b16 %v2613
      %v2710 = vunpack.c.l.b16 %v2614
      %v2711 = vunpack.c.l.b16 %v2615
      %v2712 = vunpack.c.l.b16 %v2616
      %v2713 = vunpack.c.l.b16 %v2617
      %v2714 = vunpack.c.l.b16 %v2618
      %v2715 = vunpack.c.l.b16 %v2619
      %v2716 = vpack.c.b16 %v2701, %v2700
      %v2717 = vpack.c.b16 %v2703, %v2702
      %v2718 = vpack.c.b16 %v2705, %v2704
      %v2719 = vpack.c.b16 %v2707, %v2706
      %v2720 = vpack.c.b16 %v2709, %v2708
      %v2721 = vpack.c.b16 %v2711, %v2710
      %v2722 = vpack.c.b16 %v2713, %v2712
      %v2723 = vpack.c.b16 %v2715, %v2714
      %2732 = vmatprep.subr.bf16.mxu0 0
      %2733 = vmatpush1.bf16.msra.mxu0 %v2716
      %2734 = vmatprep.subr.bf16.mxu0 0
      %2735 = vmatpush1.bf16.msra.mxu0 %v2717
      %2736 = vmatprep.subr.bf16.mxu0 0
      %2737 = vmatpush1.bf16.msra.mxu0 %v2718
      %2738 = vmatprep.subr.bf16.mxu0 0
      %2739 = vmatpush1.bf16.msra.mxu0 %v2719
      %2740 = vmatprep.subr.bf16.mxu0 0
      %2741 = vmatpush1.bf16.msra.mxu0 %v2720
      %2742 = vmatprep.subr.bf16.mxu0 0
      %2743 = vmatpush1.bf16.msra.mxu0 %v2721
      %2744 = vmatprep.subr.bf16.mxu0 0
      %2745 = vmatpush1.bf16.msra.mxu0 %v2722
      %2746 = vmatprep.subr.bf16.mxu0 0
      %2747 = vmatpush1.bf16.msra.mxu0 %v2723
      %2748 = vmatprep.subr.bf16.mxu0 0
      %2749 = vmatpush1.bf16.msra.mxu0 0
      %2750 = vmatprep.subr.bf16.mxu0 0
      %2751 = vmatpush1.bf16.msra.mxu0 0
      %2752 = vmatprep.subr.bf16.mxu0 0
      %2753 = vmatpush1.bf16.msra.mxu0 0
      %2754 = vmatprep.subr.bf16.mxu0 0
      %2755 = vmatpush1.bf16.msra.mxu0 0
      %2756 = vmatprep.subr.bf16.mxu0 0
      %2757 = vmatpush1.bf16.msra.mxu0 0
      %2758 = vmatprep.subr.bf16.mxu0 0
      %2759 = vmatpush1.bf16.msra.mxu0 0
      %2760 = vmatprep.subr.bf16.mxu0 0
      %2761 = vmatpush1.bf16.msra.mxu0 0
      %2762 = vmatprep.subr.bf16.mxu0 0
      %2763 = vmatpush1.bf16.msra.mxu0 0
      %2764 = vmatprep.mubr.bf16.mxu0 0
      %2765 = vmatmul.mubr.bf16.gmra.mrb[0].mxu0 %v2652
      %v2766 = vpop.f32.mrb[0].mxu0
      %v2767 = vadd.f32 0.0, %v2766
      %v2768 = vpop.f32.mrb[0].mxu0
      %v2769 = vpop.f32.mrb[0].mxu0
      %v2770 = vadd.f32 0.0, %v2769
      %v2771 = vpop.f32.mrb[0].mxu0
      %2772 = vmatprep.mubr.bf16.mxu0 0
      %2773 = vmatmul.mubr.bf16.gmra.mrb[0].mxu0 %v2653
      %v2774 = vpop.f32.mrb[0].mxu0
      %v2775 = vadd.f32 0.0, %v2774
      %v2776 = vpop.f32.mrb[0].mxu0
      %v2777 = vpop.f32.mrb[0].mxu0
      %v2778 = vadd.f32 0.0, %v2777
      %v2779 = vpop.f32.mrb[0].mxu0
      %2780 = vmatprep.mubr.bf16.mxu0 0
      %2781 = vmatmul.mubr.bf16.gmra.mrb[0].mxu0 %v2654
      %v2782 = vpop.f32.mrb[0].mxu0
      %v2783 = vadd.f32 0.0, %v2782
      %v2784 = vpop.f32.mrb[0].mxu0
      %v2785 = vpop.f32.mrb[0].mxu0
      %v2786 = vadd.f32 0.0, %v2785
      %v2787 = vpop.f32.mrb[0].mxu0
      %2788 = vmatprep.mubr.bf16.mxu0 0
      %2789 = vmatmul.mubr.bf16.gmra.mrb[0].mxu0 %v2655
      %v2790 = vpop.f32.mrb[0].mxu0
      %v2791 = vadd.f32 0.0, %v2790
      %v2792 = vpop.f32.mrb[0].mxu0
      %v2793 = vpop.f32.mrb[0].mxu0
      %v2794 = vadd.f32 0.0, %v2793
      %v2795 = vpop.f32.mrb[0].mxu0
      %2796 = vmatprep.mubr.bf16.mxu0 0
      %2797 = vmatmul.mubr.bf16.gmra.mrb[0].mxu0 %v2656
      %v2798 = vpop.f32.mrb[0].mxu0
      %v2799 = vadd.f32 0.0, %v2798
      %v2800 = vpop.f32.mrb[0].mxu0
      %v2801 = vpop.f32.mrb[0].mxu0
      %v2802 = vadd.f32 0.0, %v2801
      %v2803 = vpop.f32.mrb[0].mxu0
      %2804 = vmatprep.mubr.bf16.mxu0 0
      %2805 = vmatmul.mubr.bf16.gmra.mrb[0].mxu0 %v2657
      %v2806 = vpop.f32.mrb[0].mxu0
      %v2807 = vadd.f32 0.0, %v2806
      %v2808 = vpop.f32.mrb[0].mxu0
      %v2809 = vpop.f32.mrb[0].mxu0
      %v2810 = vadd.f32 0.0, %v2809
      %v2811 = vpop.f32.mrb[0].mxu0
      %2812 = vmatprep.mubr.bf16.mxu0 0
      %2813 = vmatmul.mubr.bf16.gmra.mrb[0].mxu0 %v2658
      %v2814 = vpop.f32.mrb[0].mxu0
      %v2815 = vadd.f32 0.0, %v2814
      %v2816 = vpop.f32.mrb[0].mxu0
      %v2817 = vpop.f32.mrb[0].mxu0
      %v2818 = vadd.f32 0.0, %v2817
      %v2819 = vpop.f32.mrb[0].mxu0
      %2820 = vmatprep.mubr.bf16.mxu0 0
      %2821 = vmatmul.mubr.bf16.gmra.mrb[0].mxu0 %v2659
      %v2822 = vpop.f32.mrb[0].mxu0
      %v2823 = vadd.f32 0.0, %v2822
      %v2824 = vpop.f32.mrb[0].mxu0
      %v2825 = vpop.f32.mrb[0].mxu0
      %v2826 = vadd.f32 0.0, %v2825
      %v2827 = vpop.f32.mrb[0].mxu0
      %2828 = vmatprep.mubr.bf16.mxu0 0
      %2829 = vmatmul.mubr.bf16.gmra.mrb[0].mxu0 %v2660
      %v2830 = vpop.f32.mrb[0].mxu0
      %v2831 = vadd.f32 0.0, %v2830
      %v2832 = vpop.f32.mrb[0].mxu0
      %v2833 = vpop.f32.mrb[0].mxu0
      %v2834 = vadd.f32 0.0, %v2833
      %v2835 = vpop.f32.mrb[0].mxu0
      %2836 = vmatprep.mubr.bf16.mxu0 0
      %2837 = vmatmul.mubr.bf16.gmra.mrb[0].mxu0 %v2661
      %v2838 = vpop.f32.mrb[0].mxu0
      %v2839 = vadd.f32 0.0, %v2838
      %v2840 = vpop.f32.mrb[0].mxu0
      %v2841 = vpop.f32.mrb[0].mxu0
      %v2842 = vadd.f32 0.0, %v2841
      %v2843 = vpop.f32.mrb[0].mxu0
      %2844 = vmatprep.mubr.bf16.mxu0 0
      %2845 = vmatmul.mubr.bf16.gmra.mrb[0].mxu0 %v2662
      %v2846 = vpop.f32.mrb[0].mxu0
      %v2847 = vadd.f32 0.0, %v2846
      %v2848 = vpop.f32.mrb[0].mxu0
      %v2849 = vpop.f32.mrb[0].mxu0
      %v2850 = vadd.f32 0.0, %v2849
      %v2851 = vpop.f32.mrb[0].mxu0
      %2852 = vmatprep.mubr.bf16.mxu0 0
      %2853 = vmatmul.mubr.bf16.gmra.mrb[0].mxu0 %v2663
      %v2854 = vpop.f32.mrb[0].mxu0
      %v2855 = vadd.f32 0.0, %v2854
      %v2856 = vpop.f32.mrb[0].mxu0
      %v2857 = vpop.f32.mrb[0].mxu0
      %v2858 = vadd.f32 0.0, %v2857
      %v2859 = vpop.f32.mrb[0].mxu0
      %2860 = vmatprep.mubr.bf16.mxu0 0
      %2861 = vmatmul.mubr.bf16.gmra.mrb[0].mxu0 %v2664
      %v2862 = vpop.f32.mrb[0].mxu0
      %v2863 = vadd.f32 0.0, %v2862
      %v2864 = vpop.f32.mrb[0].mxu0
      %v2865 = vpop.f32.mrb[0].mxu0
      %v2866 = vadd.f32 0.0, %v2865
      %v2867 = vpop.f32.mrb[0].mxu0
      %2868 = vmatprep.mubr.bf16.mxu0 0
      %2869 = vmatmul.mubr.bf16.gmra.mrb[0].mxu0 %v2665
      %v2870 = vpop.f32.mrb[0].mxu0
      %v2871 = vadd.f32 0.0, %v2870
      %v2872 = vpop.f32.mrb[0].mxu0
      %v2873 = vpop.f32.mrb[0].mxu0
      %v2874 = vadd.f32 0.0, %v2873
      %v2875 = vpop.f32.mrb[0].mxu0
      %2876 = vmatprep.mubr.bf16.mxu0 0
      %2877 = vmatmul.mubr.bf16.gmra.mrb[0].mxu0 %v2666
      %v2878 = vpop.f32.mrb[0].mxu0
      %v2879 = vadd.f32 0.0, %v2878
      %v2880 = vpop.f32.mrb[0].mxu0
      %v2881 = vpop.f32.mrb[0].mxu0
      %v2882 = vadd.f32 0.0, %v2881
      %v2883 = vpop.f32.mrb[0].mxu0
      %2884 = vmatprep.mubr.bf16.mxu0 0
      %2885 = vmatmul.mubr.bf16.gmra.mrb[0].mxu0 %v2667
      %v2886 = vpop.f32.mrb[0].mxu0
      %v2887 = vadd.f32 0.0, %v2886
      %v2888 = vpop.f32.mrb[0].mxu0
      %v2889 = vpop.f32.mrb[0].mxu0
      %v2890 = vadd.f32 0.0, %v2889
      %v2891 = vpop.f32.mrb[0].mxu0
      %2892 = vdwg.mxu0
      %v2893 = vadd.f32 %v2139, %v2767
      %v2894 = vadd.f32 %v2140, %v2770
      %v2895 = vadd.f32 %v2141, %v2775
      %v2896 = vadd.f32 %v2142, %v2778
      %v2897 = vadd.f32 %v2143, %v2783
      %v2898 = vadd.f32 %v2144, %v2786
      %v2899 = vadd.f32 %v2145, %v2791
      %v2900 = vadd.f32 %v2146, %v2794
      %v2901 = vadd.f32 %v2147, %v2799
      %v2902 = vadd.f32 %v2148, %v2802
      %v2903 = vadd.f32 %v2149, %v2807
      %v2904 = vadd.f32 %v2150, %v2810
      %v2905 = vadd.f32 %v2151, %v2815
      %v2906 = vadd.f32 %v2152, %v2818
      %v2907 = vadd.f32 %v2153, %v2823
      %v2908 = vadd.f32 %v2154, %v2826
      %v2909 = vadd.f32 %v2155, %v2831
      %v2910 = vadd.f32 %v2156, %v2834
      %v2911 = vadd.f32 %v2157, %v2839
      %v2912 = vadd.f32 %v2158, %v2842
      %v2913 = vadd.f32 %v2159, %v2847
      %v2914 = vadd.f32 %v2160, %v2850
      %v2915 = vadd.f32 %v2161, %v2855
      %v2916 = vadd.f32 %v2162, %v2858
      %v2917 = vadd.f32 %v2163, %v2863
      %v2918 = vadd.f32 %v2164, %v2866
      %v2919 = vadd.f32 %v2165, %v2871
      %v2920 = vadd.f32 %v2166, %v2874
      %v2921 = vadd.f32 %v2167, %v2879
      %v2922 = vadd.f32 %v2168, %v2882
      %v2923 = vadd.f32 %v2169, %v2887
      %v2924 = vadd.f32 %v2170, %v2890
      %v2925 = vld [vmem:[%s1784] sm:$0xe]
      %v2926 = vld [vmem:[%s1784 + $0xc] sm:$0xe]
      %v2927 = vld [vmem:[%s1784 + $0x18] sm:$0xe]
      %v2928 = vld [vmem:[%s1784 + $0x24] sm:$0xe]
      %v2929 = vld [vmem:[%s1784 + $0x30] sm:$0xe]
      %v2930 = vld [vmem:[%s1784 + $0x3c] sm:$0xe]
      %v2931 = vld [vmem:[%s1784 + $0x48] sm:$0xe]
      %v2932 = vld [vmem:[%s1784 + $0x54] sm:$0xe]
      %v2933 = vld [vmem:[%s1784 + $0x60] sm:$0xe]
      %v2934 = vld [vmem:[%s1784 + $0x6c] sm:$0xe]
      %v2935 = vld [vmem:[%s1784 + $0x78] sm:$0xe]
      %v2936 = vld [vmem:[%s1784 + $0x84] sm:$0xe]
      %v2937 = vld [vmem:[%s1784 + $0x90] sm:$0xe]
      %v2938 = vld [vmem:[%s1784 + $0x9c] sm:$0xe]
      %v2939 = vld [vmem:[%s1784 + $0xa8] sm:$0xe]
      %v2940 = vld [vmem:[%s1784 + $0xb4] sm:$0xe]
      %v2989 = vrot.slane %v2925, 5
      %v2990 = vrot.slane %v2989, 4
      %v2991 = vrot.slane %v2172, 5
      %v2992 = vsel %vm1349, %v2990, %v2991
      %v2993 = vrot.slane %v2991, 4
      %v2994 = vrot.slane %v2173, 5
      %v2995 = vsel %vm1349, %v2993, %v2994
      %v2996 = vrot.slane %v2926, 5
      %v2997 = vrot.slane %v2996, 4
      %v2998 = vrot.slane %v2175, 5
      %v2999 = vsel %vm1349, %v2997, %v2998
      %v3000 = vrot.slane %v2998, 4
      %v3001 = vrot.slane %v2176, 5
      %v3002 = vsel %vm1349, %v3000, %v3001
      %v3003 = vrot.slane %v2927, 5
      %v3004 = vrot.slane %v3003, 4
      %v3005 = vrot.slane %v2178, 5
      %v3006 = vsel %vm1349, %v3004, %v3005
      %v3007 = vrot.slane %v3005, 4
      %v3008 = vrot.slane %v2179, 5
      %v3009 = vsel %vm1349, %v3007, %v3008
      %v3010 = vrot.slane %v2928, 5
      %v3011 = vrot.slane %v3010, 4
      %v3012 = vrot.slane %v2181, 5
      %v3013 = vsel %vm1349, %v3011, %v3012
      %v3014 = vrot.slane %v3012, 4
      %v3015 = vrot.slane %v2182, 5
      %v3016 = vsel %vm1349, %v3014, %v3015
      %v3017 = vrot.slane %v2929, 5
      %v3018 = vrot.slane %v3017, 4
      %v3019 = vrot.slane %v2184, 5
      %v3020 = vsel %vm1349, %v3018, %v3019
      %v3021 = vrot.slane %v3019, 4
      %v3022 = vrot.slane %v2185, 5
      %v3023 = vsel %vm1349, %v3021, %v3022
      %v3024 = vrot.slane %v2930, 5
      %v3025 = vrot.slane %v3024, 4
      %v3026 = vrot.slane %v2187, 5
      %v3027 = vsel %vm1349, %v3025, %v3026
      %v3028 = vrot.slane %v3026, 4
      %v3029 = vrot.slane %v2188, 5
      %v3030 = vsel %vm1349, %v3028, %v3029
      %v3031 = vrot.slane %v2931, 5
      %v3032 = vrot.slane %v3031, 4
      %v3033 = vrot.slane %v2190, 5
      %v3034 = vsel %vm1349, %v3032, %v3033
      %v3035 = vrot.slane %v3033, 4
      %v3036 = vrot.slane %v2191, 5
      %v3037 = vsel %vm1349, %v3035, %v3036
      %v3038 = vrot.slane %v2932, 5
      %v3039 = vrot.slane %v3038, 4
      %v3040 = vrot.slane %v2193, 5
      %v3041 = vsel %vm1349, %v3039, %v3040
      %v3042 = vrot.slane %v3040, 4
      %v3043 = vrot.slane %v2194, 5
      %v3044 = vsel %vm1349, %v3042, %v3043
      %v3045 = vrot.slane %v2933, 5
      %v3046 = vrot.slane %v3045, 4
      %v3047 = vrot.slane %v2196, 5
      %v3048 = vsel %vm1349, %v3046, %v3047
      %v3049 = vrot.slane %v3047, 4
      %v3050 = vrot.slane %v2197, 5
      %v3051 = vsel %vm1349, %v3049, %v3050
      %v3052 = vrot.slane %v2934, 5
      %v3053 = vrot.slane %v3052, 4
      %v3054 = vrot.slane %v2199, 5
      %v3055 = vsel %vm1349, %v3053, %v3054
      %v3056 = vrot.slane %v3054, 4
      %v3057 = vrot.slane %v2200, 5
      %v3058 = vsel %vm1349, %v3056, %v3057
      %v3059 = vrot.slane %v2935, 5
      %v3060 = vrot.slane %v3059, 4
      %v3061 = vrot.slane %v2202, 5
      %v3062 = vsel %vm1349, %v3060, %v3061
      %v3063 = vrot.slane %v3061, 4
      %v3064 = vrot.slane %v2203, 5
      %v3065 = vsel %vm1349, %v3063, %v3064
      %v3066 = vrot.slane %v2936, 5
      %v3067 = vrot.slane %v3066, 4
      %v3068 = vrot.slane %v2205, 5
      %v3069 = vsel %vm1349, %v3067, %v3068
      %v3070 = vrot.slane %v3068, 4
      %v3071 = vrot.slane %v2206, 5
      %v3072 = vsel %vm1349, %v3070, %v3071
      %v3073 = vrot.slane %v2937, 5
      %v3074 = vrot.slane %v3073, 4
      %v3075 = vrot.slane %v2208, 5
      %v3076 = vsel %vm1349, %v3074, %v3075
      %v3077 = vrot.slane %v3075, 4
      %v3078 = vrot.slane %v2209, 5
      %v3079 = vsel %vm1349, %v3077, %v3078
      %v3080 = vrot.slane %v2938, 5
      %v3081 = vrot.slane %v3080, 4
      %v3082 = vrot.slane %v2211, 5
      %v3083 = vsel %vm1349, %v3081, %v3082
      %v3084 = vrot.slane %v3082, 4
      %v3085 = vrot.slane %v2212, 5
      %v3086 = vsel %vm1349, %v3084, %v3085
      %v3087 = vrot.slane %v2939, 5
      %v3088 = vrot.slane %v3087, 4
      %v3089 = vrot.slane %v2214, 5
      %v3090 = vsel %vm1349, %v3088, %v3089
      %v3091 = vrot.slane %v3089, 4
      %v3092 = vrot.slane %v2215, 5
      %v3093 = vsel %vm1349, %v3091, %v3092
      %v3094 = vrot.slane %v2940, 5
      %v3095 = vrot.slane %v3094, 4
      %v3096 = vrot.slane %v2217, 5
      %v3097 = vsel %vm1349, %v3095, %v3096
      %v3098 = vrot.slane %v3096, 4
      %v3099 = vrot.slane %v2218, 5
      %v3100 = vsel %vm1349, %v3098, %v3099
      %s3101 = scalar_lea.vmem %s1, 320
      %v3102 = vld [vmem:[%s3101] sm:$0xf]
      %v3103 = vld [vmem:[%s3101 + $0x4] sm:$0xf]
      %v3104 = vld [vmem:[%s3101 + $0x8] sm:$0xf]
      %v3105 = vld [vmem:[%s3101 + $0xc] sm:$0xf]
      %v3106 = vld [vmem:[%s3101 + $0x10] sm:$0xf]
      %v3107 = vld [vmem:[%s3101 + $0x14] sm:$0xf]
      %v3108 = vld [vmem:[%s3101 + $0x18] sm:$0xf]
      %v3109 = vld [vmem:[%s3101 + $0x1c] sm:$0xf]
      %v3110 = vld [vmem:[%s3101 + $0x20] sm:$0xf]
      %v3111 = vld [vmem:[%s3101 + $0x24] sm:$0xf]
      %v3112 = vld [vmem:[%s3101 + $0x28] sm:$0xf]
      %v3113 = vld [vmem:[%s3101 + $0x2c] sm:$0xf]
      %v3114 = vld [vmem:[%s3101 + $0x30] sm:$0xf]
      %v3115 = vld [vmem:[%s3101 + $0x34] sm:$0xf]
      %v3116 = vld [vmem:[%s3101 + $0x38] sm:$0xf]
      %v3117 = vld [vmem:[%s3101 + $0x3c] sm:$0xf]
      %v3118 = vunpack.c.l.b16 %v2992
      %v3119 = vunpack.c.l.b16 %v2995
      %v3120 = vunpack.c.l.b16 %v2999
      %v3121 = vunpack.c.l.b16 %v3002
      %v3122 = vunpack.c.l.b16 %v3006
      %v3123 = vunpack.c.l.b16 %v3009
      %v3124 = vunpack.c.l.b16 %v3013
      %v3125 = vunpack.c.l.b16 %v3016
      %v3126 = vunpack.c.l.b16 %v3020
      %v3127 = vunpack.c.l.b16 %v3023
      %v3128 = vunpack.c.l.b16 %v3027
      %v3129 = vunpack.c.l.b16 %v3030
      %v3130 = vunpack.c.l.b16 %v3034
      %v3131 = vunpack.c.l.b16 %v3037
      %v3132 = vunpack.c.l.b16 %v3041
      %v3133 = vunpack.c.l.b16 %v3044
      %v3134 = vunpack.c.l.b16 %v3048
      %v3135 = vunpack.c.l.b16 %v3051
      %v3136 = vunpack.c.l.b16 %v3055
      %v3137 = vunpack.c.l.b16 %v3058
      %v3138 = vunpack.c.l.b16 %v3062
      %v3139 = vunpack.c.l.b16 %v3065
      %v3140 = vunpack.c.l.b16 %v3069
      %v3141 = vunpack.c.l.b16 %v3072
      %v3142 = vunpack.c.l.b16 %v3076
      %v3143 = vunpack.c.l.b16 %v3079
      %v3144 = vunpack.c.l.b16 %v3083
      %v3145 = vunpack.c.l.b16 %v3086
      %v3146 = vunpack.c.l.b16 %v3090
      %v3147 = vunpack.c.l.b16 %v3093
      %v3148 = vunpack.c.l.b16 %v3097
      %v3149 = vunpack.c.l.b16 %v3100
      %v3150 = vpack.c.b16 %v3119, %v3118
      %v3151 = vpack.c.b16 %v3121, %v3120
      %v3152 = vpack.c.b16 %v3123, %v3122
      %v3153 = vpack.c.b16 %v3125, %v3124
      %v3154 = vpack.c.b16 %v3127, %v3126
      %v3155 = vpack.c.b16 %v3129, %v3128
      %v3156 = vpack.c.b16 %v3131, %v3130
      %v3157 = vpack.c.b16 %v3133, %v3132
      %v3158 = vpack.c.b16 %v3135, %v3134
      %v3159 = vpack.c.b16 %v3137, %v3136
      %v3160 = vpack.c.b16 %v3139, %v3138
      %v3161 = vpack.c.b16 %v3141, %v3140
      %v3162 = vpack.c.b16 %v3143, %v3142
      %v3163 = vpack.c.b16 %v3145, %v3144
      %v3164 = vpack.c.b16 %v3147, %v3146
      %v3165 = vpack.c.b16 %v3149, %v3148
      %v3198 = vunpack.c.l.b16 %v3102
      %v3199 = vunpack.c.l.b16 %v3103
      %v3200 = vunpack.c.l.b16 %v3104
      %v3201 = vunpack.c.l.b16 %v3105
      %v3202 = vunpack.c.l.b16 %v3106
      %v3203 = vunpack.c.l.b16 %v3107
      %v3204 = vunpack.c.l.b16 %v3108
      %v3205 = vunpack.c.l.b16 %v3109
      %v3206 = vunpack.c.l.b16 %v3110
      %v3207 = vunpack.c.l.b16 %v3111
      %v3208 = vunpack.c.l.b16 %v3112
      %v3209 = vunpack.c.l.b16 %v3113
      %v3210 = vunpack.c.l.b16 %v3114
      %v3211 = vunpack.c.l.b16 %v3115
      %v3212 = vunpack.c.l.b16 %v3116
      %v3213 = vunpack.c.l.b16 %v3117
      %v3214 = vpack.c.b16 %v3199, %v3198
      %v3215 = vpack.c.b16 %v3201, %v3200
      %v3216 = vpack.c.b16 %v3203, %v3202
      %v3217 = vpack.c.b16 %v3205, %v3204
      %v3218 = vpack.c.b16 %v3207, %v3206
      %v3219 = vpack.c.b16 %v3209, %v3208
      %v3220 = vpack.c.b16 %v3211, %v3210
      %v3221 = vpack.c.b16 %v3213, %v3212
      %3230 = vmatprep.subr.bf16.mxu0 0
      %3231 = vmatpush1.bf16.msra.mxu0 %v3214
      %3232 = vmatprep.subr.bf16.mxu0 0
      %3233 = vmatpush1.bf16.msra.mxu0 %v3215
      %3234 = vmatprep.subr.bf16.mxu0 0
      %3235 = vmatpush1.bf16.msra.mxu0 %v3216
      %3236 = vmatprep.subr.bf16.mxu0 0
      %3237 = vmatpush1.bf16.msra.mxu0 %v3217
      %3238 = vmatprep.subr.bf16.mxu0 0
      %3239 = vmatpush1.bf16.msra.mxu0 %v3218
      %3240 = vmatprep.subr.bf16.mxu0 0
      %3241 = vmatpush1.bf16.msra.mxu0 %v3219
      %3242 = vmatprep.subr.bf16.mxu0 0
      %3243 = vmatpush1.bf16.msra.mxu0 %v3220
      %3244 = vmatprep.subr.bf16.mxu0 0
      %3245 = vmatpush1.bf16.msra.mxu0 %v3221
      %3246 = vmatprep.subr.bf16.mxu0 0
      %3247 = vmatpush1.bf16.msra.mxu0 0
      %3248 = vmatprep.subr.bf16.mxu0 0
      %3249 = vmatpush1.bf16.msra.mxu0 0
      %3250 = vmatprep.subr.bf16.mxu0 0
      %3251 = vmatpush1.bf16.msra.mxu0 0
      %3252 = vmatprep.subr.bf16.mxu0 0
      %3253 = vmatpush1.bf16.msra.mxu0 0
      %3254 = vmatprep.subr.bf16.mxu0 0
      %3255 = vmatpush1.bf16.msra.mxu0 0
      %3256 = vmatprep.subr.bf16.mxu0 0
      %3257 = vmatpush1.bf16.msra.mxu0 0
      %3258 = vmatprep.subr.bf16.mxu0 0
      %3259 = vmatpush1.bf16.msra.mxu0 0
      %3260 = vmatprep.subr.bf16.mxu0 0
      %3261 = vmatpush1.bf16.msra.mxu0 0
      %3262 = vmatprep.mubr.bf16.mxu0 0
      %3263 = vmatmul.mubr.bf16.gmra.mrb[0].mxu0 %v3150
      %v3264 = vpop.f32.mrb[0].mxu0
      %v3265 = vadd.f32 0.0, %v3264
      %v3266 = vpop.f32.mrb[0].mxu0
      %v3267 = vpop.f32.mrb[0].mxu0
      %v3268 = vadd.f32 0.0, %v3267
      %v3269 = vpop.f32.mrb[0].mxu0
      %3270 = vmatprep.mubr.bf16.mxu0 0
      %3271 = vmatmul.mubr.bf16.gmra.mrb[0].mxu0 %v3151
      %v3272 = vpop.f32.mrb[0].mxu0
      %v3273 = vadd.f32 0.0, %v3272
      %v3274 = vpop.f32.mrb[0].mxu0
      %v3275 = vpop.f32.mrb[0].mxu0
      %v3276 = vadd.f32 0.0, %v3275
      %v3277 = vpop.f32.mrb[0].mxu0
      %3278 = vmatprep.mubr.bf16.mxu0 0
      %3279 = vmatmul.mubr.bf16.gmra.mrb[0].mxu0 %v3152
      %v3280 = vpop.f32.mrb[0].mxu0
      %v3281 = vadd.f32 0.0, %v3280
      %v3282 = vpop.f32.mrb[0].mxu0
      %v3283 = vpop.f32.mrb[0].mxu0
      %v3284 = vadd.f32 0.0, %v3283
      %v3285 = vpop.f32.mrb[0].mxu0
      %3286 = vmatprep.mubr.bf16.mxu0 0
      %3287 = vmatmul.mubr.bf16.gmra.mrb[0].mxu0 %v3153
      %v3288 = vpop.f32.mrb[0].mxu0
      %v3289 = vadd.f32 0.0, %v3288
      %v3290 = vpop.f32.mrb[0].mxu0
      %v3291 = vpop.f32.mrb[0].mxu0
      %v3292 = vadd.f32 0.0, %v3291
      %v3293 = vpop.f32.mrb[0].mxu0
      %3294 = vmatprep.mubr.bf16.mxu0 0
      %3295 = vmatmul.mubr.bf16.gmra.mrb[0].mxu0 %v3154
      %v3296 = vpop.f32.mrb[0].mxu0
      %v3297 = vadd.f32 0.0, %v3296
      %v3298 = vpop.f32.mrb[0].mxu0
      %v3299 = vpop.f32.mrb[0].mxu0
      %v3300 = vadd.f32 0.0, %v3299
      %v3301 = vpop.f32.mrb[0].mxu0
      %3302 = vmatprep.mubr.bf16.mxu0 0
      %3303 = vmatmul.mubr.bf16.gmra.mrb[0].mxu0 %v3155
      %v3304 = vpop.f32.mrb[0].mxu0
      %v3305 = vadd.f32 0.0, %v3304
      %v3306 = vpop.f32.mrb[0].mxu0
      %v3307 = vpop.f32.mrb[0].mxu0
      %v3308 = vadd.f32 0.0, %v3307
      %v3309 = vpop.f32.mrb[0].mxu0
      %3310 = vmatprep.mubr.bf16.mxu0 0
      %3311 = vmatmul.mubr.bf16.gmra.mrb[0].mxu0 %v3156
      %v3312 = vpop.f32.mrb[0].mxu0
      %v3313 = vadd.f32 0.0, %v3312
      %v3314 = vpop.f32.mrb[0].mxu0
      %v3315 = vpop.f32.mrb[0].mxu0
      %v3316 = vadd.f32 0.0, %v3315
      %v3317 = vpop.f32.mrb[0].mxu0
      %3318 = vmatprep.mubr.bf16.mxu0 0
      %3319 = vmatmul.mubr.bf16.gmra.mrb[0].mxu0 %v3157
      %v3320 = vpop.f32.mrb[0].mxu0
      %v3321 = vadd.f32 0.0, %v3320
      %v3322 = vpop.f32.mrb[0].mxu0
      %v3323 = vpop.f32.mrb[0].mxu0
      %v3324 = vadd.f32 0.0, %v3323
      %v3325 = vpop.f32.mrb[0].mxu0
      %3326 = vmatprep.mubr.bf16.mxu0 0
      %3327 = vmatmul.mubr.bf16.gmra.mrb[0].mxu0 %v3158
      %v3328 = vpop.f32.mrb[0].mxu0
      %v3329 = vadd.f32 0.0, %v3328
      %v3330 = vpop.f32.mrb[0].mxu0
      %v3331 = vpop.f32.mrb[0].mxu0
      %v3332 = vadd.f32 0.0, %v3331
      %v3333 = vpop.f32.mrb[0].mxu0
      %3334 = vmatprep.mubr.bf16.mxu0 0
      %3335 = vmatmul.mubr.bf16.gmra.mrb[0].mxu0 %v3159
      %v3336 = vpop.f32.mrb[0].mxu0
      %v3337 = vadd.f32 0.0, %v3336
      %v3338 = vpop.f32.mrb[0].mxu0
      %v3339 = vpop.f32.mrb[0].mxu0
      %v3340 = vadd.f32 0.0, %v3339
      %v3341 = vpop.f32.mrb[0].mxu0
      %3342 = vmatprep.mubr.bf16.mxu0 0
      %3343 = vmatmul.mubr.bf16.gmra.mrb[0].mxu0 %v3160
      %v3344 = vpop.f32.mrb[0].mxu0
      %v3345 = vadd.f32 0.0, %v3344
      %v3346 = vpop.f32.mrb[0].mxu0
      %v3347 = vpop.f32.mrb[0].mxu0
      %v3348 = vadd.f32 0.0, %v3347
      %v3349 = vpop.f32.mrb[0].mxu0
      %3350 = vmatprep.mubr.bf16.mxu0 0
      %3351 = vmatmul.mubr.bf16.gmra.mrb[0].mxu0 %v3161
      %v3352 = vpop.f32.mrb[0].mxu0
      %v3353 = vadd.f32 0.0, %v3352
      %v3354 = vpop.f32.mrb[0].mxu0
      %v3355 = vpop.f32.mrb[0].mxu0
      %v3356 = vadd.f32 0.0, %v3355
      %v3357 = vpop.f32.mrb[0].mxu0
      %3358 = vmatprep.mubr.bf16.mxu0 0
      %3359 = vmatmul.mubr.bf16.gmra.mrb[0].mxu0 %v3162
      %v3360 = vpop.f32.mrb[0].mxu0
      %v3361 = vadd.f32 0.0, %v3360
      %v3362 = vpop.f32.mrb[0].mxu0
      %v3363 = vpop.f32.mrb[0].mxu0
      %v3364 = vadd.f32 0.0, %v3363
      %v3365 = vpop.f32.mrb[0].mxu0
      %3366 = vmatprep.mubr.bf16.mxu0 0
      %3367 = vmatmul.mubr.bf16.gmra.mrb[0].mxu0 %v3163
      %v3368 = vpop.f32.mrb[0].mxu0
      %v3369 = vadd.f32 0.0, %v3368
      %v3370 = vpop.f32.mrb[0].mxu0
      %v3371 = vpop.f32.mrb[0].mxu0
      %v3372 = vadd.f32 0.0, %v3371
      %v3373 = vpop.f32.mrb[0].mxu0
      %3374 = vmatprep.mubr.bf16.mxu0 0
      %3375 = vmatmul.mubr.bf16.gmra.mrb[0].mxu0 %v3164
      %v3376 = vpop.f32.mrb[0].mxu0
      %v3377 = vadd.f32 0.0, %v3376
      %v3378 = vpop.f32.mrb[0].mxu0
      %v3379 = vpop.f32.mrb[0].mxu0
      %v3380 = vadd.f32 0.0, %v3379
      %v3381 = vpop.f32.mrb[0].mxu0
      %3382 = vmatprep.mubr.bf16.mxu0 0
      %3383 = vmatmul.mubr.bf16.gmra.mrb[0].mxu0 %v3165
      %v3384 = vpop.f32.mrb[0].mxu0
      %v3385 = vadd.f32 0.0, %v3384
      %v3386 = vpop.f32.mrb[0].mxu0
      %v3387 = vpop.f32.mrb[0].mxu0
      %v3388 = vadd.f32 0.0, %v3387
      %v3389 = vpop.f32.mrb[0].mxu0
      %3390 = vdwg.mxu0
      %v3391 = vadd.f32 %v2893, %v3265
      %v3392 = vadd.f32 %v2894, %v3268
      %v3393 = vadd.f32 %v2895, %v3273
      %v3394 = vadd.f32 %v2896, %v3276
      %v3395 = vadd.f32 %v2897, %v3281
      %v3396 = vadd.f32 %v2898, %v3284
      %v3397 = vadd.f32 %v2899, %v3289
      %v3398 = vadd.f32 %v2900, %v3292
      %v3399 = vadd.f32 %v2901, %v3297
      %v3400 = vadd.f32 %v2902, %v3300
      %v3401 = vadd.f32 %v2903, %v3305
      %v3402 = vadd.f32 %v2904, %v3308
      %v3403 = vadd.f32 %v2905, %v3313
      %v3404 = vadd.f32 %v2906, %v3316
      %v3405 = vadd.f32 %v2907, %v3321
      %v3406 = vadd.f32 %v2908, %v3324
      %v3407 = vadd.f32 %v2909, %v3329
      %v3408 = vadd.f32 %v2910, %v3332
      %v3409 = vadd.f32 %v2911, %v3337
      %v3410 = vadd.f32 %v2912, %v3340
      %v3411 = vadd.f32 %v2913, %v3345
      %v3412 = vadd.f32 %v2914, %v3348
      %v3413 = vadd.f32 %v2915, %v3353
      %v3414 = vadd.f32 %v2916, %v3356
      %v3415 = vadd.f32 %v2917, %v3361
      %v3416 = vadd.f32 %v2918, %v3364
      %v3417 = vadd.f32 %v2919, %v3369
      %v3418 = vadd.f32 %v2920, %v3372
      %v3419 = vadd.f32 %v2921, %v3377
      %v3420 = vadd.f32 %v2922, %v3380
      %v3421 = vadd.f32 %v2923, %v3385
      %v3422 = vadd.f32 %v2924, %v3388
      %s3423 = scalar_lea.vmem %s246, 24
      %v3424 = vld [vmem:[%s3423] sm:$0xf]
      %v3425 = vld [vmem:[%s3423 + $0x4] sm:$0xf]
      %v3426 = vld [vmem:[%s3423 + $0xc] sm:$0xf]
      %v3427 = vld [vmem:[%s3423 + $0x10] sm:$0xf]
      %v3428 = vld [vmem:[%s3423 + $0x18] sm:$0xf]
      %v3429 = vld [vmem:[%s3423 + $0x1c] sm:$0xf]
      %v3430 = vld [vmem:[%s3423 + $0x24] sm:$0xf]
      %v3431 = vld [vmem:[%s3423 + $0x28] sm:$0xf]
      %v3432 = vld [vmem:[%s3423 + $0x30] sm:$0xf]
      %v3433 = vld [vmem:[%s3423 + $0x34] sm:$0xf]
      %v3434 = vld [vmem:[%s3423 + $0x3c] sm:$0xf]
      %v3435 = vld [vmem:[%s3423 + $0x40] sm:$0xf]
      %v3436 = vld [vmem:[%s3423 + $0x48] sm:$0xf]
      %v3437 = vld [vmem:[%s3423 + $0x4c] sm:$0xf]
      %v3438 = vld [vmem:[%s3423 + $0x54] sm:$0xf]
      %v3439 = vld [vmem:[%s3423 + $0x58] sm:$0xf]
      %v3440 = vld [vmem:[%s3423 + $0x60] sm:$0xf]
      %v3441 = vld [vmem:[%s3423 + $0x64] sm:$0xf]
      %v3442 = vld [vmem:[%s3423 + $0x6c] sm:$0xf]
      %v3443 = vld [vmem:[%s3423 + $0x70] sm:$0xf]
      %v3444 = vld [vmem:[%s3423 + $0x78] sm:$0xf]
      %v3445 = vld [vmem:[%s3423 + $0x7c] sm:$0xf]
      %v3446 = vld [vmem:[%s3423 + $0x84] sm:$0xf]
      %v3447 = vld [vmem:[%s3423 + $0x88] sm:$0xf]
      %v3448 = vld [vmem:[%s3423 + $0x90] sm:$0xf]
      %v3449 = vld [vmem:[%s3423 + $0x94] sm:$0xf]
      %v3450 = vld [vmem:[%s3423 + $0x9c] sm:$0xf]
      %v3451 = vld [vmem:[%s3423 + $0xa0] sm:$0xf]
      %v3452 = vld [vmem:[%s3423 + $0xa8] sm:$0xf]
      %v3453 = vld [vmem:[%s3423 + $0xac] sm:$0xf]
      %v3454 = vld [vmem:[%s3423 + $0xb4] sm:$0xf]
      %v3455 = vld [vmem:[%s3423 + $0xb8] sm:$0xf]
      %s3456 = scalar_lea.vmem %s1, 384
      %v3457 = vld [vmem:[%s3456] sm:$0xf]
      %v3458 = vld [vmem:[%s3456 + $0x4] sm:$0xf]
      %v3459 = vld [vmem:[%s3456 + $0x8] sm:$0xf]
      %v3460 = vld [vmem:[%s3456 + $0xc] sm:$0xf]
      %v3461 = vld [vmem:[%s3456 + $0x10] sm:$0xf]
      %v3462 = vld [vmem:[%s3456 + $0x14] sm:$0xf]
      %v3463 = vld [vmem:[%s3456 + $0x18] sm:$0xf]
      %v3464 = vld [vmem:[%s3456 + $0x1c] sm:$0xf]
      %v3465 = vld [vmem:[%s3456 + $0x20] sm:$0xf]
      %v3466 = vld [vmem:[%s3456 + $0x24] sm:$0xf]
      %v3467 = vld [vmem:[%s3456 + $0x28] sm:$0xf]
      %v3468 = vld [vmem:[%s3456 + $0x2c] sm:$0xf]
      %v3469 = vld [vmem:[%s3456 + $0x30] sm:$0xf]
      %v3470 = vld [vmem:[%s3456 + $0x34] sm:$0xf]
      %v3471 = vld [vmem:[%s3456 + $0x38] sm:$0xf]
      %v3472 = vld [vmem:[%s3456 + $0x3c] sm:$0xf]
      %v3505 = vunpack.c.l.b16 %v3424
      %v3506 = vunpack.c.l.b16 %v3425
      %v3507 = vunpack.c.l.b16 %v3426
      %v3508 = vunpack.c.l.b16 %v3427
      %v3509 = vunpack.c.l.b16 %v3428
      %v3510 = vunpack.c.l.b16 %v3429
      %v3511 = vunpack.c.l.b16 %v3430
      %v3512 = vunpack.c.l.b16 %v3431
      %v3513 = vunpack.c.l.b16 %v3432
      %v3514 = vunpack.c.l.b16 %v3433
      %v3515 = vunpack.c.l.b16 %v3434
      %v3516 = vunpack.c.l.b16 %v3435
      %v3517 = vunpack.c.l.b16 %v3436
      %v3518 = vunpack.c.l.b16 %v3437
      %v3519 = vunpack.c.l.b16 %v3438
      %v3520 = vunpack.c.l.b16 %v3439
      %v3521 = vunpack.c.l.b16 %v3440
      %v3522 = vunpack.c.l.b16 %v3441
      %v3523 = vunpack.c.l.b16 %v3442
      %v3524 = vunpack.c.l.b16 %v3443
      %v3525 = vunpack.c.l.b16 %v3444
      %v3526 = vunpack.c.l.b16 %v3445
      %v3527 = vunpack.c.l.b16 %v3446
      %v3528 = vunpack.c.l.b16 %v3447
      %v3529 = vunpack.c.l.b16 %v3448
      %v3530 = vunpack.c.l.b16 %v3449
      %v3531 = vunpack.c.l.b16 %v3450
      %v3532 = vunpack.c.l.b16 %v3451
      %v3533 = vunpack.c.l.b16 %v3452
      %v3534 = vunpack.c.l.b16 %v3453
      %v3535 = vunpack.c.l.b16 %v3454
      %v3536 = vunpack.c.l.b16 %v3455
      %v3537 = vpack.c.b16 %v3506, %v3505
      %v3538 = vpack.c.b16 %v3508, %v3507
      %v3539 = vpack.c.b16 %v3510, %v3509
      %v3540 = vpack.c.b16 %v3512, %v3511
      %v3541 = vpack.c.b16 %v3514, %v3513
      %v3542 = vpack.c.b16 %v3516, %v3515
      %v3543 = vpack.c.b16 %v3518, %v3517
      %v3544 = vpack.c.b16 %v3520, %v3519
      %v3545 = vpack.c.b16 %v3522, %v3521
      %v3546 = vpack.c.b16 %v3524, %v3523
      %v3547 = vpack.c.b16 %v3526, %v3525
      %v3548 = vpack.c.b16 %v3528, %v3527
      %v3549 = vpack.c.b16 %v3530, %v3529
      %v3550 = vpack.c.b16 %v3532, %v3531
      %v3551 = vpack.c.b16 %v3534, %v3533
      %v3552 = vpack.c.b16 %v3536, %v3535
      %v3585 = vunpack.c.l.b16 %v3457
      %v3586 = vunpack.c.l.b16 %v3458
      %v3587 = vunpack.c.l.b16 %v3459
      %v3588 = vunpack.c.l.b16 %v3460
      %v3589 = vunpack.c.l.b16 %v3461
      %v3590 = vunpack.c.l.b16 %v3462
      %v3591 = vunpack.c.l.b16 %v3463
      %v3592 = vunpack.c.l.b16 %v3464
      %v3593 = vunpack.c.l.b16 %v3465
      %v3594 = vunpack.c.l.b16 %v3466
      %v3595 = vunpack.c.l.b16 %v3467
      %v3596 = vunpack.c.l.b16 %v3468
      %v3597 = vunpack.c.l.b16 %v3469
      %v3598 = vunpack.c.l.b16 %v3470
      %v3599 = vunpack.c.l.b16 %v3471
      %v3600 = vunpack.c.l.b16 %v3472
      %v3601 = vpack.c.b16 %v3586, %v3585
      %v3602 = vpack.c.b16 %v3588, %v3587
      %v3603 = vpack.c.b16 %v3590, %v3589
      %v3604 = vpack.c.b16 %v3592, %v3591
      %v3605 = vpack.c.b16 %v3594, %v3593
      %v3606 = vpack.c.b16 %v3596, %v3595
      %v3607 = vpack.c.b16 %v3598, %v3597
      %v3608 = vpack.c.b16 %v3600, %v3599
      %3617 = vmatprep.subr.bf16.mxu0 0
      %3618 = vmatpush1.bf16.msra.mxu0 %v3601
      %3619 = vmatprep.subr.bf16.mxu0 0
      %3620 = vmatpush1.bf16.msra.mxu0 %v3602
      %3621 = vmatprep.subr.bf16.mxu0 0
      %3622 = vmatpush1.bf16.msra.mxu0 %v3603
      %3623 = vmatprep.subr.bf16.mxu0 0
      %3624 = vmatpush1.bf16.msra.mxu0 %v3604
      %3625 = vmatprep.subr.bf16.mxu0 0
      %3626 = vmatpush1.bf16.msra.mxu0 %v3605
      %3627 = vmatprep.subr.bf16.mxu0 0
      %3628 = vmatpush1.bf16.msra.mxu0 %v3606
      %3629 = vmatprep.subr.bf16.mxu0 0
      %3630 = vmatpush1.bf16.msra.mxu0 %v3607
      %3631 = vmatprep.subr.bf16.mxu0 0
      %3632 = vmatpush1.bf16.msra.mxu0 %v3608
      %3633 = vmatprep.subr.bf16.mxu0 0
      %3634 = vmatpush1.bf16.msra.mxu0 0
      %3635 = vmatprep.subr.bf16.mxu0 0
      %3636 = vmatpush1.bf16.msra.mxu0 0
      %3637 = vmatprep.subr.bf16.mxu0 0
      %3638 = vmatpush1.bf16.msra.mxu0 0
      %3639 = vmatprep.subr.bf16.mxu0 0
      %3640 = vmatpush1.bf16.msra.mxu0 0
      %3641 = vmatprep.subr.bf16.mxu0 0
      %3642 = vmatpush1.bf16.msra.mxu0 0
      %3643 = vmatprep.subr.bf16.mxu0 0
      %3644 = vmatpush1.bf16.msra.mxu0 0
      %3645 = vmatprep.subr.bf16.mxu0 0
      %3646 = vmatpush1.bf16.msra.mxu0 0
      %3647 = vmatprep.subr.bf16.mxu0 0
      %3648 = vmatpush1.bf16.msra.mxu0 0
      %3649 = vmatprep.mubr.bf16.mxu0 0
      %3650 = vmatmul.mubr.bf16.gmra.mrb[0].mxu0 %v3537
      %v3651 = vpop.f32.mrb[0].mxu0
      %v3652 = vadd.f32 0.0, %v3651
      %v3653 = vpop.f32.mrb[0].mxu0
      %v3654 = vpop.f32.mrb[0].mxu0
      %v3655 = vadd.f32 0.0, %v3654
      %v3656 = vpop.f32.mrb[0].mxu0
      %3657 = vmatprep.mubr.bf16.mxu0 0
      %3658 = vmatmul.mubr.bf16.gmra.mrb[0].mxu0 %v3538
      %v3659 = vpop.f32.mrb[0].mxu0
      %v3660 = vadd.f32 0.0, %v3659
      %v3661 = vpop.f32.mrb[0].mxu0
      %v3662 = vpop.f32.mrb[0].mxu0
      %v3663 = vadd.f32 0.0, %v3662
      %v3664 = vpop.f32.mrb[0].mxu0
      %3665 = vmatprep.mubr.bf16.mxu0 0
      %3666 = vmatmul.mubr.bf16.gmra.mrb[0].mxu0 %v3539
      %v3667 = vpop.f32.mrb[0].mxu0
      %v3668 = vadd.f32 0.0, %v3667
      %v3669 = vpop.f32.mrb[0].mxu0
      %v3670 = vpop.f32.mrb[0].mxu0
      %v3671 = vadd.f32 0.0, %v3670
      %v3672 = vpop.f32.mrb[0].mxu0
      %3673 = vmatprep.mubr.bf16.mxu0 0
      %3674 = vmatmul.mubr.bf16.gmra.mrb[0].mxu0 %v3540
      %v3675 = vpop.f32.mrb[0].mxu0
      %v3676 = vadd.f32 0.0, %v3675
      %v3677 = vpop.f32.mrb[0].mxu0
      %v3678 = vpop.f32.mrb[0].mxu0
      %v3679 = vadd.f32 0.0, %v3678
      %v3680 = vpop.f32.mrb[0].mxu0
      %3681 = vmatprep.mubr.bf16.mxu0 0
      %3682 = vmatmul.mubr.bf16.gmra.mrb[0].mxu0 %v3541
      %v3683 = vpop.f32.mrb[0].mxu0
      %v3684 = vadd.f32 0.0, %v3683
      %v3685 = vpop.f32.mrb[0].mxu0
      %v3686 = vpop.f32.mrb[0].mxu0
      %v3687 = vadd.f32 0.0, %v3686
      %v3688 = vpop.f32.mrb[0].mxu0
      %3689 = vmatprep.mubr.bf16.mxu0 0
      %3690 = vmatmul.mubr.bf16.gmra.mrb[0].mxu0 %v3542
      %v3691 = vpop.f32.mrb[0].mxu0
      %v3692 = vadd.f32 0.0, %v3691
      %v3693 = vpop.f32.mrb[0].mxu0
      %v3694 = vpop.f32.mrb[0].mxu0
      %v3695 = vadd.f32 0.0, %v3694
      %v3696 = vpop.f32.mrb[0].mxu0
      %3697 = vmatprep.mubr.bf16.mxu0 0
      %3698 = vmatmul.mubr.bf16.gmra.mrb[0].mxu0 %v3543
      %v3699 = vpop.f32.mrb[0].mxu0
      %v3700 = vadd.f32 0.0, %v3699
      %v3701 = vpop.f32.mrb[0].mxu0
      %v3702 = vpop.f32.mrb[0].mxu0
      %v3703 = vadd.f32 0.0, %v3702
      %v3704 = vpop.f32.mrb[0].mxu0
      %3705 = vmatprep.mubr.bf16.mxu0 0
      %3706 = vmatmul.mubr.bf16.gmra.mrb[0].mxu0 %v3544
      %v3707 = vpop.f32.mrb[0].mxu0
      %v3708 = vadd.f32 0.0, %v3707
      %v3709 = vpop.f32.mrb[0].mxu0
      %v3710 = vpop.f32.mrb[0].mxu0
      %v3711 = vadd.f32 0.0, %v3710
      %v3712 = vpop.f32.mrb[0].mxu0
      %3713 = vmatprep.mubr.bf16.mxu0 0
      %3714 = vmatmul.mubr.bf16.gmra.mrb[0].mxu0 %v3545
      %v3715 = vpop.f32.mrb[0].mxu0
      %v3716 = vadd.f32 0.0, %v3715
      %v3717 = vpop.f32.mrb[0].mxu0
      %v3718 = vpop.f32.mrb[0].mxu0
      %v3719 = vadd.f32 0.0, %v3718
      %v3720 = vpop.f32.mrb[0].mxu0
      %3721 = vmatprep.mubr.bf16.mxu0 0
      %3722 = vmatmul.mubr.bf16.gmra.mrb[0].mxu0 %v3546
      %v3723 = vpop.f32.mrb[0].mxu0
      %v3724 = vadd.f32 0.0, %v3723
      %v3725 = vpop.f32.mrb[0].mxu0
      %v3726 = vpop.f32.mrb[0].mxu0
      %v3727 = vadd.f32 0.0, %v3726
      %v3728 = vpop.f32.mrb[0].mxu0
      %3729 = vmatprep.mubr.bf16.mxu0 0
      %3730 = vmatmul.mubr.bf16.gmra.mrb[0].mxu0 %v3547
      %v3731 = vpop.f32.mrb[0].mxu0
      %v3732 = vadd.f32 0.0, %v3731
      %v3733 = vpop.f32.mrb[0].mxu0
      %v3734 = vpop.f32.mrb[0].mxu0
      %v3735 = vadd.f32 0.0, %v3734
      %v3736 = vpop.f32.mrb[0].mxu0
      %3737 = vmatprep.mubr.bf16.mxu0 0
      %3738 = vmatmul.mubr.bf16.gmra.mrb[0].mxu0 %v3548
      %v3739 = vpop.f32.mrb[0].mxu0
      %v3740 = vadd.f32 0.0, %v3739
      %v3741 = vpop.f32.mrb[0].mxu0
      %v3742 = vpop.f32.mrb[0].mxu0
      %v3743 = vadd.f32 0.0, %v3742
      %v3744 = vpop.f32.mrb[0].mxu0
      %3745 = vmatprep.mubr.bf16.mxu0 0
      %3746 = vmatmul.mubr.bf16.gmra.mrb[0].mxu0 %v3549
      %v3747 = vpop.f32.mrb[0].mxu0
      %v3748 = vadd.f32 0.0, %v3747
      %v3749 = vpop.f32.mrb[0].mxu0
      %v3750 = vpop.f32.mrb[0].mxu0
      %v3751 = vadd.f32 0.0, %v3750
      %v3752 = vpop.f32.mrb[0].mxu0
      %3753 = vmatprep.mubr.bf16.mxu0 0
      %3754 = vmatmul.mubr.bf16.gmra.mrb[0].mxu0 %v3550
      %v3755 = vpop.f32.mrb[0].mxu0
      %v3756 = vadd.f32 0.0, %v3755
      %v3757 = vpop.f32.mrb[0].mxu0
      %v3758 = vpop.f32.mrb[0].mxu0
      %v3759 = vadd.f32 0.0, %v3758
      %v3760 = vpop.f32.mrb[0].mxu0
      %3761 = vmatprep.mubr.bf16.mxu0 0
      %3762 = vmatmul.mubr.bf16.gmra.mrb[0].mxu0 %v3551
      %v3763 = vpop.f32.mrb[0].mxu0
      %v3764 = vadd.f32 0.0, %v3763
      %v3765 = vpop.f32.mrb[0].mxu0
      %v3766 = vpop.f32.mrb[0].mxu0
      %v3767 = vadd.f32 0.0, %v3766
      %v3768 = vpop.f32.mrb[0].mxu0
      %3769 = vmatprep.mubr.bf16.mxu0 0
      %3770 = vmatmul.mubr.bf16.gmra.mrb[0].mxu0 %v3552
      %v3771 = vpop.f32.mrb[0].mxu0
      %v3772 = vadd.f32 0.0, %v3771
      %v3773 = vpop.f32.mrb[0].mxu0
      %v3774 = vpop.f32.mrb[0].mxu0
      %v3775 = vadd.f32 0.0, %v3774
      %v3776 = vpop.f32.mrb[0].mxu0
      %3777 = vdwg.mxu0
      %v3778 = vadd.f32 %v3391, %v3652
      %v3779 = vadd.f32 %v3392, %v3655
      %v3780 = vadd.f32 %v3393, %v3660
      %v3781 = vadd.f32 %v3394, %v3663
      %v3782 = vadd.f32 %v3395, %v3668
      %v3783 = vadd.f32 %v3396, %v3671
      %v3784 = vadd.f32 %v3397, %v3676
      %v3785 = vadd.f32 %v3398, %v3679
      %v3786 = vadd.f32 %v3399, %v3684
      %v3787 = vadd.f32 %v3400, %v3687
      %v3788 = vadd.f32 %v3401, %v3692
      %v3789 = vadd.f32 %v3402, %v3695
      %v3790 = vadd.f32 %v3403, %v3700
      %v3791 = vadd.f32 %v3404, %v3703
      %v3792 = vadd.f32 %v3405, %v3708
      %v3793 = vadd.f32 %v3406, %v3711
      %v3794 = vadd.f32 %v3407, %v3716
      %v3795 = vadd.f32 %v3408, %v3719
      %v3796 = vadd.f32 %v3409, %v3724
      %v3797 = vadd.f32 %v3410, %v3727
      %v3798 = vadd.f32 %v3411, %v3732
      %v3799 = vadd.f32 %v3412, %v3735
      %v3800 = vadd.f32 %v3413, %v3740
      %v3801 = vadd.f32 %v3414, %v3743
      %v3802 = vadd.f32 %v3415, %v3748
      %v3803 = vadd.f32 %v3416, %v3751
      %v3804 = vadd.f32 %v3417, %v3756
      %v3805 = vadd.f32 %v3418, %v3759
      %v3806 = vadd.f32 %v3419, %v3764
      %v3807 = vadd.f32 %v3420, %v3767
      %v3808 = vadd.f32 %v3421, %v3772
      %v3809 = vadd.f32 %v3422, %v3775
      %v3810 = vld [vmem:[%s3423] sm:$0xf]
      %v3811 = vld [vmem:[%s3423 + $0x4] sm:$0xf]
      %v3812 = vld [vmem:[%s3423 + $0x8] sm:$0x1]
      %v3813 = vld [vmem:[%s3423 + $0xc] sm:$0xf]
      %v3814 = vld [vmem:[%s3423 + $0x10] sm:$0xf]
      %v3815 = vld [vmem:[%s3423 + $0x14] sm:$0x1]
      %v3816 = vld [vmem:[%s3423 + $0x18] sm:$0xf]
      %v3817 = vld [vmem:[%s3423 + $0x1c] sm:$0xf]
      %v3818 = vld [vmem:[%s3423 + $0x20] sm:$0x1]
      %v3819 = vld [vmem:[%s3423 + $0x24] sm:$0xf]
      %v3820 = vld [vmem:[%s3423 + $0x28] sm:$0xf]
      %v3821 = vld [vmem:[%s3423 + $0x2c] sm:$0x1]
      %v3822 = vld [vmem:[%s3423 + $0x30] sm:$0xf]
      %v3823 = vld [vmem:[%s3423 + $0x34] sm:$0xf]
      %v3824 = vld [vmem:[%s3423 + $0x38] sm:$0x1]
      %v3825 = vld [vmem:[%s3423 + $0x3c] sm:$0xf]
      %v3826 = vld [vmem:[%s3423 + $0x40] sm:$0xf]
      %v3827 = vld [vmem:[%s3423 + $0x44] sm:$0x1]
      %v3828 = vld [vmem:[%s3423 + $0x48] sm:$0xf]
      %v3829 = vld [vmem:[%s3423 + $0x4c] sm:$0xf]
      %v3830 = vld [vmem:[%s3423 + $0x50] sm:$0x1]
      %v3831 = vld [vmem:[%s3423 + $0x54] sm:$0xf]
      %v3832 = vld [vmem:[%s3423 + $0x58] sm:$0xf]
      %v3833 = vld [vmem:[%s3423 + $0x5c] sm:$0x1]
      %v3834 = vld [vmem:[%s3423 + $0x60] sm:$0xf]
      %v3835 = vld [vmem:[%s3423 + $0x64] sm:$0xf]
      %v3836 = vld [vmem:[%s3423 + $0x68] sm:$0x1]
      %v3837 = vld [vmem:[%s3423 + $0x6c] sm:$0xf]
      %v3838 = vld [vmem:[%s3423 + $0x70] sm:$0xf]
      %v3839 = vld [vmem:[%s3423 + $0x74] sm:$0x1]
      %v3840 = vld [vmem:[%s3423 + $0x78] sm:$0xf]
      %v3841 = vld [vmem:[%s3423 + $0x7c] sm:$0xf]
      %v3842 = vld [vmem:[%s3423 + $0x80] sm:$0x1]
      %v3843 = vld [vmem:[%s3423 + $0x84] sm:$0xf]
      %v3844 = vld [vmem:[%s3423 + $0x88] sm:$0xf]
      %v3845 = vld [vmem:[%s3423 + $0x8c] sm:$0x1]
      %v3846 = vld [vmem:[%s3423 + $0x90] sm:$0xf]
      %v3847 = vld [vmem:[%s3423 + $0x94] sm:$0xf]
      %v3848 = vld [vmem:[%s3423 + $0x98] sm:$0x1]
      %v3849 = vld [vmem:[%s3423 + $0x9c] sm:$0xf]
      %v3850 = vld [vmem:[%s3423 + $0xa0] sm:$0xf]
      %v3851 = vld [vmem:[%s3423 + $0xa4] sm:$0x1]
      %v3852 = vld [vmem:[%s3423 + $0xa8] sm:$0xf]
      %v3853 = vld [vmem:[%s3423 + $0xac] sm:$0xf]
      %v3854 = vld [vmem:[%s3423 + $0xb0] sm:$0x1]
      %v3855 = vld [vmem:[%s3423 + $0xb4] sm:$0xf]
      %v3856 = vld [vmem:[%s3423 + $0xb8] sm:$0xf]
      %v3857 = vld [vmem:[%s3423 + $0xbc] sm:$0x1]
      %v3859 = vshrl.u32 %v3810, 16
      %v3861 = vrot.slane %v3859, 4
      %v3862 = vshll.u32 %v3810, 16
      %v3864 = vrot.slane %v3862, 5
      %v3865 = vor.u32 %v3861, %v3864
      %v3866 = vrot.slane %v3865, 4
      %v3868 = vshll.u32 %v3811, 16
      %v3870 = vrot.slane %v3868, 5
      %v3871 = vsel %vm319, %v3866, %v3870
      %v3872 = vshrl.u32 %v3811, 16
      %v3874 = vrot.slane %v3872, 4
      %v3875 = vor.u32 %v3874, %v3870
      %v3876 = vrot.slane %v3875, 4
      %v3878 = vshll.u32 %v3812, 16
      %v3880 = vrot.slane %v3878, 5
      %v3881 = vsel %vm319, %v3876, %v3880
      %v3883 = vshrl.u32 %v3813, 16
      %v3885 = vrot.slane %v3883, 4
      %v3886 = vshll.u32 %v3813, 16
      %v3888 = vrot.slane %v3886, 5
      %v3889 = vor.u32 %v3885, %v3888
      %v3890 = vrot.slane %v3889, 4
      %v3892 = vshll.u32 %v3814, 16
      %v3894 = vrot.slane %v3892, 5
      %v3895 = vsel %vm319, %v3890, %v3894
      %v3896 = vshrl.u32 %v3814, 16
      %v3898 = vrot.slane %v3896, 4
      %v3899 = vor.u32 %v3898, %v3894
      %v3900 = vrot.slane %v3899, 4
      %v3902 = vshll.u32 %v3815, 16
      %v3904 = vrot.slane %v3902, 5
      %v3905 = vsel %vm319, %v3900, %v3904
      %v3907 = vshrl.u32 %v3816, 16
      %v3909 = vrot.slane %v3907, 4
      %v3910 = vshll.u32 %v3816, 16
      %v3912 = vrot.slane %v3910, 5
      %v3913 = vor.u32 %v3909, %v3912
      %v3914 = vrot.slane %v3913, 4
      %v3916 = vshll.u32 %v3817, 16
      %v3918 = vrot.slane %v3916, 5
      %v3919 = vsel %vm319, %v3914, %v3918
      %v3920 = vshrl.u32 %v3817, 16
      %v3922 = vrot.slane %v3920, 4
      %v3923 = vor.u32 %v3922, %v3918
      %v3924 = vrot.slane %v3923, 4
      %v3926 = vshll.u32 %v3818, 16
      %v3928 = vrot.slane %v3926, 5
      %v3929 = vsel %vm319, %v3924, %v3928
      %v3931 = vshrl.u32 %v3819, 16
      %v3933 = vrot.slane %v3931, 4
      %v3934 = vshll.u32 %v3819, 16
      %v3936 = vrot.slane %v3934, 5
      %v3937 = vor.u32 %v3933, %v3936
      %v3938 = vrot.slane %v3937, 4
      %v3940 = vshll.u32 %v3820, 16
      %v3942 = vrot.slane %v3940, 5
      %v3943 = vsel %vm319, %v3938, %v3942
      %v3944 = vshrl.u32 %v3820, 16
      %v3946 = vrot.slane %v3944, 4
      %v3947 = vor.u32 %v3946, %v3942
      %v3948 = vrot.slane %v3947, 4
      %v3950 = vshll.u32 %v3821, 16
      %v3952 = vrot.slane %v3950, 5
      %v3953 = vsel %vm319, %v3948, %v3952
      %v3955 = vshrl.u32 %v3822, 16
      %v3957 = vrot.slane %v3955, 4
      %v3958 = vshll.u32 %v3822, 16
      %v3960 = vrot.slane %v3958, 5
      %v3961 = vor.u32 %v3957, %v3960
      %v3962 = vrot.slane %v3961, 4
      %v3964 = vshll.u32 %v3823, 16
      %v3966 = vrot.slane %v3964, 5
      %v3967 = vsel %vm319, %v3962, %v3966
      %v3968 = vshrl.u32 %v3823, 16
      %v3970 = vrot.slane %v3968, 4
      %v3971 = vor.u32 %v3970, %v3966
      %v3972 = vrot.slane %v3971, 4
      %v3974 = vshll.u32 %v3824, 16
      %v3976 = vrot.slane %v3974, 5
      %v3977 = vsel %vm319, %v3972, %v3976
      %v3979 = vshrl.u32 %v3825, 16
      %v3981 = vrot.slane %v3979, 4
      %v3982 = vshll.u32 %v3825, 16
      %v3984 = vrot.slane %v3982, 5
      %v3985 = vor.u32 %v3981, %v3984
      %v3986 = vrot.slane %v3985, 4
      %v3988 = vshll.u32 %v3826, 16
      %v3990 = vrot.slane %v3988, 5
      %v3991 = vsel %vm319, %v3986, %v3990
      %v3992 = vshrl.u32 %v3826, 16
      %v3994 = vrot.slane %v3992, 4
      %v3995 = vor.u32 %v3994, %v3990
      %v3996 = vrot.slane %v3995, 4
      %v3998 = vshll.u32 %v3827, 16
      %v4000 = vrot.slane %v3998, 5
      %v4001 = vsel %vm319, %v3996, %v4000
      %v4003 = vshrl.u32 %v3828, 16
      %v4005 = vrot.slane %v4003, 4
      %v4006 = vshll.u32 %v3828, 16
      %v4008 = vrot.slane %v4006, 5
      %v4009 = vor.u32 %v4005, %v4008
      %v4010 = vrot.slane %v4009, 4
      %v4012 = vshll.u32 %v3829, 16
      %v4014 = vrot.slane %v4012, 5
      %v4015 = vsel %vm319, %v4010, %v4014
      %v4016 = vshrl.u32 %v3829, 16
      %v4018 = vrot.slane %v4016, 4
      %v4019 = vor.u32 %v4018, %v4014
      %v4020 = vrot.slane %v4019, 4
      %v4022 = vshll.u32 %v3830, 16
      %v4024 = vrot.slane %v4022, 5
      %v4025 = vsel %vm319, %v4020, %v4024
      %v4027 = vshrl.u32 %v3831, 16
      %v4029 = vrot.slane %v4027, 4
      %v4030 = vshll.u32 %v3831, 16
      %v4032 = vrot.slane %v4030, 5
      %v4033 = vor.u32 %v4029, %v4032
      %v4034 = vrot.slane %v4033, 4
      %v4036 = vshll.u32 %v3832, 16
      %v4038 = vrot.slane %v4036, 5
      %v4039 = vsel %vm319, %v4034, %v4038
      %v4040 = vshrl.u32 %v3832, 16
      %v4042 = vrot.slane %v4040, 4
      %v4043 = vor.u32 %v4042, %v4038
      %v4044 = vrot.slane %v4043, 4
      %v4046 = vshll.u32 %v3833, 16
      %v4048 = vrot.slane %v4046, 5
      %v4049 = vsel %vm319, %v4044, %v4048
      %v4051 = vshrl.u32 %v3834, 16
      %v4053 = vrot.slane %v4051, 4
      %v4054 = vshll.u32 %v3834, 16
      %v4056 = vrot.slane %v4054, 5
      %v4057 = vor.u32 %v4053, %v4056
      %v4058 = vrot.slane %v4057, 4
      %v4060 = vshll.u32 %v3835, 16
      %v4062 = vrot.slane %v4060, 5
      %v4063 = vsel %vm319, %v4058, %v4062
      %v4064 = vshrl.u32 %v3835, 16
      %v4066 = vrot.slane %v4064, 4
      %v4067 = vor.u32 %v4066, %v4062
      %v4068 = vrot.slane %v4067, 4
      %v4070 = vshll.u32 %v3836, 16
      %v4072 = vrot.slane %v4070, 5
      %v4073 = vsel %vm319, %v4068, %v4072
      %v4075 = vshrl.u32 %v3837, 16
      %v4077 = vrot.slane %v4075, 4
      %v4078 = vshll.u32 %v3837, 16
      %v4080 = vrot.slane %v4078, 5
      %v4081 = vor.u32 %v4077, %v4080
      %v4082 = vrot.slane %v4081, 4
      %v4084 = vshll.u32 %v3838, 16
      %v4086 = vrot.slane %v4084, 5
      %v4087 = vsel %vm319, %v4082, %v4086
      %v4088 = vshrl.u32 %v3838, 16
      %v4090 = vrot.slane %v4088, 4
      %v4091 = vor.u32 %v4090, %v4086
      %v4092 = vrot.slane %v4091, 4
      %v4094 = vshll.u32 %v3839, 16
      %v4096 = vrot.slane %v4094, 5
      %v4097 = vsel %vm319, %v4092, %v4096
      %v4099 = vshrl.u32 %v3840, 16
      %v4101 = vrot.slane %v4099, 4
      %v4102 = vshll.u32 %v3840, 16
      %v4104 = vrot.slane %v4102, 5
      %v4105 = vor.u32 %v4101, %v4104
      %v4106 = vrot.slane %v4105, 4
      %v4108 = vshll.u32 %v3841, 16
      %v4110 = vrot.slane %v4108, 5
      %v4111 = vsel %vm319, %v4106, %v4110
      %v4112 = vshrl.u32 %v3841, 16
      %v4114 = vrot.slane %v4112, 4
      %v4115 = vor.u32 %v4114, %v4110
      %v4116 = vrot.slane %v4115, 4
      %v4118 = vshll.u32 %v3842, 16
      %v4120 = vrot.slane %v4118, 5
      %v4121 = vsel %vm319, %v4116, %v4120
      %v4123 = vshrl.u32 %v3843, 16
      %v4125 = vrot.slane %v4123, 4
      %v4126 = vshll.u32 %v3843, 16
      %v4128 = vrot.slane %v4126, 5
      %v4129 = vor.u32 %v4125, %v4128
      %v4130 = vrot.slane %v4129, 4
      %v4132 = vshll.u32 %v3844, 16
      %v4134 = vrot.slane %v4132, 5
      %v4135 = vsel %vm319, %v4130, %v4134
      %v4136 = vshrl.u32 %v3844, 16
      %v4138 = vrot.slane %v4136, 4
      %v4139 = vor.u32 %v4138, %v4134
      %v4140 = vrot.slane %v4139, 4
      %v4142 = vshll.u32 %v3845, 16
      %v4144 = vrot.slane %v4142, 5
      %v4145 = vsel %vm319, %v4140, %v4144
      %v4147 = vshrl.u32 %v3846, 16
      %v4149 = vrot.slane %v4147, 4
      %v4150 = vshll.u32 %v3846, 16
      %v4152 = vrot.slane %v4150, 5
      %v4153 = vor.u32 %v4149, %v4152
      %v4154 = vrot.slane %v4153, 4
      %v4156 = vshll.u32 %v3847, 16
      %v4158 = vrot.slane %v4156, 5
      %v4159 = vsel %vm319, %v4154, %v4158
      %v4160 = vshrl.u32 %v3847, 16
      %v4162 = vrot.slane %v4160, 4
      %v4163 = vor.u32 %v4162, %v4158
      %v4164 = vrot.slane %v4163, 4
      %v4166 = vshll.u32 %v3848, 16
      %v4168 = vrot.slane %v4166, 5
      %v4169 = vsel %vm319, %v4164, %v4168
      %v4171 = vshrl.u32 %v3849, 16
      %v4173 = vrot.slane %v4171, 4
      %v4174 = vshll.u32 %v3849, 16
      %v4176 = vrot.slane %v4174, 5
      %v4177 = vor.u32 %v4173, %v4176
      %v4178 = vrot.slane %v4177, 4
      %v4180 = vshll.u32 %v3850, 16
      %v4182 = vrot.slane %v4180, 5
      %v4183 = vsel %vm319, %v4178, %v4182
      %v4184 = vshrl.u32 %v3850, 16
      %v4186 = vrot.slane %v4184, 4
      %v4187 = vor.u32 %v4186, %v4182
      %v4188 = vrot.slane %v4187, 4
      %v4190 = vshll.u32 %v3851, 16
      %v4192 = vrot.slane %v4190, 5
      %v4193 = vsel %vm319, %v4188, %v4192
      %v4195 = vshrl.u32 %v3852, 16
      %v4197 = vrot.slane %v4195, 4
      %v4198 = vshll.u32 %v3852, 16
      %v4200 = vrot.slane %v4198, 5
      %v4201 = vor.u32 %v4197, %v4200
      %v4202 = vrot.slane %v4201, 4
      %v4204 = vshll.u32 %v3853, 16
      %v4206 = vrot.slane %v4204, 5
      %v4207 = vsel %vm319, %v4202, %v4206
      %v4208 = vshrl.u32 %v3853, 16
      %v4210 = vrot.slane %v4208, 4
      %v4211 = vor.u32 %v4210, %v4206
      %v4212 = vrot.slane %v4211, 4
      %v4214 = vshll.u32 %v3854, 16
      %v4216 = vrot.slane %v4214, 5
      %v4217 = vsel %vm319, %v4212, %v4216
      %v4219 = vshrl.u32 %v3855, 16
      %v4221 = vrot.slane %v4219, 4
      %v4222 = vshll.u32 %v3855, 16
      %v4224 = vrot.slane %v4222, 5
      %v4225 = vor.u32 %v4221, %v4224
      %v4226 = vrot.slane %v4225, 4
      %v4228 = vshll.u32 %v3856, 16
      %v4230 = vrot.slane %v4228, 5
      %v4231 = vsel %vm319, %v4226, %v4230
      %v4232 = vshrl.u32 %v3856, 16
      %v4234 = vrot.slane %v4232, 4
      %v4235 = vor.u32 %v4234, %v4230
      %v4236 = vrot.slane %v4235, 4
      %v4238 = vshll.u32 %v3857, 16
      %v4240 = vrot.slane %v4238, 5
      %v4241 = vsel %vm319, %v4236, %v4240
      %s4242 = scalar_lea.vmem %s1, 448
      %v4243 = vld [vmem:[%s4242] sm:$0xf]
      %v4244 = vld [vmem:[%s4242 + $0x4] sm:$0xf]
      %v4245 = vld [vmem:[%s4242 + $0x8] sm:$0xf]
      %v4246 = vld [vmem:[%s4242 + $0xc] sm:$0xf]
      %v4247 = vld [vmem:[%s4242 + $0x10] sm:$0xf]
      %v4248 = vld [vmem:[%s4242 + $0x14] sm:$0xf]
      %v4249 = vld [vmem:[%s4242 + $0x18] sm:$0xf]
      %v4250 = vld [vmem:[%s4242 + $0x1c] sm:$0xf]
      %v4251 = vld [vmem:[%s4242 + $0x20] sm:$0xf]
      %v4252 = vld [vmem:[%s4242 + $0x24] sm:$0xf]
      %v4253 = vld [vmem:[%s4242 + $0x28] sm:$0xf]
      %v4254 = vld [vmem:[%s4242 + $0x2c] sm:$0xf]
      %v4255 = vld [vmem:[%s4242 + $0x30] sm:$0xf]
      %v4256 = vld [vmem:[%s4242 + $0x34] sm:$0xf]
      %v4257 = vld [vmem:[%s4242 + $0x38] sm:$0xf]
      %v4258 = vld [vmem:[%s4242 + $0x3c] sm:$0xf]
      %v4259 = vunpack.c.l.b16 %v3871
      %v4260 = vunpack.c.l.b16 %v3881
      %v4261 = vunpack.c.l.b16 %v3895
      %v4262 = vunpack.c.l.b16 %v3905
      %v4263 = vunpack.c.l.b16 %v3919
      %v4264 = vunpack.c.l.b16 %v3929
      %v4265 = vunpack.c.l.b16 %v3943
      %v4266 = vunpack.c.l.b16 %v3953
      %v4267 = vunpack.c.l.b16 %v3967
      %v4268 = vunpack.c.l.b16 %v3977
      %v4269 = vunpack.c.l.b16 %v3991
      %v4270 = vunpack.c.l.b16 %v4001
      %v4271 = vunpack.c.l.b16 %v4015
      %v4272 = vunpack.c.l.b16 %v4025
      %v4273 = vunpack.c.l.b16 %v4039
      %v4274 = vunpack.c.l.b16 %v4049
      %v4275 = vunpack.c.l.b16 %v4063
      %v4276 = vunpack.c.l.b16 %v4073
      %v4277 = vunpack.c.l.b16 %v4087
      %v4278 = vunpack.c.l.b16 %v4097
      %v4279 = vunpack.c.l.b16 %v4111
      %v4280 = vunpack.c.l.b16 %v4121
      %v4281 = vunpack.c.l.b16 %v4135
      %v4282 = vunpack.c.l.b16 %v4145
      %v4283 = vunpack.c.l.b16 %v4159
      %v4284 = vunpack.c.l.b16 %v4169
      %v4285 = vunpack.c.l.b16 %v4183
      %v4286 = vunpack.c.l.b16 %v4193
      %v4287 = vunpack.c.l.b16 %v4207
      %v4288 = vunpack.c.l.b16 %v4217
      %v4289 = vunpack.c.l.b16 %v4231
      %v4290 = vunpack.c.l.b16 %v4241
      %v4291 = vpack.c.b16 %v4260, %v4259
      %v4292 = vpack.c.b16 %v4262, %v4261
      %v4293 = vpack.c.b16 %v4264, %v4263
      %v4294 = vpack.c.b16 %v4266, %v4265
      %v4295 = vpack.c.b16 %v4268, %v4267
      %v4296 = vpack.c.b16 %v4270, %v4269
      %v4297 = vpack.c.b16 %v4272, %v4271
      %v4298 = vpack.c.b16 %v4274, %v4273
      %v4299 = vpack.c.b16 %v4276, %v4275
      %v4300 = vpack.c.b16 %v4278, %v4277
      %v4301 = vpack.c.b16 %v4280, %v4279
      %v4302 = vpack.c.b16 %v4282, %v4281
      %v4303 = vpack.c.b16 %v4284, %v4283
      %v4304 = vpack.c.b16 %v4286, %v4285
      %v4305 = vpack.c.b16 %v4288, %v4287
      %v4306 = vpack.c.b16 %v4290, %v4289
      %v4339 = vunpack.c.l.b16 %v4243
      %v4340 = vunpack.c.l.b16 %v4244
      %v4341 = vunpack.c.l.b16 %v4245
      %v4342 = vunpack.c.l.b16 %v4246
      %v4343 = vunpack.c.l.b16 %v4247
      %v4344 = vunpack.c.l.b16 %v4248
      %v4345 = vunpack.c.l.b16 %v4249
      %v4346 = vunpack.c.l.b16 %v4250
      %v4347 = vunpack.c.l.b16 %v4251
      %v4348 = vunpack.c.l.b16 %v4252
      %v4349 = vunpack.c.l.b16 %v4253
      %v4350 = vunpack.c.l.b16 %v4254
      %v4351 = vunpack.c.l.b16 %v4255
      %v4352 = vunpack.c.l.b16 %v4256
      %v4353 = vunpack.c.l.b16 %v4257
      %v4354 = vunpack.c.l.b16 %v4258
      %v4355 = vpack.c.b16 %v4340, %v4339
      %v4356 = vpack.c.b16 %v4342, %v4341
      %v4357 = vpack.c.b16 %v4344, %v4343
      %v4358 = vpack.c.b16 %v4346, %v4345
      %v4359 = vpack.c.b16 %v4348, %v4347
      %v4360 = vpack.c.b16 %v4350, %v4349
      %v4361 = vpack.c.b16 %v4352, %v4351
      %v4362 = vpack.c.b16 %v4354, %v4353
      %4371 = vmatprep.subr.bf16.mxu0 0
      %4372 = vmatpush1.bf16.msra.mxu0 %v4355
      %4373 = vmatprep.subr.bf16.mxu0 0
      %4374 = vmatpush1.bf16.msra.mxu0 %v4356
      %4375 = vmatprep.subr.bf16.mxu0 0
      %4376 = vmatpush1.bf16.msra.mxu0 %v4357
      %4377 = vmatprep.subr.bf16.mxu0 0
      %4378 = vmatpush1.bf16.msra.mxu0 %v4358
      %4379 = vmatprep.subr.bf16.mxu0 0
      %4380 = vmatpush1.bf16.msra.mxu0 %v4359
      %4381 = vmatprep.subr.bf16.mxu0 0
      %4382 = vmatpush1.bf16.msra.mxu0 %v4360
      %4383 = vmatprep.subr.bf16.mxu0 0
      %4384 = vmatpush1.bf16.msra.mxu0 %v4361
      %4385 = vmatprep.subr.bf16.mxu0 0
      %4386 = vmatpush1.bf16.msra.mxu0 %v4362
      %4387 = vmatprep.subr.bf16.mxu0 0
      %4388 = vmatpush1.bf16.msra.mxu0 0
      %4389 = vmatprep.subr.bf16.mxu0 0
      %4390 = vmatpush1.bf16.msra.mxu0 0
      %4391 = vmatprep.subr.bf16.mxu0 0
      %4392 = vmatpush1.bf16.msra.mxu0 0
      %4393 = vmatprep.subr.bf16.mxu0 0
      %4394 = vmatpush1.bf16.msra.mxu0 0
      %4395 = vmatprep.subr.bf16.mxu0 0
      %4396 = vmatpush1.bf16.msra.mxu0 0
      %4397 = vmatprep.subr.bf16.mxu0 0
      %4398 = vmatpush1.bf16.msra.mxu0 0
      %4399 = vmatprep.subr.bf16.mxu0 0
      %4400 = vmatpush1.bf16.msra.mxu0 0
      %4401 = vmatprep.subr.bf16.mxu0 0
      %4402 = vmatpush1.bf16.msra.mxu0 0
      %4403 = vmatprep.mubr.bf16.mxu0 0
      %4404 = vmatmul.mubr.bf16.gmra.mrb[0].mxu0 %v4291
      %v4405 = vpop.f32.mrb[0].mxu0
      %v4406 = vadd.f32 0.0, %v4405
      %v4407 = vpop.f32.mrb[0].mxu0
      %v4408 = vpop.f32.mrb[0].mxu0
      %v4409 = vadd.f32 0.0, %v4408
      %v4410 = vpop.f32.mrb[0].mxu0
      %4411 = vmatprep.mubr.bf16.mxu0 0
      %4412 = vmatmul.mubr.bf16.gmra.mrb[0].mxu0 %v4292
      %v4413 = vpop.f32.mrb[0].mxu0
      %v4414 = vadd.f32 0.0, %v4413
      %v4415 = vpop.f32.mrb[0].mxu0
      %v4416 = vpop.f32.mrb[0].mxu0
      %v4417 = vadd.f32 0.0, %v4416
      %v4418 = vpop.f32.mrb[0].mxu0
      %4419 = vmatprep.mubr.bf16.mxu0 0
      %4420 = vmatmul.mubr.bf16.gmra.mrb[0].mxu0 %v4293
      %v4421 = vpop.f32.mrb[0].mxu0
      %v4422 = vadd.f32 0.0, %v4421
      %v4423 = vpop.f32.mrb[0].mxu0
      %v4424 = vpop.f32.mrb[0].mxu0
      %v4425 = vadd.f32 0.0, %v4424
      %v4426 = vpop.f32.mrb[0].mxu0
      %4427 = vmatprep.mubr.bf16.mxu0 0
      %4428 = vmatmul.mubr.bf16.gmra.mrb[0].mxu0 %v4294
      %v4429 = vpop.f32.mrb[0].mxu0
      %v4430 = vadd.f32 0.0, %v4429
      %v4431 = vpop.f32.mrb[0].mxu0
      %v4432 = vpop.f32.mrb[0].mxu0
      %v4433 = vadd.f32 0.0, %v4432
      %v4434 = vpop.f32.mrb[0].mxu0
      %4435 = vmatprep.mubr.bf16.mxu0 0
      %4436 = vmatmul.mubr.bf16.gmra.mrb[0].mxu0 %v4295
      %v4437 = vpop.f32.mrb[0].mxu0
      %v4438 = vadd.f32 0.0, %v4437
      %v4439 = vpop.f32.mrb[0].mxu0
      %v4440 = vpop.f32.mrb[0].mxu0
      %v4441 = vadd.f32 0.0, %v4440
      %v4442 = vpop.f32.mrb[0].mxu0
      %4443 = vmatprep.mubr.bf16.mxu0 0
      %4444 = vmatmul.mubr.bf16.gmra.mrb[0].mxu0 %v4296
      %v4445 = vpop.f32.mrb[0].mxu0
      %v4446 = vadd.f32 0.0, %v4445
      %v4447 = vpop.f32.mrb[0].mxu0
      %v4448 = vpop.f32.mrb[0].mxu0
      %v4449 = vadd.f32 0.0, %v4448
      %v4450 = vpop.f32.mrb[0].mxu0
      %4451 = vmatprep.mubr.bf16.mxu0 0
      %4452 = vmatmul.mubr.bf16.gmra.mrb[0].mxu0 %v4297
      %v4453 = vpop.f32.mrb[0].mxu0
      %v4454 = vadd.f32 0.0, %v4453
      %v4455 = vpop.f32.mrb[0].mxu0
      %v4456 = vpop.f32.mrb[0].mxu0
      %v4457 = vadd.f32 0.0, %v4456
      %v4458 = vpop.f32.mrb[0].mxu0
      %4459 = vmatprep.mubr.bf16.mxu0 0
      %4460 = vmatmul.mubr.bf16.gmra.mrb[0].mxu0 %v4298
      %v4461 = vpop.f32.mrb[0].mxu0
      %v4462 = vadd.f32 0.0, %v4461
      %v4463 = vpop.f32.mrb[0].mxu0
      %v4464 = vpop.f32.mrb[0].mxu0
      %v4465 = vadd.f32 0.0, %v4464
      %v4466 = vpop.f32.mrb[0].mxu0
      %4467 = vmatprep.mubr.bf16.mxu0 0
      %4468 = vmatmul.mubr.bf16.gmra.mrb[0].mxu0 %v4299
      %v4469 = vpop.f32.mrb[0].mxu0
      %v4470 = vadd.f32 0.0, %v4469
      %v4471 = vpop.f32.mrb[0].mxu0
      %v4472 = vpop.f32.mrb[0].mxu0
      %v4473 = vadd.f32 0.0, %v4472
      %v4474 = vpop.f32.mrb[0].mxu0
      %4475 = vmatprep.mubr.bf16.mxu0 0
      %4476 = vmatmul.mubr.bf16.gmra.mrb[0].mxu0 %v4300
      %v4477 = vpop.f32.mrb[0].mxu0
      %v4478 = vadd.f32 0.0, %v4477
      %v4479 = vpop.f32.mrb[0].mxu0
      %v4480 = vpop.f32.mrb[0].mxu0
      %v4481 = vadd.f32 0.0, %v4480
      %v4482 = vpop.f32.mrb[0].mxu0
      %4483 = vmatprep.mubr.bf16.mxu0 0
      %4484 = vmatmul.mubr.bf16.gmra.mrb[0].mxu0 %v4301
      %v4485 = vpop.f32.mrb[0].mxu0
      %v4486 = vadd.f32 0.0, %v4485
      %v4487 = vpop.f32.mrb[0].mxu0
      %v4488 = vpop.f32.mrb[0].mxu0
      %v4489 = vadd.f32 0.0, %v4488
      %v4490 = vpop.f32.mrb[0].mxu0
      %4491 = vmatprep.mubr.bf16.mxu0 0
      %4492 = vmatmul.mubr.bf16.gmra.mrb[0].mxu0 %v4302
      %v4493 = vpop.f32.mrb[0].mxu0
      %v4494 = vadd.f32 0.0, %v4493
      %v4495 = vpop.f32.mrb[0].mxu0
      %v4496 = vpop.f32.mrb[0].mxu0
      %v4497 = vadd.f32 0.0, %v4496
      %v4498 = vpop.f32.mrb[0].mxu0
      %4499 = vmatprep.mubr.bf16.mxu0 0
      %4500 = vmatmul.mubr.bf16.gmra.mrb[0].mxu0 %v4303
      %v4501 = vpop.f32.mrb[0].mxu0
      %v4502 = vadd.f32 0.0, %v4501
      %v4503 = vpop.f32.mrb[0].mxu0
      %v4504 = vpop.f32.mrb[0].mxu0
      %v4505 = vadd.f32 0.0, %v4504
      %v4506 = vpop.f32.mrb[0].mxu0
      %4507 = vmatprep.mubr.bf16.mxu0 0
      %4508 = vmatmul.mubr.bf16.gmra.mrb[0].mxu0 %v4304
      %v4509 = vpop.f32.mrb[0].mxu0
      %v4510 = vadd.f32 0.0, %v4509
      %v4511 = vpop.f32.mrb[0].mxu0
      %v4512 = vpop.f32.mrb[0].mxu0
      %v4513 = vadd.f32 0.0, %v4512
      %v4514 = vpop.f32.mrb[0].mxu0
      %4515 = vmatprep.mubr.bf16.mxu0 0
      %4516 = vmatmul.mubr.bf16.gmra.mrb[0].mxu0 %v4305
      %v4517 = vpop.f32.mrb[0].mxu0
      %v4518 = vadd.f32 0.0, %v4517
      %v4519 = vpop.f32.mrb[0].mxu0
      %v4520 = vpop.f32.mrb[0].mxu0
      %v4521 = vadd.f32 0.0, %v4520
      %v4522 = vpop.f32.mrb[0].mxu0
      %4523 = vmatprep.mubr.bf16.mxu0 0
      %4524 = vmatmul.mubr.bf16.gmra.mrb[0].mxu0 %v4306
      %v4525 = vpop.f32.mrb[0].mxu0
      %v4526 = vadd.f32 0.0, %v4525
      %v4527 = vpop.f32.mrb[0].mxu0
      %v4528 = vpop.f32.mrb[0].mxu0
      %v4529 = vadd.f32 0.0, %v4528
      %v4530 = vpop.f32.mrb[0].mxu0
      %4531 = vdwg.mxu0
      %v4532 = vadd.f32 %v3778, %v4406
      %v4533 = vadd.f32 %v3779, %v4409
      %v4534 = vadd.f32 %v3780, %v4414
      %v4535 = vadd.f32 %v3781, %v4417
      %v4536 = vadd.f32 %v3782, %v4422
      %v4537 = vadd.f32 %v3783, %v4425
      %v4538 = vadd.f32 %v3784, %v4430
      %v4539 = vadd.f32 %v3785, %v4433
      %v4540 = vadd.f32 %v3786, %v4438
      %v4541 = vadd.f32 %v3787, %v4441
      %v4542 = vadd.f32 %v3788, %v4446
      %v4543 = vadd.f32 %v3789, %v4449
      %v4544 = vadd.f32 %v3790, %v4454
      %v4545 = vadd.f32 %v3791, %v4457
      %v4546 = vadd.f32 %v3792, %v4462
      %v4547 = vadd.f32 %v3793, %v4465
      %v4548 = vadd.f32 %v3794, %v4470
      %v4549 = vadd.f32 %v3795, %v4473
      %v4550 = vadd.f32 %v3796, %v4478
      %v4551 = vadd.f32 %v3797, %v4481
      %v4552 = vadd.f32 %v3798, %v4486
      %v4553 = vadd.f32 %v3799, %v4489
      %v4554 = vadd.f32 %v3800, %v4494
      %v4555 = vadd.f32 %v3801, %v4497
      %v4556 = vadd.f32 %v3802, %v4502
      %v4557 = vadd.f32 %v3803, %v4505
      %v4558 = vadd.f32 %v3804, %v4510
      %v4559 = vadd.f32 %v3805, %v4513
      %v4560 = vadd.f32 %v3806, %v4518
      %v4561 = vadd.f32 %v3807, %v4521
      %v4562 = vadd.f32 %v3808, %v4526
      %v4563 = vadd.f32 %v3809, %v4529
      %v4564 = vld [vmem:[%s3423] sm:$0xe]
      %v4565 = vld [vmem:[%s3423 + $0xc] sm:$0xe]
      %v4566 = vld [vmem:[%s3423 + $0x18] sm:$0xe]
      %v4567 = vld [vmem:[%s3423 + $0x24] sm:$0xe]
      %v4568 = vld [vmem:[%s3423 + $0x30] sm:$0xe]
      %v4569 = vld [vmem:[%s3423 + $0x3c] sm:$0xe]
      %v4570 = vld [vmem:[%s3423 + $0x48] sm:$0xe]
      %v4571 = vld [vmem:[%s3423 + $0x54] sm:$0xe]
      %v4572 = vld [vmem:[%s3423 + $0x60] sm:$0xe]
      %v4573 = vld [vmem:[%s3423 + $0x6c] sm:$0xe]
      %v4574 = vld [vmem:[%s3423 + $0x78] sm:$0xe]
      %v4575 = vld [vmem:[%s3423 + $0x84] sm:$0xe]
      %v4576 = vld [vmem:[%s3423 + $0x90] sm:$0xe]
      %v4577 = vld [vmem:[%s3423 + $0x9c] sm:$0xe]
      %v4578 = vld [vmem:[%s3423 + $0xa8] sm:$0xe]
      %v4579 = vld [vmem:[%s3423 + $0xb4] sm:$0xe]
      %v4628 = vrot.slane %v4564, 5
      %v4629 = vrot.slane %v4628, 4
      %v4630 = vrot.slane %v3811, 5
      %v4631 = vsel %vm1349, %v4629, %v4630
      %v4632 = vrot.slane %v4630, 4
      %v4633 = vrot.slane %v3812, 5
      %v4634 = vsel %vm1349, %v4632, %v4633
      %v4635 = vrot.slane %v4565, 5
      %v4636 = vrot.slane %v4635, 4
      %v4637 = vrot.slane %v3814, 5
      %v4638 = vsel %vm1349, %v4636, %v4637
      %v4639 = vrot.slane %v4637, 4
      %v4640 = vrot.slane %v3815, 5
      %v4641 = vsel %vm1349, %v4639, %v4640
      %v4642 = vrot.slane %v4566, 5
      %v4643 = vrot.slane %v4642, 4
      %v4644 = vrot.slane %v3817, 5
      %v4645 = vsel %vm1349, %v4643, %v4644
      %v4646 = vrot.slane %v4644, 4
      %v4647 = vrot.slane %v3818, 5
      %v4648 = vsel %vm1349, %v4646, %v4647
      %v4649 = vrot.slane %v4567, 5
      %v4650 = vrot.slane %v4649, 4
      %v4651 = vrot.slane %v3820, 5
      %v4652 = vsel %vm1349, %v4650, %v4651
      %v4653 = vrot.slane %v4651, 4
      %v4654 = vrot.slane %v3821, 5
      %v4655 = vsel %vm1349, %v4653, %v4654
      %v4656 = vrot.slane %v4568, 5
      %v4657 = vrot.slane %v4656, 4
      %v4658 = vrot.slane %v3823, 5
      %v4659 = vsel %vm1349, %v4657, %v4658
      %v4660 = vrot.slane %v4658, 4
      %v4661 = vrot.slane %v3824, 5
      %v4662 = vsel %vm1349, %v4660, %v4661
      %v4663 = vrot.slane %v4569, 5
      %v4664 = vrot.slane %v4663, 4
      %v4665 = vrot.slane %v3826, 5
      %v4666 = vsel %vm1349, %v4664, %v4665
      %v4667 = vrot.slane %v4665, 4
      %v4668 = vrot.slane %v3827, 5
      %v4669 = vsel %vm1349, %v4667, %v4668
      %v4670 = vrot.slane %v4570, 5
      %v4671 = vrot.slane %v4670, 4
      %v4672 = vrot.slane %v3829, 5
      %v4673 = vsel %vm1349, %v4671, %v4672
      %v4674 = vrot.slane %v4672, 4
      %v4675 = vrot.slane %v3830, 5
      %v4676 = vsel %vm1349, %v4674, %v4675
      %v4677 = vrot.slane %v4571, 5
      %v4678 = vrot.slane %v4677, 4
      %v4679 = vrot.slane %v3832, 5
      %v4680 = vsel %vm1349, %v4678, %v4679
      %v4681 = vrot.slane %v4679, 4
      %v4682 = vrot.slane %v3833, 5
      %v4683 = vsel %vm1349, %v4681, %v4682
      %v4684 = vrot.slane %v4572, 5
      %v4685 = vrot.slane %v4684, 4
      %v4686 = vrot.slane %v3835, 5
      %v4687 = vsel %vm1349, %v4685, %v4686
      %v4688 = vrot.slane %v4686, 4
      %v4689 = vrot.slane %v3836, 5
      %v4690 = vsel %vm1349, %v4688, %v4689
      %v4691 = vrot.slane %v4573, 5
      %v4692 = vrot.slane %v4691, 4
      %v4693 = vrot.slane %v3838, 5
      %v4694 = vsel %vm1349, %v4692, %v4693
      %v4695 = vrot.slane %v4693, 4
      %v4696 = vrot.slane %v3839, 5
      %v4697 = vsel %vm1349, %v4695, %v4696
      %v4698 = vrot.slane %v4574, 5
      %v4699 = vrot.slane %v4698, 4
      %v4700 = vrot.slane %v3841, 5
      %v4701 = vsel %vm1349, %v4699, %v4700
      %v4702 = vrot.slane %v4700, 4
      %v4703 = vrot.slane %v3842, 5
      %v4704 = vsel %vm1349, %v4702, %v4703
      %v4705 = vrot.slane %v4575, 5
      %v4706 = vrot.slane %v4705, 4
      %v4707 = vrot.slane %v3844, 5
      %v4708 = vsel %vm1349, %v4706, %v4707
      %v4709 = vrot.slane %v4707, 4
      %v4710 = vrot.slane %v3845, 5
      %v4711 = vsel %vm1349, %v4709, %v4710
      %v4712 = vrot.slane %v4576, 5
      %v4713 = vrot.slane %v4712, 4
      %v4714 = vrot.slane %v3847, 5
      %v4715 = vsel %vm1349, %v4713, %v4714
      %v4716 = vrot.slane %v4714, 4
      %v4717 = vrot.slane %v3848, 5
      %v4718 = vsel %vm1349, %v4716, %v4717
      %v4719 = vrot.slane %v4577, 5
      %v4720 = vrot.slane %v4719, 4
      %v4721 = vrot.slane %v3850, 5
      %v4722 = vsel %vm1349, %v4720, %v4721
      %v4723 = vrot.slane %v4721, 4
      %v4724 = vrot.slane %v3851, 5
      %v4725 = vsel %vm1349, %v4723, %v4724
      %v4726 = vrot.slane %v4578, 5
      %v4727 = vrot.slane %v4726, 4
      %v4728 = vrot.slane %v3853, 5
      %v4729 = vsel %vm1349, %v4727, %v4728
      %v4730 = vrot.slane %v4728, 4
      %v4731 = vrot.slane %v3854, 5
      %v4732 = vsel %vm1349, %v4730, %v4731
      %v4733 = vrot.slane %v4579, 5
      %v4734 = vrot.slane %v4733, 4
      %v4735 = vrot.slane %v3856, 5
      %v4736 = vsel %vm1349, %v4734, %v4735
      %v4737 = vrot.slane %v4735, 4
      %v4738 = vrot.slane %v3857, 5
      %v4739 = vsel %vm1349, %v4737, %v4738
      %s4740 = scalar_lea.vmem %s1, 512
      %v4741 = vld [vmem:[%s4740] sm:$0xf]
      %v4742 = vld [vmem:[%s4740 + $0x4] sm:$0xf]
      %v4743 = vld [vmem:[%s4740 + $0x8] sm:$0xf]
      %v4744 = vld [vmem:[%s4740 + $0xc] sm:$0xf]
      %v4745 = vld [vmem:[%s4740 + $0x10] sm:$0xf]
      %v4746 = vld [vmem:[%s4740 + $0x14] sm:$0xf]
      %v4747 = vld [vmem:[%s4740 + $0x18] sm:$0xf]
      %v4748 = vld [vmem:[%s4740 + $0x1c] sm:$0xf]
      %v4749 = vld [vmem:[%s4740 + $0x20] sm:$0xf]
      %v4750 = vld [vmem:[%s4740 + $0x24] sm:$0xf]
      %v4751 = vld [vmem:[%s4740 + $0x28] sm:$0xf]
      %v4752 = vld [vmem:[%s4740 + $0x2c] sm:$0xf]
      %v4753 = vld [vmem:[%s4740 + $0x30] sm:$0xf]
      %v4754 = vld [vmem:[%s4740 + $0x34] sm:$0xf]
      %v4755 = vld [vmem:[%s4740 + $0x38] sm:$0xf]
      %v4756 = vld [vmem:[%s4740 + $0x3c] sm:$0xf]
      %v4757 = vunpack.c.l.b16 %v4631
      %v4758 = vunpack.c.l.b16 %v4634
      %v4759 = vunpack.c.l.b16 %v4638
      %v4760 = vunpack.c.l.b16 %v4641
      %v4761 = vunpack.c.l.b16 %v4645
      %v4762 = vunpack.c.l.b16 %v4648
      %v4763 = vunpack.c.l.b16 %v4652
      %v4764 = vunpack.c.l.b16 %v4655
      %v4765 = vunpack.c.l.b16 %v4659
      %v4766 = vunpack.c.l.b16 %v4662
      %v4767 = vunpack.c.l.b16 %v4666
      %v4768 = vunpack.c.l.b16 %v4669
      %v4769 = vunpack.c.l.b16 %v4673
      %v4770 = vunpack.c.l.b16 %v4676
      %v4771 = vunpack.c.l.b16 %v4680
      %v4772 = vunpack.c.l.b16 %v4683
      %v4773 = vunpack.c.l.b16 %v4687
      %v4774 = vunpack.c.l.b16 %v4690
      %v4775 = vunpack.c.l.b16 %v4694
      %v4776 = vunpack.c.l.b16 %v4697
      %v4777 = vunpack.c.l.b16 %v4701
      %v4778 = vunpack.c.l.b16 %v4704
      %v4779 = vunpack.c.l.b16 %v4708
      %v4780 = vunpack.c.l.b16 %v4711
      %v4781 = vunpack.c.l.b16 %v4715
      %v4782 = vunpack.c.l.b16 %v4718
      %v4783 = vunpack.c.l.b16 %v4722
      %v4784 = vunpack.c.l.b16 %v4725
      %v4785 = vunpack.c.l.b16 %v4729
      %v4786 = vunpack.c.l.b16 %v4732
      %v4787 = vunpack.c.l.b16 %v4736
      %v4788 = vunpack.c.l.b16 %v4739
      %v4789 = vpack.c.b16 %v4758, %v4757
      %v4790 = vpack.c.b16 %v4760, %v4759
      %v4791 = vpack.c.b16 %v4762, %v4761
      %v4792 = vpack.c.b16 %v4764, %v4763
      %v4793 = vpack.c.b16 %v4766, %v4765
      %v4794 = vpack.c.b16 %v4768, %v4767
      %v4795 = vpack.c.b16 %v4770, %v4769
      %v4796 = vpack.c.b16 %v4772, %v4771
      %v4797 = vpack.c.b16 %v4774, %v4773
      %v4798 = vpack.c.b16 %v4776, %v4775
      %v4799 = vpack.c.b16 %v4778, %v4777
      %v4800 = vpack.c.b16 %v4780, %v4779
      %v4801 = vpack.c.b16 %v4782, %v4781
      %v4802 = vpack.c.b16 %v4784, %v4783
      %v4803 = vpack.c.b16 %v4786, %v4785
      %v4804 = vpack.c.b16 %v4788, %v4787
      %v4837 = vunpack.c.l.b16 %v4741
      %v4838 = vunpack.c.l.b16 %v4742
      %v4839 = vunpack.c.l.b16 %v4743
      %v4840 = vunpack.c.l.b16 %v4744
      %v4841 = vunpack.c.l.b16 %v4745
      %v4842 = vunpack.c.l.b16 %v4746
      %v4843 = vunpack.c.l.b16 %v4747
      %v4844 = vunpack.c.l.b16 %v4748
      %v4845 = vunpack.c.l.b16 %v4749
      %v4846 = vunpack.c.l.b16 %v4750
      %v4847 = vunpack.c.l.b16 %v4751
      %v4848 = vunpack.c.l.b16 %v4752
      %v4849 = vunpack.c.l.b16 %v4753
      %v4850 = vunpack.c.l.b16 %v4754
      %v4851 = vunpack.c.l.b16 %v4755
      %v4852 = vunpack.c.l.b16 %v4756
      %v4853 = vpack.c.b16 %v4838, %v4837
      %v4854 = vpack.c.b16 %v4840, %v4839
      %v4855 = vpack.c.b16 %v4842, %v4841
      %v4856 = vpack.c.b16 %v4844, %v4843
      %v4857 = vpack.c.b16 %v4846, %v4845
      %v4858 = vpack.c.b16 %v4848, %v4847
      %v4859 = vpack.c.b16 %v4850, %v4849
      %v4860 = vpack.c.b16 %v4852, %v4851
      %4869 = vmatprep.subr.bf16.mxu0 0
      %4870 = vmatpush1.bf16.msra.mxu0 %v4853
      %4871 = vmatprep.subr.bf16.mxu0 0
      %4872 = vmatpush1.bf16.msra.mxu0 %v4854
      %4873 = vmatprep.subr.bf16.mxu0 0
      %4874 = vmatpush1.bf16.msra.mxu0 %v4855
      %4875 = vmatprep.subr.bf16.mxu0 0
      %4876 = vmatpush1.bf16.msra.mxu0 %v4856
      %4877 = vmatprep.subr.bf16.mxu0 0
      %4878 = vmatpush1.bf16.msra.mxu0 %v4857
      %4879 = vmatprep.subr.bf16.mxu0 0
      %4880 = vmatpush1.bf16.msra.mxu0 %v4858
      %4881 = vmatprep.subr.bf16.mxu0 0
      %4882 = vmatpush1.bf16.msra.mxu0 %v4859
      %4883 = vmatprep.subr.bf16.mxu0 0
      %4884 = vmatpush1.bf16.msra.mxu0 %v4860
      %4885 = vmatprep.subr.bf16.mxu0 0
      %4886 = vmatpush1.bf16.msra.mxu0 0
      %4887 = vmatprep.subr.bf16.mxu0 0
      %4888 = vmatpush1.bf16.msra.mxu0 0
      %4889 = vmatprep.subr.bf16.mxu0 0
      %4890 = vmatpush1.bf16.msra.mxu0 0
      %4891 = vmatprep.subr.bf16.mxu0 0
      %4892 = vmatpush1.bf16.msra.mxu0 0
      %4893 = vmatprep.subr.bf16.mxu0 0
      %4894 = vmatpush1.bf16.msra.mxu0 0
      %4895 = vmatprep.subr.bf16.mxu0 0
      %4896 = vmatpush1.bf16.msra.mxu0 0
      %4897 = vmatprep.subr.bf16.mxu0 0
      %4898 = vmatpush1.bf16.msra.mxu0 0
      %4899 = vmatprep.subr.bf16.mxu0 0
      %4900 = vmatpush1.bf16.msra.mxu0 0
      %4901 = vmatprep.mubr.bf16.mxu0 0
      %4902 = vmatmul.mubr.bf16.gmra.mrb[0].mxu0 %v4789
      %v4903 = vpop.f32.mrb[0].mxu0
      %v4904 = vadd.f32 0.0, %v4903
      %v4905 = vpop.f32.mrb[0].mxu0
      %v4906 = vpop.f32.mrb[0].mxu0
      %v4907 = vadd.f32 0.0, %v4906
      %v4908 = vpop.f32.mrb[0].mxu0
      %4909 = vmatprep.mubr.bf16.mxu0 0
      %4910 = vmatmul.mubr.bf16.gmra.mrb[0].mxu0 %v4790
      %v4911 = vpop.f32.mrb[0].mxu0
      %v4912 = vadd.f32 0.0, %v4911
      %v4913 = vpop.f32.mrb[0].mxu0
      %v4914 = vpop.f32.mrb[0].mxu0
      %v4915 = vadd.f32 0.0, %v4914
      %v4916 = vpop.f32.mrb[0].mxu0
      %4917 = vmatprep.mubr.bf16.mxu0 0
      %4918 = vmatmul.mubr.bf16.gmra.mrb[0].mxu0 %v4791
      %v4919 = vpop.f32.mrb[0].mxu0
      %v4920 = vadd.f32 0.0, %v4919
      %v4921 = vpop.f32.mrb[0].mxu0
      %v4922 = vpop.f32.mrb[0].mxu0
      %v4923 = vadd.f32 0.0, %v4922
      %v4924 = vpop.f32.mrb[0].mxu0
      %4925 = vmatprep.mubr.bf16.mxu0 0
      %4926 = vmatmul.mubr.bf16.gmra.mrb[0].mxu0 %v4792
      %v4927 = vpop.f32.mrb[0].mxu0
      %v4928 = vadd.f32 0.0, %v4927
      %v4929 = vpop.f32.mrb[0].mxu0
      %v4930 = vpop.f32.mrb[0].mxu0
      %v4931 = vadd.f32 0.0, %v4930
      %v4932 = vpop.f32.mrb[0].mxu0
      %4933 = vmatprep.mubr.bf16.mxu0 0
      %4934 = vmatmul.mubr.bf16.gmra.mrb[0].mxu0 %v4793
      %v4935 = vpop.f32.mrb[0].mxu0
      %v4936 = vadd.f32 0.0, %v4935
      %v4937 = vpop.f32.mrb[0].mxu0
      %v4938 = vpop.f32.mrb[0].mxu0
      %v4939 = vadd.f32 0.0, %v4938
      %v4940 = vpop.f32.mrb[0].mxu0
      %4941 = vmatprep.mubr.bf16.mxu0 0
      %4942 = vmatmul.mubr.bf16.gmra.mrb[0].mxu0 %v4794
      %v4943 = vpop.f32.mrb[0].mxu0
      %v4944 = vadd.f32 0.0, %v4943
      %v4945 = vpop.f32.mrb[0].mxu0
      %v4946 = vpop.f32.mrb[0].mxu0
      %v4947 = vadd.f32 0.0, %v4946
      %v4948 = vpop.f32.mrb[0].mxu0
      %4949 = vmatprep.mubr.bf16.mxu0 0
      %4950 = vmatmul.mubr.bf16.gmra.mrb[0].mxu0 %v4795
      %v4951 = vpop.f32.mrb[0].mxu0
      %v4952 = vadd.f32 0.0, %v4951
      %v4953 = vpop.f32.mrb[0].mxu0
      %v4954 = vpop.f32.mrb[0].mxu0
      %v4955 = vadd.f32 0.0, %v4954
      %v4956 = vpop.f32.mrb[0].mxu0
      %4957 = vmatprep.mubr.bf16.mxu0 0
      %4958 = vmatmul.mubr.bf16.gmra.mrb[0].mxu0 %v4796
      %v4959 = vpop.f32.mrb[0].mxu0
      %v4960 = vadd.f32 0.0, %v4959
      %v4961 = vpop.f32.mrb[0].mxu0
      %v4962 = vpop.f32.mrb[0].mxu0
      %v4963 = vadd.f32 0.0, %v4962
      %v4964 = vpop.f32.mrb[0].mxu0
      %4965 = vmatprep.mubr.bf16.mxu0 0
      %4966 = vmatmul.mubr.bf16.gmra.mrb[0].mxu0 %v4797
      %v4967 = vpop.f32.mrb[0].mxu0
      %v4968 = vadd.f32 0.0, %v4967
      %v4969 = vpop.f32.mrb[0].mxu0
      %v4970 = vpop.f32.mrb[0].mxu0
      %v4971 = vadd.f32 0.0, %v4970
      %v4972 = vpop.f32.mrb[0].mxu0
      %4973 = vmatprep.mubr.bf16.mxu0 0
      %4974 = vmatmul.mubr.bf16.gmra.mrb[0].mxu0 %v4798
      %v4975 = vpop.f32.mrb[0].mxu0
      %v4976 = vadd.f32 0.0, %v4975
      %v4977 = vpop.f32.mrb[0].mxu0
      %v4978 = vpop.f32.mrb[0].mxu0
      %v4979 = vadd.f32 0.0, %v4978
      %v4980 = vpop.f32.mrb[0].mxu0
      %4981 = vmatprep.mubr.bf16.mxu0 0
      %4982 = vmatmul.mubr.bf16.gmra.mrb[0].mxu0 %v4799
      %v4983 = vpop.f32.mrb[0].mxu0
      %v4984 = vadd.f32 0.0, %v4983
      %v4985 = vpop.f32.mrb[0].mxu0
      %v4986 = vpop.f32.mrb[0].mxu0
      %v4987 = vadd.f32 0.0, %v4986
      %v4988 = vpop.f32.mrb[0].mxu0
      %4989 = vmatprep.mubr.bf16.mxu0 0
      %4990 = vmatmul.mubr.bf16.gmra.mrb[0].mxu0 %v4800
      %v4991 = vpop.f32.mrb[0].mxu0
      %v4992 = vadd.f32 0.0, %v4991
      %v4993 = vpop.f32.mrb[0].mxu0
      %v4994 = vpop.f32.mrb[0].mxu0
      %v4995 = vadd.f32 0.0, %v4994
      %v4996 = vpop.f32.mrb[0].mxu0
      %4997 = vmatprep.mubr.bf16.mxu0 0
      %4998 = vmatmul.mubr.bf16.gmra.mrb[0].mxu0 %v4801
      %v4999 = vpop.f32.mrb[0].mxu0
      %v5000 = vadd.f32 0.0, %v4999
      %v5001 = vpop.f32.mrb[0].mxu0
      %v5002 = vpop.f32.mrb[0].mxu0
      %v5003 = vadd.f32 0.0, %v5002
      %v5004 = vpop.f32.mrb[0].mxu0
      %5005 = vmatprep.mubr.bf16.mxu0 0
      %5006 = vmatmul.mubr.bf16.gmra.mrb[0].mxu0 %v4802
      %v5007 = vpop.f32.mrb[0].mxu0
      %v5008 = vadd.f32 0.0, %v5007
      %v5009 = vpop.f32.mrb[0].mxu0
      %v5010 = vpop.f32.mrb[0].mxu0
      %v5011 = vadd.f32 0.0, %v5010
      %v5012 = vpop.f32.mrb[0].mxu0
      %5013 = vmatprep.mubr.bf16.mxu0 0
      %5014 = vmatmul.mubr.bf16.gmra.mrb[0].mxu0 %v4803
      %v5015 = vpop.f32.mrb[0].mxu0
      %v5016 = vadd.f32 0.0, %v5015
      %v5017 = vpop.f32.mrb[0].mxu0
      %v5018 = vpop.f32.mrb[0].mxu0
      %v5019 = vadd.f32 0.0, %v5018
      %v5020 = vpop.f32.mrb[0].mxu0
      %5021 = vmatprep.mubr.bf16.mxu0 0
      %5022 = vmatmul.mubr.bf16.gmra.mrb[0].mxu0 %v4804
      %v5023 = vpop.f32.mrb[0].mxu0
      %v5024 = vadd.f32 0.0, %v5023
      %v5025 = vpop.f32.mrb[0].mxu0
      %v5026 = vpop.f32.mrb[0].mxu0
      %v5027 = vadd.f32 0.0, %v5026
      %v5028 = vpop.f32.mrb[0].mxu0
      %5029 = vdwg.mxu0
      %v5030 = vadd.f32 %v4532, %v4904
      %v5031 = vadd.f32 %v4533, %v4907
      %v5032 = vadd.f32 %v4534, %v4912
      %v5033 = vadd.f32 %v4535, %v4915
      %v5034 = vadd.f32 %v4536, %v4920
      %v5035 = vadd.f32 %v4537, %v4923
      %v5036 = vadd.f32 %v4538, %v4928
      %v5037 = vadd.f32 %v4539, %v4931
      %v5038 = vadd.f32 %v4540, %v4936
      %v5039 = vadd.f32 %v4541, %v4939
      %v5040 = vadd.f32 %v4542, %v4944
      %v5041 = vadd.f32 %v4543, %v4947
      %v5042 = vadd.f32 %v4544, %v4952
      %v5043 = vadd.f32 %v4545, %v4955
      %v5044 = vadd.f32 %v4546, %v4960
      %v5045 = vadd.f32 %v4547, %v4963
      %v5046 = vadd.f32 %v4548, %v4968
      %v5047 = vadd.f32 %v4549, %v4971
      %v5048 = vadd.f32 %v4550, %v4976
      %v5049 = vadd.f32 %v4551, %v4979
      %v5050 = vadd.f32 %v4552, %v4984
      %v5051 = vadd.f32 %v4553, %v4987
      %v5052 = vadd.f32 %v4554, %v4992
      %v5053 = vadd.f32 %v4555, %v4995
      %v5054 = vadd.f32 %v4556, %v5000
      %v5055 = vadd.f32 %v4557, %v5003
      %v5056 = vadd.f32 %v4558, %v5008
      %v5057 = vadd.f32 %v4559, %v5011
      %v5058 = vadd.f32 %v4560, %v5016
      %v5059 = vadd.f32 %v4561, %v5019
      %v5060 = vadd.f32 %v4562, %v5024
      %v5061 = vadd.f32 %v4563, %v5027
      %v5062 = vld [vmem:[%s2] sm:$0x1]
      %v5064 = vlaneseq
      %v5065 = vshrl.u32 %v5064, 7
      %v5066 = vsub.s32 0, %v5065
      %v5067 = vrot.slane %v5062, %v5066
      %v5069 = vadd.f32 %v5030, %v5067
      %v5070 = vadd.f32 %v5031, %v5067
      %v5071 = vadd.f32 %v5032, %v5067
      %v5072 = vadd.f32 %v5033, %v5067
      %v5073 = vadd.f32 %v5034, %v5067
      %v5074 = vadd.f32 %v5035, %v5067
      %v5075 = vadd.f32 %v5036, %v5067
      %v5076 = vadd.f32 %v5037, %v5067
      %v5077 = vadd.f32 %v5038, %v5067
      %v5078 = vadd.f32 %v5039, %v5067
      %v5079 = vadd.f32 %v5040, %v5067
      %v5080 = vadd.f32 %v5041, %v5067
      %v5081 = vadd.f32 %v5042, %v5067
      %v5082 = vadd.f32 %v5043, %v5067
      %v5083 = vadd.f32 %v5044, %v5067
      %v5084 = vadd.f32 %v5045, %v5067
      %v5085 = vadd.f32 %v5046, %v5067
      %v5086 = vadd.f32 %v5047, %v5067
      %v5087 = vadd.f32 %v5048, %v5067
      %v5088 = vadd.f32 %v5049, %v5067
      %v5089 = vadd.f32 %v5050, %v5067
      %v5090 = vadd.f32 %v5051, %v5067
      %v5091 = vadd.f32 %v5052, %v5067
      %v5092 = vadd.f32 %v5053, %v5067
      %v5093 = vadd.f32 %v5054, %v5067
      %v5094 = vadd.f32 %v5055, %v5067
      %v5095 = vadd.f32 %v5056, %v5067
      %v5096 = vadd.f32 %v5057, %v5067
      %v5097 = vadd.f32 %v5058, %v5067
      %v5098 = vadd.f32 %v5059, %v5067
      %v5099 = vadd.f32 %v5060, %v5067
      %v5100 = vadd.f32 %v5061, %v5067
      %v5101 = vmax.f32 %v5069, 0.0
      %v5102 = vmax.f32 %v5070, 0.0
      %v5103 = vmax.f32 %v5071, 0.0
      %v5104 = vmax.f32 %v5072, 0.0
      %v5105 = vmax.f32 %v5073, 0.0
      %v5106 = vmax.f32 %v5074, 0.0
      %v5107 = vmax.f32 %v5075, 0.0
      %v5108 = vmax.f32 %v5076, 0.0
      %v5109 = vmax.f32 %v5077, 0.0
      %v5110 = vmax.f32 %v5078, 0.0
      %v5111 = vmax.f32 %v5079, 0.0
      %v5112 = vmax.f32 %v5080, 0.0
      %v5113 = vmax.f32 %v5081, 0.0
      %v5114 = vmax.f32 %v5082, 0.0
      %v5115 = vmax.f32 %v5083, 0.0
      %v5116 = vmax.f32 %v5084, 0.0
      %v5117 = vmax.f32 %v5085, 0.0
      %v5118 = vmax.f32 %v5086, 0.0
      %v5119 = vmax.f32 %v5087, 0.0
      %v5120 = vmax.f32 %v5088, 0.0
      %v5121 = vmax.f32 %v5089, 0.0
      %v5122 = vmax.f32 %v5090, 0.0
      %v5123 = vmax.f32 %v5091, 0.0
      %v5124 = vmax.f32 %v5092, 0.0
      %v5125 = vmax.f32 %v5093, 0.0
      %v5126 = vmax.f32 %v5094, 0.0
      %v5127 = vmax.f32 %v5095, 0.0
      %v5128 = vmax.f32 %v5096, 0.0
      %v5129 = vmax.f32 %v5097, 0.0
      %v5130 = vmax.f32 %v5098, 0.0
      %v5131 = vmax.f32 %v5099, 0.0
      %v5132 = vmax.f32 %v5100, 0.0
      %5133 = vst [vmem:[#allocation2] sm:$0xf] 0
      %5134 = vst [vmem:[#allocation2 + $0x4] sm:$0xf] 0
      %5135 = vst [vmem:[#allocation2 + $0x8] sm:$0x1] 0
      %5136 = vst [vmem:[#allocation2 + $0xc] sm:$0xf] 0
      %5137 = vst [vmem:[#allocation2 + $0x10] sm:$0xf] 0
      %5138 = vst [vmem:[#allocation2 + $0x14] sm:$0x1] 0
      %5139 = vst [vmem:[#allocation2 + $0x18] sm:$0xf] 0
      %5140 = vst [vmem:[#allocation2 + $0x1c] sm:$0xf] 0
      %5141 = vst [vmem:[#allocation2 + $0x20] sm:$0x1] 0
      %5142 = vst [vmem:[#allocation2 + $0x24] sm:$0xf] 0
      %5143 = vst [vmem:[#allocation2 + $0x28] sm:$0xf] 0
      %5144 = vst [vmem:[#allocation2 + $0x2c] sm:$0x1] 0
      %5145 = vst [vmem:[#allocation2 + $0x30] sm:$0xf] 0
      %5146 = vst [vmem:[#allocation2 + $0x34] sm:$0xf] 0
      %5147 = vst [vmem:[#allocation2 + $0x38] sm:$0x1] 0
      %5148 = vst [vmem:[#allocation2 + $0x3c] sm:$0xf] 0
      %5149 = vst [vmem:[#allocation2 + $0x40] sm:$0xf] 0
      %5150 = vst [vmem:[#allocation2 + $0x44] sm:$0x1] 0
      %5151 = vst [vmem:[#allocation2 + $0x48] sm:$0xf] 0
      %5152 = vst [vmem:[#allocation2 + $0x4c] sm:$0xf] 0
      %5153 = vst [vmem:[#allocation2 + $0x50] sm:$0x1] 0
      %5154 = vst [vmem:[#allocation2 + $0x54] sm:$0xf] 0
      %5155 = vst [vmem:[#allocation2 + $0x58] sm:$0xf] 0
      %5156 = vst [vmem:[#allocation2 + $0x5c] sm:$0x1] 0
      %5157 = vst [vmem:[#allocation2 + $0x60] sm:$0xf] 0
      %5158 = vst [vmem:[#allocation2 + $0x64] sm:$0xf] 0
      %5159 = vst [vmem:[#allocation2 + $0x68] sm:$0x1] 0
      %5160 = vst [vmem:[#allocation2 + $0x6c] sm:$0xf] 0
      %5161 = vst [vmem:[#allocation2 + $0x70] sm:$0xf] 0
      %5162 = vst [vmem:[#allocation2 + $0x74] sm:$0x1] 0
      %5163 = vst [vmem:[#allocation2 + $0x78] sm:$0xf] 0
      %5164 = vst [vmem:[#allocation2 + $0x7c] sm:$0xf] 0
      %5165 = vst [vmem:[#allocation2 + $0x80] sm:$0x1] 0
      %5166 = vst [vmem:[#allocation2 + $0x84] sm:$0xf] 0
      %5167 = vst [vmem:[#allocation2 + $0x88] sm:$0xf] 0
      %5168 = vst [vmem:[#allocation2 + $0x8c] sm:$0x1] 0
      %5169 = vst [vmem:[#allocation2 + $0x90] sm:$0xf] 0
      %5170 = vst [vmem:[#allocation2 + $0x94] sm:$0xf] 0
      %5171 = vst [vmem:[#allocation2 + $0x98] sm:$0x1] 0
      %5172 = vst [vmem:[#allocation2 + $0x9c] sm:$0xf] 0
      %5173 = vst [vmem:[#allocation2 + $0xa0] sm:$0xf] 0
      %5174 = vst [vmem:[#allocation2 + $0xa4] sm:$0x1] 0
      %5175 = vst [vmem:[#allocation2 + $0xa8] sm:$0xf] 0
      %5176 = vst [vmem:[#allocation2 + $0xac] sm:$0xf] 0
      %5177 = vst [vmem:[#allocation2 + $0xb0] sm:$0x1] 0
      %5178 = vst [vmem:[#allocation2 + $0xb4] sm:$0xf] 0
      %5179 = vst [vmem:[#allocation2 + $0xb8] sm:$0xf] 0
      %5180 = vst [vmem:[#allocation2 + $0xbc] sm:$0x1] 0
      %5181 = vst [vmem:[#allocation2 + $0xc0] sm:$0xf] 0
      %5182 = vst [vmem:[#allocation2 + $0xc4] sm:$0xf] 0
      %5183 = vst [vmem:[#allocation2 + $0xc8] sm:$0x1] 0
      %5184 = vst [vmem:[#allocation2 + $0xcc] sm:$0xf] 0
      %5185 = vst [vmem:[#allocation2 + $0xd0] sm:$0xf] 0
      %5186 = vst [vmem:[#allocation2 + $0xd4] sm:$0x1] 0
      %v5187 = vpack.c.bf16 %v5102, %v5101
      %v5188 = vpack.c.bf16 %v5104, %v5103
      %v5189 = vpack.c.bf16 %v5106, %v5105
      %v5190 = vpack.c.bf16 %v5108, %v5107
      %v5191 = vpack.c.bf16 %v5110, %v5109
      %v5192 = vpack.c.bf16 %v5112, %v5111
      %v5193 = vpack.c.bf16 %v5114, %v5113
      %v5194 = vpack.c.bf16 %v5116, %v5115
      %v5195 = vpack.c.bf16 %v5118, %v5117
      %v5196 = vpack.c.bf16 %v5120, %v5119
      %v5197 = vpack.c.bf16 %v5122, %v5121
      %v5198 = vpack.c.bf16 %v5124, %v5123
      %v5199 = vpack.c.bf16 %v5126, %v5125
      %v5200 = vpack.c.bf16 %v5128, %v5127
      %v5201 = vpack.c.bf16 %v5130, %v5129
      %v5202 = vpack.c.bf16 %v5132, %v5131
      %v5219 = vunpack.c.l.b16 %v5187
      %v5220 = vunpack.c.h.b16 %v5187
      %v5221 = vunpack.c.l.b16 %v5188
      %v5222 = vunpack.c.h.b16 %v5188
      %v5223 = vunpack.c.l.b16 %v5189
      %v5224 = vunpack.c.h.b16 %v5189
      %v5225 = vunpack.c.l.b16 %v5190
      %v5226 = vunpack.c.h.b16 %v5190
      %v5227 = vunpack.c.l.b16 %v5191
      %v5228 = vunpack.c.h.b16 %v5191
      %v5229 = vunpack.c.l.b16 %v5192
      %v5230 = vunpack.c.h.b16 %v5192
      %v5231 = vunpack.c.l.b16 %v5193
      %v5232 = vunpack.c.h.b16 %v5193
      %v5233 = vunpack.c.l.b16 %v5194
      %v5234 = vunpack.c.h.b16 %v5194
      %v5235 = vunpack.c.l.b16 %v5195
      %v5236 = vunpack.c.h.b16 %v5195
      %v5237 = vunpack.c.l.b16 %v5196
      %v5238 = vunpack.c.h.b16 %v5196
      %v5239 = vunpack.c.l.b16 %v5197
      %v5240 = vunpack.c.h.b16 %v5197
      %v5241 = vunpack.c.l.b16 %v5198
      %v5242 = vunpack.c.h.b16 %v5198
      %v5243 = vunpack.c.l.b16 %v5199
      %v5244 = vunpack.c.h.b16 %v5199
      %v5245 = vunpack.c.l.b16 %v5200
      %v5246 = vunpack.c.h.b16 %v5200
      %v5247 = vunpack.c.l.b16 %v5201
      %v5248 = vunpack.c.h.b16 %v5201
      %v5249 = vunpack.c.l.b16 %v5202
      %v5250 = vunpack.c.h.b16 %v5202
      %v5251 = vpack.c.b16 %v5219, %v5219
      %v5252 = vpack.c.b16 %v5220, %v5220
      %v5253 = vpack.c.b16 %v5221, %v5221
      %v5254 = vpack.c.b16 %v5222, %v5222
      %v5255 = vpack.c.b16 %v5223, %v5223
      %v5256 = vpack.c.b16 %v5224, %v5224
      %v5257 = vpack.c.b16 %v5225, %v5225
      %v5258 = vpack.c.b16 %v5226, %v5226
      %v5259 = vpack.c.b16 %v5227, %v5227
      %v5260 = vpack.c.b16 %v5228, %v5228
      %v5261 = vpack.c.b16 %v5229, %v5229
      %v5262 = vpack.c.b16 %v5230, %v5230
      %v5263 = vpack.c.b16 %v5231, %v5231
      %v5264 = vpack.c.b16 %v5232, %v5232
      %v5265 = vpack.c.b16 %v5233, %v5233
      %v5266 = vpack.c.b16 %v5234, %v5234
      %v5267 = vpack.c.b16 %v5235, %v5235
      %v5268 = vpack.c.b16 %v5236, %v5236
      %v5269 = vpack.c.b16 %v5237, %v5237
      %v5270 = vpack.c.b16 %v5238, %v5238
      %v5271 = vpack.c.b16 %v5239, %v5239
      %v5272 = vpack.c.b16 %v5240, %v5240
      %v5273 = vpack.c.b16 %v5241, %v5241
      %v5274 = vpack.c.b16 %v5242, %v5242
      %v5275 = vpack.c.b16 %v5243, %v5243
      %v5276 = vpack.c.b16 %v5244, %v5244
      %v5277 = vpack.c.b16 %v5245, %v5245
      %v5278 = vpack.c.b16 %v5246, %v5246
      %v5279 = vpack.c.b16 %v5247, %v5247
      %v5280 = vpack.c.b16 %v5248, %v5248
      %v5281 = vpack.c.b16 %v5249, %v5249
      %v5282 = vpack.c.b16 %v5250, %v5250
      %vm5283 = vsmask.f32 256
      %vm5284 = vsmask.f32 4368
      %vm5285 = vmor %vm5283, %vm5284
      %v5287 = vshrl.u32 %v5251, 16
      %v5289 = vrot.slane %v5287, 7
      %v5290 = vshll.u32 %v5251, 16
      %v5292 = vor.u32 %v5289, %v5290
      %v5293 = vrot.slane %v5289, 4
      %v5295 = vshrl.u32 %v5252, 16
      %v5297 = vrot.slane %v5295, 7
      %v5298 = vshll.u32 %v5252, 16
      %v5300 = vor.u32 %v5297, %v5298
      %v5301 = vsel %vm5285, %v5293, %v5300
      %v5302 = vrot.slane %v5297, 4
      %v5304 = vshrl.u32 %v5253, 16
      %v5306 = vrot.slane %v5304, 7
      %v5307 = vshll.u32 %v5253, 16
      %v5309 = vor.u32 %v5306, %v5307
      %v5310 = vrot.slane %v5306, 4
      %v5312 = vshrl.u32 %v5254, 16
      %v5314 = vrot.slane %v5312, 7
      %v5315 = vshll.u32 %v5254, 16
      %v5317 = vor.u32 %v5314, %v5315
      %v5318 = vsel %vm5285, %v5310, %v5317
      %v5319 = vrot.slane %v5314, 4
      %v5321 = vshrl.u32 %v5255, 16
      %v5323 = vrot.slane %v5321, 7
      %v5324 = vshll.u32 %v5255, 16
      %v5326 = vor.u32 %v5323, %v5324
      %v5327 = vrot.slane %v5323, 4
      %v5329 = vshrl.u32 %v5256, 16
      %v5331 = vrot.slane %v5329, 7
      %v5332 = vshll.u32 %v5256, 16
      %v5334 = vor.u32 %v5331, %v5332
      %v5335 = vsel %vm5285, %v5327, %v5334
      %v5336 = vrot.slane %v5331, 4
      %v5338 = vshrl.u32 %v5257, 16
      %v5340 = vrot.slane %v5338, 7
      %v5341 = vshll.u32 %v5257, 16
      %v5343 = vor.u32 %v5340, %v5341
      %v5344 = vrot.slane %v5340, 4
      %v5346 = vshrl.u32 %v5258, 16
      %v5348 = vrot.slane %v5346, 7
      %v5349 = vshll.u32 %v5258, 16
      %v5351 = vor.u32 %v5348, %v5349
      %v5352 = vsel %vm5285, %v5344, %v5351
      %v5353 = vrot.slane %v5348, 4
      %v5355 = vshrl.u32 %v5259, 16
      %v5357 = vrot.slane %v5355, 7
      %v5358 = vshll.u32 %v5259, 16
      %v5360 = vor.u32 %v5357, %v5358
      %v5361 = vrot.slane %v5357, 4
      %v5363 = vshrl.u32 %v5260, 16
      %v5365 = vrot.slane %v5363, 7
      %v5366 = vshll.u32 %v5260, 16
      %v5368 = vor.u32 %v5365, %v5366
      %v5369 = vsel %vm5285, %v5361, %v5368
      %v5370 = vrot.slane %v5365, 4
      %v5372 = vshrl.u32 %v5261, 16
      %v5374 = vrot.slane %v5372, 7
      %v5375 = vshll.u32 %v5261, 16
      %v5377 = vor.u32 %v5374, %v5375
      %v5378 = vrot.slane %v5374, 4
      %v5380 = vshrl.u32 %v5262, 16
      %v5382 = vrot.slane %v5380, 7
      %v5383 = vshll.u32 %v5262, 16
      %v5385 = vor.u32 %v5382, %v5383
      %v5386 = vsel %vm5285, %v5378, %v5385
      %v5387 = vrot.slane %v5382, 4
      %v5389 = vshrl.u32 %v5263, 16
      %v5391 = vrot.slane %v5389, 7
      %v5392 = vshll.u32 %v5263, 16
      %v5394 = vor.u32 %v5391, %v5392
      %v5395 = vrot.slane %v5391, 4
      %v5397 = vshrl.u32 %v5264, 16
      %v5399 = vrot.slane %v5397, 7
      %v5400 = vshll.u32 %v5264, 16
      %v5402 = vor.u32 %v5399, %v5400
      %v5403 = vsel %vm5285, %v5395, %v5402
      %v5404 = vrot.slane %v5399, 4
      %v5406 = vshrl.u32 %v5265, 16
      %v5408 = vrot.slane %v5406, 7
      %v5409 = vshll.u32 %v5265, 16
      %v5411 = vor.u32 %v5408, %v5409
      %v5412 = vrot.slane %v5408, 4
      %v5414 = vshrl.u32 %v5266, 16
      %v5416 = vrot.slane %v5414, 7
      %v5417 = vshll.u32 %v5266, 16
      %v5419 = vor.u32 %v5416, %v5417
      %v5420 = vsel %vm5285, %v5412, %v5419
      %v5421 = vrot.slane %v5416, 4
      %v5423 = vshrl.u32 %v5267, 16
      %v5425 = vrot.slane %v5423, 7
      %v5426 = vshll.u32 %v5267, 16
      %v5428 = vor.u32 %v5425, %v5426
      %v5429 = vrot.slane %v5425, 4
      %v5431 = vshrl.u32 %v5268, 16
      %v5433 = vrot.slane %v5431, 7
      %v5434 = vshll.u32 %v5268, 16
      %v5436 = vor.u32 %v5433, %v5434
      %v5437 = vsel %vm5285, %v5429, %v5436
      %v5438 = vrot.slane %v5433, 4
      %v5440 = vshrl.u32 %v5269, 16
      %v5442 = vrot.slane %v5440, 7
      %v5443 = vshll.u32 %v5269, 16
      %v5445 = vor.u32 %v5442, %v5443
      %v5446 = vrot.slane %v5442, 4
      %v5448 = vshrl.u32 %v5270, 16
      %v5450 = vrot.slane %v5448, 7
      %v5451 = vshll.u32 %v5270, 16
      %v5453 = vor.u32 %v5450, %v5451
      %v5454 = vsel %vm5285, %v5446, %v5453
      %v5455 = vrot.slane %v5450, 4
      %v5457 = vshrl.u32 %v5271, 16
      %v5459 = vrot.slane %v5457, 7
      %v5460 = vshll.u32 %v5271, 16
      %v5462 = vor.u32 %v5459, %v5460
      %v5463 = vrot.slane %v5459, 4
      %v5465 = vshrl.u32 %v5272, 16
      %v5467 = vrot.slane %v5465, 7
      %v5468 = vshll.u32 %v5272, 16
      %v5470 = vor.u32 %v5467, %v5468
      %v5471 = vsel %vm5285, %v5463, %v5470
      %v5472 = vrot.slane %v5467, 4
      %v5474 = vshrl.u32 %v5273, 16
      %v5476 = vrot.slane %v5474, 7
      %v5477 = vshll.u32 %v5273, 16
      %v5479 = vor.u32 %v5476, %v5477
      %v5480 = vrot.slane %v5476, 4
      %v5482 = vshrl.u32 %v5274, 16
      %v5484 = vrot.slane %v5482, 7
      %v5485 = vshll.u32 %v5274, 16
      %v5487 = vor.u32 %v5484, %v5485
      %v5488 = vsel %vm5285, %v5480, %v5487
      %v5489 = vrot.slane %v5484, 4
      %v5491 = vshrl.u32 %v5275, 16
      %v5493 = vrot.slane %v5491, 7
      %v5494 = vshll.u32 %v5275, 16
      %v5496 = vor.u32 %v5493, %v5494
      %v5497 = vrot.slane %v5493, 4
      %v5499 = vshrl.u32 %v5276, 16
      %v5501 = vrot.slane %v5499, 7
      %v5502 = vshll.u32 %v5276, 16
      %v5504 = vor.u32 %v5501, %v5502
      %v5505 = vsel %vm5285, %v5497, %v5504
      %v5506 = vrot.slane %v5501, 4
      %v5508 = vshrl.u32 %v5277, 16
      %v5510 = vrot.slane %v5508, 7
      %v5511 = vshll.u32 %v5277, 16
      %v5513 = vor.u32 %v5510, %v5511
      %v5514 = vrot.slane %v5510, 4
      %v5516 = vshrl.u32 %v5278, 16
      %v5518 = vrot.slane %v5516, 7
      %v5519 = vshll.u32 %v5278, 16
      %v5521 = vor.u32 %v5518, %v5519
      %v5522 = vsel %vm5285, %v5514, %v5521
      %v5523 = vrot.slane %v5518, 4
      %v5525 = vshrl.u32 %v5279, 16
      %v5527 = vrot.slane %v5525, 7
      %v5528 = vshll.u32 %v5279, 16
      %v5530 = vor.u32 %v5527, %v5528
      %v5531 = vrot.slane %v5527, 4
      %v5533 = vshrl.u32 %v5280, 16
      %v5535 = vrot.slane %v5533, 7
      %v5536 = vshll.u32 %v5280, 16
      %v5538 = vor.u32 %v5535, %v5536
      %v5539 = vsel %vm5285, %v5531, %v5538
      %v5540 = vrot.slane %v5535, 4
      %v5542 = vshrl.u32 %v5281, 16
      %v5544 = vrot.slane %v5542, 7
      %v5545 = vshll.u32 %v5281, 16
      %v5547 = vor.u32 %v5544, %v5545
      %v5548 = vrot.slane %v5544, 4
      %v5550 = vshrl.u32 %v5282, 16
      %v5552 = vrot.slane %v5550, 7
      %v5553 = vshll.u32 %v5282, 16
      %v5555 = vor.u32 %v5552, %v5553
      %v5556 = vsel %vm5285, %v5548, %v5555
      %v5557 = vrot.slane %v5552, 4
      %s5606 = scalar_lea.vmem [#allocation2], 12
      %vm5607 = vcmask 1043456
      %vm5608 = vsmask.f32 7938
      %vm5609 = vmand %vm5607, %vm5608
      %v5610 = vld [vmem:[%s5606] sm:$0xf]
      %v5611 = vsel %vm5609, %v5292, %v5610
      %5612 = vst [vmem:[%s5606] sm:$0xf] %v5611
      %5613 = vst [vmem:[%s5606 + $0x4] sm:$0xf] %v5301
      %vm5614 = vcmask 1040384
      %vm5615 = vmand %vm5614, %vm5283
      %v5616 = vld [vmem:[%s5606 + $0x8] sm:$0x1]
      %v5617 = vsel %vm5615, %v5302, %v5616
      %5618 = vst [vmem:[%s5606 + $0x8] sm:$0x1] %v5617
      %v5619 = vld [vmem:[%s5606 + $0xc] sm:$0xf]
      %v5620 = vsel %vm5609, %v5309, %v5619
      %5621 = vst [vmem:[%s5606 + $0xc] sm:$0xf] %v5620
      %5622 = vst [vmem:[%s5606 + $0x10] sm:$0xf] %v5318
      %v5623 = vld [vmem:[%s5606 + $0x14] sm:$0x1]
      %v5624 = vsel %vm5615, %v5319, %v5623
      %5625 = vst [vmem:[%s5606 + $0x14] sm:$0x1] %v5624
      %v5626 = vld [vmem:[%s5606 + $0x18] sm:$0xf]
      %v5627 = vsel %vm5609, %v5326, %v5626
      %5628 = vst [vmem:[%s5606 + $0x18] sm:$0xf] %v5627
      %5629 = vst [vmem:[%s5606 + $0x1c] sm:$0xf] %v5335
      %v5630 = vld [vmem:[%s5606 + $0x20] sm:$0x1]
      %v5631 = vsel %vm5615, %v5336, %v5630
      %5632 = vst [vmem:[%s5606 + $0x20] sm:$0x1] %v5631
      %v5633 = vld [vmem:[%s5606 + $0x24] sm:$0xf]
      %v5634 = vsel %vm5609, %v5343, %v5633
      %5635 = vst [vmem:[%s5606 + $0x24] sm:$0xf] %v5634
      %5636 = vst [vmem:[%s5606 + $0x28] sm:$0xf] %v5352
      %v5637 = vld [vmem:[%s5606 + $0x2c] sm:$0x1]
      %v5638 = vsel %vm5615, %v5353, %v5637
      %5639 = vst [vmem:[%s5606 + $0x2c] sm:$0x1] %v5638
      %v5640 = vld [vmem:[%s5606 + $0x30] sm:$0xf]
      %v5641 = vsel %vm5609, %v5360, %v5640
      %5642 = vst [vmem:[%s5606 + $0x30] sm:$0xf] %v5641
      %5643 = vst [vmem:[%s5606 + $0x34] sm:$0xf] %v5369
      %v5644 = vld [vmem:[%s5606 + $0x38] sm:$0x1]
      %v5645 = vsel %vm5615, %v5370, %v5644
      %5646 = vst [vmem:[%s5606 + $0x38] sm:$0x1] %v5645
      %v5647 = vld [vmem:[%s5606 + $0x3c] sm:$0xf]
      %v5648 = vsel %vm5609, %v5377, %v5647
      %5649 = vst [vmem:[%s5606 + $0x3c] sm:$0xf] %v5648
      %5650 = vst [vmem:[%s5606 + $0x40] sm:$0xf] %v5386
      %v5651 = vld [vmem:[%s5606 + $0x44] sm:$0x1]
      %v5652 = vsel %vm5615, %v5387, %v5651
      %5653 = vst [vmem:[%s5606 + $0x44] sm:$0x1] %v5652
      %v5654 = vld [vmem:[%s5606 + $0x48] sm:$0xf]
      %v5655 = vsel %vm5609, %v5394, %v5654
      %5656 = vst [vmem:[%s5606 + $0x48] sm:$0xf] %v5655
      %5657 = vst [vmem:[%s5606 + $0x4c] sm:$0xf] %v5403
      %v5658 = vld [vmem:[%s5606 + $0x50] sm:$0x1]
      %v5659 = vsel %vm5615, %v5404, %v5658
      %5660 = vst [vmem:[%s5606 + $0x50] sm:$0x1] %v5659
      %v5661 = vld [vmem:[%s5606 + $0x54] sm:$0xf]
      %v5662 = vsel %vm5609, %v5411, %v5661
      %5663 = vst [vmem:[%s5606 + $0x54] sm:$0xf] %v5662
      %5664 = vst [vmem:[%s5606 + $0x58] sm:$0xf] %v5420
      %v5665 = vld [vmem:[%s5606 + $0x5c] sm:$0x1]
      %v5666 = vsel %vm5615, %v5421, %v5665
      %5667 = vst [vmem:[%s5606 + $0x5c] sm:$0x1] %v5666
      %v5668 = vld [vmem:[%s5606 + $0x60] sm:$0xf]
      %v5669 = vsel %vm5609, %v5428, %v5668
      %5670 = vst [vmem:[%s5606 + $0x60] sm:$0xf] %v5669
      %5671 = vst [vmem:[%s5606 + $0x64] sm:$0xf] %v5437
      %v5672 = vld [vmem:[%s5606 + $0x68] sm:$0x1]
      %v5673 = vsel %vm5615, %v5438, %v5672
      %5674 = vst [vmem:[%s5606 + $0x68] sm:$0x1] %v5673
      %v5675 = vld [vmem:[%s5606 + $0x6c] sm:$0xf]
      %v5676 = vsel %vm5609, %v5445, %v5675
      %5677 = vst [vmem:[%s5606 + $0x6c] sm:$0xf] %v5676
      %5678 = vst [vmem:[%s5606 + $0x70] sm:$0xf] %v5454
      %v5679 = vld [vmem:[%s5606 + $0x74] sm:$0x1]
      %v5680 = vsel %vm5615, %v5455, %v5679
      %5681 = vst [vmem:[%s5606 + $0x74] sm:$0x1] %v5680
      %v5682 = vld [vmem:[%s5606 + $0x78] sm:$0xf]
      %v5683 = vsel %vm5609, %v5462, %v5682
      %5684 = vst [vmem:[%s5606 + $0x78] sm:$0xf] %v5683
      %5685 = vst [vmem:[%s5606 + $0x7c] sm:$0xf] %v5471
      %v5686 = vld [vmem:[%s5606 + $0x80] sm:$0x1]
      %v5687 = vsel %vm5615, %v5472, %v5686
      %5688 = vst [vmem:[%s5606 + $0x80] sm:$0x1] %v5687
      %v5689 = vld [vmem:[%s5606 + $0x84] sm:$0xf]
      %v5690 = vsel %vm5609, %v5479, %v5689
      %5691 = vst [vmem:[%s5606 + $0x84] sm:$0xf] %v5690
      %5692 = vst [vmem:[%s5606 + $0x88] sm:$0xf] %v5488
      %v5693 = vld [vmem:[%s5606 + $0x8c] sm:$0x1]
      %v5694 = vsel %vm5615, %v5489, %v5693
      %5695 = vst [vmem:[%s5606 + $0x8c] sm:$0x1] %v5694
      %v5696 = vld [vmem:[%s5606 + $0x90] sm:$0xf]
      %v5697 = vsel %vm5609, %v5496, %v5696
      %5698 = vst [vmem:[%s5606 + $0x90] sm:$0xf] %v5697
      %5699 = vst [vmem:[%s5606 + $0x94] sm:$0xf] %v5505
      %v5700 = vld [vmem:[%s5606 + $0x98] sm:$0x1]
      %v5701 = vsel %vm5615, %v5506, %v5700
      %5702 = vst [vmem:[%s5606 + $0x98] sm:$0x1] %v5701
      %v5703 = vld [vmem:[%s5606 + $0x9c] sm:$0xf]
      %v5704 = vsel %vm5609, %v5513, %v5703
      %5705 = vst [vmem:[%s5606 + $0x9c] sm:$0xf] %v5704
      %5706 = vst [vmem:[%s5606 + $0xa0] sm:$0xf] %v5522
      %v5707 = vld [vmem:[%s5606 + $0xa4] sm:$0x1]
      %v5708 = vsel %vm5615, %v5523, %v5707
      %5709 = vst [vmem:[%s5606 + $0xa4] sm:$0x1] %v5708
      %v5710 = vld [vmem:[%s5606 + $0xa8] sm:$0xf]
      %v5711 = vsel %vm5609, %v5530, %v5710
      %5712 = vst [vmem:[%s5606 + $0xa8] sm:$0xf] %v5711
      %5713 = vst [vmem:[%s5606 + $0xac] sm:$0xf] %v5539
      %v5714 = vld [vmem:[%s5606 + $0xb0] sm:$0x1]
      %v5715 = vsel %vm5615, %v5540, %v5714
      %5716 = vst [vmem:[%s5606 + $0xb0] sm:$0x1] %v5715
      %v5717 = vld [vmem:[%s5606 + $0xb4] sm:$0xf]
      %v5718 = vsel %vm5609, %v5547, %v5717
      %5719 = vst [vmem:[%s5606 + $0xb4] sm:$0xf] %v5718
      %5720 = vst [vmem:[%s5606 + $0xb8] sm:$0xf] %v5556
      %v5721 = vld [vmem:[%s5606 + $0xbc] sm:$0x1]
      %v5722 = vsel %vm5615, %v5557, %v5721
      %5723 = vst [vmem:[%s5606 + $0xbc] sm:$0x1] %v5722
      %v5724 = vld [vmem:[#allocation2] sm:$0xf]
      %v5725 = vld [vmem:[#allocation2 + $0x4] sm:$0xf]
      %v5726 = vld [vmem:[#allocation2 + $0xc] sm:$0xf]
      %v5727 = vld [vmem:[#allocation2 + $0x10] sm:$0xf]
      %v5728 = vld [vmem:[#allocation2 + $0x18] sm:$0xf]
      %v5729 = vld [vmem:[#allocation2 + $0x1c] sm:$0xf]
      %v5730 = vld [vmem:[#allocation2 + $0x24] sm:$0xf]
      %v5731 = vld [vmem:[#allocation2 + $0x28] sm:$0xf]
      %v5732 = vld [vmem:[#allocation2 + $0x30] sm:$0xf]
      %v5733 = vld [vmem:[#allocation2 + $0x34] sm:$0xf]
      %v5734 = vld [vmem:[#allocation2 + $0x3c] sm:$0xf]
      %v5735 = vld [vmem:[#allocation2 + $0x40] sm:$0xf]
      %v5736 = vld [vmem:[#allocation2 + $0x48] sm:$0xf]
      %v5737 = vld [vmem:[#allocation2 + $0x4c] sm:$0xf]
      %v5738 = vld [vmem:[#allocation2 + $0x54] sm:$0xf]
      %v5739 = vld [vmem:[#allocation2 + $0x58] sm:$0xf]
      %v5740 = vld [vmem:[#allocation2 + $0x60] sm:$0xf]
      %v5741 = vld [vmem:[#allocation2 + $0x64] sm:$0xf]
      %v5742 = vld [vmem:[#allocation2 + $0x6c] sm:$0xf]
      %v5743 = vld [vmem:[#allocation2 + $0x70] sm:$0xf]
      %v5744 = vld [vmem:[#allocation2 + $0x78] sm:$0xf]
      %v5745 = vld [vmem:[#allocation2 + $0x7c] sm:$0xf]
      %v5746 = vld [vmem:[#allocation2 + $0x84] sm:$0xf]
      %v5747 = vld [vmem:[#allocation2 + $0x88] sm:$0xf]
      %v5748 = vld [vmem:[#allocation2 + $0x90] sm:$0xf]
      %v5749 = vld [vmem:[#allocation2 + $0x94] sm:$0xf]
      %v5750 = vld [vmem:[#allocation2 + $0x9c] sm:$0xf]
      %v5751 = vld [vmem:[#allocation2 + $0xa0] sm:$0xf]
      %v5752 = vld [vmem:[#allocation2 + $0xa8] sm:$0xf]
      %v5753 = vld [vmem:[#allocation2 + $0xac] sm:$0xf]
      %v5754 = vld [vmem:[#allocation2 + $0xb4] sm:$0xf]
      %v5755 = vld [vmem:[#allocation2 + $0xb8] sm:$0xf]
      %v5756 = vld [vmem:[%s3] sm:$0xf]
      %v5757 = vld [vmem:[%s3 + $0x4] sm:$0xf]
      %v5758 = vld [vmem:[%s3 + $0x8] sm:$0xf]
      %v5759 = vld [vmem:[%s3 + $0xc] sm:$0xf]
      %v5760 = vld [vmem:[%s3 + $0x10] sm:$0xf]
      %v5761 = vld [vmem:[%s3 + $0x14] sm:$0xf]
      %v5762 = vld [vmem:[%s3 + $0x18] sm:$0xf]
      %v5763 = vld [vmem:[%s3 + $0x1c] sm:$0xf]
      %v5764 = vld [vmem:[%s3 + $0x20] sm:$0xf]
      %v5765 = vld [vmem:[%s3 + $0x24] sm:$0xf]
      %v5766 = vld [vmem:[%s3 + $0x28] sm:$0xf]
      %v5767 = vld [vmem:[%s3 + $0x2c] sm:$0xf]
      %v5768 = vld [vmem:[%s3 + $0x30] sm:$0xf]
      %v5769 = vld [vmem:[%s3 + $0x34] sm:$0xf]
      %v5770 = vld [vmem:[%s3 + $0x38] sm:$0xf]
      %v5771 = vld [vmem:[%s3 + $0x3c] sm:$0xf]
      %v5772 = vld [vmem:[#allocation2 + $0x8] sm:$0x1]
      %v5773 = vld [vmem:[#allocation2 + $0x14] sm:$0x1]
      %v5774 = vld [vmem:[#allocation2 + $0x20] sm:$0x1]
      %v5775 = vld [vmem:[#allocation2 + $0x2c] sm:$0x1]
      %v5776 = vld [vmem:[#allocation2 + $0x38] sm:$0x1]
      %v5777 = vld [vmem:[#allocation2 + $0x44] sm:$0x1]
      %v5778 = vld [vmem:[#allocation2 + $0x50] sm:$0x1]
      %v5779 = vld [vmem:[#allocation2 + $0x5c] sm:$0x1]
      %v5780 = vld [vmem:[#allocation2 + $0x68] sm:$0x1]
      %v5781 = vld [vmem:[#allocation2 + $0x74] sm:$0x1]
      %v5782 = vld [vmem:[#allocation2 + $0x80] sm:$0x1]
      %v5783 = vld [vmem:[#allocation2 + $0x8c] sm:$0x1]
      %v5784 = vld [vmem:[#allocation2 + $0x98] sm:$0x1]
      %v5785 = vld [vmem:[#allocation2 + $0xa4] sm:$0x1]
      %v5786 = vld [vmem:[#allocation2 + $0xb0] sm:$0x1]
      %v5787 = vld [vmem:[#allocation2 + $0xbc] sm:$0x1]
      %v5789 = vshrl.u32 %v5724, 16
      %v5791 = vrot.slane %v5789, 4
      %v5792 = vshll.u32 %v5724, 16
      %v5794 = vrot.slane %v5792, 5
      %v5795 = vor.u32 %v5791, %v5794
      %v5796 = vrot.slane %v5795, 4
      %v5798 = vshll.u32 %v5725, 16
      %v5800 = vrot.slane %v5798, 5
      %v5801 = vsel %vm319, %v5796, %v5800
      %v5802 = vshrl.u32 %v5725, 16
      %v5804 = vrot.slane %v5802, 4
      %v5805 = vor.u32 %v5804, %v5800
      %v5806 = vrot.slane %v5805, 4
      %v5808 = vshll.u32 %v5772, 16
      %v5810 = vrot.slane %v5808, 5
      %v5811 = vsel %vm319, %v5806, %v5810
      %v5813 = vshrl.u32 %v5726, 16
      %v5815 = vrot.slane %v5813, 4
      %v5816 = vshll.u32 %v5726, 16
      %v5818 = vrot.slane %v5816, 5
      %v5819 = vor.u32 %v5815, %v5818
      %v5820 = vrot.slane %v5819, 4
      %v5822 = vshll.u32 %v5727, 16
      %v5824 = vrot.slane %v5822, 5
      %v5825 = vsel %vm319, %v5820, %v5824
      %v5826 = vshrl.u32 %v5727, 16
      %v5828 = vrot.slane %v5826, 4
      %v5829 = vor.u32 %v5828, %v5824
      %v5830 = vrot.slane %v5829, 4
      %v5832 = vshll.u32 %v5773, 16
      %v5834 = vrot.slane %v5832, 5
      %v5835 = vsel %vm319, %v5830, %v5834
      %v5837 = vshrl.u32 %v5728, 16
      %v5839 = vrot.slane %v5837, 4
      %v5840 = vshll.u32 %v5728, 16
      %v5842 = vrot.slane %v5840, 5
      %v5843 = vor.u32 %v5839, %v5842
      %v5844 = vrot.slane %v5843, 4
      %v5846 = vshll.u32 %v5729, 16
      %v5848 = vrot.slane %v5846, 5
      %v5849 = vsel %vm319, %v5844, %v5848
      %v5850 = vshrl.u32 %v5729, 16
      %v5852 = vrot.slane %v5850, 4
      %v5853 = vor.u32 %v5852, %v5848
      %v5854 = vrot.slane %v5853, 4
      %v5856 = vshll.u32 %v5774, 16
      %v5858 = vrot.slane %v5856, 5
      %v5859 = vsel %vm319, %v5854, %v5858
      %v5861 = vshrl.u32 %v5730, 16
      %v5863 = vrot.slane %v5861, 4
      %v5864 = vshll.u32 %v5730, 16
      %v5866 = vrot.slane %v5864, 5
      %v5867 = vor.u32 %v5863, %v5866
      %v5868 = vrot.slane %v5867, 4
      %v5870 = vshll.u32 %v5731, 16
      %v5872 = vrot.slane %v5870, 5
      %v5873 = vsel %vm319, %v5868, %v5872
      %v5874 = vshrl.u32 %v5731, 16
      %v5876 = vrot.slane %v5874, 4
      %v5877 = vor.u32 %v5876, %v5872
      %v5878 = vrot.slane %v5877, 4
      %v5880 = vshll.u32 %v5775, 16
      %v5882 = vrot.slane %v5880, 5
      %v5883 = vsel %vm319, %v5878, %v5882
      %v5885 = vshrl.u32 %v5732, 16
      %v5887 = vrot.slane %v5885, 4
      %v5888 = vshll.u32 %v5732, 16
      %v5890 = vrot.slane %v5888, 5
      %v5891 = vor.u32 %v5887, %v5890
      %v5892 = vrot.slane %v5891, 4
      %v5894 = vshll.u32 %v5733, 16
      %v5896 = vrot.slane %v5894, 5
      %v5897 = vsel %vm319, %v5892, %v5896
      %v5898 = vshrl.u32 %v5733, 16
      %v5900 = vrot.slane %v5898, 4
      %v5901 = vor.u32 %v5900, %v5896
      %v5902 = vrot.slane %v5901, 4
      %v5904 = vshll.u32 %v5776, 16
      %v5906 = vrot.slane %v5904, 5
      %v5907 = vsel %vm319, %v5902, %v5906
      %v5909 = vshrl.u32 %v5734, 16
      %v5911 = vrot.slane %v5909, 4
      %v5912 = vshll.u32 %v5734, 16
      %v5914 = vrot.slane %v5912, 5
      %v5915 = vor.u32 %v5911, %v5914
      %v5916 = vrot.slane %v5915, 4
      %v5918 = vshll.u32 %v5735, 16
      %v5920 = vrot.slane %v5918, 5
      %v5921 = vsel %vm319, %v5916, %v5920
      %v5922 = vshrl.u32 %v5735, 16
      %v5924 = vrot.slane %v5922, 4
      %v5925 = vor.u32 %v5924, %v5920
      %v5926 = vrot.slane %v5925, 4
      %v5928 = vshll.u32 %v5777, 16
      %v5930 = vrot.slane %v5928, 5
      %v5931 = vsel %vm319, %v5926, %v5930
      %v5933 = vshrl.u32 %v5736, 16
      %v5935 = vrot.slane %v5933, 4
      %v5936 = vshll.u32 %v5736, 16
      %v5938 = vrot.slane %v5936, 5
      %v5939 = vor.u32 %v5935, %v5938
      %v5940 = vrot.slane %v5939, 4
      %v5942 = vshll.u32 %v5737, 16
      %v5944 = vrot.slane %v5942, 5
      %v5945 = vsel %vm319, %v5940, %v5944
      %v5946 = vshrl.u32 %v5737, 16
      %v5948 = vrot.slane %v5946, 4
      %v5949 = vor.u32 %v5948, %v5944
      %v5950 = vrot.slane %v5949, 4
      %v5952 = vshll.u32 %v5778, 16
      %v5954 = vrot.slane %v5952, 5
      %v5955 = vsel %vm319, %v5950, %v5954
      %v5957 = vshrl.u32 %v5738, 16
      %v5959 = vrot.slane %v5957, 4
      %v5960 = vshll.u32 %v5738, 16
      %v5962 = vrot.slane %v5960, 5
      %v5963 = vor.u32 %v5959, %v5962
      %v5964 = vrot.slane %v5963, 4
      %v5966 = vshll.u32 %v5739, 16
      %v5968 = vrot.slane %v5966, 5
      %v5969 = vsel %vm319, %v5964, %v5968
      %v5970 = vshrl.u32 %v5739, 16
      %v5972 = vrot.slane %v5970, 4
      %v5973 = vor.u32 %v5972, %v5968
      %v5974 = vrot.slane %v5973, 4
      %v5976 = vshll.u32 %v5779, 16
      %v5978 = vrot.slane %v5976, 5
      %v5979 = vsel %vm319, %v5974, %v5978
      %v5981 = vshrl.u32 %v5740, 16
      %v5983 = vrot.slane %v5981, 4
      %v5984 = vshll.u32 %v5740, 16
      %v5986 = vrot.slane %v5984, 5
      %v5987 = vor.u32 %v5983, %v5986
      %v5988 = vrot.slane %v5987, 4
      %v5990 = vshll.u32 %v5741, 16
      %v5992 = vrot.slane %v5990, 5
      %v5993 = vsel %vm319, %v5988, %v5992
      %v5994 = vshrl.u32 %v5741, 16
      %v5996 = vrot.slane %v5994, 4
      %v5997 = vor.u32 %v5996, %v5992
      %v5998 = vrot.slane %v5997, 4
      %v6000 = vshll.u32 %v5780, 16
      %v6002 = vrot.slane %v6000, 5
      %v6003 = vsel %vm319, %v5998, %v6002
      %v6005 = vshrl.u32 %v5742, 16
      %v6007 = vrot.slane %v6005, 4
      %v6008 = vshll.u32 %v5742, 16
      %v6010 = vrot.slane %v6008, 5
      %v6011 = vor.u32 %v6007, %v6010
      %v6012 = vrot.slane %v6011, 4
      %v6014 = vshll.u32 %v5743, 16
      %v6016 = vrot.slane %v6014, 5
      %v6017 = vsel %vm319, %v6012, %v6016
      %v6018 = vshrl.u32 %v5743, 16
      %v6020 = vrot.slane %v6018, 4
      %v6021 = vor.u32 %v6020, %v6016
      %v6022 = vrot.slane %v6021, 4
      %v6024 = vshll.u32 %v5781, 16
      %v6026 = vrot.slane %v6024, 5
      %v6027 = vsel %vm319, %v6022, %v6026
      %v6029 = vshrl.u32 %v5744, 16
      %v6031 = vrot.slane %v6029, 4
      %v6032 = vshll.u32 %v5744, 16
      %v6034 = vrot.slane %v6032, 5
      %v6035 = vor.u32 %v6031, %v6034
      %v6036 = vrot.slane %v6035, 4
      %v6038 = vshll.u32 %v5745, 16
      %v6040 = vrot.slane %v6038, 5
      %v6041 = vsel %vm319, %v6036, %v6040
      %v6042 = vshrl.u32 %v5745, 16
      %v6044 = vrot.slane %v6042, 4
      %v6045 = vor.u32 %v6044, %v6040
      %v6046 = vrot.slane %v6045, 4
      %v6048 = vshll.u32 %v5782, 16
      %v6050 = vrot.slane %v6048, 5
      %v6051 = vsel %vm319, %v6046, %v6050
      %v6053 = vshrl.u32 %v5746, 16
      %v6055 = vrot.slane %v6053, 4
      %v6056 = vshll.u32 %v5746, 16
      %v6058 = vrot.slane %v6056, 5
      %v6059 = vor.u32 %v6055, %v6058
      %v6060 = vrot.slane %v6059, 4
      %v6062 = vshll.u32 %v5747, 16
      %v6064 = vrot.slane %v6062, 5
      %v6065 = vsel %vm319, %v6060, %v6064
      %v6066 = vshrl.u32 %v5747, 16
      %v6068 = vrot.slane %v6066, 4
      %v6069 = vor.u32 %v6068, %v6064
      %v6070 = vrot.slane %v6069, 4
      %v6072 = vshll.u32 %v5783, 16
      %v6074 = vrot.slane %v6072, 5
      %v6075 = vsel %vm319, %v6070, %v6074
      %v6077 = vshrl.u32 %v5748, 16
      %v6079 = vrot.slane %v6077, 4
      %v6080 = vshll.u32 %v5748, 16
      %v6082 = vrot.slane %v6080, 5
      %v6083 = vor.u32 %v6079, %v6082
      %v6084 = vrot.slane %v6083, 4
      %v6086 = vshll.u32 %v5749, 16
      %v6088 = vrot.slane %v6086, 5
      %v6089 = vsel %vm319, %v6084, %v6088
      %v6090 = vshrl.u32 %v5749, 16
      %v6092 = vrot.slane %v6090, 4
      %v6093 = vor.u32 %v6092, %v6088
      %v6094 = vrot.slane %v6093, 4
      %v6096 = vshll.u32 %v5784, 16
      %v6098 = vrot.slane %v6096, 5
      %v6099 = vsel %vm319, %v6094, %v6098
      %v6101 = vshrl.u32 %v5750, 16
      %v6103 = vrot.slane %v6101, 4
      %v6104 = vshll.u32 %v5750, 16
      %v6106 = vrot.slane %v6104, 5
      %v6107 = vor.u32 %v6103, %v6106
      %v6108 = vrot.slane %v6107, 4
      %v6110 = vshll.u32 %v5751, 16
      %v6112 = vrot.slane %v6110, 5
      %v6113 = vsel %vm319, %v6108, %v6112
      %v6114 = vshrl.u32 %v5751, 16
      %v6116 = vrot.slane %v6114, 4
      %v6117 = vor.u32 %v6116, %v6112
      %v6118 = vrot.slane %v6117, 4
      %v6120 = vshll.u32 %v5785, 16
      %v6122 = vrot.slane %v6120, 5
      %v6123 = vsel %vm319, %v6118, %v6122
      %v6125 = vshrl.u32 %v5752, 16
      %v6127 = vrot.slane %v6125, 4
      %v6128 = vshll.u32 %v5752, 16
      %v6130 = vrot.slane %v6128, 5
      %v6131 = vor.u32 %v6127, %v6130
      %v6132 = vrot.slane %v6131, 4
      %v6134 = vshll.u32 %v5753, 16
      %v6136 = vrot.slane %v6134, 5
      %v6137 = vsel %vm319, %v6132, %v6136
      %v6138 = vshrl.u32 %v5753, 16
      %v6140 = vrot.slane %v6138, 4
      %v6141 = vor.u32 %v6140, %v6136
      %v6142 = vrot.slane %v6141, 4
      %v6144 = vshll.u32 %v5786, 16
      %v6146 = vrot.slane %v6144, 5
      %v6147 = vsel %vm319, %v6142, %v6146
      %v6149 = vshrl.u32 %v5754, 16
      %v6151 = vrot.slane %v6149, 4
      %v6152 = vshll.u32 %v5754, 16
      %v6154 = vrot.slane %v6152, 5
      %v6155 = vor.u32 %v6151, %v6154
      %v6156 = vrot.slane %v6155, 4
      %v6158 = vshll.u32 %v5755, 16
      %v6160 = vrot.slane %v6158, 5
      %v6161 = vsel %vm319, %v6156, %v6160
      %v6162 = vshrl.u32 %v5755, 16
      %v6164 = vrot.slane %v6162, 4
      %v6165 = vor.u32 %v6164, %v6160
      %v6166 = vrot.slane %v6165, 4
      %v6168 = vshll.u32 %v5787, 16
      %v6170 = vrot.slane %v6168, 5
      %v6171 = vsel %vm319, %v6166, %v6170
      %s6172 = scalar_lea.vmem %s3, 64
      %v6173 = vld [vmem:[%s6172] sm:$0xf]
      %v6174 = vld [vmem:[%s6172 + $0x4] sm:$0xf]
      %v6175 = vld [vmem:[%s6172 + $0x8] sm:$0xf]
      %v6176 = vld [vmem:[%s6172 + $0xc] sm:$0xf]
      %v6177 = vld [vmem:[%s6172 + $0x10] sm:$0xf]
      %v6178 = vld [vmem:[%s6172 + $0x14] sm:$0xf]
      %v6179 = vld [vmem:[%s6172 + $0x18] sm:$0xf]
      %v6180 = vld [vmem:[%s6172 + $0x1c] sm:$0xf]
      %v6181 = vld [vmem:[%s6172 + $0x20] sm:$0xf]
      %v6182 = vld [vmem:[%s6172 + $0x24] sm:$0xf]
      %v6183 = vld [vmem:[%s6172 + $0x28] sm:$0xf]
      %v6184 = vld [vmem:[%s6172 + $0x2c] sm:$0xf]
      %v6185 = vld [vmem:[%s6172 + $0x30] sm:$0xf]
      %v6186 = vld [vmem:[%s6172 + $0x34] sm:$0xf]
      %v6187 = vld [vmem:[%s6172 + $0x38] sm:$0xf]
      %v6188 = vld [vmem:[%s6172 + $0x3c] sm:$0xf]
      %v6189 = vunpack.c.l.b16 %v5801
      %v6190 = vunpack.c.l.b16 %v5811
      %v6191 = vunpack.c.l.b16 %v5825
      %v6192 = vunpack.c.l.b16 %v5835
      %v6193 = vunpack.c.l.b16 %v5849
      %v6194 = vunpack.c.l.b16 %v5859
      %v6195 = vunpack.c.l.b16 %v5873
      %v6196 = vunpack.c.l.b16 %v5883
      %v6197 = vunpack.c.l.b16 %v5897
      %v6198 = vunpack.c.l.b16 %v5907
      %v6199 = vunpack.c.l.b16 %v5921
      %v6200 = vunpack.c.l.b16 %v5931
      %v6201 = vunpack.c.l.b16 %v5945
      %v6202 = vunpack.c.l.b16 %v5955
      %v6203 = vunpack.c.l.b16 %v5969
      %v6204 = vunpack.c.l.b16 %v5979
      %v6205 = vunpack.c.l.b16 %v5993
      %v6206 = vunpack.c.l.b16 %v6003
      %v6207 = vunpack.c.l.b16 %v6017
      %v6208 = vunpack.c.l.b16 %v6027
      %v6209 = vunpack.c.l.b16 %v6041
      %v6210 = vunpack.c.l.b16 %v6051
      %v6211 = vunpack.c.l.b16 %v6065
      %v6212 = vunpack.c.l.b16 %v6075
      %v6213 = vunpack.c.l.b16 %v6089
      %v6214 = vunpack.c.l.b16 %v6099
      %v6215 = vunpack.c.l.b16 %v6113
      %v6216 = vunpack.c.l.b16 %v6123
      %v6217 = vunpack.c.l.b16 %v6137
      %v6218 = vunpack.c.l.b16 %v6147
      %v6219 = vunpack.c.l.b16 %v6161
      %v6220 = vunpack.c.l.b16 %v6171
      %v6221 = vpack.c.b16 %v6190, %v6189
      %v6222 = vpack.c.b16 %v6192, %v6191
      %v6223 = vpack.c.b16 %v6194, %v6193
      %v6224 = vpack.c.b16 %v6196, %v6195
      %v6225 = vpack.c.b16 %v6198, %v6197
      %v6226 = vpack.c.b16 %v6200, %v6199
      %v6227 = vpack.c.b16 %v6202, %v6201
      %v6228 = vpack.c.b16 %v6204, %v6203
      %v6229 = vpack.c.b16 %v6206, %v6205
      %v6230 = vpack.c.b16 %v6208, %v6207
      %v6231 = vpack.c.b16 %v6210, %v6209
      %v6232 = vpack.c.b16 %v6212, %v6211
      %v6233 = vpack.c.b16 %v6214, %v6213
      %v6234 = vpack.c.b16 %v6216, %v6215
      %v6235 = vpack.c.b16 %v6218, %v6217
      %v6236 = vpack.c.b16 %v6220, %v6219
      %v6269 = vunpack.c.l.b16 %v6173
      %v6270 = vunpack.c.l.b16 %v6174
      %v6271 = vunpack.c.l.b16 %v6175
      %v6272 = vunpack.c.l.b16 %v6176
      %v6273 = vunpack.c.l.b16 %v6177
      %v6274 = vunpack.c.l.b16 %v6178
      %v6275 = vunpack.c.l.b16 %v6179
      %v6276 = vunpack.c.l.b16 %v6180
      %v6277 = vunpack.c.l.b16 %v6181
      %v6278 = vunpack.c.l.b16 %v6182
      %v6279 = vunpack.c.l.b16 %v6183
      %v6280 = vunpack.c.l.b16 %v6184
      %v6281 = vunpack.c.l.b16 %v6185
      %v6282 = vunpack.c.l.b16 %v6186
      %v6283 = vunpack.c.l.b16 %v6187
      %v6284 = vunpack.c.l.b16 %v6188
      %v6285 = vpack.c.b16 %v6270, %v6269
      %v6286 = vpack.c.b16 %v6272, %v6271
      %v6287 = vpack.c.b16 %v6274, %v6273
      %v6288 = vpack.c.b16 %v6276, %v6275
      %v6289 = vpack.c.b16 %v6278, %v6277
      %v6290 = vpack.c.b16 %v6280, %v6279
      %v6291 = vpack.c.b16 %v6282, %v6281
      %v6292 = vpack.c.b16 %v6284, %v6283
      %6301 = vmatprep.subr.bf16.mxu0 0
      %6302 = vmatpush1.bf16.msra.mxu0 %v6285
      %6303 = vmatprep.subr.bf16.mxu0 0
      %6304 = vmatpush1.bf16.msra.mxu0 %v6286
      %6305 = vmatprep.subr.bf16.mxu0 0
      %6306 = vmatpush1.bf16.msra.mxu0 %v6287
      %6307 = vmatprep.subr.bf16.mxu0 0
      %6308 = vmatpush1.bf16.msra.mxu0 %v6288
      %6309 = vmatprep.subr.bf16.mxu0 0
      %6310 = vmatpush1.bf16.msra.mxu0 %v6289
      %6311 = vmatprep.subr.bf16.mxu0 0
      %6312 = vmatpush1.bf16.msra.mxu0 %v6290
      %6313 = vmatprep.subr.bf16.mxu0 0
      %6314 = vmatpush1.bf16.msra.mxu0 %v6291
      %6315 = vmatprep.subr.bf16.mxu0 0
      %6316 = vmatpush1.bf16.msra.mxu0 %v6292
      %6317 = vmatprep.subr.bf16.mxu0 0
      %6318 = vmatpush1.bf16.msra.mxu0 0
      %6319 = vmatprep.subr.bf16.mxu0 0
      %6320 = vmatpush1.bf16.msra.mxu0 0
      %6321 = vmatprep.subr.bf16.mxu0 0
      %6322 = vmatpush1.bf16.msra.mxu0 0
      %6323 = vmatprep.subr.bf16.mxu0 0
      %6324 = vmatpush1.bf16.msra.mxu0 0
      %6325 = vmatprep.subr.bf16.mxu0 0
      %6326 = vmatpush1.bf16.msra.mxu0 0
      %6327 = vmatprep.subr.bf16.mxu0 0
      %6328 = vmatpush1.bf16.msra.mxu0 0
      %6329 = vmatprep.subr.bf16.mxu0 0
      %6330 = vmatpush1.bf16.msra.mxu0 0
      %6331 = vmatprep.subr.bf16.mxu0 0
      %6332 = vmatpush1.bf16.msra.mxu0 0
      %6333 = vmatprep.mubr.bf16.mxu0 0
      %6334 = vmatmul.mubr.bf16.gmra.mrb[0].mxu0 %v6221
      %v6335 = vpop.f32.mrb[0].mxu0
      %v6336 = vadd.f32 0.0, %v6335
      %v6337 = vpop.f32.mrb[0].mxu0
      %v6338 = vpop.f32.mrb[0].mxu0
      %v6339 = vadd.f32 0.0, %v6338
      %v6340 = vpop.f32.mrb[0].mxu0
      %6341 = vmatprep.mubr.bf16.mxu0 0
      %6342 = vmatmul.mubr.bf16.gmra.mrb[0].mxu0 %v6222
      %v6343 = vpop.f32.mrb[0].mxu0
      %v6344 = vadd.f32 0.0, %v6343
      %v6345 = vpop.f32.mrb[0].mxu0
      %v6346 = vpop.f32.mrb[0].mxu0
      %v6347 = vadd.f32 0.0, %v6346
      %v6348 = vpop.f32.mrb[0].mxu0
      %6349 = vmatprep.mubr.bf16.mxu0 0
      %6350 = vmatmul.mubr.bf16.gmra.mrb[0].mxu0 %v6223
      %v6351 = vpop.f32.mrb[0].mxu0
      %v6352 = vadd.f32 0.0, %v6351
      %v6353 = vpop.f32.mrb[0].mxu0
      %v6354 = vpop.f32.mrb[0].mxu0
      %v6355 = vadd.f32 0.0, %v6354
      %v6356 = vpop.f32.mrb[0].mxu0
      %6357 = vmatprep.mubr.bf16.mxu0 0
      %6358 = vmatmul.mubr.bf16.gmra.mrb[0].mxu0 %v6224
      %v6359 = vpop.f32.mrb[0].mxu0
      %v6360 = vadd.f32 0.0, %v6359
      %v6361 = vpop.f32.mrb[0].mxu0
      %v6362 = vpop.f32.mrb[0].mxu0
      %v6363 = vadd.f32 0.0, %v6362
      %v6364 = vpop.f32.mrb[0].mxu0
      %6365 = vmatprep.mubr.bf16.mxu0 0
      %6366 = vmatmul.mubr.bf16.gmra.mrb[0].mxu0 %v6225
      %v6367 = vpop.f32.mrb[0].mxu0
      %v6368 = vadd.f32 0.0, %v6367
      %v6369 = vpop.f32.mrb[0].mxu0
      %v6370 = vpop.f32.mrb[0].mxu0
      %v6371 = vadd.f32 0.0, %v6370
      %v6372 = vpop.f32.mrb[0].mxu0
      %6373 = vmatprep.mubr.bf16.mxu0 0
      %6374 = vmatmul.mubr.bf16.gmra.mrb[0].mxu0 %v6226
      %v6375 = vpop.f32.mrb[0].mxu0
      %v6376 = vadd.f32 0.0, %v6375
      %v6377 = vpop.f32.mrb[0].mxu0
      %v6378 = vpop.f32.mrb[0].mxu0
      %v6379 = vadd.f32 0.0, %v6378
      %v6380 = vpop.f32.mrb[0].mxu0
      %6381 = vmatprep.mubr.bf16.mxu0 0
      %6382 = vmatmul.mubr.bf16.gmra.mrb[0].mxu0 %v6227
      %v6383 = vpop.f32.mrb[0].mxu0
      %v6384 = vadd.f32 0.0, %v6383
      %v6385 = vpop.f32.mrb[0].mxu0
      %v6386 = vpop.f32.mrb[0].mxu0
      %v6387 = vadd.f32 0.0, %v6386
      %v6388 = vpop.f32.mrb[0].mxu0
      %6389 = vmatprep.mubr.bf16.mxu0 0
      %6390 = vmatmul.mubr.bf16.gmra.mrb[0].mxu0 %v6228
      %v6391 = vpop.f32.mrb[0].mxu0
      %v6392 = vadd.f32 0.0, %v6391
      %v6393 = vpop.f32.mrb[0].mxu0
      %v6394 = vpop.f32.mrb[0].mxu0
      %v6395 = vadd.f32 0.0, %v6394
      %v6396 = vpop.f32.mrb[0].mxu0
      %6397 = vmatprep.mubr.bf16.mxu0 0
      %6398 = vmatmul.mubr.bf16.gmra.mrb[0].mxu0 %v6229
      %v6399 = vpop.f32.mrb[0].mxu0
      %v6400 = vadd.f32 0.0, %v6399
      %v6401 = vpop.f32.mrb[0].mxu0
      %v6402 = vpop.f32.mrb[0].mxu0
      %v6403 = vadd.f32 0.0, %v6402
      %v6404 = vpop.f32.mrb[0].mxu0
      %6405 = vmatprep.mubr.bf16.mxu0 0
      %6406 = vmatmul.mubr.bf16.gmra.mrb[0].mxu0 %v6230
      %v6407 = vpop.f32.mrb[0].mxu0
      %v6408 = vadd.f32 0.0, %v6407
      %v6409 = vpop.f32.mrb[0].mxu0
      %v6410 = vpop.f32.mrb[0].mxu0
      %v6411 = vadd.f32 0.0, %v6410
      %v6412 = vpop.f32.mrb[0].mxu0
      %6413 = vmatprep.mubr.bf16.mxu0 0
      %6414 = vmatmul.mubr.bf16.gmra.mrb[0].mxu0 %v6231
      %v6415 = vpop.f32.mrb[0].mxu0
      %v6416 = vadd.f32 0.0, %v6415
      %v6417 = vpop.f32.mrb[0].mxu0
      %v6418 = vpop.f32.mrb[0].mxu0
      %v6419 = vadd.f32 0.0, %v6418
      %v6420 = vpop.f32.mrb[0].mxu0
      %6421 = vmatprep.mubr.bf16.mxu0 0
      %6422 = vmatmul.mubr.bf16.gmra.mrb[0].mxu0 %v6232
      %v6423 = vpop.f32.mrb[0].mxu0
      %v6424 = vadd.f32 0.0, %v6423
      %v6425 = vpop.f32.mrb[0].mxu0
      %v6426 = vpop.f32.mrb[0].mxu0
      %v6427 = vadd.f32 0.0, %v6426
      %v6428 = vpop.f32.mrb[0].mxu0
      %6429 = vmatprep.mubr.bf16.mxu0 0
      %6430 = vmatmul.mubr.bf16.gmra.mrb[0].mxu0 %v6233
      %v6431 = vpop.f32.mrb[0].mxu0
      %v6432 = vadd.f32 0.0, %v6431
      %v6433 = vpop.f32.mrb[0].mxu0
      %v6434 = vpop.f32.mrb[0].mxu0
      %v6435 = vadd.f32 0.0, %v6434
      %v6436 = vpop.f32.mrb[0].mxu0
      %6437 = vmatprep.mubr.bf16.mxu0 0
      %6438 = vmatmul.mubr.bf16.gmra.mrb[0].mxu0 %v6234
      %v6439 = vpop.f32.mrb[0].mxu0
      %v6440 = vadd.f32 0.0, %v6439
      %v6441 = vpop.f32.mrb[0].mxu0
      %v6442 = vpop.f32.mrb[0].mxu0
      %v6443 = vadd.f32 0.0, %v6442
      %v6444 = vpop.f32.mrb[0].mxu0
      %6445 = vmatprep.mubr.bf16.mxu0 0
      %6446 = vmatmul.mubr.bf16.gmra.mrb[0].mxu0 %v6235
      %v6447 = vpop.f32.mrb[0].mxu0
      %v6448 = vadd.f32 0.0, %v6447
      %v6449 = vpop.f32.mrb[0].mxu0
      %v6450 = vpop.f32.mrb[0].mxu0
      %v6451 = vadd.f32 0.0, %v6450
      %v6452 = vpop.f32.mrb[0].mxu0
      %6453 = vmatprep.mubr.bf16.mxu0 0
      %6454 = vmatmul.mubr.bf16.gmra.mrb[0].mxu0 %v6236
      %v6455 = vpop.f32.mrb[0].mxu0
      %v6456 = vadd.f32 0.0, %v6455
      %v6457 = vpop.f32.mrb[0].mxu0
      %v6458 = vpop.f32.mrb[0].mxu0
      %v6459 = vadd.f32 0.0, %v6458
      %v6460 = vpop.f32.mrb[0].mxu0
      %6461 = vdwg.mxu0
      %v6494 = vunpack.c.l.b16 %v5724
      %v6495 = vunpack.c.l.b16 %v5725
      %v6496 = vunpack.c.l.b16 %v5726
      %v6497 = vunpack.c.l.b16 %v5727
      %v6498 = vunpack.c.l.b16 %v5728
      %v6499 = vunpack.c.l.b16 %v5729
      %v6500 = vunpack.c.l.b16 %v5730
      %v6501 = vunpack.c.l.b16 %v5731
      %v6502 = vunpack.c.l.b16 %v5732
      %v6503 = vunpack.c.l.b16 %v5733
      %v6504 = vunpack.c.l.b16 %v5734
      %v6505 = vunpack.c.l.b16 %v5735
      %v6506 = vunpack.c.l.b16 %v5736
      %v6507 = vunpack.c.l.b16 %v5737
      %v6508 = vunpack.c.l.b16 %v5738
      %v6509 = vunpack.c.l.b16 %v5739
      %v6510 = vunpack.c.l.b16 %v5740
      %v6511 = vunpack.c.l.b16 %v5741
      %v6512 = vunpack.c.l.b16 %v5742
      %v6513 = vunpack.c.l.b16 %v5743
      %v6514 = vunpack.c.l.b16 %v5744
      %v6515 = vunpack.c.l.b16 %v5745
      %v6516 = vunpack.c.l.b16 %v5746
      %v6517 = vunpack.c.l.b16 %v5747
      %v6518 = vunpack.c.l.b16 %v5748
      %v6519 = vunpack.c.l.b16 %v5749
      %v6520 = vunpack.c.l.b16 %v5750
      %v6521 = vunpack.c.l.b16 %v5751
      %v6522 = vunpack.c.l.b16 %v5752
      %v6523 = vunpack.c.l.b16 %v5753
      %v6524 = vunpack.c.l.b16 %v5754
      %v6525 = vunpack.c.l.b16 %v5755
      %v6526 = vpack.c.b16 %v6495, %v6494
      %v6527 = vpack.c.b16 %v6497, %v6496
      %v6528 = vpack.c.b16 %v6499, %v6498
      %v6529 = vpack.c.b16 %v6501, %v6500
      %v6530 = vpack.c.b16 %v6503, %v6502
      %v6531 = vpack.c.b16 %v6505, %v6504
      %v6532 = vpack.c.b16 %v6507, %v6506
      %v6533 = vpack.c.b16 %v6509, %v6508
      %v6534 = vpack.c.b16 %v6511, %v6510
      %v6535 = vpack.c.b16 %v6513, %v6512
      %v6536 = vpack.c.b16 %v6515, %v6514
      %v6537 = vpack.c.b16 %v6517, %v6516
      %v6538 = vpack.c.b16 %v6519, %v6518
      %v6539 = vpack.c.b16 %v6521, %v6520
      %v6540 = vpack.c.b16 %v6523, %v6522
      %v6541 = vpack.c.b16 %v6525, %v6524
      %v6574 = vunpack.c.l.b16 %v5756
      %v6575 = vunpack.c.l.b16 %v5757
      %v6576 = vunpack.c.l.b16 %v5758
      %v6577 = vunpack.c.l.b16 %v5759
      %v6578 = vunpack.c.l.b16 %v5760
      %v6579 = vunpack.c.l.b16 %v5761
      %v6580 = vunpack.c.l.b16 %v5762
      %v6581 = vunpack.c.l.b16 %v5763
      %v6582 = vunpack.c.l.b16 %v5764
      %v6583 = vunpack.c.l.b16 %v5765
      %v6584 = vunpack.c.l.b16 %v5766
      %v6585 = vunpack.c.l.b16 %v5767
      %v6586 = vunpack.c.l.b16 %v5768
      %v6587 = vunpack.c.l.b16 %v5769
      %v6588 = vunpack.c.l.b16 %v5770
      %v6589 = vunpack.c.l.b16 %v5771
      %v6590 = vpack.c.b16 %v6575, %v6574
      %v6591 = vpack.c.b16 %v6577, %v6576
      %v6592 = vpack.c.b16 %v6579, %v6578
      %v6593 = vpack.c.b16 %v6581, %v6580
      %v6594 = vpack.c.b16 %v6583, %v6582
      %v6595 = vpack.c.b16 %v6585, %v6584
      %v6596 = vpack.c.b16 %v6587, %v6586
      %v6597 = vpack.c.b16 %v6589, %v6588
      %6606 = vmatprep.subr.bf16.mxu0 0
      %6607 = vmatpush1.bf16.msra.mxu0 %v6590
      %6608 = vmatprep.subr.bf16.mxu0 0
      %6609 = vmatpush1.bf16.msra.mxu0 %v6591
      %6610 = vmatprep.subr.bf16.mxu0 0
      %6611 = vmatpush1.bf16.msra.mxu0 %v6592
      %6612 = vmatprep.subr.bf16.mxu0 0
      %6613 = vmatpush1.bf16.msra.mxu0 %v6593
      %6614 = vmatprep.subr.bf16.mxu0 0
      %6615 = vmatpush1.bf16.msra.mxu0 %v6594
      %6616 = vmatprep.subr.bf16.mxu0 0
      %6617 = vmatpush1.bf16.msra.mxu0 %v6595
      %6618 = vmatprep.subr.bf16.mxu0 0
      %6619 = vmatpush1.bf16.msra.mxu0 %v6596
      %6620 = vmatprep.subr.bf16.mxu0 0
      %6621 = vmatpush1.bf16.msra.mxu0 %v6597
      %6622 = vmatprep.subr.bf16.mxu0 0
      %6623 = vmatpush1.bf16.msra.mxu0 0
      %6624 = vmatprep.subr.bf16.mxu0 0
      %6625 = vmatpush1.bf16.msra.mxu0 0
      %6626 = vmatprep.subr.bf16.mxu0 0
      %6627 = vmatpush1.bf16.msra.mxu0 0
      %6628 = vmatprep.subr.bf16.mxu0 0
      %6629 = vmatpush1.bf16.msra.mxu0 0
      %6630 = vmatprep.subr.bf16.mxu0 0
      %6631 = vmatpush1.bf16.msra.mxu0 0
      %6632 = vmatprep.subr.bf16.mxu0 0
      %6633 = vmatpush1.bf16.msra.mxu0 0
      %6634 = vmatprep.subr.bf16.mxu0 0
      %6635 = vmatpush1.bf16.msra.mxu0 0
      %6636 = vmatprep.subr.bf16.mxu0 0
      %6637 = vmatpush1.bf16.msra.mxu0 0
      %6638 = vmatprep.mubr.bf16.mxu0 0
      %6639 = vmatmul.mubr.bf16.gmra.mrb[0].mxu0 %v6526
      %v6640 = vpop.f32.mrb[0].mxu0
      %v6641 = vadd.f32 %v6336, %v6640
      %v6642 = vpop.f32.mrb[0].mxu0
      %v6643 = vpop.f32.mrb[0].mxu0
      %v6644 = vadd.f32 %v6339, %v6643
      %v6645 = vpop.f32.mrb[0].mxu0
      %6646 = vmatprep.mubr.bf16.mxu0 0
      %6647 = vmatmul.mubr.bf16.gmra.mrb[0].mxu0 %v6527
      %v6648 = vpop.f32.mrb[0].mxu0
      %v6649 = vadd.f32 %v6344, %v6648
      %v6650 = vpop.f32.mrb[0].mxu0
      %v6651 = vpop.f32.mrb[0].mxu0
      %v6652 = vadd.f32 %v6347, %v6651
      %v6653 = vpop.f32.mrb[0].mxu0
      %6654 = vmatprep.mubr.bf16.mxu0 0
      %6655 = vmatmul.mubr.bf16.gmra.mrb[0].mxu0 %v6528
      %v6656 = vpop.f32.mrb[0].mxu0
      %v6657 = vadd.f32 %v6352, %v6656
      %v6658 = vpop.f32.mrb[0].mxu0
      %v6659 = vpop.f32.mrb[0].mxu0
      %v6660 = vadd.f32 %v6355, %v6659
      %v6661 = vpop.f32.mrb[0].mxu0
      %6662 = vmatprep.mubr.bf16.mxu0 0
      %6663 = vmatmul.mubr.bf16.gmra.mrb[0].mxu0 %v6529
      %v6664 = vpop.f32.mrb[0].mxu0
      %v6665 = vadd.f32 %v6360, %v6664
      %v6666 = vpop.f32.mrb[0].mxu0
      %v6667 = vpop.f32.mrb[0].mxu0
      %v6668 = vadd.f32 %v6363, %v6667
      %v6669 = vpop.f32.mrb[0].mxu0
      %6670 = vmatprep.mubr.bf16.mxu0 0
      %6671 = vmatmul.mubr.bf16.gmra.mrb[0].mxu0 %v6530
      %v6672 = vpop.f32.mrb[0].mxu0
      %v6673 = vadd.f32 %v6368, %v6672
      %v6674 = vpop.f32.mrb[0].mxu0
      %v6675 = vpop.f32.mrb[0].mxu0
      %v6676 = vadd.f32 %v6371, %v6675
      %v6677 = vpop.f32.mrb[0].mxu0
      %6678 = vmatprep.mubr.bf16.mxu0 0
      %6679 = vmatmul.mubr.bf16.gmra.mrb[0].mxu0 %v6531
      %v6680 = vpop.f32.mrb[0].mxu0
      %v6681 = vadd.f32 %v6376, %v6680
      %v6682 = vpop.f32.mrb[0].mxu0
      %v6683 = vpop.f32.mrb[0].mxu0
      %v6684 = vadd.f32 %v6379, %v6683
      %v6685 = vpop.f32.mrb[0].mxu0
      %6686 = vmatprep.mubr.bf16.mxu0 0
      %6687 = vmatmul.mubr.bf16.gmra.mrb[0].mxu0 %v6532
      %v6688 = vpop.f32.mrb[0].mxu0
      %v6689 = vadd.f32 %v6384, %v6688
      %v6690 = vpop.f32.mrb[0].mxu0
      %v6691 = vpop.f32.mrb[0].mxu0
      %v6692 = vadd.f32 %v6387, %v6691
      %v6693 = vpop.f32.mrb[0].mxu0
      %6694 = vmatprep.mubr.bf16.mxu0 0
      %6695 = vmatmul.mubr.bf16.gmra.mrb[0].mxu0 %v6533
      %v6696 = vpop.f32.mrb[0].mxu0
      %v6697 = vadd.f32 %v6392, %v6696
      %v6698 = vpop.f32.mrb[0].mxu0
      %v6699 = vpop.f32.mrb[0].mxu0
      %v6700 = vadd.f32 %v6395, %v6699
      %v6701 = vpop.f32.mrb[0].mxu0
      %6702 = vmatprep.mubr.bf16.mxu0 0
      %6703 = vmatmul.mubr.bf16.gmra.mrb[0].mxu0 %v6534
      %v6704 = vpop.f32.mrb[0].mxu0
      %v6705 = vadd.f32 %v6400, %v6704
      %v6706 = vpop.f32.mrb[0].mxu0
      %v6707 = vpop.f32.mrb[0].mxu0
      %v6708 = vadd.f32 %v6403, %v6707
      %v6709 = vpop.f32.mrb[0].mxu0
      %6710 = vmatprep.mubr.bf16.mxu0 0
      %6711 = vmatmul.mubr.bf16.gmra.mrb[0].mxu0 %v6535
      %v6712 = vpop.f32.mrb[0].mxu0
      %v6713 = vadd.f32 %v6408, %v6712
      %v6714 = vpop.f32.mrb[0].mxu0
      %v6715 = vpop.f32.mrb[0].mxu0
      %v6716 = vadd.f32 %v6411, %v6715
      %v6717 = vpop.f32.mrb[0].mxu0
      %6718 = vmatprep.mubr.bf16.mxu0 0
      %6719 = vmatmul.mubr.bf16.gmra.mrb[0].mxu0 %v6536
      %v6720 = vpop.f32.mrb[0].mxu0
      %v6721 = vadd.f32 %v6416, %v6720
      %v6722 = vpop.f32.mrb[0].mxu0
      %v6723 = vpop.f32.mrb[0].mxu0
      %v6724 = vadd.f32 %v6419, %v6723
      %v6725 = vpop.f32.mrb[0].mxu0
      %6726 = vmatprep.mubr.bf16.mxu0 0
      %6727 = vmatmul.mubr.bf16.gmra.mrb[0].mxu0 %v6537
      %v6728 = vpop.f32.mrb[0].mxu0
      %v6729 = vadd.f32 %v6424, %v6728
      %v6730 = vpop.f32.mrb[0].mxu0
      %v6731 = vpop.f32.mrb[0].mxu0
      %v6732 = vadd.f32 %v6427, %v6731
      %v6733 = vpop.f32.mrb[0].mxu0
      %6734 = vmatprep.mubr.bf16.mxu0 0
      %6735 = vmatmul.mubr.bf16.gmra.mrb[0].mxu0 %v6538
      %v6736 = vpop.f32.mrb[0].mxu0
      %v6737 = vadd.f32 %v6432, %v6736
      %v6738 = vpop.f32.mrb[0].mxu0
      %v6739 = vpop.f32.mrb[0].mxu0
      %v6740 = vadd.f32 %v6435, %v6739
      %v6741 = vpop.f32.mrb[0].mxu0
      %6742 = vmatprep.mubr.bf16.mxu0 0
      %6743 = vmatmul.mubr.bf16.gmra.mrb[0].mxu0 %v6539
      %v6744 = vpop.f32.mrb[0].mxu0
      %v6745 = vadd.f32 %v6440, %v6744
      %v6746 = vpop.f32.mrb[0].mxu0
      %v6747 = vpop.f32.mrb[0].mxu0
      %v6748 = vadd.f32 %v6443, %v6747
      %v6749 = vpop.f32.mrb[0].mxu0
      %6750 = vmatprep.mubr.bf16.mxu0 0
      %6751 = vmatmul.mubr.bf16.gmra.mrb[0].mxu0 %v6540
      %v6752 = vpop.f32.mrb[0].mxu0
      %v6753 = vadd.f32 %v6448, %v6752
      %v6754 = vpop.f32.mrb[0].mxu0
      %v6755 = vpop.f32.mrb[0].mxu0
      %v6756 = vadd.f32 %v6451, %v6755
      %v6757 = vpop.f32.mrb[0].mxu0
      %6758 = vmatprep.mubr.bf16.mxu0 0
      %6759 = vmatmul.mubr.bf16.gmra.mrb[0].mxu0 %v6541
      %v6760 = vpop.f32.mrb[0].mxu0
      %v6761 = vadd.f32 %v6456, %v6760
      %v6762 = vpop.f32.mrb[0].mxu0
      %v6763 = vpop.f32.mrb[0].mxu0
      %v6764 = vadd.f32 %v6459, %v6763
      %v6765 = vpop.f32.mrb[0].mxu0
      %6766 = vdwg.mxu0
      %v6767 = vld [vmem:[#allocation2] sm:$0xe]
      %v6768 = vld [vmem:[#allocation2 + $0xc] sm:$0xe]
      %v6769 = vld [vmem:[#allocation2 + $0x18] sm:$0xe]
      %v6770 = vld [vmem:[#allocation2 + $0x24] sm:$0xe]
      %v6771 = vld [vmem:[#allocation2 + $0x30] sm:$0xe]
      %v6772 = vld [vmem:[#allocation2 + $0x3c] sm:$0xe]
      %v6773 = vld [vmem:[#allocation2 + $0x48] sm:$0xe]
      %v6774 = vld [vmem:[#allocation2 + $0x54] sm:$0xe]
      %v6775 = vld [vmem:[#allocation2 + $0x60] sm:$0xe]
      %v6776 = vld [vmem:[#allocation2 + $0x6c] sm:$0xe]
      %v6777 = vld [vmem:[#allocation2 + $0x78] sm:$0xe]
      %v6778 = vld [vmem:[#allocation2 + $0x84] sm:$0xe]
      %v6779 = vld [vmem:[#allocation2 + $0x90] sm:$0xe]
      %v6780 = vld [vmem:[#allocation2 + $0x9c] sm:$0xe]
      %v6781 = vld [vmem:[#allocation2 + $0xa8] sm:$0xe]
      %v6782 = vld [vmem:[#allocation2 + $0xb4] sm:$0xe]
      %v6815 = vrot.slane %v6767, 5
      %v6816 = vrot.slane %v6815, 4
      %v6817 = vrot.slane %v5725, 5
      %v6818 = vsel %vm1349, %v6816, %v6817
      %v6819 = vrot.slane %v6817, 4
      %v6820 = vrot.slane %v5772, 5
      %v6821 = vsel %vm1349, %v6819, %v6820
      %v6822 = vrot.slane %v6768, 5
      %v6823 = vrot.slane %v6822, 4
      %v6824 = vrot.slane %v5727, 5
      %v6825 = vsel %vm1349, %v6823, %v6824
      %v6826 = vrot.slane %v6824, 4
      %v6827 = vrot.slane %v5773, 5
      %v6828 = vsel %vm1349, %v6826, %v6827
      %v6829 = vrot.slane %v6769, 5
      %v6830 = vrot.slane %v6829, 4
      %v6831 = vrot.slane %v5729, 5
      %v6832 = vsel %vm1349, %v6830, %v6831
      %v6833 = vrot.slane %v6831, 4
      %v6834 = vrot.slane %v5774, 5
      %v6835 = vsel %vm1349, %v6833, %v6834
      %v6836 = vrot.slane %v6770, 5
      %v6837 = vrot.slane %v6836, 4
      %v6838 = vrot.slane %v5731, 5
      %v6839 = vsel %vm1349, %v6837, %v6838
      %v6840 = vrot.slane %v6838, 4
      %v6841 = vrot.slane %v5775, 5
      %v6842 = vsel %vm1349, %v6840, %v6841
      %v6843 = vrot.slane %v6771, 5
      %v6844 = vrot.slane %v6843, 4
      %v6845 = vrot.slane %v5733, 5
      %v6846 = vsel %vm1349, %v6844, %v6845
      %v6847 = vrot.slane %v6845, 4
      %v6848 = vrot.slane %v5776, 5
      %v6849 = vsel %vm1349, %v6847, %v6848
      %v6850 = vrot.slane %v6772, 5
      %v6851 = vrot.slane %v6850, 4
      %v6852 = vrot.slane %v5735, 5
      %v6853 = vsel %vm1349, %v6851, %v6852
      %v6854 = vrot.slane %v6852, 4
      %v6855 = vrot.slane %v5777, 5
      %v6856 = vsel %vm1349, %v6854, %v6855
      %v6857 = vrot.slane %v6773, 5
      %v6858 = vrot.slane %v6857, 4
      %v6859 = vrot.slane %v5737, 5
      %v6860 = vsel %vm1349, %v6858, %v6859
      %v6861 = vrot.slane %v6859, 4
      %v6862 = vrot.slane %v5778, 5
      %v6863 = vsel %vm1349, %v6861, %v6862
      %v6864 = vrot.slane %v6774, 5
      %v6865 = vrot.slane %v6864, 4
      %v6866 = vrot.slane %v5739, 5
      %v6867 = vsel %vm1349, %v6865, %v6866
      %v6868 = vrot.slane %v6866, 4
      %v6869 = vrot.slane %v5779, 5
      %v6870 = vsel %vm1349, %v6868, %v6869
      %v6871 = vrot.slane %v6775, 5
      %v6872 = vrot.slane %v6871, 4
      %v6873 = vrot.slane %v5741, 5
      %v6874 = vsel %vm1349, %v6872, %v6873
      %v6875 = vrot.slane %v6873, 4
      %v6876 = vrot.slane %v5780, 5
      %v6877 = vsel %vm1349, %v6875, %v6876
      %v6878 = vrot.slane %v6776, 5
      %v6879 = vrot.slane %v6878, 4
      %v6880 = vrot.slane %v5743, 5
      %v6881 = vsel %vm1349, %v6879, %v6880
      %v6882 = vrot.slane %v6880, 4
      %v6883 = vrot.slane %v5781, 5
      %v6884 = vsel %vm1349, %v6882, %v6883
      %v6885 = vrot.slane %v6777, 5
      %v6886 = vrot.slane %v6885, 4
      %v6887 = vrot.slane %v5745, 5
      %v6888 = vsel %vm1349, %v6886, %v6887
      %v6889 = vrot.slane %v6887, 4
      %v6890 = vrot.slane %v5782, 5
      %v6891 = vsel %vm1349, %v6889, %v6890
      %v6892 = vrot.slane %v6778, 5
      %v6893 = vrot.slane %v6892, 4
      %v6894 = vrot.slane %v5747, 5
      %v6895 = vsel %vm1349, %v6893, %v6894
      %v6896 = vrot.slane %v6894, 4
      %v6897 = vrot.slane %v5783, 5
      %v6898 = vsel %vm1349, %v6896, %v6897
      %v6899 = vrot.slane %v6779, 5
      %v6900 = vrot.slane %v6899, 4
      %v6901 = vrot.slane %v5749, 5
      %v6902 = vsel %vm1349, %v6900, %v6901
      %v6903 = vrot.slane %v6901, 4
      %v6904 = vrot.slane %v5784, 5
      %v6905 = vsel %vm1349, %v6903, %v6904
      %v6906 = vrot.slane %v6780, 5
      %v6907 = vrot.slane %v6906, 4
      %v6908 = vrot.slane %v5751, 5
      %v6909 = vsel %vm1349, %v6907, %v6908
      %v6910 = vrot.slane %v6908, 4
      %v6911 = vrot.slane %v5785, 5
      %v6912 = vsel %vm1349, %v6910, %v6911
      %v6913 = vrot.slane %v6781, 5
      %v6914 = vrot.slane %v6913, 4
      %v6915 = vrot.slane %v5753, 5
      %v6916 = vsel %vm1349, %v6914, %v6915
      %v6917 = vrot.slane %v6915, 4
      %v6918 = vrot.slane %v5786, 5
      %v6919 = vsel %vm1349, %v6917, %v6918
      %v6920 = vrot.slane %v6782, 5
      %v6921 = vrot.slane %v6920, 4
      %v6922 = vrot.slane %v5755, 5
      %v6923 = vsel %vm1349, %v6921, %v6922
      %v6924 = vrot.slane %v6922, 4
      %v6925 = vrot.slane %v5787, 5
      %v6926 = vsel %vm1349, %v6924, %v6925
      %s6927 = scalar_lea.vmem %s3, 128
      %v6928 = vld [vmem:[%s6927] sm:$0xf]
      %v6929 = vld [vmem:[%s6927 + $0x4] sm:$0xf]
      %v6930 = vld [vmem:[%s6927 + $0x8] sm:$0xf]
      %v6931 = vld [vmem:[%s6927 + $0xc] sm:$0xf]
      %v6932 = vld [vmem:[%s6927 + $0x10] sm:$0xf]
      %v6933 = vld [vmem:[%s6927 + $0x14] sm:$0xf]
      %v6934 = vld [vmem:[%s6927 + $0x18] sm:$0xf]
      %v6935 = vld [vmem:[%s6927 + $0x1c] sm:$0xf]
      %v6936 = vld [vmem:[%s6927 + $0x20] sm:$0xf]
      %v6937 = vld [vmem:[%s6927 + $0x24] sm:$0xf]
      %v6938 = vld [vmem:[%s6927 + $0x28] sm:$0xf]
      %v6939 = vld [vmem:[%s6927 + $0x2c] sm:$0xf]
      %v6940 = vld [vmem:[%s6927 + $0x30] sm:$0xf]
      %v6941 = vld [vmem:[%s6927 + $0x34] sm:$0xf]
      %v6942 = vld [vmem:[%s6927 + $0x38] sm:$0xf]
      %v6943 = vld [vmem:[%s6927 + $0x3c] sm:$0xf]
      %v6944 = vunpack.c.l.b16 %v6818
      %v6945 = vunpack.c.l.b16 %v6821
      %v6946 = vunpack.c.l.b16 %v6825
      %v6947 = vunpack.c.l.b16 %v6828
      %v6948 = vunpack.c.l.b16 %v6832
      %v6949 = vunpack.c.l.b16 %v6835
      %v6950 = vunpack.c.l.b16 %v6839
      %v6951 = vunpack.c.l.b16 %v6842
      %v6952 = vunpack.c.l.b16 %v6846
      %v6953 = vunpack.c.l.b16 %v6849
      %v6954 = vunpack.c.l.b16 %v6853
      %v6955 = vunpack.c.l.b16 %v6856
      %v6956 = vunpack.c.l.b16 %v6860
      %v6957 = vunpack.c.l.b16 %v6863
      %v6958 = vunpack.c.l.b16 %v6867
      %v6959 = vunpack.c.l.b16 %v6870
      %v6960 = vunpack.c.l.b16 %v6874
      %v6961 = vunpack.c.l.b16 %v6877
      %v6962 = vunpack.c.l.b16 %v6881
      %v6963 = vunpack.c.l.b16 %v6884
      %v6964 = vunpack.c.l.b16 %v6888
      %v6965 = vunpack.c.l.b16 %v6891
      %v6966 = vunpack.c.l.b16 %v6895
      %v6967 = vunpack.c.l.b16 %v6898
      %v6968 = vunpack.c.l.b16 %v6902
      %v6969 = vunpack.c.l.b16 %v6905
      %v6970 = vunpack.c.l.b16 %v6909
      %v6971 = vunpack.c.l.b16 %v6912
      %v6972 = vunpack.c.l.b16 %v6916
      %v6973 = vunpack.c.l.b16 %v6919
      %v6974 = vunpack.c.l.b16 %v6923
      %v6975 = vunpack.c.l.b16 %v6926
      %v6976 = vpack.c.b16 %v6945, %v6944
      %v6977 = vpack.c.b16 %v6947, %v6946
      %v6978 = vpack.c.b16 %v6949, %v6948
      %v6979 = vpack.c.b16 %v6951, %v6950
      %v6980 = vpack.c.b16 %v6953, %v6952
      %v6981 = vpack.c.b16 %v6955, %v6954
      %v6982 = vpack.c.b16 %v6957, %v6956
      %v6983 = vpack.c.b16 %v6959, %v6958
      %v6984 = vpack.c.b16 %v6961, %v6960
      %v6985 = vpack.c.b16 %v6963, %v6962
      %v6986 = vpack.c.b16 %v6965, %v6964
      %v6987 = vpack.c.b16 %v6967, %v6966
      %v6988 = vpack.c.b16 %v6969, %v6968
      %v6989 = vpack.c.b16 %v6971, %v6970
      %v6990 = vpack.c.b16 %v6973, %v6972
      %v6991 = vpack.c.b16 %v6975, %v6974
      %v7024 = vunpack.c.l.b16 %v6928
      %v7025 = vunpack.c.l.b16 %v6929
      %v7026 = vunpack.c.l.b16 %v6930
      %v7027 = vunpack.c.l.b16 %v6931
      %v7028 = vunpack.c.l.b16 %v6932
      %v7029 = vunpack.c.l.b16 %v6933
      %v7030 = vunpack.c.l.b16 %v6934
      %v7031 = vunpack.c.l.b16 %v6935
      %v7032 = vunpack.c.l.b16 %v6936
      %v7033 = vunpack.c.l.b16 %v6937
      %v7034 = vunpack.c.l.b16 %v6938
      %v7035 = vunpack.c.l.b16 %v6939
      %v7036 = vunpack.c.l.b16 %v6940
      %v7037 = vunpack.c.l.b16 %v6941
      %v7038 = vunpack.c.l.b16 %v6942
      %v7039 = vunpack.c.l.b16 %v6943
      %v7040 = vpack.c.b16 %v7025, %v7024
      %v7041 = vpack.c.b16 %v7027, %v7026
      %v7042 = vpack.c.b16 %v7029, %v7028
      %v7043 = vpack.c.b16 %v7031, %v7030
      %v7044 = vpack.c.b16 %v7033, %v7032
      %v7045 = vpack.c.b16 %v7035, %v7034
      %v7046 = vpack.c.b16 %v7037, %v7036
      %v7047 = vpack.c.b16 %v7039, %v7038
      %7056 = vmatprep.subr.bf16.mxu0 0
      %7057 = vmatpush1.bf16.msra.mxu0 %v7040
      %7058 = vmatprep.subr.bf16.mxu0 0
      %7059 = vmatpush1.bf16.msra.mxu0 %v7041
      %7060 = vmatprep.subr.bf16.mxu0 0
      %7061 = vmatpush1.bf16.msra.mxu0 %v7042
      %7062 = vmatprep.subr.bf16.mxu0 0
      %7063 = vmatpush1.bf16.msra.mxu0 %v7043
      %7064 = vmatprep.subr.bf16.mxu0 0
      %7065 = vmatpush1.bf16.msra.mxu0 %v7044
      %7066 = vmatprep.subr.bf16.mxu0 0
      %7067 = vmatpush1.bf16.msra.mxu0 %v7045
      %7068 = vmatprep.subr.bf16.mxu0 0
      %7069 = vmatpush1.bf16.msra.mxu0 %v7046
      %7070 = vmatprep.subr.bf16.mxu0 0
      %7071 = vmatpush1.bf16.msra.mxu0 %v7047
      %7072 = vmatprep.subr.bf16.mxu0 0
      %7073 = vmatpush1.bf16.msra.mxu0 0
      %7074 = vmatprep.subr.bf16.mxu0 0
      %7075 = vmatpush1.bf16.msra.mxu0 0
      %7076 = vmatprep.subr.bf16.mxu0 0
      %7077 = vmatpush1.bf16.msra.mxu0 0
      %7078 = vmatprep.subr.bf16.mxu0 0
      %7079 = vmatpush1.bf16.msra.mxu0 0
      %7080 = vmatprep.subr.bf16.mxu0 0
      %7081 = vmatpush1.bf16.msra.mxu0 0
      %7082 = vmatprep.subr.bf16.mxu0 0
      %7083 = vmatpush1.bf16.msra.mxu0 0
      %7084 = vmatprep.subr.bf16.mxu0 0
      %7085 = vmatpush1.bf16.msra.mxu0 0
      %7086 = vmatprep.subr.bf16.mxu0 0
      %7087 = vmatpush1.bf16.msra.mxu0 0
      %7088 = vmatprep.mubr.bf16.mxu0 0
      %7089 = vmatmul.mubr.bf16.gmra.mrb[0].mxu0 %v6976
      %v7090 = vpop.f32.mrb[0].mxu0
      %v7091 = vadd.f32 0.0, %v7090
      %v7092 = vpop.f32.mrb[0].mxu0
      %v7093 = vpop.f32.mrb[0].mxu0
      %v7094 = vadd.f32 0.0, %v7093
      %v7095 = vpop.f32.mrb[0].mxu0
      %7096 = vmatprep.mubr.bf16.mxu0 0
      %7097 = vmatmul.mubr.bf16.gmra.mrb[0].mxu0 %v6977
      %v7098 = vpop.f32.mrb[0].mxu0
      %v7099 = vadd.f32 0.0, %v7098
      %v7100 = vpop.f32.mrb[0].mxu0
      %v7101 = vpop.f32.mrb[0].mxu0
      %v7102 = vadd.f32 0.0, %v7101
      %v7103 = vpop.f32.mrb[0].mxu0
      %7104 = vmatprep.mubr.bf16.mxu0 0
      %7105 = vmatmul.mubr.bf16.gmra.mrb[0].mxu0 %v6978
      %v7106 = vpop.f32.mrb[0].mxu0
      %v7107 = vadd.f32 0.0, %v7106
      %v7108 = vpop.f32.mrb[0].mxu0
      %v7109 = vpop.f32.mrb[0].mxu0
      %v7110 = vadd.f32 0.0, %v7109
      %v7111 = vpop.f32.mrb[0].mxu0
      %7112 = vmatprep.mubr.bf16.mxu0 0
      %7113 = vmatmul.mubr.bf16.gmra.mrb[0].mxu0 %v6979
      %v7114 = vpop.f32.mrb[0].mxu0
      %v7115 = vadd.f32 0.0, %v7114
      %v7116 = vpop.f32.mrb[0].mxu0
      %v7117 = vpop.f32.mrb[0].mxu0
      %v7118 = vadd.f32 0.0, %v7117
      %v7119 = vpop.f32.mrb[0].mxu0
      %7120 = vmatprep.mubr.bf16.mxu0 0
      %7121 = vmatmul.mubr.bf16.gmra.mrb[0].mxu0 %v6980
      %v7122 = vpop.f32.mrb[0].mxu0
      %v7123 = vadd.f32 0.0, %v7122
      %v7124 = vpop.f32.mrb[0].mxu0
      %v7125 = vpop.f32.mrb[0].mxu0
      %v7126 = vadd.f32 0.0, %v7125
      %v7127 = vpop.f32.mrb[0].mxu0
      %7128 = vmatprep.mubr.bf16.mxu0 0
      %7129 = vmatmul.mubr.bf16.gmra.mrb[0].mxu0 %v6981
      %v7130 = vpop.f32.mrb[0].mxu0
      %v7131 = vadd.f32 0.0, %v7130
      %v7132 = vpop.f32.mrb[0].mxu0
      %v7133 = vpop.f32.mrb[0].mxu0
      %v7134 = vadd.f32 0.0, %v7133
      %v7135 = vpop.f32.mrb[0].mxu0
      %7136 = vmatprep.mubr.bf16.mxu0 0
      %7137 = vmatmul.mubr.bf16.gmra.mrb[0].mxu0 %v6982
      %v7138 = vpop.f32.mrb[0].mxu0
      %v7139 = vadd.f32 0.0, %v7138
      %v7140 = vpop.f32.mrb[0].mxu0
      %v7141 = vpop.f32.mrb[0].mxu0
      %v7142 = vadd.f32 0.0, %v7141
      %v7143 = vpop.f32.mrb[0].mxu0
      %7144 = vmatprep.mubr.bf16.mxu0 0
      %7145 = vmatmul.mubr.bf16.gmra.mrb[0].mxu0 %v6983
      %v7146 = vpop.f32.mrb[0].mxu0
      %v7147 = vadd.f32 0.0, %v7146
      %v7148 = vpop.f32.mrb[0].mxu0
      %v7149 = vpop.f32.mrb[0].mxu0
      %v7150 = vadd.f32 0.0, %v7149
      %v7151 = vpop.f32.mrb[0].mxu0
      %7152 = vmatprep.mubr.bf16.mxu0 0
      %7153 = vmatmul.mubr.bf16.gmra.mrb[0].mxu0 %v6984
      %v7154 = vpop.f32.mrb[0].mxu0
      %v7155 = vadd.f32 0.0, %v7154
      %v7156 = vpop.f32.mrb[0].mxu0
      %v7157 = vpop.f32.mrb[0].mxu0
      %v7158 = vadd.f32 0.0, %v7157
      %v7159 = vpop.f32.mrb[0].mxu0
      %7160 = vmatprep.mubr.bf16.mxu0 0
      %7161 = vmatmul.mubr.bf16.gmra.mrb[0].mxu0 %v6985
      %v7162 = vpop.f32.mrb[0].mxu0
      %v7163 = vadd.f32 0.0, %v7162
      %v7164 = vpop.f32.mrb[0].mxu0
      %v7165 = vpop.f32.mrb[0].mxu0
      %v7166 = vadd.f32 0.0, %v7165
      %v7167 = vpop.f32.mrb[0].mxu0
      %7168 = vmatprep.mubr.bf16.mxu0 0
      %7169 = vmatmul.mubr.bf16.gmra.mrb[0].mxu0 %v6986
      %v7170 = vpop.f32.mrb[0].mxu0
      %v7171 = vadd.f32 0.0, %v7170
      %v7172 = vpop.f32.mrb[0].mxu0
      %v7173 = vpop.f32.mrb[0].mxu0
      %v7174 = vadd.f32 0.0, %v7173
      %v7175 = vpop.f32.mrb[0].mxu0
      %7176 = vmatprep.mubr.bf16.mxu0 0
      %7177 = vmatmul.mubr.bf16.gmra.mrb[0].mxu0 %v6987
      %v7178 = vpop.f32.mrb[0].mxu0
      %v7179 = vadd.f32 0.0, %v7178
      %v7180 = vpop.f32.mrb[0].mxu0
      %v7181 = vpop.f32.mrb[0].mxu0
      %v7182 = vadd.f32 0.0, %v7181
      %v7183 = vpop.f32.mrb[0].mxu0
      %7184 = vmatprep.mubr.bf16.mxu0 0
      %7185 = vmatmul.mubr.bf16.gmra.mrb[0].mxu0 %v6988
      %v7186 = vpop.f32.mrb[0].mxu0
      %v7187 = vadd.f32 0.0, %v7186
      %v7188 = vpop.f32.mrb[0].mxu0
      %v7189 = vpop.f32.mrb[0].mxu0
      %v7190 = vadd.f32 0.0, %v7189
      %v7191 = vpop.f32.mrb[0].mxu0
      %7192 = vmatprep.mubr.bf16.mxu0 0
      %7193 = vmatmul.mubr.bf16.gmra.mrb[0].mxu0 %v6989
      %v7194 = vpop.f32.mrb[0].mxu0
      %v7195 = vadd.f32 0.0, %v7194
      %v7196 = vpop.f32.mrb[0].mxu0
      %v7197 = vpop.f32.mrb[0].mxu0
      %v7198 = vadd.f32 0.0, %v7197
      %v7199 = vpop.f32.mrb[0].mxu0
      %7200 = vmatprep.mubr.bf16.mxu0 0
      %7201 = vmatmul.mubr.bf16.gmra.mrb[0].mxu0 %v6990
      %v7202 = vpop.f32.mrb[0].mxu0
      %v7203 = vadd.f32 0.0, %v7202
      %v7204 = vpop.f32.mrb[0].mxu0
      %v7205 = vpop.f32.mrb[0].mxu0
      %v7206 = vadd.f32 0.0, %v7205
      %v7207 = vpop.f32.mrb[0].mxu0
      %7208 = vmatprep.mubr.bf16.mxu0 0
      %7209 = vmatmul.mubr.bf16.gmra.mrb[0].mxu0 %v6991
      %v7210 = vpop.f32.mrb[0].mxu0
      %v7211 = vadd.f32 0.0, %v7210
      %v7212 = vpop.f32.mrb[0].mxu0
      %v7213 = vpop.f32.mrb[0].mxu0
      %v7214 = vadd.f32 0.0, %v7213
      %v7215 = vpop.f32.mrb[0].mxu0
      %7216 = vdwg.mxu0
      %v7217 = vadd.f32 %v6641, %v7091
      %v7218 = vadd.f32 %v6644, %v7094
      %v7219 = vadd.f32 %v6649, %v7099
      %v7220 = vadd.f32 %v6652, %v7102
      %v7221 = vadd.f32 %v6657, %v7107
      %v7222 = vadd.f32 %v6660, %v7110
      %v7223 = vadd.f32 %v6665, %v7115
      %v7224 = vadd.f32 %v6668, %v7118
      %v7225 = vadd.f32 %v6673, %v7123
      %v7226 = vadd.f32 %v6676, %v7126
      %v7227 = vadd.f32 %v6681, %v7131
      %v7228 = vadd.f32 %v6684, %v7134
      %v7229 = vadd.f32 %v6689, %v7139
      %v7230 = vadd.f32 %v6692, %v7142
      %v7231 = vadd.f32 %v6697, %v7147
      %v7232 = vadd.f32 %v6700, %v7150
      %v7233 = vadd.f32 %v6705, %v7155
      %v7234 = vadd.f32 %v6708, %v7158
      %v7235 = vadd.f32 %v6713, %v7163
      %v7236 = vadd.f32 %v6716, %v7166
      %v7237 = vadd.f32 %v6721, %v7171
      %v7238 = vadd.f32 %v6724, %v7174
      %v7239 = vadd.f32 %v6729, %v7179
      %v7240 = vadd.f32 %v6732, %v7182
      %v7241 = vadd.f32 %v6737, %v7187
      %v7242 = vadd.f32 %v6740, %v7190
      %v7243 = vadd.f32 %v6745, %v7195
      %v7244 = vadd.f32 %v6748, %v7198
      %v7245 = vadd.f32 %v6753, %v7203
      %v7246 = vadd.f32 %v6756, %v7206
      %v7247 = vadd.f32 %v6761, %v7211
      %v7248 = vadd.f32 %v6764, %v7214
      %v7249 = vld [vmem:[%s5606] sm:$0xf]
      %v7250 = vld [vmem:[%s5606 + $0x4] sm:$0xf]
      %v7251 = vld [vmem:[%s5606 + $0xc] sm:$0xf]
      %v7252 = vld [vmem:[%s5606 + $0x10] sm:$0xf]
      %v7253 = vld [vmem:[%s5606 + $0x18] sm:$0xf]
      %v7254 = vld [vmem:[%s5606 + $0x1c] sm:$0xf]
      %v7255 = vld [vmem:[%s5606 + $0x24] sm:$0xf]
      %v7256 = vld [vmem:[%s5606 + $0x28] sm:$0xf]
      %v7257 = vld [vmem:[%s5606 + $0x30] sm:$0xf]
      %v7258 = vld [vmem:[%s5606 + $0x34] sm:$0xf]
      %v7259 = vld [vmem:[%s5606 + $0x3c] sm:$0xf]
      %v7260 = vld [vmem:[%s5606 + $0x40] sm:$0xf]
      %v7261 = vld [vmem:[%s5606 + $0x48] sm:$0xf]
      %v7262 = vld [vmem:[%s5606 + $0x4c] sm:$0xf]
      %v7263 = vld [vmem:[%s5606 + $0x54] sm:$0xf]
      %v7264 = vld [vmem:[%s5606 + $0x58] sm:$0xf]
      %v7265 = vld [vmem:[%s5606 + $0x60] sm:$0xf]
      %v7266 = vld [vmem:[%s5606 + $0x64] sm:$0xf]
      %v7267 = vld [vmem:[%s5606 + $0x6c] sm:$0xf]
      %v7268 = vld [vmem:[%s5606 + $0x70] sm:$0xf]
      %v7269 = vld [vmem:[%s5606 + $0x78] sm:$0xf]
      %v7270 = vld [vmem:[%s5606 + $0x7c] sm:$0xf]
      %v7271 = vld [vmem:[%s5606 + $0x84] sm:$0xf]
      %v7272 = vld [vmem:[%s5606 + $0x88] sm:$0xf]
      %v7273 = vld [vmem:[%s5606 + $0x90] sm:$0xf]
      %v7274 = vld [vmem:[%s5606 + $0x94] sm:$0xf]
      %v7275 = vld [vmem:[%s5606 + $0x9c] sm:$0xf]
      %v7276 = vld [vmem:[%s5606 + $0xa0] sm:$0xf]
      %v7277 = vld [vmem:[%s5606 + $0xa8] sm:$0xf]
      %v7278 = vld [vmem:[%s5606 + $0xac] sm:$0xf]
      %v7279 = vld [vmem:[%s5606 + $0xb4] sm:$0xf]
      %v7280 = vld [vmem:[%s5606 + $0xb8] sm:$0xf]
      %s7281 = scalar_lea.vmem %s3, 192
      %v7282 = vld [vmem:[%s7281] sm:$0xf]
      %v7283 = vld [vmem:[%s7281 + $0x4] sm:$0xf]
      %v7284 = vld [vmem:[%s7281 + $0x8] sm:$0xf]
      %v7285 = vld [vmem:[%s7281 + $0xc] sm:$0xf]
      %v7286 = vld [vmem:[%s7281 + $0x10] sm:$0xf]
      %v7287 = vld [vmem:[%s7281 + $0x14] sm:$0xf]
      %v7288 = vld [vmem:[%s7281 + $0x18] sm:$0xf]
      %v7289 = vld [vmem:[%s7281 + $0x1c] sm:$0xf]
      %v7290 = vld [vmem:[%s7281 + $0x20] sm:$0xf]
      %v7291 = vld [vmem:[%s7281 + $0x24] sm:$0xf]
      %v7292 = vld [vmem:[%s7281 + $0x28] sm:$0xf]
      %v7293 = vld [vmem:[%s7281 + $0x2c] sm:$0xf]
      %v7294 = vld [vmem:[%s7281 + $0x30] sm:$0xf]
      %v7295 = vld [vmem:[%s7281 + $0x34] sm:$0xf]
      %v7296 = vld [vmem:[%s7281 + $0x38] sm:$0xf]
      %v7297 = vld [vmem:[%s7281 + $0x3c] sm:$0xf]
      %v7330 = vunpack.c.l.b16 %v7249
      %v7331 = vunpack.c.l.b16 %v7250
      %v7332 = vunpack.c.l.b16 %v7251
      %v7333 = vunpack.c.l.b16 %v7252
      %v7334 = vunpack.c.l.b16 %v7253
      %v7335 = vunpack.c.l.b16 %v7254
      %v7336 = vunpack.c.l.b16 %v7255
      %v7337 = vunpack.c.l.b16 %v7256
      %v7338 = vunpack.c.l.b16 %v7257
      %v7339 = vunpack.c.l.b16 %v7258
      %v7340 = vunpack.c.l.b16 %v7259
      %v7341 = vunpack.c.l.b16 %v7260
      %v7342 = vunpack.c.l.b16 %v7261
      %v7343 = vunpack.c.l.b16 %v7262
      %v7344 = vunpack.c.l.b16 %v7263
      %v7345 = vunpack.c.l.b16 %v7264
      %v7346 = vunpack.c.l.b16 %v7265
      %v7347 = vunpack.c.l.b16 %v7266
      %v7348 = vunpack.c.l.b16 %v7267
      %v7349 = vunpack.c.l.b16 %v7268
      %v7350 = vunpack.c.l.b16 %v7269
      %v7351 = vunpack.c.l.b16 %v7270
      %v7352 = vunpack.c.l.b16 %v7271
      %v7353 = vunpack.c.l.b16 %v7272
      %v7354 = vunpack.c.l.b16 %v7273
      %v7355 = vunpack.c.l.b16 %v7274
      %v7356 = vunpack.c.l.b16 %v7275
      %v7357 = vunpack.c.l.b16 %v7276
      %v7358 = vunpack.c.l.b16 %v7277
      %v7359 = vunpack.c.l.b16 %v7278
      %v7360 = vunpack.c.l.b16 %v7279
      %v7361 = vunpack.c.l.b16 %v7280
      %v7362 = vpack.c.b16 %v7331, %v7330
      %v7363 = vpack.c.b16 %v7333, %v7332
      %v7364 = vpack.c.b16 %v7335, %v7334
      %v7365 = vpack.c.b16 %v7337, %v7336
      %v7366 = vpack.c.b16 %v7339, %v7338
      %v7367 = vpack.c.b16 %v7341, %v7340
      %v7368 = vpack.c.b16 %v7343, %v7342
      %v7369 = vpack.c.b16 %v7345, %v7344
      %v7370 = vpack.c.b16 %v7347, %v7346
      %v7371 = vpack.c.b16 %v7349, %v7348
      %v7372 = vpack.c.b16 %v7351, %v7350
      %v7373 = vpack.c.b16 %v7353, %v7352
      %v7374 = vpack.c.b16 %v7355, %v7354
      %v7375 = vpack.c.b16 %v7357, %v7356
      %v7376 = vpack.c.b16 %v7359, %v7358
      %v7377 = vpack.c.b16 %v7361, %v7360
      %v7410 = vunpack.c.l.b16 %v7282
      %v7411 = vunpack.c.l.b16 %v7283
      %v7412 = vunpack.c.l.b16 %v7284
      %v7413 = vunpack.c.l.b16 %v7285
      %v7414 = vunpack.c.l.b16 %v7286
      %v7415 = vunpack.c.l.b16 %v7287
      %v7416 = vunpack.c.l.b16 %v7288
      %v7417 = vunpack.c.l.b16 %v7289
      %v7418 = vunpack.c.l.b16 %v7290
      %v7419 = vunpack.c.l.b16 %v7291
      %v7420 = vunpack.c.l.b16 %v7292
      %v7421 = vunpack.c.l.b16 %v7293
      %v7422 = vunpack.c.l.b16 %v7294
      %v7423 = vunpack.c.l.b16 %v7295
      %v7424 = vunpack.c.l.b16 %v7296
      %v7425 = vunpack.c.l.b16 %v7297
      %v7426 = vpack.c.b16 %v7411, %v7410
      %v7427 = vpack.c.b16 %v7413, %v7412
      %v7428 = vpack.c.b16 %v7415, %v7414
      %v7429 = vpack.c.b16 %v7417, %v7416
      %v7430 = vpack.c.b16 %v7419, %v7418
      %v7431 = vpack.c.b16 %v7421, %v7420
      %v7432 = vpack.c.b16 %v7423, %v7422
      %v7433 = vpack.c.b16 %v7425, %v7424
      %7442 = vmatprep.subr.bf16.mxu0 0
      %7443 = vmatpush1.bf16.msra.mxu0 %v7426
      %7444 = vmatprep.subr.bf16.mxu0 0
      %7445 = vmatpush1.bf16.msra.mxu0 %v7427
      %7446 = vmatprep.subr.bf16.mxu0 0
      %7447 = vmatpush1.bf16.msra.mxu0 %v7428
      %7448 = vmatprep.subr.bf16.mxu0 0
      %7449 = vmatpush1.bf16.msra.mxu0 %v7429
      %7450 = vmatprep.subr.bf16.mxu0 0
      %7451 = vmatpush1.bf16.msra.mxu0 %v7430
      %7452 = vmatprep.subr.bf16.mxu0 0
      %7453 = vmatpush1.bf16.msra.mxu0 %v7431
      %7454 = vmatprep.subr.bf16.mxu0 0
      %7455 = vmatpush1.bf16.msra.mxu0 %v7432
      %7456 = vmatprep.subr.bf16.mxu0 0
      %7457 = vmatpush1.bf16.msra.mxu0 %v7433
      %7458 = vmatprep.subr.bf16.mxu0 0
      %7459 = vmatpush1.bf16.msra.mxu0 0
      %7460 = vmatprep.subr.bf16.mxu0 0
      %7461 = vmatpush1.bf16.msra.mxu0 0
      %7462 = vmatprep.subr.bf16.mxu0 0
      %7463 = vmatpush1.bf16.msra.mxu0 0
      %7464 = vmatprep.subr.bf16.mxu0 0
      %7465 = vmatpush1.bf16.msra.mxu0 0
      %7466 = vmatprep.subr.bf16.mxu0 0
      %7467 = vmatpush1.bf16.msra.mxu0 0
      %7468 = vmatprep.subr.bf16.mxu0 0
      %7469 = vmatpush1.bf16.msra.mxu0 0
      %7470 = vmatprep.subr.bf16.mxu0 0
      %7471 = vmatpush1.bf16.msra.mxu0 0
      %7472 = vmatprep.subr.bf16.mxu0 0
      %7473 = vmatpush1.bf16.msra.mxu0 0
      %7474 = vmatprep.mubr.bf16.mxu0 0
      %7475 = vmatmul.mubr.bf16.gmra.mrb[0].mxu0 %v7362
      %v7476 = vpop.f32.mrb[0].mxu0
      %v7477 = vadd.f32 0.0, %v7476
      %v7478 = vpop.f32.mrb[0].mxu0
      %v7479 = vpop.f32.mrb[0].mxu0
      %v7480 = vadd.f32 0.0, %v7479
      %v7481 = vpop.f32.mrb[0].mxu0
      %7482 = vmatprep.mubr.bf16.mxu0 0
      %7483 = vmatmul.mubr.bf16.gmra.mrb[0].mxu0 %v7363
      %v7484 = vpop.f32.mrb[0].mxu0
      %v7485 = vadd.f32 0.0, %v7484
      %v7486 = vpop.f32.mrb[0].mxu0
      %v7487 = vpop.f32.mrb[0].mxu0
      %v7488 = vadd.f32 0.0, %v7487
      %v7489 = vpop.f32.mrb[0].mxu0
      %7490 = vmatprep.mubr.bf16.mxu0 0
      %7491 = vmatmul.mubr.bf16.gmra.mrb[0].mxu0 %v7364
      %v7492 = vpop.f32.mrb[0].mxu0
      %v7493 = vadd.f32 0.0, %v7492
      %v7494 = vpop.f32.mrb[0].mxu0
      %v7495 = vpop.f32.mrb[0].mxu0
      %v7496 = vadd.f32 0.0, %v7495
      %v7497 = vpop.f32.mrb[0].mxu0
      %7498 = vmatprep.mubr.bf16.mxu0 0
      %7499 = vmatmul.mubr.bf16.gmra.mrb[0].mxu0 %v7365
      %v7500 = vpop.f32.mrb[0].mxu0
      %v7501 = vadd.f32 0.0, %v7500
      %v7502 = vpop.f32.mrb[0].mxu0
      %v7503 = vpop.f32.mrb[0].mxu0
      %v7504 = vadd.f32 0.0, %v7503
      %v7505 = vpop.f32.mrb[0].mxu0
      %7506 = vmatprep.mubr.bf16.mxu0 0
      %7507 = vmatmul.mubr.bf16.gmra.mrb[0].mxu0 %v7366
      %v7508 = vpop.f32.mrb[0].mxu0
      %v7509 = vadd.f32 0.0, %v7508
      %v7510 = vpop.f32.mrb[0].mxu0
      %v7511 = vpop.f32.mrb[0].mxu0
      %v7512 = vadd.f32 0.0, %v7511
      %v7513 = vpop.f32.mrb[0].mxu0
      %7514 = vmatprep.mubr.bf16.mxu0 0
      %7515 = vmatmul.mubr.bf16.gmra.mrb[0].mxu0 %v7367
      %v7516 = vpop.f32.mrb[0].mxu0
      %v7517 = vadd.f32 0.0, %v7516
      %v7518 = vpop.f32.mrb[0].mxu0
      %v7519 = vpop.f32.mrb[0].mxu0
      %v7520 = vadd.f32 0.0, %v7519
      %v7521 = vpop.f32.mrb[0].mxu0
      %7522 = vmatprep.mubr.bf16.mxu0 0
      %7523 = vmatmul.mubr.bf16.gmra.mrb[0].mxu0 %v7368
      %v7524 = vpop.f32.mrb[0].mxu0
      %v7525 = vadd.f32 0.0, %v7524
      %v7526 = vpop.f32.mrb[0].mxu0
      %v7527 = vpop.f32.mrb[0].mxu0
      %v7528 = vadd.f32 0.0, %v7527
      %v7529 = vpop.f32.mrb[0].mxu0
      %7530 = vmatprep.mubr.bf16.mxu0 0
      %7531 = vmatmul.mubr.bf16.gmra.mrb[0].mxu0 %v7369
      %v7532 = vpop.f32.mrb[0].mxu0
      %v7533 = vadd.f32 0.0, %v7532
      %v7534 = vpop.f32.mrb[0].mxu0
      %v7535 = vpop.f32.mrb[0].mxu0
      %v7536 = vadd.f32 0.0, %v7535
      %v7537 = vpop.f32.mrb[0].mxu0
      %7538 = vmatprep.mubr.bf16.mxu0 0
      %7539 = vmatmul.mubr.bf16.gmra.mrb[0].mxu0 %v7370
      %v7540 = vpop.f32.mrb[0].mxu0
      %v7541 = vadd.f32 0.0, %v7540
      %v7542 = vpop.f32.mrb[0].mxu0
      %v7543 = vpop.f32.mrb[0].mxu0
      %v7544 = vadd.f32 0.0, %v7543
      %v7545 = vpop.f32.mrb[0].mxu0
      %7546 = vmatprep.mubr.bf16.mxu0 0
      %7547 = vmatmul.mubr.bf16.gmra.mrb[0].mxu0 %v7371
      %v7548 = vpop.f32.mrb[0].mxu0
      %v7549 = vadd.f32 0.0, %v7548
      %v7550 = vpop.f32.mrb[0].mxu0
      %v7551 = vpop.f32.mrb[0].mxu0
      %v7552 = vadd.f32 0.0, %v7551
      %v7553 = vpop.f32.mrb[0].mxu0
      %7554 = vmatprep.mubr.bf16.mxu0 0
      %7555 = vmatmul.mubr.bf16.gmra.mrb[0].mxu0 %v7372
      %v7556 = vpop.f32.mrb[0].mxu0
      %v7557 = vadd.f32 0.0, %v7556
      %v7558 = vpop.f32.mrb[0].mxu0
      %v7559 = vpop.f32.mrb[0].mxu0
      %v7560 = vadd.f32 0.0, %v7559
      %v7561 = vpop.f32.mrb[0].mxu0
      %7562 = vmatprep.mubr.bf16.mxu0 0
      %7563 = vmatmul.mubr.bf16.gmra.mrb[0].mxu0 %v7373
      %v7564 = vpop.f32.mrb[0].mxu0
      %v7565 = vadd.f32 0.0, %v7564
      %v7566 = vpop.f32.mrb[0].mxu0
      %v7567 = vpop.f32.mrb[0].mxu0
      %v7568 = vadd.f32 0.0, %v7567
      %v7569 = vpop.f32.mrb[0].mxu0
      %7570 = vmatprep.mubr.bf16.mxu0 0
      %7571 = vmatmul.mubr.bf16.gmra.mrb[0].mxu0 %v7374
      %v7572 = vpop.f32.mrb[0].mxu0
      %v7573 = vadd.f32 0.0, %v7572
      %v7574 = vpop.f32.mrb[0].mxu0
      %v7575 = vpop.f32.mrb[0].mxu0
      %v7576 = vadd.f32 0.0, %v7575
      %v7577 = vpop.f32.mrb[0].mxu0
      %7578 = vmatprep.mubr.bf16.mxu0 0
      %7579 = vmatmul.mubr.bf16.gmra.mrb[0].mxu0 %v7375
      %v7580 = vpop.f32.mrb[0].mxu0
      %v7581 = vadd.f32 0.0, %v7580
      %v7582 = vpop.f32.mrb[0].mxu0
      %v7583 = vpop.f32.mrb[0].mxu0
      %v7584 = vadd.f32 0.0, %v7583
      %v7585 = vpop.f32.mrb[0].mxu0
      %7586 = vmatprep.mubr.bf16.mxu0 0
      %7587 = vmatmul.mubr.bf16.gmra.mrb[0].mxu0 %v7376
      %v7588 = vpop.f32.mrb[0].mxu0
      %v7589 = vadd.f32 0.0, %v7588
      %v7590 = vpop.f32.mrb[0].mxu0
      %v7591 = vpop.f32.mrb[0].mxu0
      %v7592 = vadd.f32 0.0, %v7591
      %v7593 = vpop.f32.mrb[0].mxu0
      %7594 = vmatprep.mubr.bf16.mxu0 0
      %7595 = vmatmul.mubr.bf16.gmra.mrb[0].mxu0 %v7377
      %v7596 = vpop.f32.mrb[0].mxu0
      %v7597 = vadd.f32 0.0, %v7596
      %v7598 = vpop.f32.mrb[0].mxu0
      %v7599 = vpop.f32.mrb[0].mxu0
      %v7600 = vadd.f32 0.0, %v7599
      %v7601 = vpop.f32.mrb[0].mxu0
      %7602 = vdwg.mxu0
      %v7603 = vadd.f32 %v7217, %v7477
      %v7604 = vadd.f32 %v7218, %v7480
      %v7605 = vadd.f32 %v7219, %v7485
      %v7606 = vadd.f32 %v7220, %v7488
      %v7607 = vadd.f32 %v7221, %v7493
      %v7608 = vadd.f32 %v7222, %v7496
      %v7609 = vadd.f32 %v7223, %v7501
      %v7610 = vadd.f32 %v7224, %v7504
      %v7611 = vadd.f32 %v7225, %v7509
      %v7612 = vadd.f32 %v7226, %v7512
      %v7613 = vadd.f32 %v7227, %v7517
      %v7614 = vadd.f32 %v7228, %v7520
      %v7615 = vadd.f32 %v7229, %v7525
      %v7616 = vadd.f32 %v7230, %v7528
      %v7617 = vadd.f32 %v7231, %v7533
      %v7618 = vadd.f32 %v7232, %v7536
      %v7619 = vadd.f32 %v7233, %v7541
      %v7620 = vadd.f32 %v7234, %v7544
      %v7621 = vadd.f32 %v7235, %v7549
      %v7622 = vadd.f32 %v7236, %v7552
      %v7623 = vadd.f32 %v7237, %v7557
      %v7624 = vadd.f32 %v7238, %v7560
      %v7625 = vadd.f32 %v7239, %v7565
      %v7626 = vadd.f32 %v7240, %v7568
      %v7627 = vadd.f32 %v7241, %v7573
      %v7628 = vadd.f32 %v7242, %v7576
      %v7629 = vadd.f32 %v7243, %v7581
      %v7630 = vadd.f32 %v7244, %v7584
      %v7631 = vadd.f32 %v7245, %v7589
      %v7632 = vadd.f32 %v7246, %v7592
      %v7633 = vadd.f32 %v7247, %v7597
      %v7634 = vadd.f32 %v7248, %v7600
      %v7635 = vld [vmem:[%s5606] sm:$0xf]
      %v7636 = vld [vmem:[%s5606 + $0x4] sm:$0xf]
      %v7637 = vld [vmem:[%s5606 + $0x8] sm:$0x1]
      %v7638 = vld [vmem:[%s5606 + $0xc] sm:$0xf]
      %v7639 = vld [vmem:[%s5606 + $0x10] sm:$0xf]
      %v7640 = vld [vmem:[%s5606 + $0x14] sm:$0x1]
      %v7641 = vld [vmem:[%s5606 + $0x18] sm:$0xf]
      %v7642 = vld [vmem:[%s5606 + $0x1c] sm:$0xf]
      %v7643 = vld [vmem:[%s5606 + $0x20] sm:$0x1]
      %v7644 = vld [vmem:[%s5606 + $0x24] sm:$0xf]
      %v7645 = vld [vmem:[%s5606 + $0x28] sm:$0xf]
      %v7646 = vld [vmem:[%s5606 + $0x2c] sm:$0x1]
      %v7647 = vld [vmem:[%s5606 + $0x30] sm:$0xf]
      %v7648 = vld [vmem:[%s5606 + $0x34] sm:$0xf]
      %v7649 = vld [vmem:[%s5606 + $0x38] sm:$0x1]
      %v7650 = vld [vmem:[%s5606 + $0x3c] sm:$0xf]
      %v7651 = vld [vmem:[%s5606 + $0x40] sm:$0xf]
      %v7652 = vld [vmem:[%s5606 + $0x44] sm:$0x1]
      %v7653 = vld [vmem:[%s5606 + $0x48] sm:$0xf]
      %v7654 = vld [vmem:[%s5606 + $0x4c] sm:$0xf]
      %v7655 = vld [vmem:[%s5606 + $0x50] sm:$0x1]
      %v7656 = vld [vmem:[%s5606 + $0x54] sm:$0xf]
      %v7657 = vld [vmem:[%s5606 + $0x58] sm:$0xf]
      %v7658 = vld [vmem:[%s5606 + $0x5c] sm:$0x1]
      %v7659 = vld [vmem:[%s5606 + $0x60] sm:$0xf]
      %v7660 = vld [vmem:[%s5606 + $0x64] sm:$0xf]
      %v7661 = vld [vmem:[%s5606 + $0x68] sm:$0x1]
      %v7662 = vld [vmem:[%s5606 + $0x6c] sm:$0xf]
      %v7663 = vld [vmem:[%s5606 + $0x70] sm:$0xf]
      %v7664 = vld [vmem:[%s5606 + $0x74] sm:$0x1]
      %v7665 = vld [vmem:[%s5606 + $0x78] sm:$0xf]
      %v7666 = vld [vmem:[%s5606 + $0x7c] sm:$0xf]
      %v7667 = vld [vmem:[%s5606 + $0x80] sm:$0x1]
      %v7668 = vld [vmem:[%s5606 + $0x84] sm:$0xf]
      %v7669 = vld [vmem:[%s5606 + $0x88] sm:$0xf]
      %v7670 = vld [vmem:[%s5606 + $0x8c] sm:$0x1]
      %v7671 = vld [vmem:[%s5606 + $0x90] sm:$0xf]
      %v7672 = vld [vmem:[%s5606 + $0x94] sm:$0xf]
      %v7673 = vld [vmem:[%s5606 + $0x98] sm:$0x1]
      %v7674 = vld [vmem:[%s5606 + $0x9c] sm:$0xf]
      %v7675 = vld [vmem:[%s5606 + $0xa0] sm:$0xf]
      %v7676 = vld [vmem:[%s5606 + $0xa4] sm:$0x1]
      %v7677 = vld [vmem:[%s5606 + $0xa8] sm:$0xf]
      %v7678 = vld [vmem:[%s5606 + $0xac] sm:$0xf]
      %v7679 = vld [vmem:[%s5606 + $0xb0] sm:$0x1]
      %v7680 = vld [vmem:[%s5606 + $0xb4] sm:$0xf]
      %v7681 = vld [vmem:[%s5606 + $0xb8] sm:$0xf]
      %v7682 = vld [vmem:[%s5606 + $0xbc] sm:$0x1]
      %v7684 = vshrl.u32 %v7635, 16
      %v7686 = vrot.slane %v7684, 4
      %v7687 = vshll.u32 %v7635, 16
      %v7689 = vrot.slane %v7687, 5
      %v7690 = vor.u32 %v7686, %v7689
      %v7691 = vrot.slane %v7690, 4
      %v7693 = vshll.u32 %v7636, 16
      %v7695 = vrot.slane %v7693, 5
      %v7696 = vsel %vm319, %v7691, %v7695
      %v7697 = vshrl.u32 %v7636, 16
      %v7699 = vrot.slane %v7697, 4
      %v7700 = vor.u32 %v7699, %v7695
      %v7701 = vrot.slane %v7700, 4
      %v7703 = vshll.u32 %v7637, 16
      %v7705 = vrot.slane %v7703, 5
      %v7706 = vsel %vm319, %v7701, %v7705
      %v7708 = vshrl.u32 %v7638, 16
      %v7710 = vrot.slane %v7708, 4
      %v7711 = vshll.u32 %v7638, 16
      %v7713 = vrot.slane %v7711, 5
      %v7714 = vor.u32 %v7710, %v7713
      %v7715 = vrot.slane %v7714, 4
      %v7717 = vshll.u32 %v7639, 16
      %v7719 = vrot.slane %v7717, 5
      %v7720 = vsel %vm319, %v7715, %v7719
      %v7721 = vshrl.u32 %v7639, 16
      %v7723 = vrot.slane %v7721, 4
      %v7724 = vor.u32 %v7723, %v7719
      %v7725 = vrot.slane %v7724, 4
      %v7727 = vshll.u32 %v7640, 16
      %v7729 = vrot.slane %v7727, 5
      %v7730 = vsel %vm319, %v7725, %v7729
      %v7732 = vshrl.u32 %v7641, 16
      %v7734 = vrot.slane %v7732, 4
      %v7735 = vshll.u32 %v7641, 16
      %v7737 = vrot.slane %v7735, 5
      %v7738 = vor.u32 %v7734, %v7737
      %v7739 = vrot.slane %v7738, 4
      %v7741 = vshll.u32 %v7642, 16
      %v7743 = vrot.slane %v7741, 5
      %v7744 = vsel %vm319, %v7739, %v7743
      %v7745 = vshrl.u32 %v7642, 16
      %v7747 = vrot.slane %v7745, 4
      %v7748 = vor.u32 %v7747, %v7743
      %v7749 = vrot.slane %v7748, 4
      %v7751 = vshll.u32 %v7643, 16
      %v7753 = vrot.slane %v7751, 5
      %v7754 = vsel %vm319, %v7749, %v7753
      %v7756 = vshrl.u32 %v7644, 16
      %v7758 = vrot.slane %v7756, 4
      %v7759 = vshll.u32 %v7644, 16
      %v7761 = vrot.slane %v7759, 5
      %v7762 = vor.u32 %v7758, %v7761
      %v7763 = vrot.slane %v7762, 4
      %v7765 = vshll.u32 %v7645, 16
      %v7767 = vrot.slane %v7765, 5
      %v7768 = vsel %vm319, %v7763, %v7767
      %v7769 = vshrl.u32 %v7645, 16
      %v7771 = vrot.slane %v7769, 4
      %v7772 = vor.u32 %v7771, %v7767
      %v7773 = vrot.slane %v7772, 4
      %v7775 = vshll.u32 %v7646, 16
      %v7777 = vrot.slane %v7775, 5
      %v7778 = vsel %vm319, %v7773, %v7777
      %v7780 = vshrl.u32 %v7647, 16
      %v7782 = vrot.slane %v7780, 4
      %v7783 = vshll.u32 %v7647, 16
      %v7785 = vrot.slane %v7783, 5
      %v7786 = vor.u32 %v7782, %v7785
      %v7787 = vrot.slane %v7786, 4
      %v7789 = vshll.u32 %v7648, 16
      %v7791 = vrot.slane %v7789, 5
      %v7792 = vsel %vm319, %v7787, %v7791
      %v7793 = vshrl.u32 %v7648, 16
      %v7795 = vrot.slane %v7793, 4
      %v7796 = vor.u32 %v7795, %v7791
      %v7797 = vrot.slane %v7796, 4
      %v7799 = vshll.u32 %v7649, 16
      %v7801 = vrot.slane %v7799, 5
      %v7802 = vsel %vm319, %v7797, %v7801
      %v7804 = vshrl.u32 %v7650, 16
      %v7806 = vrot.slane %v7804, 4
      %v7807 = vshll.u32 %v7650, 16
      %v7809 = vrot.slane %v7807, 5
      %v7810 = vor.u32 %v7806, %v7809
      %v7811 = vrot.slane %v7810, 4
      %v7813 = vshll.u32 %v7651, 16
      %v7815 = vrot.slane %v7813, 5
      %v7816 = vsel %vm319, %v7811, %v7815
      %v7817 = vshrl.u32 %v7651, 16
      %v7819 = vrot.slane %v7817, 4
      %v7820 = vor.u32 %v7819, %v7815
      %v7821 = vrot.slane %v7820, 4
      %v7823 = vshll.u32 %v7652, 16
      %v7825 = vrot.slane %v7823, 5
      %v7826 = vsel %vm319, %v7821, %v7825
      %v7828 = vshrl.u32 %v7653, 16
      %v7830 = vrot.slane %v7828, 4
      %v7831 = vshll.u32 %v7653, 16
      %v7833 = vrot.slane %v7831, 5
      %v7834 = vor.u32 %v7830, %v7833
      %v7835 = vrot.slane %v7834, 4
      %v7837 = vshll.u32 %v7654, 16
      %v7839 = vrot.slane %v7837, 5
      %v7840 = vsel %vm319, %v7835, %v7839
      %v7841 = vshrl.u32 %v7654, 16
      %v7843 = vrot.slane %v7841, 4
      %v7844 = vor.u32 %v7843, %v7839
      %v7845 = vrot.slane %v7844, 4
      %v7847 = vshll.u32 %v7655, 16
      %v7849 = vrot.slane %v7847, 5
      %v7850 = vsel %vm319, %v7845, %v7849
      %v7852 = vshrl.u32 %v7656, 16
      %v7854 = vrot.slane %v7852, 4
      %v7855 = vshll.u32 %v7656, 16
      %v7857 = vrot.slane %v7855, 5
      %v7858 = vor.u32 %v7854, %v7857
      %v7859 = vrot.slane %v7858, 4
      %v7861 = vshll.u32 %v7657, 16
      %v7863 = vrot.slane %v7861, 5
      %v7864 = vsel %vm319, %v7859, %v7863
      %v7865 = vshrl.u32 %v7657, 16
      %v7867 = vrot.slane %v7865, 4
      %v7868 = vor.u32 %v7867, %v7863
      %v7869 = vrot.slane %v7868, 4
      %v7871 = vshll.u32 %v7658, 16
      %v7873 = vrot.slane %v7871, 5
      %v7874 = vsel %vm319, %v7869, %v7873
      %v7876 = vshrl.u32 %v7659, 16
      %v7878 = vrot.slane %v7876, 4
      %v7879 = vshll.u32 %v7659, 16
      %v7881 = vrot.slane %v7879, 5
      %v7882 = vor.u32 %v7878, %v7881
      %v7883 = vrot.slane %v7882, 4
      %v7885 = vshll.u32 %v7660, 16
      %v7887 = vrot.slane %v7885, 5
      %v7888 = vsel %vm319, %v7883, %v7887
      %v7889 = vshrl.u32 %v7660, 16
      %v7891 = vrot.slane %v7889, 4
      %v7892 = vor.u32 %v7891, %v7887
      %v7893 = vrot.slane %v7892, 4
      %v7895 = vshll.u32 %v7661, 16
      %v7897 = vrot.slane %v7895, 5
      %v7898 = vsel %vm319, %v7893, %v7897
      %v7900 = vshrl.u32 %v7662, 16
      %v7902 = vrot.slane %v7900, 4
      %v7903 = vshll.u32 %v7662, 16
      %v7905 = vrot.slane %v7903, 5
      %v7906 = vor.u32 %v7902, %v7905
      %v7907 = vrot.slane %v7906, 4
      %v7909 = vshll.u32 %v7663, 16
      %v7911 = vrot.slane %v7909, 5
      %v7912 = vsel %vm319, %v7907, %v7911
      %v7913 = vshrl.u32 %v7663, 16
      %v7915 = vrot.slane %v7913, 4
      %v7916 = vor.u32 %v7915, %v7911
      %v7917 = vrot.slane %v7916, 4
      %v7919 = vshll.u32 %v7664, 16
      %v7921 = vrot.slane %v7919, 5
      %v7922 = vsel %vm319, %v7917, %v7921
      %v7924 = vshrl.u32 %v7665, 16
      %v7926 = vrot.slane %v7924, 4
      %v7927 = vshll.u32 %v7665, 16
      %v7929 = vrot.slane %v7927, 5
      %v7930 = vor.u32 %v7926, %v7929
      %v7931 = vrot.slane %v7930, 4
      %v7933 = vshll.u32 %v7666, 16
      %v7935 = vrot.slane %v7933, 5
      %v7936 = vsel %vm319, %v7931, %v7935
      %v7937 = vshrl.u32 %v7666, 16
      %v7939 = vrot.slane %v7937, 4
      %v7940 = vor.u32 %v7939, %v7935
      %v7941 = vrot.slane %v7940, 4
      %v7943 = vshll.u32 %v7667, 16
      %v7945 = vrot.slane %v7943, 5
      %v7946 = vsel %vm319, %v7941, %v7945
      %v7948 = vshrl.u32 %v7668, 16
      %v7950 = vrot.slane %v7948, 4
      %v7951 = vshll.u32 %v7668, 16
      %v7953 = vrot.slane %v7951, 5
      %v7954 = vor.u32 %v7950, %v7953
      %v7955 = vrot.slane %v7954, 4
      %v7957 = vshll.u32 %v7669, 16
      %v7959 = vrot.slane %v7957, 5
      %v7960 = vsel %vm319, %v7955, %v7959
      %v7961 = vshrl.u32 %v7669, 16
      %v7963 = vrot.slane %v7961, 4
      %v7964 = vor.u32 %v7963, %v7959
      %v7965 = vrot.slane %v7964, 4
      %v7967 = vshll.u32 %v7670, 16
      %v7969 = vrot.slane %v7967, 5
      %v7970 = vsel %vm319, %v7965, %v7969
      %v7972 = vshrl.u32 %v7671, 16
      %v7974 = vrot.slane %v7972, 4
      %v7975 = vshll.u32 %v7671, 16
      %v7977 = vrot.slane %v7975, 5
      %v7978 = vor.u32 %v7974, %v7977
      %v7979 = vrot.slane %v7978, 4
      %v7981 = vshll.u32 %v7672, 16
      %v7983 = vrot.slane %v7981, 5
      %v7984 = vsel %vm319, %v7979, %v7983
      %v7985 = vshrl.u32 %v7672, 16
      %v7987 = vrot.slane %v7985, 4
      %v7988 = vor.u32 %v7987, %v7983
      %v7989 = vrot.slane %v7988, 4
      %v7991 = vshll.u32 %v7673, 16
      %v7993 = vrot.slane %v7991, 5
      %v7994 = vsel %vm319, %v7989, %v7993
      %v7996 = vshrl.u32 %v7674, 16
      %v7998 = vrot.slane %v7996, 4
      %v7999 = vshll.u32 %v7674, 16
      %v8001 = vrot.slane %v7999, 5
      %v8002 = vor.u32 %v7998, %v8001
      %v8003 = vrot.slane %v8002, 4
      %v8005 = vshll.u32 %v7675, 16
      %v8007 = vrot.slane %v8005, 5
      %v8008 = vsel %vm319, %v8003, %v8007
      %v8009 = vshrl.u32 %v7675, 16
      %v8011 = vrot.slane %v8009, 4
      %v8012 = vor.u32 %v8011, %v8007
      %v8013 = vrot.slane %v8012, 4
      %v8015 = vshll.u32 %v7676, 16
      %v8017 = vrot.slane %v8015, 5
      %v8018 = vsel %vm319, %v8013, %v8017
      %v8020 = vshrl.u32 %v7677, 16
      %v8022 = vrot.slane %v8020, 4
      %v8023 = vshll.u32 %v7677, 16
      %v8025 = vrot.slane %v8023, 5
      %v8026 = vor.u32 %v8022, %v8025
      %v8027 = vrot.slane %v8026, 4
      %v8029 = vshll.u32 %v7678, 16
      %v8031 = vrot.slane %v8029, 5
      %v8032 = vsel %vm319, %v8027, %v8031
      %v8033 = vshrl.u32 %v7678, 16
      %v8035 = vrot.slane %v8033, 4
      %v8036 = vor.u32 %v8035, %v8031
      %v8037 = vrot.slane %v8036, 4
      %v8039 = vshll.u32 %v7679, 16
      %v8041 = vrot.slane %v8039, 5
      %v8042 = vsel %vm319, %v8037, %v8041
      %v8044 = vshrl.u32 %v7680, 16
      %v8046 = vrot.slane %v8044, 4
      %v8047 = vshll.u32 %v7680, 16
      %v8049 = vrot.slane %v8047, 5
      %v8050 = vor.u32 %v8046, %v8049
      %v8051 = vrot.slane %v8050, 4
      %v8053 = vshll.u32 %v7681, 16
      %v8055 = vrot.slane %v8053, 5
      %v8056 = vsel %vm319, %v8051, %v8055
      %v8057 = vshrl.u32 %v7681, 16
      %v8059 = vrot.slane %v8057, 4
      %v8060 = vor.u32 %v8059, %v8055
      %v8061 = vrot.slane %v8060, 4
      %v8063 = vshll.u32 %v7682, 16
      %v8065 = vrot.slane %v8063, 5
      %v8066 = vsel %vm319, %v8061, %v8065
      %s8067 = scalar_lea.vmem %s3, 256
      %v8068 = vld [vmem:[%s8067] sm:$0xf]
      %v8069 = vld [vmem:[%s8067 + $0x4] sm:$0xf]
      %v8070 = vld [vmem:[%s8067 + $0x8] sm:$0xf]
      %v8071 = vld [vmem:[%s8067 + $0xc] sm:$0xf]
      %v8072 = vld [vmem:[%s8067 + $0x10] sm:$0xf]
      %v8073 = vld [vmem:[%s8067 + $0x14] sm:$0xf]
      %v8074 = vld [vmem:[%s8067 + $0x18] sm:$0xf]
      %v8075 = vld [vmem:[%s8067 + $0x1c] sm:$0xf]
      %v8076 = vld [vmem:[%s8067 + $0x20] sm:$0xf]
      %v8077 = vld [vmem:[%s8067 + $0x24] sm:$0xf]
      %v8078 = vld [vmem:[%s8067 + $0x28] sm:$0xf]
      %v8079 = vld [vmem:[%s8067 + $0x2c] sm:$0xf]
      %v8080 = vld [vmem:[%s8067 + $0x30] sm:$0xf]
      %v8081 = vld [vmem:[%s8067 + $0x34] sm:$0xf]
      %v8082 = vld [vmem:[%s8067 + $0x38] sm:$0xf]
      %v8083 = vld [vmem:[%s8067 + $0x3c] sm:$0xf]
      %v8084 = vunpack.c.l.b16 %v7696
      %v8085 = vunpack.c.l.b16 %v7706
      %v8086 = vunpack.c.l.b16 %v7720
      %v8087 = vunpack.c.l.b16 %v7730
      %v8088 = vunpack.c.l.b16 %v7744
      %v8089 = vunpack.c.l.b16 %v7754
      %v8090 = vunpack.c.l.b16 %v7768
      %v8091 = vunpack.c.l.b16 %v7778
      %v8092 = vunpack.c.l.b16 %v7792
      %v8093 = vunpack.c.l.b16 %v7802
      %v8094 = vunpack.c.l.b16 %v7816
      %v8095 = vunpack.c.l.b16 %v7826
      %v8096 = vunpack.c.l.b16 %v7840
      %v8097 = vunpack.c.l.b16 %v7850
      %v8098 = vunpack.c.l.b16 %v7864
      %v8099 = vunpack.c.l.b16 %v7874
      %v8100 = vunpack.c.l.b16 %v7888
      %v8101 = vunpack.c.l.b16 %v7898
      %v8102 = vunpack.c.l.b16 %v7912
      %v8103 = vunpack.c.l.b16 %v7922
      %v8104 = vunpack.c.l.b16 %v7936
      %v8105 = vunpack.c.l.b16 %v7946
      %v8106 = vunpack.c.l.b16 %v7960
      %v8107 = vunpack.c.l.b16 %v7970
      %v8108 = vunpack.c.l.b16 %v7984
      %v8109 = vunpack.c.l.b16 %v7994
      %v8110 = vunpack.c.l.b16 %v8008
      %v8111 = vunpack.c.l.b16 %v8018
      %v8112 = vunpack.c.l.b16 %v8032
      %v8113 = vunpack.c.l.b16 %v8042
      %v8114 = vunpack.c.l.b16 %v8056
      %v8115 = vunpack.c.l.b16 %v8066
      %v8116 = vpack.c.b16 %v8085, %v8084
      %v8117 = vpack.c.b16 %v8087, %v8086
      %v8118 = vpack.c.b16 %v8089, %v8088
      %v8119 = vpack.c.b16 %v8091, %v8090
      %v8120 = vpack.c.b16 %v8093, %v8092
      %v8121 = vpack.c.b16 %v8095, %v8094
      %v8122 = vpack.c.b16 %v8097, %v8096
      %v8123 = vpack.c.b16 %v8099, %v8098
      %v8124 = vpack.c.b16 %v8101, %v8100
      %v8125 = vpack.c.b16 %v8103, %v8102
      %v8126 = vpack.c.b16 %v8105, %v8104
      %v8127 = vpack.c.b16 %v8107, %v8106
      %v8128 = vpack.c.b16 %v8109, %v8108
      %v8129 = vpack.c.b16 %v8111, %v8110
      %v8130 = vpack.c.b16 %v8113, %v8112
      %v8131 = vpack.c.b16 %v8115, %v8114
      %v8164 = vunpack.c.l.b16 %v8068
      %v8165 = vunpack.c.l.b16 %v8069
      %v8166 = vunpack.c.l.b16 %v8070
      %v8167 = vunpack.c.l.b16 %v8071
      %v8168 = vunpack.c.l.b16 %v8072
      %v8169 = vunpack.c.l.b16 %v8073
      %v8170 = vunpack.c.l.b16 %v8074
      %v8171 = vunpack.c.l.b16 %v8075
      %v8172 = vunpack.c.l.b16 %v8076
      %v8173 = vunpack.c.l.b16 %v8077
      %v8174 = vunpack.c.l.b16 %v8078
      %v8175 = vunpack.c.l.b16 %v8079
      %v8176 = vunpack.c.l.b16 %v8080
      %v8177 = vunpack.c.l.b16 %v8081
      %v8178 = vunpack.c.l.b16 %v8082
      %v8179 = vunpack.c.l.b16 %v8083
      %v8180 = vpack.c.b16 %v8165, %v8164
      %v8181 = vpack.c.b16 %v8167, %v8166
      %v8182 = vpack.c.b16 %v8169, %v8168
      %v8183 = vpack.c.b16 %v8171, %v8170
      %v8184 = vpack.c.b16 %v8173, %v8172
      %v8185 = vpack.c.b16 %v8175, %v8174
      %v8186 = vpack.c.b16 %v8177, %v8176
      %v8187 = vpack.c.b16 %v8179, %v8178
      %8196 = vmatprep.subr.bf16.mxu0 0
      %8197 = vmatpush1.bf16.msra.mxu0 %v8180
      %8198 = vmatprep.subr.bf16.mxu0 0
      %8199 = vmatpush1.bf16.msra.mxu0 %v8181
      %8200 = vmatprep.subr.bf16.mxu0 0
      %8201 = vmatpush1.bf16.msra.mxu0 %v8182
      %8202 = vmatprep.subr.bf16.mxu0 0
      %8203 = vmatpush1.bf16.msra.mxu0 %v8183
      %8204 = vmatprep.subr.bf16.mxu0 0
      %8205 = vmatpush1.bf16.msra.mxu0 %v8184
      %8206 = vmatprep.subr.bf16.mxu0 0
      %8207 = vmatpush1.bf16.msra.mxu0 %v8185
      %8208 = vmatprep.subr.bf16.mxu0 0
      %8209 = vmatpush1.bf16.msra.mxu0 %v8186
      %8210 = vmatprep.subr.bf16.mxu0 0
      %8211 = vmatpush1.bf16.msra.mxu0 %v8187
      %8212 = vmatprep.subr.bf16.mxu0 0
      %8213 = vmatpush1.bf16.msra.mxu0 0
      %8214 = vmatprep.subr.bf16.mxu0 0
      %8215 = vmatpush1.bf16.msra.mxu0 0
      %8216 = vmatprep.subr.bf16.mxu0 0
      %8217 = vmatpush1.bf16.msra.mxu0 0
      %8218 = vmatprep.subr.bf16.mxu0 0
      %8219 = vmatpush1.bf16.msra.mxu0 0
      %8220 = vmatprep.subr.bf16.mxu0 0
      %8221 = vmatpush1.bf16.msra.mxu0 0
      %8222 = vmatprep.subr.bf16.mxu0 0
      %8223 = vmatpush1.bf16.msra.mxu0 0
      %8224 = vmatprep.subr.bf16.mxu0 0
      %8225 = vmatpush1.bf16.msra.mxu0 0
      %8226 = vmatprep.subr.bf16.mxu0 0
      %8227 = vmatpush1.bf16.msra.mxu0 0
      %8228 = vmatprep.mubr.bf16.mxu0 0
      %8229 = vmatmul.mubr.bf16.gmra.mrb[0].mxu0 %v8116
      %v8230 = vpop.f32.mrb[0].mxu0
      %v8231 = vadd.f32 0.0, %v8230
      %v8232 = vpop.f32.mrb[0].mxu0
      %v8233 = vpop.f32.mrb[0].mxu0
      %v8234 = vadd.f32 0.0, %v8233
      %v8235 = vpop.f32.mrb[0].mxu0
      %8236 = vmatprep.mubr.bf16.mxu0 0
      %8237 = vmatmul.mubr.bf16.gmra.mrb[0].mxu0 %v8117
      %v8238 = vpop.f32.mrb[0].mxu0
      %v8239 = vadd.f32 0.0, %v8238
      %v8240 = vpop.f32.mrb[0].mxu0
      %v8241 = vpop.f32.mrb[0].mxu0
      %v8242 = vadd.f32 0.0, %v8241
      %v8243 = vpop.f32.mrb[0].mxu0
      %8244 = vmatprep.mubr.bf16.mxu0 0
      %8245 = vmatmul.mubr.bf16.gmra.mrb[0].mxu0 %v8118
      %v8246 = vpop.f32.mrb[0].mxu0
      %v8247 = vadd.f32 0.0, %v8246
      %v8248 = vpop.f32.mrb[0].mxu0
      %v8249 = vpop.f32.mrb[0].mxu0
      %v8250 = vadd.f32 0.0, %v8249
      %v8251 = vpop.f32.mrb[0].mxu0
      %8252 = vmatprep.mubr.bf16.mxu0 0
      %8253 = vmatmul.mubr.bf16.gmra.mrb[0].mxu0 %v8119
      %v8254 = vpop.f32.mrb[0].mxu0
      %v8255 = vadd.f32 0.0, %v8254
      %v8256 = vpop.f32.mrb[0].mxu0
      %v8257 = vpop.f32.mrb[0].mxu0
      %v8258 = vadd.f32 0.0, %v8257
      %v8259 = vpop.f32.mrb[0].mxu0
      %8260 = vmatprep.mubr.bf16.mxu0 0
      %8261 = vmatmul.mubr.bf16.gmra.mrb[0].mxu0 %v8120
      %v8262 = vpop.f32.mrb[0].mxu0
      %v8263 = vadd.f32 0.0, %v8262
      %v8264 = vpop.f32.mrb[0].mxu0
      %v8265 = vpop.f32.mrb[0].mxu0
      %v8266 = vadd.f32 0.0, %v8265
      %v8267 = vpop.f32.mrb[0].mxu0
      %8268 = vmatprep.mubr.bf16.mxu0 0
      %8269 = vmatmul.mubr.bf16.gmra.mrb[0].mxu0 %v8121
      %v8270 = vpop.f32.mrb[0].mxu0
      %v8271 = vadd.f32 0.0, %v8270
      %v8272 = vpop.f32.mrb[0].mxu0
      %v8273 = vpop.f32.mrb[0].mxu0
      %v8274 = vadd.f32 0.0, %v8273
      %v8275 = vpop.f32.mrb[0].mxu0
      %8276 = vmatprep.mubr.bf16.mxu0 0
      %8277 = vmatmul.mubr.bf16.gmra.mrb[0].mxu0 %v8122
      %v8278 = vpop.f32.mrb[0].mxu0
      %v8279 = vadd.f32 0.0, %v8278
      %v8280 = vpop.f32.mrb[0].mxu0
      %v8281 = vpop.f32.mrb[0].mxu0
      %v8282 = vadd.f32 0.0, %v8281
      %v8283 = vpop.f32.mrb[0].mxu0
      %8284 = vmatprep.mubr.bf16.mxu0 0
      %8285 = vmatmul.mubr.bf16.gmra.mrb[0].mxu0 %v8123
      %v8286 = vpop.f32.mrb[0].mxu0
      %v8287 = vadd.f32 0.0, %v8286
      %v8288 = vpop.f32.mrb[0].mxu0
      %v8289 = vpop.f32.mrb[0].mxu0
      %v8290 = vadd.f32 0.0, %v8289
      %v8291 = vpop.f32.mrb[0].mxu0
      %8292 = vmatprep.mubr.bf16.mxu0 0
      %8293 = vmatmul.mubr.bf16.gmra.mrb[0].mxu0 %v8124
      %v8294 = vpop.f32.mrb[0].mxu0
      %v8295 = vadd.f32 0.0, %v8294
      %v8296 = vpop.f32.mrb[0].mxu0
      %v8297 = vpop.f32.mrb[0].mxu0
      %v8298 = vadd.f32 0.0, %v8297
      %v8299 = vpop.f32.mrb[0].mxu0
      %8300 = vmatprep.mubr.bf16.mxu0 0
      %8301 = vmatmul.mubr.bf16.gmra.mrb[0].mxu0 %v8125
      %v8302 = vpop.f32.mrb[0].mxu0
      %v8303 = vadd.f32 0.0, %v8302
      %v8304 = vpop.f32.mrb[0].mxu0
      %v8305 = vpop.f32.mrb[0].mxu0
      %v8306 = vadd.f32 0.0, %v8305
      %v8307 = vpop.f32.mrb[0].mxu0
      %8308 = vmatprep.mubr.bf16.mxu0 0
      %8309 = vmatmul.mubr.bf16.gmra.mrb[0].mxu0 %v8126
      %v8310 = vpop.f32.mrb[0].mxu0
      %v8311 = vadd.f32 0.0, %v8310
      %v8312 = vpop.f32.mrb[0].mxu0
      %v8313 = vpop.f32.mrb[0].mxu0
      %v8314 = vadd.f32 0.0, %v8313
      %v8315 = vpop.f32.mrb[0].mxu0
      %8316 = vmatprep.mubr.bf16.mxu0 0
      %8317 = vmatmul.mubr.bf16.gmra.mrb[0].mxu0 %v8127
      %v8318 = vpop.f32.mrb[0].mxu0
      %v8319 = vadd.f32 0.0, %v8318
      %v8320 = vpop.f32.mrb[0].mxu0
      %v8321 = vpop.f32.mrb[0].mxu0
      %v8322 = vadd.f32 0.0, %v8321
      %v8323 = vpop.f32.mrb[0].mxu0
      %8324 = vmatprep.mubr.bf16.mxu0 0
      %8325 = vmatmul.mubr.bf16.gmra.mrb[0].mxu0 %v8128
      %v8326 = vpop.f32.mrb[0].mxu0
      %v8327 = vadd.f32 0.0, %v8326
      %v8328 = vpop.f32.mrb[0].mxu0
      %v8329 = vpop.f32.mrb[0].mxu0
      %v8330 = vadd.f32 0.0, %v8329
      %v8331 = vpop.f32.mrb[0].mxu0
      %8332 = vmatprep.mubr.bf16.mxu0 0
      %8333 = vmatmul.mubr.bf16.gmra.mrb[0].mxu0 %v8129
      %v8334 = vpop.f32.mrb[0].mxu0
      %v8335 = vadd.f32 0.0, %v8334
      %v8336 = vpop.f32.mrb[0].mxu0
      %v8337 = vpop.f32.mrb[0].mxu0
      %v8338 = vadd.f32 0.0, %v8337
      %v8339 = vpop.f32.mrb[0].mxu0
      %8340 = vmatprep.mubr.bf16.mxu0 0
      %8341 = vmatmul.mubr.bf16.gmra.mrb[0].mxu0 %v8130
      %v8342 = vpop.f32.mrb[0].mxu0
      %v8343 = vadd.f32 0.0, %v8342
      %v8344 = vpop.f32.mrb[0].mxu0
      %v8345 = vpop.f32.mrb[0].mxu0
      %v8346 = vadd.f32 0.0, %v8345
      %v8347 = vpop.f32.mrb[0].mxu0
      %8348 = vmatprep.mubr.bf16.mxu0 0
      %8349 = vmatmul.mubr.bf16.gmra.mrb[0].mxu0 %v8131
      %v8350 = vpop.f32.mrb[0].mxu0
      %v8351 = vadd.f32 0.0, %v8350
      %v8352 = vpop.f32.mrb[0].mxu0
      %v8353 = vpop.f32.mrb[0].mxu0
      %v8354 = vadd.f32 0.0, %v8353
      %v8355 = vpop.f32.mrb[0].mxu0
      %8356 = vdwg.mxu0
      %v8357 = vadd.f32 %v7603, %v8231
      %v8358 = vadd.f32 %v7604, %v8234
      %v8359 = vadd.f32 %v7605, %v8239
      %v8360 = vadd.f32 %v7606, %v8242
      %v8361 = vadd.f32 %v7607, %v8247
      %v8362 = vadd.f32 %v7608, %v8250
      %v8363 = vadd.f32 %v7609, %v8255
      %v8364 = vadd.f32 %v7610, %v8258
      %v8365 = vadd.f32 %v7611, %v8263
      %v8366 = vadd.f32 %v7612, %v8266
      %v8367 = vadd.f32 %v7613, %v8271
      %v8368 = vadd.f32 %v7614, %v8274
      %v8369 = vadd.f32 %v7615, %v8279
      %v8370 = vadd.f32 %v7616, %v8282
      %v8371 = vadd.f32 %v7617, %v8287
      %v8372 = vadd.f32 %v7618, %v8290
      %v8373 = vadd.f32 %v7619, %v8295
      %v8374 = vadd.f32 %v7620, %v8298
      %v8375 = vadd.f32 %v7621, %v8303
      %v8376 = vadd.f32 %v7622, %v8306
      %v8377 = vadd.f32 %v7623, %v8311
      %v8378 = vadd.f32 %v7624, %v8314
      %v8379 = vadd.f32 %v7625, %v8319
      %v8380 = vadd.f32 %v7626, %v8322
      %v8381 = vadd.f32 %v7627, %v8327
      %v8382 = vadd.f32 %v7628, %v8330
      %v8383 = vadd.f32 %v7629, %v8335
      %v8384 = vadd.f32 %v7630, %v8338
      %v8385 = vadd.f32 %v7631, %v8343
      %v8386 = vadd.f32 %v7632, %v8346
      %v8387 = vadd.f32 %v7633, %v8351
      %v8388 = vadd.f32 %v7634, %v8354
      %v8389 = vld [vmem:[%s5606] sm:$0xe]
      %v8390 = vld [vmem:[%s5606 + $0xc] sm:$0xe]
      %v8391 = vld [vmem:[%s5606 + $0x18] sm:$0xe]
      %v8392 = vld [vmem:[%s5606 + $0x24] sm:$0xe]
      %v8393 = vld [vmem:[%s5606 + $0x30] sm:$0xe]
      %v8394 = vld [vmem:[%s5606 + $0x3c] sm:$0xe]
      %v8395 = vld [vmem:[%s5606 + $0x48] sm:$0xe]
      %v8396 = vld [vmem:[%s5606 + $0x54] sm:$0xe]
      %v8397 = vld [vmem:[%s5606 + $0x60] sm:$0xe]
      %v8398 = vld [vmem:[%s5606 + $0x6c] sm:$0xe]
      %v8399 = vld [vmem:[%s5606 + $0x78] sm:$0xe]
      %v8400 = vld [vmem:[%s5606 + $0x84] sm:$0xe]
      %v8401 = vld [vmem:[%s5606 + $0x90] sm:$0xe]
      %v8402 = vld [vmem:[%s5606 + $0x9c] sm:$0xe]
      %v8403 = vld [vmem:[%s5606 + $0xa8] sm:$0xe]
      %v8404 = vld [vmem:[%s5606 + $0xb4] sm:$0xe]
      %v8453 = vrot.slane %v8389, 5
      %v8454 = vrot.slane %v8453, 4
      %v8455 = vrot.slane %v7636, 5
      %v8456 = vsel %vm1349, %v8454, %v8455
      %v8457 = vrot.slane %v8455, 4
      %v8458 = vrot.slane %v7637, 5
      %v8459 = vsel %vm1349, %v8457, %v8458
      %v8460 = vrot.slane %v8390, 5
      %v8461 = vrot.slane %v8460, 4
      %v8462 = vrot.slane %v7639, 5
      %v8463 = vsel %vm1349, %v8461, %v8462
      %v8464 = vrot.slane %v8462, 4
      %v8465 = vrot.slane %v7640, 5
      %v8466 = vsel %vm1349, %v8464, %v8465
      %v8467 = vrot.slane %v8391, 5
      %v8468 = vrot.slane %v8467, 4
      %v8469 = vrot.slane %v7642, 5
      %v8470 = vsel %vm1349, %v8468, %v8469
      %v8471 = vrot.slane %v8469, 4
      %v8472 = vrot.slane %v7643, 5
      %v8473 = vsel %vm1349, %v8471, %v8472
      %v8474 = vrot.slane %v8392, 5
      %v8475 = vrot.slane %v8474, 4
      %v8476 = vrot.slane %v7645, 5
      %v8477 = vsel %vm1349, %v8475, %v8476
      %v8478 = vrot.slane %v8476, 4
      %v8479 = vrot.slane %v7646, 5
      %v8480 = vsel %vm1349, %v8478, %v8479
      %v8481 = vrot.slane %v8393, 5
      %v8482 = vrot.slane %v8481, 4
      %v8483 = vrot.slane %v7648, 5
      %v8484 = vsel %vm1349, %v8482, %v8483
      %v8485 = vrot.slane %v8483, 4
      %v8486 = vrot.slane %v7649, 5
      %v8487 = vsel %vm1349, %v8485, %v8486
      %v8488 = vrot.slane %v8394, 5
      %v8489 = vrot.slane %v8488, 4
      %v8490 = vrot.slane %v7651, 5
      %v8491 = vsel %vm1349, %v8489, %v8490
      %v8492 = vrot.slane %v8490, 4
      %v8493 = vrot.slane %v7652, 5
      %v8494 = vsel %vm1349, %v8492, %v8493
      %v8495 = vrot.slane %v8395, 5
      %v8496 = vrot.slane %v8495, 4
      %v8497 = vrot.slane %v7654, 5
      %v8498 = vsel %vm1349, %v8496, %v8497
      %v8499 = vrot.slane %v8497, 4
      %v8500 = vrot.slane %v7655, 5
      %v8501 = vsel %vm1349, %v8499, %v8500
      %v8502 = vrot.slane %v8396, 5
      %v8503 = vrot.slane %v8502, 4
      %v8504 = vrot.slane %v7657, 5
      %v8505 = vsel %vm1349, %v8503, %v8504
      %v8506 = vrot.slane %v8504, 4
      %v8507 = vrot.slane %v7658, 5
      %v8508 = vsel %vm1349, %v8506, %v8507
      %v8509 = vrot.slane %v8397, 5
      %v8510 = vrot.slane %v8509, 4
      %v8511 = vrot.slane %v7660, 5
      %v8512 = vsel %vm1349, %v8510, %v8511
      %v8513 = vrot.slane %v8511, 4
      %v8514 = vrot.slane %v7661, 5
      %v8515 = vsel %vm1349, %v8513, %v8514
      %v8516 = vrot.slane %v8398, 5
      %v8517 = vrot.slane %v8516, 4
      %v8518 = vrot.slane %v7663, 5
      %v8519 = vsel %vm1349, %v8517, %v8518
      %v8520 = vrot.slane %v8518, 4
      %v8521 = vrot.slane %v7664, 5
      %v8522 = vsel %vm1349, %v8520, %v8521
      %v8523 = vrot.slane %v8399, 5
      %v8524 = vrot.slane %v8523, 4
      %v8525 = vrot.slane %v7666, 5
      %v8526 = vsel %vm1349, %v8524, %v8525
      %v8527 = vrot.slane %v8525, 4
      %v8528 = vrot.slane %v7667, 5
      %v8529 = vsel %vm1349, %v8527, %v8528
      %v8530 = vrot.slane %v8400, 5
      %v8531 = vrot.slane %v8530, 4
      %v8532 = vrot.slane %v7669, 5
      %v8533 = vsel %vm1349, %v8531, %v8532
      %v8534 = vrot.slane %v8532, 4
      %v8535 = vrot.slane %v7670, 5
      %v8536 = vsel %vm1349, %v8534, %v8535
      %v8537 = vrot.slane %v8401, 5
      %v8538 = vrot.slane %v8537, 4
      %v8539 = vrot.slane %v7672, 5
      %v8540 = vsel %vm1349, %v8538, %v8539
      %v8541 = vrot.slane %v8539, 4
      %v8542 = vrot.slane %v7673, 5
      %v8543 = vsel %vm1349, %v8541, %v8542
      %v8544 = vrot.slane %v8402, 5
      %v8545 = vrot.slane %v8544, 4
      %v8546 = vrot.slane %v7675, 5
      %v8547 = vsel %vm1349, %v8545, %v8546
      %v8548 = vrot.slane %v8546, 4
      %v8549 = vrot.slane %v7676, 5
      %v8550 = vsel %vm1349, %v8548, %v8549
      %v8551 = vrot.slane %v8403, 5
      %v8552 = vrot.slane %v8551, 4
      %v8553 = vrot.slane %v7678, 5
      %v8554 = vsel %vm1349, %v8552, %v8553
      %v8555 = vrot.slane %v8553, 4
      %v8556 = vrot.slane %v7679, 5
      %v8557 = vsel %vm1349, %v8555, %v8556
      %v8558 = vrot.slane %v8404, 5
      %v8559 = vrot.slane %v8558, 4
      %v8560 = vrot.slane %v7681, 5
      %v8561 = vsel %vm1349, %v8559, %v8560
      %v8562 = vrot.slane %v8560, 4
      %v8563 = vrot.slane %v7682, 5
      %v8564 = vsel %vm1349, %v8562, %v8563
      %s8565 = scalar_lea.vmem %s3, 320
      %v8566 = vld [vmem:[%s8565] sm:$0xf]
      %v8567 = vld [vmem:[%s8565 + $0x4] sm:$0xf]
      %v8568 = vld [vmem:[%s8565 + $0x8] sm:$0xf]
      %v8569 = vld [vmem:[%s8565 + $0xc] sm:$0xf]
      %v8570 = vld [vmem:[%s8565 + $0x10] sm:$0xf]
      %v8571 = vld [vmem:[%s8565 + $0x14] sm:$0xf]
      %v8572 = vld [vmem:[%s8565 + $0x18] sm:$0xf]
      %v8573 = vld [vmem:[%s8565 + $0x1c] sm:$0xf]
      %v8574 = vld [vmem:[%s8565 + $0x20] sm:$0xf]
      %v8575 = vld [vmem:[%s8565 + $0x24] sm:$0xf]
      %v8576 = vld [vmem:[%s8565 + $0x28] sm:$0xf]
      %v8577 = vld [vmem:[%s8565 + $0x2c] sm:$0xf]
      %v8578 = vld [vmem:[%s8565 + $0x30] sm:$0xf]
      %v8579 = vld [vmem:[%s8565 + $0x34] sm:$0xf]
      %v8580 = vld [vmem:[%s8565 + $0x38] sm:$0xf]
      %v8581 = vld [vmem:[%s8565 + $0x3c] sm:$0xf]
      %v8582 = vunpack.c.l.b16 %v8456
      %v8583 = vunpack.c.l.b16 %v8459
      %v8584 = vunpack.c.l.b16 %v8463
      %v8585 = vunpack.c.l.b16 %v8466
      %v8586 = vunpack.c.l.b16 %v8470
      %v8587 = vunpack.c.l.b16 %v8473
      %v8588 = vunpack.c.l.b16 %v8477
      %v8589 = vunpack.c.l.b16 %v8480
      %v8590 = vunpack.c.l.b16 %v8484
      %v8591 = vunpack.c.l.b16 %v8487
      %v8592 = vunpack.c.l.b16 %v8491
      %v8593 = vunpack.c.l.b16 %v8494
      %v8594 = vunpack.c.l.b16 %v8498
      %v8595 = vunpack.c.l.b16 %v8501
      %v8596 = vunpack.c.l.b16 %v8505
      %v8597 = vunpack.c.l.b16 %v8508
      %v8598 = vunpack.c.l.b16 %v8512
      %v8599 = vunpack.c.l.b16 %v8515
      %v8600 = vunpack.c.l.b16 %v8519
      %v8601 = vunpack.c.l.b16 %v8522
      %v8602 = vunpack.c.l.b16 %v8526
      %v8603 = vunpack.c.l.b16 %v8529
      %v8604 = vunpack.c.l.b16 %v8533
      %v8605 = vunpack.c.l.b16 %v8536
      %v8606 = vunpack.c.l.b16 %v8540
      %v8607 = vunpack.c.l.b16 %v8543
      %v8608 = vunpack.c.l.b16 %v8547
      %v8609 = vunpack.c.l.b16 %v8550
      %v8610 = vunpack.c.l.b16 %v8554
      %v8611 = vunpack.c.l.b16 %v8557
      %v8612 = vunpack.c.l.b16 %v8561
      %v8613 = vunpack.c.l.b16 %v8564
      %v8614 = vpack.c.b16 %v8583, %v8582
      %v8615 = vpack.c.b16 %v8585, %v8584
      %v8616 = vpack.c.b16 %v8587, %v8586
      %v8617 = vpack.c.b16 %v8589, %v8588
      %v8618 = vpack.c.b16 %v8591, %v8590
      %v8619 = vpack.c.b16 %v8593, %v8592
      %v8620 = vpack.c.b16 %v8595, %v8594
      %v8621 = vpack.c.b16 %v8597, %v8596
      %v8622 = vpack.c.b16 %v8599, %v8598
      %v8623 = vpack.c.b16 %v8601, %v8600
      %v8624 = vpack.c.b16 %v8603, %v8602
      %v8625 = vpack.c.b16 %v8605, %v8604
      %v8626 = vpack.c.b16 %v8607, %v8606
      %v8627 = vpack.c.b16 %v8609, %v8608
      %v8628 = vpack.c.b16 %v8611, %v8610
      %v8629 = vpack.c.b16 %v8613, %v8612
      %v8662 = vunpack.c.l.b16 %v8566
      %v8663 = vunpack.c.l.b16 %v8567
      %v8664 = vunpack.c.l.b16 %v8568
      %v8665 = vunpack.c.l.b16 %v8569
      %v8666 = vunpack.c.l.b16 %v8570
      %v8667 = vunpack.c.l.b16 %v8571
      %v8668 = vunpack.c.l.b16 %v8572
      %v8669 = vunpack.c.l.b16 %v8573
      %v8670 = vunpack.c.l.b16 %v8574
      %v8671 = vunpack.c.l.b16 %v8575
      %v8672 = vunpack.c.l.b16 %v8576
      %v8673 = vunpack.c.l.b16 %v8577
      %v8674 = vunpack.c.l.b16 %v8578
      %v8675 = vunpack.c.l.b16 %v8579
      %v8676 = vunpack.c.l.b16 %v8580
      %v8677 = vunpack.c.l.b16 %v8581
      %v8678 = vpack.c.b16 %v8663, %v8662
      %v8679 = vpack.c.b16 %v8665, %v8664
      %v8680 = vpack.c.b16 %v8667, %v8666
      %v8681 = vpack.c.b16 %v8669, %v8668
      %v8682 = vpack.c.b16 %v8671, %v8670
      %v8683 = vpack.c.b16 %v8673, %v8672
      %v8684 = vpack.c.b16 %v8675, %v8674
      %v8685 = vpack.c.b16 %v8677, %v8676
      %8694 = vmatprep.subr.bf16.mxu0 0
      %8695 = vmatpush1.bf16.msra.mxu0 %v8678
      %8696 = vmatprep.subr.bf16.mxu0 0
      %8697 = vmatpush1.bf16.msra.mxu0 %v8679
      %8698 = vmatprep.subr.bf16.mxu0 0
      %8699 = vmatpush1.bf16.msra.mxu0 %v8680
      %8700 = vmatprep.subr.bf16.mxu0 0
      %8701 = vmatpush1.bf16.msra.mxu0 %v8681
      %8702 = vmatprep.subr.bf16.mxu0 0
      %8703 = vmatpush1.bf16.msra.mxu0 %v8682
      %8704 = vmatprep.subr.bf16.mxu0 0
      %8705 = vmatpush1.bf16.msra.mxu0 %v8683
      %8706 = vmatprep.subr.bf16.mxu0 0
      %8707 = vmatpush1.bf16.msra.mxu0 %v8684
      %8708 = vmatprep.subr.bf16.mxu0 0
      %8709 = vmatpush1.bf16.msra.mxu0 %v8685
      %8710 = vmatprep.subr.bf16.mxu0 0
      %8711 = vmatpush1.bf16.msra.mxu0 0
      %8712 = vmatprep.subr.bf16.mxu0 0
      %8713 = vmatpush1.bf16.msra.mxu0 0
      %8714 = vmatprep.subr.bf16.mxu0 0
      %8715 = vmatpush1.bf16.msra.mxu0 0
      %8716 = vmatprep.subr.bf16.mxu0 0
      %8717 = vmatpush1.bf16.msra.mxu0 0
      %8718 = vmatprep.subr.bf16.mxu0 0
      %8719 = vmatpush1.bf16.msra.mxu0 0
      %8720 = vmatprep.subr.bf16.mxu0 0
      %8721 = vmatpush1.bf16.msra.mxu0 0
      %8722 = vmatprep.subr.bf16.mxu0 0
      %8723 = vmatpush1.bf16.msra.mxu0 0
      %8724 = vmatprep.subr.bf16.mxu0 0
      %8725 = vmatpush1.bf16.msra.mxu0 0
      %8726 = vmatprep.mubr.bf16.mxu0 0
      %8727 = vmatmul.mubr.bf16.gmra.mrb[0].mxu0 %v8614
      %v8728 = vpop.f32.mrb[0].mxu0
      %v8729 = vadd.f32 0.0, %v8728
      %v8730 = vpop.f32.mrb[0].mxu0
      %v8731 = vpop.f32.mrb[0].mxu0
      %v8732 = vadd.f32 0.0, %v8731
      %v8733 = vpop.f32.mrb[0].mxu0
      %8734 = vmatprep.mubr.bf16.mxu0 0
      %8735 = vmatmul.mubr.bf16.gmra.mrb[0].mxu0 %v8615
      %v8736 = vpop.f32.mrb[0].mxu0
      %v8737 = vadd.f32 0.0, %v8736
      %v8738 = vpop.f32.mrb[0].mxu0
      %v8739 = vpop.f32.mrb[0].mxu0
      %v8740 = vadd.f32 0.0, %v8739
      %v8741 = vpop.f32.mrb[0].mxu0
      %8742 = vmatprep.mubr.bf16.mxu0 0
      %8743 = vmatmul.mubr.bf16.gmra.mrb[0].mxu0 %v8616
      %v8744 = vpop.f32.mrb[0].mxu0
      %v8745 = vadd.f32 0.0, %v8744
      %v8746 = vpop.f32.mrb[0].mxu0
      %v8747 = vpop.f32.mrb[0].mxu0
      %v8748 = vadd.f32 0.0, %v8747
      %v8749 = vpop.f32.mrb[0].mxu0
      %8750 = vmatprep.mubr.bf16.mxu0 0
      %8751 = vmatmul.mubr.bf16.gmra.mrb[0].mxu0 %v8617
      %v8752 = vpop.f32.mrb[0].mxu0
      %v8753 = vadd.f32 0.0, %v8752
      %v8754 = vpop.f32.mrb[0].mxu0
      %v8755 = vpop.f32.mrb[0].mxu0
      %v8756 = vadd.f32 0.0, %v8755
      %v8757 = vpop.f32.mrb[0].mxu0
      %8758 = vmatprep.mubr.bf16.mxu0 0
      %8759 = vmatmul.mubr.bf16.gmra.mrb[0].mxu0 %v8618
      %v8760 = vpop.f32.mrb[0].mxu0
      %v8761 = vadd.f32 0.0, %v8760
      %v8762 = vpop.f32.mrb[0].mxu0
      %v8763 = vpop.f32.mrb[0].mxu0
      %v8764 = vadd.f32 0.0, %v8763
      %v8765 = vpop.f32.mrb[0].mxu0
      %8766 = vmatprep.mubr.bf16.mxu0 0
      %8767 = vmatmul.mubr.bf16.gmra.mrb[0].mxu0 %v8619
      %v8768 = vpop.f32.mrb[0].mxu0
      %v8769 = vadd.f32 0.0, %v8768
      %v8770 = vpop.f32.mrb[0].mxu0
      %v8771 = vpop.f32.mrb[0].mxu0
      %v8772 = vadd.f32 0.0, %v8771
      %v8773 = vpop.f32.mrb[0].mxu0
      %8774 = vmatprep.mubr.bf16.mxu0 0
      %8775 = vmatmul.mubr.bf16.gmra.mrb[0].mxu0 %v8620
      %v8776 = vpop.f32.mrb[0].mxu0
      %v8777 = vadd.f32 0.0, %v8776
      %v8778 = vpop.f32.mrb[0].mxu0
      %v8779 = vpop.f32.mrb[0].mxu0
      %v8780 = vadd.f32 0.0, %v8779
      %v8781 = vpop.f32.mrb[0].mxu0
      %8782 = vmatprep.mubr.bf16.mxu0 0
      %8783 = vmatmul.mubr.bf16.gmra.mrb[0].mxu0 %v8621
      %v8784 = vpop.f32.mrb[0].mxu0
      %v8785 = vadd.f32 0.0, %v8784
      %v8786 = vpop.f32.mrb[0].mxu0
      %v8787 = vpop.f32.mrb[0].mxu0
      %v8788 = vadd.f32 0.0, %v8787
      %v8789 = vpop.f32.mrb[0].mxu0
      %8790 = vmatprep.mubr.bf16.mxu0 0
      %8791 = vmatmul.mubr.bf16.gmra.mrb[0].mxu0 %v8622
      %v8792 = vpop.f32.mrb[0].mxu0
      %v8793 = vadd.f32 0.0, %v8792
      %v8794 = vpop.f32.mrb[0].mxu0
      %v8795 = vpop.f32.mrb[0].mxu0
      %v8796 = vadd.f32 0.0, %v8795
      %v8797 = vpop.f32.mrb[0].mxu0
      %8798 = vmatprep.mubr.bf16.mxu0 0
      %8799 = vmatmul.mubr.bf16.gmra.mrb[0].mxu0 %v8623
      %v8800 = vpop.f32.mrb[0].mxu0
      %v8801 = vadd.f32 0.0, %v8800
      %v8802 = vpop.f32.mrb[0].mxu0
      %v8803 = vpop.f32.mrb[0].mxu0
      %v8804 = vadd.f32 0.0, %v8803
      %v8805 = vpop.f32.mrb[0].mxu0
      %8806 = vmatprep.mubr.bf16.mxu0 0
      %8807 = vmatmul.mubr.bf16.gmra.mrb[0].mxu0 %v8624
      %v8808 = vpop.f32.mrb[0].mxu0
      %v8809 = vadd.f32 0.0, %v8808
      %v8810 = vpop.f32.mrb[0].mxu0
      %v8811 = vpop.f32.mrb[0].mxu0
      %v8812 = vadd.f32 0.0, %v8811
      %v8813 = vpop.f32.mrb[0].mxu0
      %8814 = vmatprep.mubr.bf16.mxu0 0
      %8815 = vmatmul.mubr.bf16.gmra.mrb[0].mxu0 %v8625
      %v8816 = vpop.f32.mrb[0].mxu0
      %v8817 = vadd.f32 0.0, %v8816
      %v8818 = vpop.f32.mrb[0].mxu0
      %v8819 = vpop.f32.mrb[0].mxu0
      %v8820 = vadd.f32 0.0, %v8819
      %v8821 = vpop.f32.mrb[0].mxu0
      %8822 = vmatprep.mubr.bf16.mxu0 0
      %8823 = vmatmul.mubr.bf16.gmra.mrb[0].mxu0 %v8626
      %v8824 = vpop.f32.mrb[0].mxu0
      %v8825 = vadd.f32 0.0, %v8824
      %v8826 = vpop.f32.mrb[0].mxu0
      %v8827 = vpop.f32.mrb[0].mxu0
      %v8828 = vadd.f32 0.0, %v8827
      %v8829 = vpop.f32.mrb[0].mxu0
      %8830 = vmatprep.mubr.bf16.mxu0 0
      %8831 = vmatmul.mubr.bf16.gmra.mrb[0].mxu0 %v8627
      %v8832 = vpop.f32.mrb[0].mxu0
      %v8833 = vadd.f32 0.0, %v8832
      %v8834 = vpop.f32.mrb[0].mxu0
      %v8835 = vpop.f32.mrb[0].mxu0
      %v8836 = vadd.f32 0.0, %v8835
      %v8837 = vpop.f32.mrb[0].mxu0
      %8838 = vmatprep.mubr.bf16.mxu0 0
      %8839 = vmatmul.mubr.bf16.gmra.mrb[0].mxu0 %v8628
      %v8840 = vpop.f32.mrb[0].mxu0
      %v8841 = vadd.f32 0.0, %v8840
      %v8842 = vpop.f32.mrb[0].mxu0
      %v8843 = vpop.f32.mrb[0].mxu0
      %v8844 = vadd.f32 0.0, %v8843
      %v8845 = vpop.f32.mrb[0].mxu0
      %8846 = vmatprep.mubr.bf16.mxu0 0
      %8847 = vmatmul.mubr.bf16.gmra.mrb[0].mxu0 %v8629
      %v8848 = vpop.f32.mrb[0].mxu0
      %v8849 = vadd.f32 0.0, %v8848
      %v8850 = vpop.f32.mrb[0].mxu0
      %v8851 = vpop.f32.mrb[0].mxu0
      %v8852 = vadd.f32 0.0, %v8851
      %v8853 = vpop.f32.mrb[0].mxu0
      %8854 = vdwg.mxu0
      %v8855 = vadd.f32 %v8357, %v8729
      %v8856 = vadd.f32 %v8358, %v8732
      %v8857 = vadd.f32 %v8359, %v8737
      %v8858 = vadd.f32 %v8360, %v8740
      %v8859 = vadd.f32 %v8361, %v8745
      %v8860 = vadd.f32 %v8362, %v8748
      %v8861 = vadd.f32 %v8363, %v8753
      %v8862 = vadd.f32 %v8364, %v8756
      %v8863 = vadd.f32 %v8365, %v8761
      %v8864 = vadd.f32 %v8366, %v8764
      %v8865 = vadd.f32 %v8367, %v8769
      %v8866 = vadd.f32 %v8368, %v8772
      %v8867 = vadd.f32 %v8369, %v8777
      %v8868 = vadd.f32 %v8370, %v8780
      %v8869 = vadd.f32 %v8371, %v8785
      %v8870 = vadd.f32 %v8372, %v8788
      %v8871 = vadd.f32 %v8373, %v8793
      %v8872 = vadd.f32 %v8374, %v8796
      %v8873 = vadd.f32 %v8375, %v8801
      %v8874 = vadd.f32 %v8376, %v8804
      %v8875 = vadd.f32 %v8377, %v8809
      %v8876 = vadd.f32 %v8378, %v8812
      %v8877 = vadd.f32 %v8379, %v8817
      %v8878 = vadd.f32 %v8380, %v8820
      %v8879 = vadd.f32 %v8381, %v8825
      %v8880 = vadd.f32 %v8382, %v8828
      %v8881 = vadd.f32 %v8383, %v8833
      %v8882 = vadd.f32 %v8384, %v8836
      %v8883 = vadd.f32 %v8385, %v8841
      %v8884 = vadd.f32 %v8386, %v8844
      %v8885 = vadd.f32 %v8387, %v8849
      %v8886 = vadd.f32 %v8388, %v8852
      %s8887 = scalar_lea.vmem [#allocation2], 24
      %v8888 = vld [vmem:[%s8887] sm:$0xf]
      %v8889 = vld [vmem:[%s8887 + $0x4] sm:$0xf]
      %v8890 = vld [vmem:[%s8887 + $0xc] sm:$0xf]
      %v8891 = vld [vmem:[%s8887 + $0x10] sm:$0xf]
      %v8892 = vld [vmem:[%s8887 + $0x18] sm:$0xf]
      %v8893 = vld [vmem:[%s8887 + $0x1c] sm:$0xf]
      %v8894 = vld [vmem:[%s8887 + $0x24] sm:$0xf]
      %v8895 = vld [vmem:[%s8887 + $0x28] sm:$0xf]
      %v8896 = vld [vmem:[%s8887 + $0x30] sm:$0xf]
      %v8897 = vld [vmem:[%s8887 + $0x34] sm:$0xf]
      %v8898 = vld [vmem:[%s8887 + $0x3c] sm:$0xf]
      %v8899 = vld [vmem:[%s8887 + $0x40] sm:$0xf]
      %v8900 = vld [vmem:[%s8887 + $0x48] sm:$0xf]
      %v8901 = vld [vmem:[%s8887 + $0x4c] sm:$0xf]
      %v8902 = vld [vmem:[%s8887 + $0x54] sm:$0xf]
      %v8903 = vld [vmem:[%s8887 + $0x58] sm:$0xf]
      %v8904 = vld [vmem:[%s8887 + $0x60] sm:$0xf]
      %v8905 = vld [vmem:[%s8887 + $0x64] sm:$0xf]
      %v8906 = vld [vmem:[%s8887 + $0x6c] sm:$0xf]
      %v8907 = vld [vmem:[%s8887 + $0x70] sm:$0xf]
      %v8908 = vld [vmem:[%s8887 + $0x78] sm:$0xf]
      %v8909 = vld [vmem:[%s8887 + $0x7c] sm:$0xf]
      %v8910 = vld [vmem:[%s8887 + $0x84] sm:$0xf]
      %v8911 = vld [vmem:[%s8887 + $0x88] sm:$0xf]
      %v8912 = vld [vmem:[%s8887 + $0x90] sm:$0xf]
      %v8913 = vld [vmem:[%s8887 + $0x94] sm:$0xf]
      %v8914 = vld [vmem:[%s8887 + $0x9c] sm:$0xf]
      %v8915 = vld [vmem:[%s8887 + $0xa0] sm:$0xf]
      %v8916 = vld [vmem:[%s8887 + $0xa8] sm:$0xf]
      %v8917 = vld [vmem:[%s8887 + $0xac] sm:$0xf]
      %v8918 = vld [vmem:[%s8887 + $0xb4] sm:$0xf]
      %v8919 = vld [vmem:[%s8887 + $0xb8] sm:$0xf]
      %s8920 = scalar_lea.vmem %s3, 384
      %v8921 = vld [vmem:[%s8920] sm:$0xf]
      %v8922 = vld [vmem:[%s8920 + $0x4] sm:$0xf]
      %v8923 = vld [vmem:[%s8920 + $0x8] sm:$0xf]
      %v8924 = vld [vmem:[%s8920 + $0xc] sm:$0xf]
      %v8925 = vld [vmem:[%s8920 + $0x10] sm:$0xf]
      %v8926 = vld [vmem:[%s8920 + $0x14] sm:$0xf]
      %v8927 = vld [vmem:[%s8920 + $0x18] sm:$0xf]
      %v8928 = vld [vmem:[%s8920 + $0x1c] sm:$0xf]
      %v8929 = vld [vmem:[%s8920 + $0x20] sm:$0xf]
      %v8930 = vld [vmem:[%s8920 + $0x24] sm:$0xf]
      %v8931 = vld [vmem:[%s8920 + $0x28] sm:$0xf]
      %v8932 = vld [vmem:[%s8920 + $0x2c] sm:$0xf]
      %v8933 = vld [vmem:[%s8920 + $0x30] sm:$0xf]
      %v8934 = vld [vmem:[%s8920 + $0x34] sm:$0xf]
      %v8935 = vld [vmem:[%s8920 + $0x38] sm:$0xf]
      %v8936 = vld [vmem:[%s8920 + $0x3c] sm:$0xf]
      %v8969 = vunpack.c.l.b16 %v8888
      %v8970 = vunpack.c.l.b16 %v8889
      %v8971 = vunpack.c.l.b16 %v8890
      %v8972 = vunpack.c.l.b16 %v8891
      %v8973 = vunpack.c.l.b16 %v8892
      %v8974 = vunpack.c.l.b16 %v8893
      %v8975 = vunpack.c.l.b16 %v8894
      %v8976 = vunpack.c.l.b16 %v8895
      %v8977 = vunpack.c.l.b16 %v8896
      %v8978 = vunpack.c.l.b16 %v8897
      %v8979 = vunpack.c.l.b16 %v8898
      %v8980 = vunpack.c.l.b16 %v8899
      %v8981 = vunpack.c.l.b16 %v8900
      %v8982 = vunpack.c.l.b16 %v8901
      %v8983 = vunpack.c.l.b16 %v8902
      %v8984 = vunpack.c.l.b16 %v8903
      %v8985 = vunpack.c.l.b16 %v8904
      %v8986 = vunpack.c.l.b16 %v8905
      %v8987 = vunpack.c.l.b16 %v8906
      %v8988 = vunpack.c.l.b16 %v8907
      %v8989 = vunpack.c.l.b16 %v8908
      %v8990 = vunpack.c.l.b16 %v8909
      %v8991 = vunpack.c.l.b16 %v8910
      %v8992 = vunpack.c.l.b16 %v8911
      %v8993 = vunpack.c.l.b16 %v8912
      %v8994 = vunpack.c.l.b16 %v8913
      %v8995 = vunpack.c.l.b16 %v8914
      %v8996 = vunpack.c.l.b16 %v8915
      %v8997 = vunpack.c.l.b16 %v8916
      %v8998 = vunpack.c.l.b16 %v8917
      %v8999 = vunpack.c.l.b16 %v8918
      %v9000 = vunpack.c.l.b16 %v8919
      %v9001 = vpack.c.b16 %v8970, %v8969
      %v9002 = vpack.c.b16 %v8972, %v8971
      %v9003 = vpack.c.b16 %v8974, %v8973
      %v9004 = vpack.c.b16 %v8976, %v8975
      %v9005 = vpack.c.b16 %v8978, %v8977
      %v9006 = vpack.c.b16 %v8980, %v8979
      %v9007 = vpack.c.b16 %v8982, %v8981
      %v9008 = vpack.c.b16 %v8984, %v8983
      %v9009 = vpack.c.b16 %v8986, %v8985
      %v9010 = vpack.c.b16 %v8988, %v8987
      %v9011 = vpack.c.b16 %v8990, %v8989
      %v9012 = vpack.c.b16 %v8992, %v8991
      %v9013 = vpack.c.b16 %v8994, %v8993
      %v9014 = vpack.c.b16 %v8996, %v8995
      %v9015 = vpack.c.b16 %v8998, %v8997
      %v9016 = vpack.c.b16 %v9000, %v8999
      %v9049 = vunpack.c.l.b16 %v8921
      %v9050 = vunpack.c.l.b16 %v8922
      %v9051 = vunpack.c.l.b16 %v8923
      %v9052 = vunpack.c.l.b16 %v8924
      %v9053 = vunpack.c.l.b16 %v8925
      %v9054 = vunpack.c.l.b16 %v8926
      %v9055 = vunpack.c.l.b16 %v8927
      %v9056 = vunpack.c.l.b16 %v8928
      %v9057 = vunpack.c.l.b16 %v8929
      %v9058 = vunpack.c.l.b16 %v8930
      %v9059 = vunpack.c.l.b16 %v8931
      %v9060 = vunpack.c.l.b16 %v8932
      %v9061 = vunpack.c.l.b16 %v8933
      %v9062 = vunpack.c.l.b16 %v8934
      %v9063 = vunpack.c.l.b16 %v8935
      %v9064 = vunpack.c.l.b16 %v8936
      %v9065 = vpack.c.b16 %v9050, %v9049
      %v9066 = vpack.c.b16 %v9052, %v9051
      %v9067 = vpack.c.b16 %v9054, %v9053
      %v9068 = vpack.c.b16 %v9056, %v9055
      %v9069 = vpack.c.b16 %v9058, %v9057
      %v9070 = vpack.c.b16 %v9060, %v9059
      %v9071 = vpack.c.b16 %v9062, %v9061
      %v9072 = vpack.c.b16 %v9064, %v9063
      %9081 = vmatprep.subr.bf16.mxu0 0
      %9082 = vmatpush1.bf16.msra.mxu0 %v9065
      %9083 = vmatprep.subr.bf16.mxu0 0
      %9084 = vmatpush1.bf16.msra.mxu0 %v9066
      %9085 = vmatprep.subr.bf16.mxu0 0
      %9086 = vmatpush1.bf16.msra.mxu0 %v9067
      %9087 = vmatprep.subr.bf16.mxu0 0
      %9088 = vmatpush1.bf16.msra.mxu0 %v9068
      %9089 = vmatprep.subr.bf16.mxu0 0
      %9090 = vmatpush1.bf16.msra.mxu0 %v9069
      %9091 = vmatprep.subr.bf16.mxu0 0
      %9092 = vmatpush1.bf16.msra.mxu0 %v9070
      %9093 = vmatprep.subr.bf16.mxu0 0
      %9094 = vmatpush1.bf16.msra.mxu0 %v9071
      %9095 = vmatprep.subr.bf16.mxu0 0
      %9096 = vmatpush1.bf16.msra.mxu0 %v9072
      %9097 = vmatprep.subr.bf16.mxu0 0
      %9098 = vmatpush1.bf16.msra.mxu0 0
      %9099 = vmatprep.subr.bf16.mxu0 0
      %9100 = vmatpush1.bf16.msra.mxu0 0
      %9101 = vmatprep.subr.bf16.mxu0 0
      %9102 = vmatpush1.bf16.msra.mxu0 0
      %9103 = vmatprep.subr.bf16.mxu0 0
      %9104 = vmatpush1.bf16.msra.mxu0 0
      %9105 = vmatprep.subr.bf16.mxu0 0
      %9106 = vmatpush1.bf16.msra.mxu0 0
      %9107 = vmatprep.subr.bf16.mxu0 0
      %9108 = vmatpush1.bf16.msra.mxu0 0
      %9109 = vmatprep.subr.bf16.mxu0 0
      %9110 = vmatpush1.bf16.msra.mxu0 0
      %9111 = vmatprep.subr.bf16.mxu0 0
      %9112 = vmatpush1.bf16.msra.mxu0 0
      %9113 = vmatprep.mubr.bf16.mxu0 0
      %9114 = vmatmul.mubr.bf16.gmra.mrb[0].mxu0 %v9001
      %v9115 = vpop.f32.mrb[0].mxu0
      %v9116 = vadd.f32 0.0, %v9115
      %v9117 = vpop.f32.mrb[0].mxu0
      %v9118 = vpop.f32.mrb[0].mxu0
      %v9119 = vadd.f32 0.0, %v9118
      %v9120 = vpop.f32.mrb[0].mxu0
      %9121 = vmatprep.mubr.bf16.mxu0 0
      %9122 = vmatmul.mubr.bf16.gmra.mrb[0].mxu0 %v9002
      %v9123 = vpop.f32.mrb[0].mxu0
      %v9124 = vadd.f32 0.0, %v9123
      %v9125 = vpop.f32.mrb[0].mxu0
      %v9126 = vpop.f32.mrb[0].mxu0
      %v9127 = vadd.f32 0.0, %v9126
      %v9128 = vpop.f32.mrb[0].mxu0
      %9129 = vmatprep.mubr.bf16.mxu0 0
      %9130 = vmatmul.mubr.bf16.gmra.mrb[0].mxu0 %v9003
      %v9131 = vpop.f32.mrb[0].mxu0
      %v9132 = vadd.f32 0.0, %v9131
      %v9133 = vpop.f32.mrb[0].mxu0
      %v9134 = vpop.f32.mrb[0].mxu0
      %v9135 = vadd.f32 0.0, %v9134
      %v9136 = vpop.f32.mrb[0].mxu0
      %9137 = vmatprep.mubr.bf16.mxu0 0
      %9138 = vmatmul.mubr.bf16.gmra.mrb[0].mxu0 %v9004
      %v9139 = vpop.f32.mrb[0].mxu0
      %v9140 = vadd.f32 0.0, %v9139
      %v9141 = vpop.f32.mrb[0].mxu0
      %v9142 = vpop.f32.mrb[0].mxu0
      %v9143 = vadd.f32 0.0, %v9142
      %v9144 = vpop.f32.mrb[0].mxu0
      %9145 = vmatprep.mubr.bf16.mxu0 0
      %9146 = vmatmul.mubr.bf16.gmra.mrb[0].mxu0 %v9005
      %v9147 = vpop.f32.mrb[0].mxu0
      %v9148 = vadd.f32 0.0, %v9147
      %v9149 = vpop.f32.mrb[0].mxu0
      %v9150 = vpop.f32.mrb[0].mxu0
      %v9151 = vadd.f32 0.0, %v9150
      %v9152 = vpop.f32.mrb[0].mxu0
      %9153 = vmatprep.mubr.bf16.mxu0 0
      %9154 = vmatmul.mubr.bf16.gmra.mrb[0].mxu0 %v9006
      %v9155 = vpop.f32.mrb[0].mxu0
      %v9156 = vadd.f32 0.0, %v9155
      %v9157 = vpop.f32.mrb[0].mxu0
      %v9158 = vpop.f32.mrb[0].mxu0
      %v9159 = vadd.f32 0.0, %v9158
      %v9160 = vpop.f32.mrb[0].mxu0
      %9161 = vmatprep.mubr.bf16.mxu0 0
      %9162 = vmatmul.mubr.bf16.gmra.mrb[0].mxu0 %v9007
      %v9163 = vpop.f32.mrb[0].mxu0
      %v9164 = vadd.f32 0.0, %v9163
      %v9165 = vpop.f32.mrb[0].mxu0
      %v9166 = vpop.f32.mrb[0].mxu0
      %v9167 = vadd.f32 0.0, %v9166
      %v9168 = vpop.f32.mrb[0].mxu0
      %9169 = vmatprep.mubr.bf16.mxu0 0
      %9170 = vmatmul.mubr.bf16.gmra.mrb[0].mxu0 %v9008
      %v9171 = vpop.f32.mrb[0].mxu0
      %v9172 = vadd.f32 0.0, %v9171
      %v9173 = vpop.f32.mrb[0].mxu0
      %v9174 = vpop.f32.mrb[0].mxu0
      %v9175 = vadd.f32 0.0, %v9174
      %v9176 = vpop.f32.mrb[0].mxu0
      %9177 = vmatprep.mubr.bf16.mxu0 0
      %9178 = vmatmul.mubr.bf16.gmra.mrb[0].mxu0 %v9009
      %v9179 = vpop.f32.mrb[0].mxu0
      %v9180 = vadd.f32 0.0, %v9179
      %v9181 = vpop.f32.mrb[0].mxu0
      %v9182 = vpop.f32.mrb[0].mxu0
      %v9183 = vadd.f32 0.0, %v9182
      %v9184 = vpop.f32.mrb[0].mxu0
      %9185 = vmatprep.mubr.bf16.mxu0 0
      %9186 = vmatmul.mubr.bf16.gmra.mrb[0].mxu0 %v9010
      %v9187 = vpop.f32.mrb[0].mxu0
      %v9188 = vadd.f32 0.0, %v9187
      %v9189 = vpop.f32.mrb[0].mxu0
      %v9190 = vpop.f32.mrb[0].mxu0
      %v9191 = vadd.f32 0.0, %v9190
      %v9192 = vpop.f32.mrb[0].mxu0
      %9193 = vmatprep.mubr.bf16.mxu0 0
      %9194 = vmatmul.mubr.bf16.gmra.mrb[0].mxu0 %v9011
      %v9195 = vpop.f32.mrb[0].mxu0
      %v9196 = vadd.f32 0.0, %v9195
      %v9197 = vpop.f32.mrb[0].mxu0
      %v9198 = vpop.f32.mrb[0].mxu0
      %v9199 = vadd.f32 0.0, %v9198
      %v9200 = vpop.f32.mrb[0].mxu0
      %9201 = vmatprep.mubr.bf16.mxu0 0
      %9202 = vmatmul.mubr.bf16.gmra.mrb[0].mxu0 %v9012
      %v9203 = vpop.f32.mrb[0].mxu0
      %v9204 = vadd.f32 0.0, %v9203
      %v9205 = vpop.f32.mrb[0].mxu0
      %v9206 = vpop.f32.mrb[0].mxu0
      %v9207 = vadd.f32 0.0, %v9206
      %v9208 = vpop.f32.mrb[0].mxu0
      %9209 = vmatprep.mubr.bf16.mxu0 0
      %9210 = vmatmul.mubr.bf16.gmra.mrb[0].mxu0 %v9013
      %v9211 = vpop.f32.mrb[0].mxu0
      %v9212 = vadd.f32 0.0, %v9211
      %v9213 = vpop.f32.mrb[0].mxu0
      %v9214 = vpop.f32.mrb[0].mxu0
      %v9215 = vadd.f32 0.0, %v9214
      %v9216 = vpop.f32.mrb[0].mxu0
      %9217 = vmatprep.mubr.bf16.mxu0 0
      %9218 = vmatmul.mubr.bf16.gmra.mrb[0].mxu0 %v9014
      %v9219 = vpop.f32.mrb[0].mxu0
      %v9220 = vadd.f32 0.0, %v9219
      %v9221 = vpop.f32.mrb[0].mxu0
      %v9222 = vpop.f32.mrb[0].mxu0
      %v9223 = vadd.f32 0.0, %v9222
      %v9224 = vpop.f32.mrb[0].mxu0
      %9225 = vmatprep.mubr.bf16.mxu0 0
      %9226 = vmatmul.mubr.bf16.gmra.mrb[0].mxu0 %v9015
      %v9227 = vpop.f32.mrb[0].mxu0
      %v9228 = vadd.f32 0.0, %v9227
      %v9229 = vpop.f32.mrb[0].mxu0
      %v9230 = vpop.f32.mrb[0].mxu0
      %v9231 = vadd.f32 0.0, %v9230
      %v9232 = vpop.f32.mrb[0].mxu0
      %9233 = vmatprep.mubr.bf16.mxu0 0
      %9234 = vmatmul.mubr.bf16.gmra.mrb[0].mxu0 %v9016
      %v9235 = vpop.f32.mrb[0].mxu0
      %v9236 = vadd.f32 0.0, %v9235
      %v9237 = vpop.f32.mrb[0].mxu0
      %v9238 = vpop.f32.mrb[0].mxu0
      %v9239 = vadd.f32 0.0, %v9238
      %v9240 = vpop.f32.mrb[0].mxu0
      %9241 = vdwg.mxu0
      %v9242 = vadd.f32 %v8855, %v9116
      %v9243 = vadd.f32 %v8856, %v9119
      %v9244 = vadd.f32 %v8857, %v9124
      %v9245 = vadd.f32 %v8858, %v9127
      %v9246 = vadd.f32 %v8859, %v9132
      %v9247 = vadd.f32 %v8860, %v9135
      %v9248 = vadd.f32 %v8861, %v9140
      %v9249 = vadd.f32 %v8862, %v9143
      %v9250 = vadd.f32 %v8863, %v9148
      %v9251 = vadd.f32 %v8864, %v9151
      %v9252 = vadd.f32 %v8865, %v9156
      %v9253 = vadd.f32 %v8866, %v9159
      %v9254 = vadd.f32 %v8867, %v9164
      %v9255 = vadd.f32 %v8868, %v9167
      %v9256 = vadd.f32 %v8869, %v9172
      %v9257 = vadd.f32 %v8870, %v9175
      %v9258 = vadd.f32 %v8871, %v9180
      %v9259 = vadd.f32 %v8872, %v9183
      %v9260 = vadd.f32 %v8873, %v9188
      %v9261 = vadd.f32 %v8874, %v9191
      %v9262 = vadd.f32 %v8875, %v9196
      %v9263 = vadd.f32 %v8876, %v9199
      %v9264 = vadd.f32 %v8877, %v9204
      %v9265 = vadd.f32 %v8878, %v9207
      %v9266 = vadd.f32 %v8879, %v9212
      %v9267 = vadd.f32 %v8880, %v9215
      %v9268 = vadd.f32 %v8881, %v9220
      %v9269 = vadd.f32 %v8882, %v9223
      %v9270 = vadd.f32 %v8883, %v9228
      %v9271 = vadd.f32 %v8884, %v9231
      %v9272 = vadd.f32 %v8885, %v9236
      %v9273 = vadd.f32 %v8886, %v9239
      %v9274 = vld [vmem:[%s8887] sm:$0xf]
      %v9275 = vld [vmem:[%s8887 + $0x4] sm:$0xf]
      %v9276 = vld [vmem:[%s8887 + $0x8] sm:$0x1]
      %v9277 = vld [vmem:[%s8887 + $0xc] sm:$0xf]
      %v9278 = vld [vmem:[%s8887 + $0x10] sm:$0xf]
      %v9279 = vld [vmem:[%s8887 + $0x14] sm:$0x1]
      %v9280 = vld [vmem:[%s8887 + $0x18] sm:$0xf]
      %v9281 = vld [vmem:[%s8887 + $0x1c] sm:$0xf]
      %v9282 = vld [vmem:[%s8887 + $0x20] sm:$0x1]
      %v9283 = vld [vmem:[%s8887 + $0x24] sm:$0xf]
      %v9284 = vld [vmem:[%s8887 + $0x28] sm:$0xf]
      %v9285 = vld [vmem:[%s8887 + $0x2c] sm:$0x1]
      %v9286 = vld [vmem:[%s8887 + $0x30] sm:$0xf]
      %v9287 = vld [vmem:[%s8887 + $0x34] sm:$0xf]
      %v9288 = vld [vmem:[%s8887 + $0x38] sm:$0x1]
      %v9289 = vld [vmem:[%s8887 + $0x3c] sm:$0xf]
      %v9290 = vld [vmem:[%s8887 + $0x40] sm:$0xf]
      %v9291 = vld [vmem:[%s8887 + $0x44] sm:$0x1]
      %v9292 = vld [vmem:[%s8887 + $0x48] sm:$0xf]
      %v9293 = vld [vmem:[%s8887 + $0x4c] sm:$0xf]
      %v9294 = vld [vmem:[%s8887 + $0x50] sm:$0x1]
      %v9295 = vld [vmem:[%s8887 + $0x54] sm:$0xf]
      %v9296 = vld [vmem:[%s8887 + $0x58] sm:$0xf]
      %v9297 = vld [vmem:[%s8887 + $0x5c] sm:$0x1]
      %v9298 = vld [vmem:[%s8887 + $0x60] sm:$0xf]
      %v9299 = vld [vmem:[%s8887 + $0x64] sm:$0xf]
      %v9300 = vld [vmem:[%s8887 + $0x68] sm:$0x1]
      %v9301 = vld [vmem:[%s8887 + $0x6c] sm:$0xf]
      %v9302 = vld [vmem:[%s8887 + $0x70] sm:$0xf]
      %v9303 = vld [vmem:[%s8887 + $0x74] sm:$0x1]
      %v9304 = vld [vmem:[%s8887 + $0x78] sm:$0xf]
      %v9305 = vld [vmem:[%s8887 + $0x7c] sm:$0xf]
      %v9306 = vld [vmem:[%s8887 + $0x80] sm:$0x1]
      %v9307 = vld [vmem:[%s8887 + $0x84] sm:$0xf]
      %v9308 = vld [vmem:[%s8887 + $0x88] sm:$0xf]
      %v9309 = vld [vmem:[%s8887 + $0x8c] sm:$0x1]
      %v9310 = vld [vmem:[%s8887 + $0x90] sm:$0xf]
      %v9311 = vld [vmem:[%s8887 + $0x94] sm:$0xf]
      %v9312 = vld [vmem:[%s8887 + $0x98] sm:$0x1]
      %v9313 = vld [vmem:[%s8887 + $0x9c] sm:$0xf]
      %v9314 = vld [vmem:[%s8887 + $0xa0] sm:$0xf]
      %v9315 = vld [vmem:[%s8887 + $0xa4] sm:$0x1]
      %v9316 = vld [vmem:[%s8887 + $0xa8] sm:$0xf]
      %v9317 = vld [vmem:[%s8887 + $0xac] sm:$0xf]
      %v9318 = vld [vmem:[%s8887 + $0xb0] sm:$0x1]
      %v9319 = vld [vmem:[%s8887 + $0xb4] sm:$0xf]
      %v9320 = vld [vmem:[%s8887 + $0xb8] sm:$0xf]
      %v9321 = vld [vmem:[%s8887 + $0xbc] sm:$0x1]
      %v9323 = vshrl.u32 %v9274, 16
      %v9325 = vrot.slane %v9323, 4
      %v9326 = vshll.u32 %v9274, 16
      %v9328 = vrot.slane %v9326, 5
      %v9329 = vor.u32 %v9325, %v9328
      %v9330 = vrot.slane %v9329, 4
      %v9332 = vshll.u32 %v9275, 16
      %v9334 = vrot.slane %v9332, 5
      %v9335 = vsel %vm319, %v9330, %v9334
      %v9336 = vshrl.u32 %v9275, 16
      %v9338 = vrot.slane %v9336, 4
      %v9339 = vor.u32 %v9338, %v9334
      %v9340 = vrot.slane %v9339, 4
      %v9342 = vshll.u32 %v9276, 16
      %v9344 = vrot.slane %v9342, 5
      %v9345 = vsel %vm319, %v9340, %v9344
      %v9347 = vshrl.u32 %v9277, 16
      %v9349 = vrot.slane %v9347, 4
      %v9350 = vshll.u32 %v9277, 16
      %v9352 = vrot.slane %v9350, 5
      %v9353 = vor.u32 %v9349, %v9352
      %v9354 = vrot.slane %v9353, 4
      %v9356 = vshll.u32 %v9278, 16
      %v9358 = vrot.slane %v9356, 5
      %v9359 = vsel %vm319, %v9354, %v9358
      %v9360 = vshrl.u32 %v9278, 16
      %v9362 = vrot.slane %v9360, 4
      %v9363 = vor.u32 %v9362, %v9358
      %v9364 = vrot.slane %v9363, 4
      %v9366 = vshll.u32 %v9279, 16
      %v9368 = vrot.slane %v9366, 5
      %v9369 = vsel %vm319, %v9364, %v9368
      %v9371 = vshrl.u32 %v9280, 16
      %v9373 = vrot.slane %v9371, 4
      %v9374 = vshll.u32 %v9280, 16
      %v9376 = vrot.slane %v9374, 5
      %v9377 = vor.u32 %v9373, %v9376
      %v9378 = vrot.slane %v9377, 4
      %v9380 = vshll.u32 %v9281, 16
      %v9382 = vrot.slane %v9380, 5
      %v9383 = vsel %vm319, %v9378, %v9382
      %v9384 = vshrl.u32 %v9281, 16
      %v9386 = vrot.slane %v9384, 4
      %v9387 = vor.u32 %v9386, %v9382
      %v9388 = vrot.slane %v9387, 4
      %v9390 = vshll.u32 %v9282, 16
      %v9392 = vrot.slane %v9390, 5
      %v9393 = vsel %vm319, %v9388, %v9392
      %v9395 = vshrl.u32 %v9283, 16
      %v9397 = vrot.slane %v9395, 4
      %v9398 = vshll.u32 %v9283, 16
      %v9400 = vrot.slane %v9398, 5
      %v9401 = vor.u32 %v9397, %v9400
      %v9402 = vrot.slane %v9401, 4
      %v9404 = vshll.u32 %v9284, 16
      %v9406 = vrot.slane %v9404, 5
      %v9407 = vsel %vm319, %v9402, %v9406
      %v9408 = vshrl.u32 %v9284, 16
      %v9410 = vrot.slane %v9408, 4
      %v9411 = vor.u32 %v9410, %v9406
      %v9412 = vrot.slane %v9411, 4
      %v9414 = vshll.u32 %v9285, 16
      %v9416 = vrot.slane %v9414, 5
      %v9417 = vsel %vm319, %v9412, %v9416
      %v9419 = vshrl.u32 %v9286, 16
      %v9421 = vrot.slane %v9419, 4
      %v9422 = vshll.u32 %v9286, 16
      %v9424 = vrot.slane %v9422, 5
      %v9425 = vor.u32 %v9421, %v9424
      %v9426 = vrot.slane %v9425, 4
      %v9428 = vshll.u32 %v9287, 16
      %v9430 = vrot.slane %v9428, 5
      %v9431 = vsel %vm319, %v9426, %v9430
      %v9432 = vshrl.u32 %v9287, 16
      %v9434 = vrot.slane %v9432, 4
      %v9435 = vor.u32 %v9434, %v9430
      %v9436 = vrot.slane %v9435, 4
      %v9438 = vshll.u32 %v9288, 16
      %v9440 = vrot.slane %v9438, 5
      %v9441 = vsel %vm319, %v9436, %v9440
      %v9443 = vshrl.u32 %v9289, 16
      %v9445 = vrot.slane %v9443, 4
      %v9446 = vshll.u32 %v9289, 16
      %v9448 = vrot.slane %v9446, 5
      %v9449 = vor.u32 %v9445, %v9448
      %v9450 = vrot.slane %v9449, 4
      %v9452 = vshll.u32 %v9290, 16
      %v9454 = vrot.slane %v9452, 5
      %v9455 = vsel %vm319, %v9450, %v9454
      %v9456 = vshrl.u32 %v9290, 16
      %v9458 = vrot.slane %v9456, 4
      %v9459 = vor.u32 %v9458, %v9454
      %v9460 = vrot.slane %v9459, 4
      %v9462 = vshll.u32 %v9291, 16
      %v9464 = vrot.slane %v9462, 5
      %v9465 = vsel %vm319, %v9460, %v9464
      %v9467 = vshrl.u32 %v9292, 16
      %v9469 = vrot.slane %v9467, 4
      %v9470 = vshll.u32 %v9292, 16
      %v9472 = vrot.slane %v9470, 5
      %v9473 = vor.u32 %v9469, %v9472
      %v9474 = vrot.slane %v9473, 4
      %v9476 = vshll.u32 %v9293, 16
      %v9478 = vrot.slane %v9476, 5
      %v9479 = vsel %vm319, %v9474, %v9478
      %v9480 = vshrl.u32 %v9293, 16
      %v9482 = vrot.slane %v9480, 4
      %v9483 = vor.u32 %v9482, %v9478
      %v9484 = vrot.slane %v9483, 4
      %v9486 = vshll.u32 %v9294, 16
      %v9488 = vrot.slane %v9486, 5
      %v9489 = vsel %vm319, %v9484, %v9488
      %v9491 = vshrl.u32 %v9295, 16
      %v9493 = vrot.slane %v9491, 4
      %v9494 = vshll.u32 %v9295, 16
      %v9496 = vrot.slane %v9494, 5
      %v9497 = vor.u32 %v9493, %v9496
      %v9498 = vrot.slane %v9497, 4
      %v9500 = vshll.u32 %v9296, 16
      %v9502 = vrot.slane %v9500, 5
      %v9503 = vsel %vm319, %v9498, %v9502
      %v9504 = vshrl.u32 %v9296, 16
      %v9506 = vrot.slane %v9504, 4
      %v9507 = vor.u32 %v9506, %v9502
      %v9508 = vrot.slane %v9507, 4
      %v9510 = vshll.u32 %v9297, 16
      %v9512 = vrot.slane %v9510, 5
      %v9513 = vsel %vm319, %v9508, %v9512
      %v9515 = vshrl.u32 %v9298, 16
      %v9517 = vrot.slane %v9515, 4
      %v9518 = vshll.u32 %v9298, 16
      %v9520 = vrot.slane %v9518, 5
      %v9521 = vor.u32 %v9517, %v9520
      %v9522 = vrot.slane %v9521, 4
      %v9524 = vshll.u32 %v9299, 16
      %v9526 = vrot.slane %v9524, 5
      %v9527 = vsel %vm319, %v9522, %v9526
      %v9528 = vshrl.u32 %v9299, 16
      %v9530 = vrot.slane %v9528, 4
      %v9531 = vor.u32 %v9530, %v9526
      %v9532 = vrot.slane %v9531, 4
      %v9534 = vshll.u32 %v9300, 16
      %v9536 = vrot.slane %v9534, 5
      %v9537 = vsel %vm319, %v9532, %v9536
      %v9539 = vshrl.u32 %v9301, 16
      %v9541 = vrot.slane %v9539, 4
      %v9542 = vshll.u32 %v9301, 16
      %v9544 = vrot.slane %v9542, 5
      %v9545 = vor.u32 %v9541, %v9544
      %v9546 = vrot.slane %v9545, 4
      %v9548 = vshll.u32 %v9302, 16
      %v9550 = vrot.slane %v9548, 5
      %v9551 = vsel %vm319, %v9546, %v9550
      %v9552 = vshrl.u32 %v9302, 16
      %v9554 = vrot.slane %v9552, 4
      %v9555 = vor.u32 %v9554, %v9550
      %v9556 = vrot.slane %v9555, 4
      %v9558 = vshll.u32 %v9303, 16
      %v9560 = vrot.slane %v9558, 5
      %v9561 = vsel %vm319, %v9556, %v9560
      %v9563 = vshrl.u32 %v9304, 16
      %v9565 = vrot.slane %v9563, 4
      %v9566 = vshll.u32 %v9304, 16
      %v9568 = vrot.slane %v9566, 5
      %v9569 = vor.u32 %v9565, %v9568
      %v9570 = vrot.slane %v9569, 4
      %v9572 = vshll.u32 %v9305, 16
      %v9574 = vrot.slane %v9572, 5
      %v9575 = vsel %vm319, %v9570, %v9574
      %v9576 = vshrl.u32 %v9305, 16
      %v9578 = vrot.slane %v9576, 4
      %v9579 = vor.u32 %v9578, %v9574
      %v9580 = vrot.slane %v9579, 4
      %v9582 = vshll.u32 %v9306, 16
      %v9584 = vrot.slane %v9582, 5
      %v9585 = vsel %vm319, %v9580, %v9584
      %v9587 = vshrl.u32 %v9307, 16
      %v9589 = vrot.slane %v9587, 4
      %v9590 = vshll.u32 %v9307, 16
      %v9592 = vrot.slane %v9590, 5
      %v9593 = vor.u32 %v9589, %v9592
      %v9594 = vrot.slane %v9593, 4
      %v9596 = vshll.u32 %v9308, 16
      %v9598 = vrot.slane %v9596, 5
      %v9599 = vsel %vm319, %v9594, %v9598
      %v9600 = vshrl.u32 %v9308, 16
      %v9602 = vrot.slane %v9600, 4
      %v9603 = vor.u32 %v9602, %v9598
      %v9604 = vrot.slane %v9603, 4
      %v9606 = vshll.u32 %v9309, 16
      %v9608 = vrot.slane %v9606, 5
      %v9609 = vsel %vm319, %v9604, %v9608
      %v9611 = vshrl.u32 %v9310, 16
      %v9613 = vrot.slane %v9611, 4
      %v9614 = vshll.u32 %v9310, 16
      %v9616 = vrot.slane %v9614, 5
      %v9617 = vor.u32 %v9613, %v9616
      %v9618 = vrot.slane %v9617, 4
      %v9620 = vshll.u32 %v9311, 16
      %v9622 = vrot.slane %v9620, 5
      %v9623 = vsel %vm319, %v9618, %v9622
      %v9624 = vshrl.u32 %v9311, 16
      %v9626 = vrot.slane %v9624, 4
      %v9627 = vor.u32 %v9626, %v9622
      %v9628 = vrot.slane %v9627, 4
      %v9630 = vshll.u32 %v9312, 16
      %v9632 = vrot.slane %v9630, 5
      %v9633 = vsel %vm319, %v9628, %v9632
      %v9635 = vshrl.u32 %v9313, 16
      %v9637 = vrot.slane %v9635, 4
      %v9638 = vshll.u32 %v9313, 16
      %v9640 = vrot.slane %v9638, 5
      %v9641 = vor.u32 %v9637, %v9640
      %v9642 = vrot.slane %v9641, 4
      %v9644 = vshll.u32 %v9314, 16
      %v9646 = vrot.slane %v9644, 5
      %v9647 = vsel %vm319, %v9642, %v9646
      %v9648 = vshrl.u32 %v9314, 16
      %v9650 = vrot.slane %v9648, 4
      %v9651 = vor.u32 %v9650, %v9646
      %v9652 = vrot.slane %v9651, 4
      %v9654 = vshll.u32 %v9315, 16
      %v9656 = vrot.slane %v9654, 5
      %v9657 = vsel %vm319, %v9652, %v9656
      %v9659 = vshrl.u32 %v9316, 16
      %v9661 = vrot.slane %v9659, 4
      %v9662 = vshll.u32 %v9316, 16
      %v9664 = vrot.slane %v9662, 5
      %v9665 = vor.u32 %v9661, %v9664
      %v9666 = vrot.slane %v9665, 4
      %v9668 = vshll.u32 %v9317, 16
      %v9670 = vrot.slane %v9668, 5
      %v9671 = vsel %vm319, %v9666, %v9670
      %v9672 = vshrl.u32 %v9317, 16
      %v9674 = vrot.slane %v9672, 4
      %v9675 = vor.u32 %v9674, %v9670
      %v9676 = vrot.slane %v9675, 4
      %v9678 = vshll.u32 %v9318, 16
      %v9680 = vrot.slane %v9678, 5
      %v9681 = vsel %vm319, %v9676, %v9680
      %v9683 = vshrl.u32 %v9319, 16
      %v9685 = vrot.slane %v9683, 4
      %v9686 = vshll.u32 %v9319, 16
      %v9688 = vrot.slane %v9686, 5
      %v9689 = vor.u32 %v9685, %v9688
      %v9690 = vrot.slane %v9689, 4
      %v9692 = vshll.u32 %v9320, 16
      %v9694 = vrot.slane %v9692, 5
      %v9695 = vsel %vm319, %v9690, %v9694
      %v9696 = vshrl.u32 %v9320, 16
      %v9698 = vrot.slane %v9696, 4
      %v9699 = vor.u32 %v9698, %v9694
      %v9700 = vrot.slane %v9699, 4
      %v9702 = vshll.u32 %v9321, 16
      %v9704 = vrot.slane %v9702, 5
      %v9705 = vsel %vm319, %v9700, %v9704
      %s9706 = scalar_lea.vmem %s3, 448
      %v9707 = vld [vmem:[%s9706] sm:$0xf]
      %v9708 = vld [vmem:[%s9706 + $0x4] sm:$0xf]
      %v9709 = vld [vmem:[%s9706 + $0x8] sm:$0xf]
      %v9710 = vld [vmem:[%s9706 + $0xc] sm:$0xf]
      %v9711 = vld [vmem:[%s9706 + $0x10] sm:$0xf]
      %v9712 = vld [vmem:[%s9706 + $0x14] sm:$0xf]
      %v9713 = vld [vmem:[%s9706 + $0x18] sm:$0xf]
      %v9714 = vld [vmem:[%s9706 + $0x1c] sm:$0xf]
      %v9715 = vld [vmem:[%s9706 + $0x20] sm:$0xf]
      %v9716 = vld [vmem:[%s9706 + $0x24] sm:$0xf]
      %v9717 = vld [vmem:[%s9706 + $0x28] sm:$0xf]
      %v9718 = vld [vmem:[%s9706 + $0x2c] sm:$0xf]
      %v9719 = vld [vmem:[%s9706 + $0x30] sm:$0xf]
      %v9720 = vld [vmem:[%s9706 + $0x34] sm:$0xf]
      %v9721 = vld [vmem:[%s9706 + $0x38] sm:$0xf]
      %v9722 = vld [vmem:[%s9706 + $0x3c] sm:$0xf]
      %v9723 = vunpack.c.l.b16 %v9335
      %v9724 = vunpack.c.l.b16 %v9345
      %v9725 = vunpack.c.l.b16 %v9359
      %v9726 = vunpack.c.l.b16 %v9369
      %v9727 = vunpack.c.l.b16 %v9383
      %v9728 = vunpack.c.l.b16 %v9393
      %v9729 = vunpack.c.l.b16 %v9407
      %v9730 = vunpack.c.l.b16 %v9417
      %v9731 = vunpack.c.l.b16 %v9431
      %v9732 = vunpack.c.l.b16 %v9441
      %v9733 = vunpack.c.l.b16 %v9455
      %v9734 = vunpack.c.l.b16 %v9465
      %v9735 = vunpack.c.l.b16 %v9479
      %v9736 = vunpack.c.l.b16 %v9489
      %v9737 = vunpack.c.l.b16 %v9503
      %v9738 = vunpack.c.l.b16 %v9513
      %v9739 = vunpack.c.l.b16 %v9527
      %v9740 = vunpack.c.l.b16 %v9537
      %v9741 = vunpack.c.l.b16 %v9551
      %v9742 = vunpack.c.l.b16 %v9561
      %v9743 = vunpack.c.l.b16 %v9575
      %v9744 = vunpack.c.l.b16 %v9585
      %v9745 = vunpack.c.l.b16 %v9599
      %v9746 = vunpack.c.l.b16 %v9609
      %v9747 = vunpack.c.l.b16 %v9623
      %v9748 = vunpack.c.l.b16 %v9633
      %v9749 = vunpack.c.l.b16 %v9647
      %v9750 = vunpack.c.l.b16 %v9657
      %v9751 = vunpack.c.l.b16 %v9671
      %v9752 = vunpack.c.l.b16 %v9681
      %v9753 = vunpack.c.l.b16 %v9695
      %v9754 = vunpack.c.l.b16 %v9705
      %v9755 = vpack.c.b16 %v9724, %v9723
      %v9756 = vpack.c.b16 %v9726, %v9725
      %v9757 = vpack.c.b16 %v9728, %v9727
      %v9758 = vpack.c.b16 %v9730, %v9729
      %v9759 = vpack.c.b16 %v9732, %v9731
      %v9760 = vpack.c.b16 %v9734, %v9733
      %v9761 = vpack.c.b16 %v9736, %v9735
      %v9762 = vpack.c.b16 %v9738, %v9737
      %v9763 = vpack.c.b16 %v9740, %v9739
      %v9764 = vpack.c.b16 %v9742, %v9741
      %v9765 = vpack.c.b16 %v9744, %v9743
      %v9766 = vpack.c.b16 %v9746, %v9745
      %v9767 = vpack.c.b16 %v9748, %v9747
      %v9768 = vpack.c.b16 %v9750, %v9749
      %v9769 = vpack.c.b16 %v9752, %v9751
      %v9770 = vpack.c.b16 %v9754, %v9753
      %v9803 = vunpack.c.l.b16 %v9707
      %v9804 = vunpack.c.l.b16 %v9708
      %v9805 = vunpack.c.l.b16 %v9709
      %v9806 = vunpack.c.l.b16 %v9710
      %v9807 = vunpack.c.l.b16 %v9711
      %v9808 = vunpack.c.l.b16 %v9712
      %v9809 = vunpack.c.l.b16 %v9713
      %v9810 = vunpack.c.l.b16 %v9714
      %v9811 = vunpack.c.l.b16 %v9715
      %v9812 = vunpack.c.l.b16 %v9716
      %v9813 = vunpack.c.l.b16 %v9717
      %v9814 = vunpack.c.l.b16 %v9718
      %v9815 = vunpack.c.l.b16 %v9719
      %v9816 = vunpack.c.l.b16 %v9720
      %v9817 = vunpack.c.l.b16 %v9721
      %v9818 = vunpack.c.l.b16 %v9722
      %v9819 = vpack.c.b16 %v9804, %v9803
      %v9820 = vpack.c.b16 %v9806, %v9805
      %v9821 = vpack.c.b16 %v9808, %v9807
      %v9822 = vpack.c.b16 %v9810, %v9809
      %v9823 = vpack.c.b16 %v9812, %v9811
      %v9824 = vpack.c.b16 %v9814, %v9813
      %v9825 = vpack.c.b16 %v9816, %v9815
      %v9826 = vpack.c.b16 %v9818, %v9817
      %9835 = vmatprep.subr.bf16.mxu0 0
      %9836 = vmatpush1.bf16.msra.mxu0 %v9819
      %9837 = vmatprep.subr.bf16.mxu0 0
      %9838 = vmatpush1.bf16.msra.mxu0 %v9820
      %9839 = vmatprep.subr.bf16.mxu0 0
      %9840 = vmatpush1.bf16.msra.mxu0 %v9821
      %9841 = vmatprep.subr.bf16.mxu0 0
      %9842 = vmatpush1.bf16.msra.mxu0 %v9822
      %9843 = vmatprep.subr.bf16.mxu0 0
      %9844 = vmatpush1.bf16.msra.mxu0 %v9823
      %9845 = vmatprep.subr.bf16.mxu0 0
      %9846 = vmatpush1.bf16.msra.mxu0 %v9824
      %9847 = vmatprep.subr.bf16.mxu0 0
      %9848 = vmatpush1.bf16.msra.mxu0 %v9825
      %9849 = vmatprep.subr.bf16.mxu0 0
      %9850 = vmatpush1.bf16.msra.mxu0 %v9826
      %9851 = vmatprep.subr.bf16.mxu0 0
      %9852 = vmatpush1.bf16.msra.mxu0 0
      %9853 = vmatprep.subr.bf16.mxu0 0
      %9854 = vmatpush1.bf16.msra.mxu0 0
      %9855 = vmatprep.subr.bf16.mxu0 0
      %9856 = vmatpush1.bf16.msra.mxu0 0
      %9857 = vmatprep.subr.bf16.mxu0 0
      %9858 = vmatpush1.bf16.msra.mxu0 0
      %9859 = vmatprep.subr.bf16.mxu0 0
      %9860 = vmatpush1.bf16.msra.mxu0 0
      %9861 = vmatprep.subr.bf16.mxu0 0
      %9862 = vmatpush1.bf16.msra.mxu0 0
      %9863 = vmatprep.subr.bf16.mxu0 0
      %9864 = vmatpush1.bf16.msra.mxu0 0
      %9865 = vmatprep.subr.bf16.mxu0 0
      %9866 = vmatpush1.bf16.msra.mxu0 0
      %9867 = vmatprep.mubr.bf16.mxu0 0
      %9868 = vmatmul.mubr.bf16.gmra.mrb[0].mxu0 %v9755
      %v9869 = vpop.f32.mrb[0].mxu0
      %v9870 = vadd.f32 0.0, %v9869
      %v9871 = vpop.f32.mrb[0].mxu0
      %v9872 = vpop.f32.mrb[0].mxu0
      %v9873 = vadd.f32 0.0, %v9872
      %v9874 = vpop.f32.mrb[0].mxu0
      %9875 = vmatprep.mubr.bf16.mxu0 0
      %9876 = vmatmul.mubr.bf16.gmra.mrb[0].mxu0 %v9756
      %v9877 = vpop.f32.mrb[0].mxu0
      %v9878 = vadd.f32 0.0, %v9877
      %v9879 = vpop.f32.mrb[0].mxu0
      %v9880 = vpop.f32.mrb[0].mxu0
      %v9881 = vadd.f32 0.0, %v9880
      %v9882 = vpop.f32.mrb[0].mxu0
      %9883 = vmatprep.mubr.bf16.mxu0 0
      %9884 = vmatmul.mubr.bf16.gmra.mrb[0].mxu0 %v9757
      %v9885 = vpop.f32.mrb[0].mxu0
      %v9886 = vadd.f32 0.0, %v9885
      %v9887 = vpop.f32.mrb[0].mxu0
      %v9888 = vpop.f32.mrb[0].mxu0
      %v9889 = vadd.f32 0.0, %v9888
      %v9890 = vpop.f32.mrb[0].mxu0
      %9891 = vmatprep.mubr.bf16.mxu0 0
      %9892 = vmatmul.mubr.bf16.gmra.mrb[0].mxu0 %v9758
      %v9893 = vpop.f32.mrb[0].mxu0
      %v9894 = vadd.f32 0.0, %v9893
      %v9895 = vpop.f32.mrb[0].mxu0
      %v9896 = vpop.f32.mrb[0].mxu0
      %v9897 = vadd.f32 0.0, %v9896
      %v9898 = vpop.f32.mrb[0].mxu0
      %9899 = vmatprep.mubr.bf16.mxu0 0
      %9900 = vmatmul.mubr.bf16.gmra.mrb[0].mxu0 %v9759
      %v9901 = vpop.f32.mrb[0].mxu0
      %v9902 = vadd.f32 0.0, %v9901
      %v9903 = vpop.f32.mrb[0].mxu0
      %v9904 = vpop.f32.mrb[0].mxu0
      %v9905 = vadd.f32 0.0, %v9904
      %v9906 = vpop.f32.mrb[0].mxu0
      %9907 = vmatprep.mubr.bf16.mxu0 0
      %9908 = vmatmul.mubr.bf16.gmra.mrb[0].mxu0 %v9760
      %v9909 = vpop.f32.mrb[0].mxu0
      %v9910 = vadd.f32 0.0, %v9909
      %v9911 = vpop.f32.mrb[0].mxu0
      %v9912 = vpop.f32.mrb[0].mxu0
      %v9913 = vadd.f32 0.0, %v9912
      %v9914 = vpop.f32.mrb[0].mxu0
      %9915 = vmatprep.mubr.bf16.mxu0 0
      %9916 = vmatmul.mubr.bf16.gmra.mrb[0].mxu0 %v9761
      %v9917 = vpop.f32.mrb[0].mxu0
      %v9918 = vadd.f32 0.0, %v9917
      %v9919 = vpop.f32.mrb[0].mxu0
      %v9920 = vpop.f32.mrb[0].mxu0
      %v9921 = vadd.f32 0.0, %v9920
      %v9922 = vpop.f32.mrb[0].mxu0
      %9923 = vmatprep.mubr.bf16.mxu0 0
      %9924 = vmatmul.mubr.bf16.gmra.mrb[0].mxu0 %v9762
      %v9925 = vpop.f32.mrb[0].mxu0
      %v9926 = vadd.f32 0.0, %v9925
      %v9927 = vpop.f32.mrb[0].mxu0
      %v9928 = vpop.f32.mrb[0].mxu0
      %v9929 = vadd.f32 0.0, %v9928
      %v9930 = vpop.f32.mrb[0].mxu0
      %9931 = vmatprep.mubr.bf16.mxu0 0
      %9932 = vmatmul.mubr.bf16.gmra.mrb[0].mxu0 %v9763
      %v9933 = vpop.f32.mrb[0].mxu0
      %v9934 = vadd.f32 0.0, %v9933
      %v9935 = vpop.f32.mrb[0].mxu0
      %v9936 = vpop.f32.mrb[0].mxu0
      %v9937 = vadd.f32 0.0, %v9936
      %v9938 = vpop.f32.mrb[0].mxu0
      %9939 = vmatprep.mubr.bf16.mxu0 0
      %9940 = vmatmul.mubr.bf16.gmra.mrb[0].mxu0 %v9764
      %v9941 = vpop.f32.mrb[0].mxu0
      %v9942 = vadd.f32 0.0, %v9941
      %v9943 = vpop.f32.mrb[0].mxu0
      %v9944 = vpop.f32.mrb[0].mxu0
      %v9945 = vadd.f32 0.0, %v9944
      %v9946 = vpop.f32.mrb[0].mxu0
      %9947 = vmatprep.mubr.bf16.mxu0 0
      %9948 = vmatmul.mubr.bf16.gmra.mrb[0].mxu0 %v9765
      %v9949 = vpop.f32.mrb[0].mxu0
      %v9950 = vadd.f32 0.0, %v9949
      %v9951 = vpop.f32.mrb[0].mxu0
      %v9952 = vpop.f32.mrb[0].mxu0
      %v9953 = vadd.f32 0.0, %v9952
      %v9954 = vpop.f32.mrb[0].mxu0
      %9955 = vmatprep.mubr.bf16.mxu0 0
      %9956 = vmatmul.mubr.bf16.gmra.mrb[0].mxu0 %v9766
      %v9957 = vpop.f32.mrb[0].mxu0
      %v9958 = vadd.f32 0.0, %v9957
      %v9959 = vpop.f32.mrb[0].mxu0
      %v9960 = vpop.f32.mrb[0].mxu0
      %v9961 = vadd.f32 0.0, %v9960
      %v9962 = vpop.f32.mrb[0].mxu0
      %9963 = vmatprep.mubr.bf16.mxu0 0
      %9964 = vmatmul.mubr.bf16.gmra.mrb[0].mxu0 %v9767
      %v9965 = vpop.f32.mrb[0].mxu0
      %v9966 = vadd.f32 0.0, %v9965
      %v9967 = vpop.f32.mrb[0].mxu0
      %v9968 = vpop.f32.mrb[0].mxu0
      %v9969 = vadd.f32 0.0, %v9968
      %v9970 = vpop.f32.mrb[0].mxu0
      %9971 = vmatprep.mubr.bf16.mxu0 0
      %9972 = vmatmul.mubr.bf16.gmra.mrb[0].mxu0 %v9768
      %v9973 = vpop.f32.mrb[0].mxu0
      %v9974 = vadd.f32 0.0, %v9973
      %v9975 = vpop.f32.mrb[0].mxu0
      %v9976 = vpop.f32.mrb[0].mxu0
      %v9977 = vadd.f32 0.0, %v9976
      %v9978 = vpop.f32.mrb[0].mxu0
      %9979 = vmatprep.mubr.bf16.mxu0 0
      %9980 = vmatmul.mubr.bf16.gmra.mrb[0].mxu0 %v9769
      %v9981 = vpop.f32.mrb[0].mxu0
      %v9982 = vadd.f32 0.0, %v9981
      %v9983 = vpop.f32.mrb[0].mxu0
      %v9984 = vpop.f32.mrb[0].mxu0
      %v9985 = vadd.f32 0.0, %v9984
      %v9986 = vpop.f32.mrb[0].mxu0
      %9987 = vmatprep.mubr.bf16.mxu0 0
      %9988 = vmatmul.mubr.bf16.gmra.mrb[0].mxu0 %v9770
      %v9989 = vpop.f32.mrb[0].mxu0
      %v9990 = vadd.f32 0.0, %v9989
      %v9991 = vpop.f32.mrb[0].mxu0
      %v9992 = vpop.f32.mrb[0].mxu0
      %v9993 = vadd.f32 0.0, %v9992
      %v9994 = vpop.f32.mrb[0].mxu0
      %9995 = vdwg.mxu0
      %v9996 = vadd.f32 %v9242, %v9870
      %v9997 = vadd.f32 %v9243, %v9873
      %v9998 = vadd.f32 %v9244, %v9878
      %v9999 = vadd.f32 %v9245, %v9881
      %v10000 = vadd.f32 %v9246, %v9886
      %v10001 = vadd.f32 %v9247, %v9889
      %v10002 = vadd.f32 %v9248, %v9894
      %v10003 = vadd.f32 %v9249, %v9897
      %v10004 = vadd.f32 %v9250, %v9902
      %v10005 = vadd.f32 %v9251, %v9905
      %v10006 = vadd.f32 %v9252, %v9910
      %v10007 = vadd.f32 %v9253, %v9913
      %v10008 = vadd.f32 %v9254, %v9918
      %v10009 = vadd.f32 %v9255, %v9921
      %v10010 = vadd.f32 %v9256, %v9926
      %v10011 = vadd.f32 %v9257, %v9929
      %v10012 = vadd.f32 %v9258, %v9934
      %v10013 = vadd.f32 %v9259, %v9937
      %v10014 = vadd.f32 %v9260, %v9942
      %v10015 = vadd.f32 %v9261, %v9945
      %v10016 = vadd.f32 %v9262, %v9950
      %v10017 = vadd.f32 %v9263, %v9953
      %v10018 = vadd.f32 %v9264, %v9958
      %v10019 = vadd.f32 %v9265, %v9961
      %v10020 = vadd.f32 %v9266, %v9966
      %v10021 = vadd.f32 %v9267, %v9969
      %v10022 = vadd.f32 %v9268, %v9974
      %v10023 = vadd.f32 %v9269, %v9977
      %v10024 = vadd.f32 %v9270, %v9982
      %v10025 = vadd.f32 %v9271, %v9985
      %v10026 = vadd.f32 %v9272, %v9990
      %v10027 = vadd.f32 %v9273, %v9993
      %v10028 = vld [vmem:[%s8887] sm:$0xe]
      %v10029 = vld [vmem:[%s8887 + $0xc] sm:$0xe]
      %v10030 = vld [vmem:[%s8887 + $0x18] sm:$0xe]
      %v10031 = vld [vmem:[%s8887 + $0x24] sm:$0xe]
      %v10032 = vld [vmem:[%s8887 + $0x30] sm:$0xe]
      %v10033 = vld [vmem:[%s8887 + $0x3c] sm:$0xe]
      %v10034 = vld [vmem:[%s8887 + $0x48] sm:$0xe]
      %v10035 = vld [vmem:[%s8887 + $0x54] sm:$0xe]
      %v10036 = vld [vmem:[%s8887 + $0x60] sm:$0xe]
      %v10037 = vld [vmem:[%s8887 + $0x6c] sm:$0xe]
      %v10038 = vld [vmem:[%s8887 + $0x78] sm:$0xe]
      %v10039 = vld [vmem:[%s8887 + $0x84] sm:$0xe]
      %v10040 = vld [vmem:[%s8887 + $0x90] sm:$0xe]
      %v10041 = vld [vmem:[%s8887 + $0x9c] sm:$0xe]
      %v10042 = vld [vmem:[%s8887 + $0xa8] sm:$0xe]
      %v10043 = vld [vmem:[%s8887 + $0xb4] sm:$0xe]
      %v10092 = vrot.slane %v10028, 5
      %v10093 = vrot.slane %v10092, 4
      %v10094 = vrot.slane %v9275, 5
      %v10095 = vsel %vm1349, %v10093, %v10094
      %v10096 = vrot.slane %v10094, 4
      %v10097 = vrot.slane %v9276, 5
      %v10098 = vsel %vm1349, %v10096, %v10097
      %v10099 = vrot.slane %v10029, 5
      %v10100 = vrot.slane %v10099, 4
      %v10101 = vrot.slane %v9278, 5
      %v10102 = vsel %vm1349, %v10100, %v10101
      %v10103 = vrot.slane %v10101, 4
      %v10104 = vrot.slane %v9279, 5
      %v10105 = vsel %vm1349, %v10103, %v10104
      %v10106 = vrot.slane %v10030, 5
      %v10107 = vrot.slane %v10106, 4
      %v10108 = vrot.slane %v9281, 5
      %v10109 = vsel %vm1349, %v10107, %v10108
      %v10110 = vrot.slane %v10108, 4
      %v10111 = vrot.slane %v9282, 5
      %v10112 = vsel %vm1349, %v10110, %v10111
      %v10113 = vrot.slane %v10031, 5
      %v10114 = vrot.slane %v10113, 4
      %v10115 = vrot.slane %v9284, 5
      %v10116 = vsel %vm1349, %v10114, %v10115
      %v10117 = vrot.slane %v10115, 4
      %v10118 = vrot.slane %v9285, 5
      %v10119 = vsel %vm1349, %v10117, %v10118
      %v10120 = vrot.slane %v10032, 5
      %v10121 = vrot.slane %v10120, 4
      %v10122 = vrot.slane %v9287, 5
      %v10123 = vsel %vm1349, %v10121, %v10122
      %v10124 = vrot.slane %v10122, 4
      %v10125 = vrot.slane %v9288, 5
      %v10126 = vsel %vm1349, %v10124, %v10125
      %v10127 = vrot.slane %v10033, 5
      %v10128 = vrot.slane %v10127, 4
      %v10129 = vrot.slane %v9290, 5
      %v10130 = vsel %vm1349, %v10128, %v10129
      %v10131 = vrot.slane %v10129, 4
      %v10132 = vrot.slane %v9291, 5
      %v10133 = vsel %vm1349, %v10131, %v10132
      %v10134 = vrot.slane %v10034, 5
      %v10135 = vrot.slane %v10134, 4
      %v10136 = vrot.slane %v9293, 5
      %v10137 = vsel %vm1349, %v10135, %v10136
      %v10138 = vrot.slane %v10136, 4
      %v10139 = vrot.slane %v9294, 5
      %v10140 = vsel %vm1349, %v10138, %v10139
      %v10141 = vrot.slane %v10035, 5
      %v10142 = vrot.slane %v10141, 4
      %v10143 = vrot.slane %v9296, 5
      %v10144 = vsel %vm1349, %v10142, %v10143
      %v10145 = vrot.slane %v10143, 4
      %v10146 = vrot.slane %v9297, 5
      %v10147 = vsel %vm1349, %v10145, %v10146
      %v10148 = vrot.slane %v10036, 5
      %v10149 = vrot.slane %v10148, 4
      %v10150 = vrot.slane %v9299, 5
      %v10151 = vsel %vm1349, %v10149, %v10150
      %v10152 = vrot.slane %v10150, 4
      %v10153 = vrot.slane %v9300, 5
      %v10154 = vsel %vm1349, %v10152, %v10153
      %v10155 = vrot.slane %v10037, 5
      %v10156 = vrot.slane %v10155, 4
      %v10157 = vrot.slane %v9302, 5
      %v10158 = vsel %vm1349, %v10156, %v10157
      %v10159 = vrot.slane %v10157, 4
      %v10160 = vrot.slane %v9303, 5
      %v10161 = vsel %vm1349, %v10159, %v10160
      %v10162 = vrot.slane %v10038, 5
      %v10163 = vrot.slane %v10162, 4
      %v10164 = vrot.slane %v9305, 5
      %v10165 = vsel %vm1349, %v10163, %v10164
      %v10166 = vrot.slane %v10164, 4
      %v10167 = vrot.slane %v9306, 5
      %v10168 = vsel %vm1349, %v10166, %v10167
      %v10169 = vrot.slane %v10039, 5
      %v10170 = vrot.slane %v10169, 4
      %v10171 = vrot.slane %v9308, 5
      %v10172 = vsel %vm1349, %v10170, %v10171
      %v10173 = vrot.slane %v10171, 4
      %v10174 = vrot.slane %v9309, 5
      %v10175 = vsel %vm1349, %v10173, %v10174
      %v10176 = vrot.slane %v10040, 5
      %v10177 = vrot.slane %v10176, 4
      %v10178 = vrot.slane %v9311, 5
      %v10179 = vsel %vm1349, %v10177, %v10178
      %v10180 = vrot.slane %v10178, 4
      %v10181 = vrot.slane %v9312, 5
      %v10182 = vsel %vm1349, %v10180, %v10181
      %v10183 = vrot.slane %v10041, 5
      %v10184 = vrot.slane %v10183, 4
      %v10185 = vrot.slane %v9314, 5
      %v10186 = vsel %vm1349, %v10184, %v10185
      %v10187 = vrot.slane %v10185, 4
      %v10188 = vrot.slane %v9315, 5
      %v10189 = vsel %vm1349, %v10187, %v10188
      %v10190 = vrot.slane %v10042, 5
      %v10191 = vrot.slane %v10190, 4
      %v10192 = vrot.slane %v9317, 5
      %v10193 = vsel %vm1349, %v10191, %v10192
      %v10194 = vrot.slane %v10192, 4
      %v10195 = vrot.slane %v9318, 5
      %v10196 = vsel %vm1349, %v10194, %v10195
      %v10197 = vrot.slane %v10043, 5
      %v10198 = vrot.slane %v10197, 4
      %v10199 = vrot.slane %v9320, 5
      %v10200 = vsel %vm1349, %v10198, %v10199
      %v10201 = vrot.slane %v10199, 4
      %v10202 = vrot.slane %v9321, 5
      %v10203 = vsel %vm1349, %v10201, %v10202
      %s10204 = scalar_lea.vmem %s3, 512
      %v10205 = vld [vmem:[%s10204] sm:$0xf]
      %v10206 = vld [vmem:[%s10204 + $0x4] sm:$0xf]
      %v10207 = vld [vmem:[%s10204 + $0x8] sm:$0xf]
      %v10208 = vld [vmem:[%s10204 + $0xc] sm:$0xf]
      %v10209 = vld [vmem:[%s10204 + $0x10] sm:$0xf]
      %v10210 = vld [vmem:[%s10204 + $0x14] sm:$0xf]
      %v10211 = vld [vmem:[%s10204 + $0x18] sm:$0xf]
      %v10212 = vld [vmem:[%s10204 + $0x1c] sm:$0xf]
      %v10213 = vld [vmem:[%s10204 + $0x20] sm:$0xf]
      %v10214 = vld [vmem:[%s10204 + $0x24] sm:$0xf]
      %v10215 = vld [vmem:[%s10204 + $0x28] sm:$0xf]
      %v10216 = vld [vmem:[%s10204 + $0x2c] sm:$0xf]
      %v10217 = vld [vmem:[%s10204 + $0x30] sm:$0xf]
      %v10218 = vld [vmem:[%s10204 + $0x34] sm:$0xf]
      %v10219 = vld [vmem:[%s10204 + $0x38] sm:$0xf]
      %v10220 = vld [vmem:[%s10204 + $0x3c] sm:$0xf]
      %v10221 = vunpack.c.l.b16 %v10095
      %v10222 = vunpack.c.l.b16 %v10098
      %v10223 = vunpack.c.l.b16 %v10102
      %v10224 = vunpack.c.l.b16 %v10105
      %v10225 = vunpack.c.l.b16 %v10109
      %v10226 = vunpack.c.l.b16 %v10112
      %v10227 = vunpack.c.l.b16 %v10116
      %v10228 = vunpack.c.l.b16 %v10119
      %v10229 = vunpack.c.l.b16 %v10123
      %v10230 = vunpack.c.l.b16 %v10126
      %v10231 = vunpack.c.l.b16 %v10130
      %v10232 = vunpack.c.l.b16 %v10133
      %v10233 = vunpack.c.l.b16 %v10137
      %v10234 = vunpack.c.l.b16 %v10140
      %v10235 = vunpack.c.l.b16 %v10144
      %v10236 = vunpack.c.l.b16 %v10147
      %v10237 = vunpack.c.l.b16 %v10151
      %v10238 = vunpack.c.l.b16 %v10154
      %v10239 = vunpack.c.l.b16 %v10158
      %v10240 = vunpack.c.l.b16 %v10161
      %v10241 = vunpack.c.l.b16 %v10165
      %v10242 = vunpack.c.l.b16 %v10168
      %v10243 = vunpack.c.l.b16 %v10172
      %v10244 = vunpack.c.l.b16 %v10175
      %v10245 = vunpack.c.l.b16 %v10179
      %v10246 = vunpack.c.l.b16 %v10182
      %v10247 = vunpack.c.l.b16 %v10186
      %v10248 = vunpack.c.l.b16 %v10189
      %v10249 = vunpack.c.l.b16 %v10193
      %v10250 = vunpack.c.l.b16 %v10196
      %v10251 = vunpack.c.l.b16 %v10200
      %v10252 = vunpack.c.l.b16 %v10203
      %v10253 = vpack.c.b16 %v10222, %v10221
      %v10254 = vpack.c.b16 %v10224, %v10223
      %v10255 = vpack.c.b16 %v10226, %v10225
      %v10256 = vpack.c.b16 %v10228, %v10227
      %v10257 = vpack.c.b16 %v10230, %v10229
      %v10258 = vpack.c.b16 %v10232, %v10231
      %v10259 = vpack.c.b16 %v10234, %v10233
      %v10260 = vpack.c.b16 %v10236, %v10235
      %v10261 = vpack.c.b16 %v10238, %v10237
      %v10262 = vpack.c.b16 %v10240, %v10239
      %v10263 = vpack.c.b16 %v10242, %v10241
      %v10264 = vpack.c.b16 %v10244, %v10243
      %v10265 = vpack.c.b16 %v10246, %v10245
      %v10266 = vpack.c.b16 %v10248, %v10247
      %v10267 = vpack.c.b16 %v10250, %v10249
      %v10268 = vpack.c.b16 %v10252, %v10251
      %v10301 = vunpack.c.l.b16 %v10205
      %v10302 = vunpack.c.l.b16 %v10206
      %v10303 = vunpack.c.l.b16 %v10207
      %v10304 = vunpack.c.l.b16 %v10208
      %v10305 = vunpack.c.l.b16 %v10209
      %v10306 = vunpack.c.l.b16 %v10210
      %v10307 = vunpack.c.l.b16 %v10211
      %v10308 = vunpack.c.l.b16 %v10212
      %v10309 = vunpack.c.l.b16 %v10213
      %v10310 = vunpack.c.l.b16 %v10214
      %v10311 = vunpack.c.l.b16 %v10215
      %v10312 = vunpack.c.l.b16 %v10216
      %v10313 = vunpack.c.l.b16 %v10217
      %v10314 = vunpack.c.l.b16 %v10218
      %v10315 = vunpack.c.l.b16 %v10219
      %v10316 = vunpack.c.l.b16 %v10220
      %v10317 = vpack.c.b16 %v10302, %v10301
      %v10318 = vpack.c.b16 %v10304, %v10303
      %v10319 = vpack.c.b16 %v10306, %v10305
      %v10320 = vpack.c.b16 %v10308, %v10307
      %v10321 = vpack.c.b16 %v10310, %v10309
      %v10322 = vpack.c.b16 %v10312, %v10311
      %v10323 = vpack.c.b16 %v10314, %v10313
      %v10324 = vpack.c.b16 %v10316, %v10315
      %10333 = vmatprep.subr.bf16.mxu0 0
      %10334 = vmatpush1.bf16.msra.mxu0 %v10317
      %10335 = vmatprep.subr.bf16.mxu0 0
      %10336 = vmatpush1.bf16.msra.mxu0 %v10318
      %10337 = vmatprep.subr.bf16.mxu0 0
      %10338 = vmatpush1.bf16.msra.mxu0 %v10319
      %10339 = vmatprep.subr.bf16.mxu0 0
      %10340 = vmatpush1.bf16.msra.mxu0 %v10320
      %10341 = vmatprep.subr.bf16.mxu0 0
      %10342 = vmatpush1.bf16.msra.mxu0 %v10321
      %10343 = vmatprep.subr.bf16.mxu0 0
      %10344 = vmatpush1.bf16.msra.mxu0 %v10322
      %10345 = vmatprep.subr.bf16.mxu0 0
      %10346 = vmatpush1.bf16.msra.mxu0 %v10323
      %10347 = vmatprep.subr.bf16.mxu0 0
      %10348 = vmatpush1.bf16.msra.mxu0 %v10324
      %10349 = vmatprep.subr.bf16.mxu0 0
      %10350 = vmatpush1.bf16.msra.mxu0 0
      %10351 = vmatprep.subr.bf16.mxu0 0
      %10352 = vmatpush1.bf16.msra.mxu0 0
      %10353 = vmatprep.subr.bf16.mxu0 0
      %10354 = vmatpush1.bf16.msra.mxu0 0
      %10355 = vmatprep.subr.bf16.mxu0 0
      %10356 = vmatpush1.bf16.msra.mxu0 0
      %10357 = vmatprep.subr.bf16.mxu0 0
      %10358 = vmatpush1.bf16.msra.mxu0 0
      %10359 = vmatprep.subr.bf16.mxu0 0
      %10360 = vmatpush1.bf16.msra.mxu0 0
      %10361 = vmatprep.subr.bf16.mxu0 0
      %10362 = vmatpush1.bf16.msra.mxu0 0
      %10363 = vmatprep.subr.bf16.mxu0 0
      %10364 = vmatpush1.bf16.msra.mxu0 0
      %10365 = vmatprep.mubr.bf16.mxu0 0
      %10366 = vmatmul.mubr.bf16.gmra.mrb[0].mxu0 %v10253
      %v10367 = vpop.f32.mrb[0].mxu0
      %v10368 = vadd.f32 0.0, %v10367
      %v10369 = vpop.f32.mrb[0].mxu0
      %v10370 = vpop.f32.mrb[0].mxu0
      %v10371 = vadd.f32 0.0, %v10370
      %v10372 = vpop.f32.mrb[0].mxu0
      %10373 = vmatprep.mubr.bf16.mxu0 0
      %10374 = vmatmul.mubr.bf16.gmra.mrb[0].mxu0 %v10254
      %v10375 = vpop.f32.mrb[0].mxu0
      %v10376 = vadd.f32 0.0, %v10375
      %v10377 = vpop.f32.mrb[0].mxu0
      %v10378 = vpop.f32.mrb[0].mxu0
      %v10379 = vadd.f32 0.0, %v10378
      %v10380 = vpop.f32.mrb[0].mxu0
      %10381 = vmatprep.mubr.bf16.mxu0 0
      %10382 = vmatmul.mubr.bf16.gmra.mrb[0].mxu0 %v10255
      %v10383 = vpop.f32.mrb[0].mxu0
      %v10384 = vadd.f32 0.0, %v10383
      %v10385 = vpop.f32.mrb[0].mxu0
      %v10386 = vpop.f32.mrb[0].mxu0
      %v10387 = vadd.f32 0.0, %v10386
      %v10388 = vpop.f32.mrb[0].mxu0
      %10389 = vmatprep.mubr.bf16.mxu0 0
      %10390 = vmatmul.mubr.bf16.gmra.mrb[0].mxu0 %v10256
      %v10391 = vpop.f32.mrb[0].mxu0
      %v10392 = vadd.f32 0.0, %v10391
      %v10393 = vpop.f32.mrb[0].mxu0
      %v10394 = vpop.f32.mrb[0].mxu0
      %v10395 = vadd.f32 0.0, %v10394
      %v10396 = vpop.f32.mrb[0].mxu0
      %10397 = vmatprep.mubr.bf16.mxu0 0
      %10398 = vmatmul.mubr.bf16.gmra.mrb[0].mxu0 %v10257
      %v10399 = vpop.f32.mrb[0].mxu0
      %v10400 = vadd.f32 0.0, %v10399
      %v10401 = vpop.f32.mrb[0].mxu0
      %v10402 = vpop.f32.mrb[0].mxu0
      %v10403 = vadd.f32 0.0, %v10402
      %v10404 = vpop.f32.mrb[0].mxu0
      %10405 = vmatprep.mubr.bf16.mxu0 0
      %10406 = vmatmul.mubr.bf16.gmra.mrb[0].mxu0 %v10258
      %v10407 = vpop.f32.mrb[0].mxu0
      %v10408 = vadd.f32 0.0, %v10407
      %v10409 = vpop.f32.mrb[0].mxu0
      %v10410 = vpop.f32.mrb[0].mxu0
      %v10411 = vadd.f32 0.0, %v10410
      %v10412 = vpop.f32.mrb[0].mxu0
      %10413 = vmatprep.mubr.bf16.mxu0 0
      %10414 = vmatmul.mubr.bf16.gmra.mrb[0].mxu0 %v10259
      %v10415 = vpop.f32.mrb[0].mxu0
      %v10416 = vadd.f32 0.0, %v10415
      %v10417 = vpop.f32.mrb[0].mxu0
      %v10418 = vpop.f32.mrb[0].mxu0
      %v10419 = vadd.f32 0.0, %v10418
      %v10420 = vpop.f32.mrb[0].mxu0
      %10421 = vmatprep.mubr.bf16.mxu0 0
      %10422 = vmatmul.mubr.bf16.gmra.mrb[0].mxu0 %v10260
      %v10423 = vpop.f32.mrb[0].mxu0
      %v10424 = vadd.f32 0.0, %v10423
      %v10425 = vpop.f32.mrb[0].mxu0
      %v10426 = vpop.f32.mrb[0].mxu0
      %v10427 = vadd.f32 0.0, %v10426
      %v10428 = vpop.f32.mrb[0].mxu0
      %10429 = vmatprep.mubr.bf16.mxu0 0
      %10430 = vmatmul.mubr.bf16.gmra.mrb[0].mxu0 %v10261
      %v10431 = vpop.f32.mrb[0].mxu0
      %v10432 = vadd.f32 0.0, %v10431
      %v10433 = vpop.f32.mrb[0].mxu0
      %v10434 = vpop.f32.mrb[0].mxu0
      %v10435 = vadd.f32 0.0, %v10434
      %v10436 = vpop.f32.mrb[0].mxu0
      %10437 = vmatprep.mubr.bf16.mxu0 0
      %10438 = vmatmul.mubr.bf16.gmra.mrb[0].mxu0 %v10262
      %v10439 = vpop.f32.mrb[0].mxu0
      %v10440 = vadd.f32 0.0, %v10439
      %v10441 = vpop.f32.mrb[0].mxu0
      %v10442 = vpop.f32.mrb[0].mxu0
      %v10443 = vadd.f32 0.0, %v10442
      %v10444 = vpop.f32.mrb[0].mxu0
      %10445 = vmatprep.mubr.bf16.mxu0 0
      %10446 = vmatmul.mubr.bf16.gmra.mrb[0].mxu0 %v10263
      %v10447 = vpop.f32.mrb[0].mxu0
      %v10448 = vadd.f32 0.0, %v10447
      %v10449 = vpop.f32.mrb[0].mxu0
      %v10450 = vpop.f32.mrb[0].mxu0
      %v10451 = vadd.f32 0.0, %v10450
      %v10452 = vpop.f32.mrb[0].mxu0
      %10453 = vmatprep.mubr.bf16.mxu0 0
      %10454 = vmatmul.mubr.bf16.gmra.mrb[0].mxu0 %v10264
      %v10455 = vpop.f32.mrb[0].mxu0
      %v10456 = vadd.f32 0.0, %v10455
      %v10457 = vpop.f32.mrb[0].mxu0
      %v10458 = vpop.f32.mrb[0].mxu0
      %v10459 = vadd.f32 0.0, %v10458
      %v10460 = vpop.f32.mrb[0].mxu0
      %10461 = vmatprep.mubr.bf16.mxu0 0
      %10462 = vmatmul.mubr.bf16.gmra.mrb[0].mxu0 %v10265
      %v10463 = vpop.f32.mrb[0].mxu0
      %v10464 = vadd.f32 0.0, %v10463
      %v10465 = vpop.f32.mrb[0].mxu0
      %v10466 = vpop.f32.mrb[0].mxu0
      %v10467 = vadd.f32 0.0, %v10466
      %v10468 = vpop.f32.mrb[0].mxu0
      %10469 = vmatprep.mubr.bf16.mxu0 0
      %10470 = vmatmul.mubr.bf16.gmra.mrb[0].mxu0 %v10266
      %v10471 = vpop.f32.mrb[0].mxu0
      %v10472 = vadd.f32 0.0, %v10471
      %v10473 = vpop.f32.mrb[0].mxu0
      %v10474 = vpop.f32.mrb[0].mxu0
      %v10475 = vadd.f32 0.0, %v10474
      %v10476 = vpop.f32.mrb[0].mxu0
      %10477 = vmatprep.mubr.bf16.mxu0 0
      %10478 = vmatmul.mubr.bf16.gmra.mrb[0].mxu0 %v10267
      %v10479 = vpop.f32.mrb[0].mxu0
      %v10480 = vadd.f32 0.0, %v10479
      %v10481 = vpop.f32.mrb[0].mxu0
      %v10482 = vpop.f32.mrb[0].mxu0
      %v10483 = vadd.f32 0.0, %v10482
      %v10484 = vpop.f32.mrb[0].mxu0
      %10485 = vmatprep.mubr.bf16.mxu0 0
      %10486 = vmatmul.mubr.bf16.gmra.mrb[0].mxu0 %v10268
      %v10487 = vpop.f32.mrb[0].mxu0
      %v10488 = vadd.f32 0.0, %v10487
      %v10489 = vpop.f32.mrb[0].mxu0
      %v10490 = vpop.f32.mrb[0].mxu0
      %v10491 = vadd.f32 0.0, %v10490
      %v10492 = vpop.f32.mrb[0].mxu0
      %10493 = vdwg.mxu0
      %v10494 = vadd.f32 %v9996, %v10368
      %v10495 = vadd.f32 %v9997, %v10371
      %v10496 = vadd.f32 %v9998, %v10376
      %v10497 = vadd.f32 %v9999, %v10379
      %v10498 = vadd.f32 %v10000, %v10384
      %v10499 = vadd.f32 %v10001, %v10387
      %v10500 = vadd.f32 %v10002, %v10392
      %v10501 = vadd.f32 %v10003, %v10395
      %v10502 = vadd.f32 %v10004, %v10400
      %v10503 = vadd.f32 %v10005, %v10403
      %v10504 = vadd.f32 %v10006, %v10408
      %v10505 = vadd.f32 %v10007, %v10411
      %v10506 = vadd.f32 %v10008, %v10416
      %v10507 = vadd.f32 %v10009, %v10419
      %v10508 = vadd.f32 %v10010, %v10424
      %v10509 = vadd.f32 %v10011, %v10427
      %v10510 = vadd.f32 %v10012, %v10432
      %v10511 = vadd.f32 %v10013, %v10435
      %v10512 = vadd.f32 %v10014, %v10440
      %v10513 = vadd.f32 %v10015, %v10443
      %v10514 = vadd.f32 %v10016, %v10448
      %v10515 = vadd.f32 %v10017, %v10451
      %v10516 = vadd.f32 %v10018, %v10456
      %v10517 = vadd.f32 %v10019, %v10459
      %v10518 = vadd.f32 %v10020, %v10464
      %v10519 = vadd.f32 %v10021, %v10467
      %v10520 = vadd.f32 %v10022, %v10472
      %v10521 = vadd.f32 %v10023, %v10475
      %v10522 = vadd.f32 %v10024, %v10480
      %v10523 = vadd.f32 %v10025, %v10483
      %v10524 = vadd.f32 %v10026, %v10488
      %v10525 = vadd.f32 %v10027, %v10491
      %v10526 = vld [vmem:[%s1784] sm:$0xf]
      %v10527 = vld [vmem:[%s1784 + $0x4] sm:$0xf]
      %v10528 = vld [vmem:[%s1784 + $0x8] sm:$0x1]
      %v10529 = vld [vmem:[%s1784 + $0xc] sm:$0xf]
      %v10530 = vld [vmem:[%s1784 + $0x10] sm:$0xf]
      %v10531 = vld [vmem:[%s1784 + $0x14] sm:$0x1]
      %v10532 = vld [vmem:[%s1784 + $0x18] sm:$0xf]
      %v10533 = vld [vmem:[%s1784 + $0x1c] sm:$0xf]
      %v10534 = vld [vmem:[%s1784 + $0x20] sm:$0x1]
      %v10535 = vld [vmem:[%s1784 + $0x24] sm:$0xf]
      %v10536 = vld [vmem:[%s1784 + $0x28] sm:$0xf]
      %v10537 = vld [vmem:[%s1784 + $0x2c] sm:$0x1]
      %v10538 = vld [vmem:[%s1784 + $0x30] sm:$0xf]
      %v10539 = vld [vmem:[%s1784 + $0x34] sm:$0xf]
      %v10540 = vld [vmem:[%s1784 + $0x38] sm:$0x1]
      %v10541 = vld [vmem:[%s1784 + $0x3c] sm:$0xf]
      %v10542 = vld [vmem:[%s1784 + $0x40] sm:$0xf]
      %v10543 = vld [vmem:[%s1784 + $0x44] sm:$0x1]
      %v10544 = vld [vmem:[%s1784 + $0x48] sm:$0xf]
      %v10545 = vld [vmem:[%s1784 + $0x4c] sm:$0xf]
      %v10546 = vld [vmem:[%s1784 + $0x50] sm:$0x1]
      %v10547 = vld [vmem:[%s1784 + $0x54] sm:$0xf]
      %v10548 = vld [vmem:[%s1784 + $0x58] sm:$0xf]
      %v10549 = vld [vmem:[%s1784 + $0x5c] sm:$0x1]
      %v10550 = vld [vmem:[%s1784 + $0x60] sm:$0xf]
      %v10551 = vld [vmem:[%s1784 + $0x64] sm:$0xf]
      %v10552 = vld [vmem:[%s1784 + $0x68] sm:$0x1]
      %v10553 = vld [vmem:[%s1784 + $0x6c] sm:$0xf]
      %v10554 = vld [vmem:[%s1784 + $0x70] sm:$0xf]
      %v10555 = vld [vmem:[%s1784 + $0x74] sm:$0x1]
      %v10556 = vld [vmem:[%s1784 + $0x78] sm:$0xf]
      %v10557 = vld [vmem:[%s1784 + $0x7c] sm:$0xf]
      %v10558 = vld [vmem:[%s1784 + $0x80] sm:$0x1]
      %v10559 = vld [vmem:[%s1784 + $0x84] sm:$0xf]
      %v10560 = vld [vmem:[%s1784 + $0x88] sm:$0xf]
      %v10561 = vld [vmem:[%s1784 + $0x8c] sm:$0x1]
      %v10562 = vld [vmem:[%s1784 + $0x90] sm:$0xf]
      %v10563 = vld [vmem:[%s1784 + $0x94] sm:$0xf]
      %v10564 = vld [vmem:[%s1784 + $0x98] sm:$0x1]
      %v10565 = vld [vmem:[%s1784 + $0x9c] sm:$0xf]
      %v10566 = vld [vmem:[%s1784 + $0xa0] sm:$0xf]
      %v10567 = vld [vmem:[%s1784 + $0xa4] sm:$0x1]
      %v10568 = vld [vmem:[%s1784 + $0xa8] sm:$0xf]
      %v10569 = vld [vmem:[%s1784 + $0xac] sm:$0xf]
      %v10570 = vld [vmem:[%s1784 + $0xb0] sm:$0x1]
      %v10571 = vld [vmem:[%s1784 + $0xb4] sm:$0xf]
      %v10572 = vld [vmem:[%s1784 + $0xb8] sm:$0xf]
      %v10573 = vld [vmem:[%s1784 + $0xbc] sm:$0x1]
      %v10575 = vshrl.u32 %v10526, 16
      %v10577 = vrot.slane %v10575, 4
      %v10578 = vshll.u32 %v10526, 16
      %v10580 = vrot.slane %v10578, 5
      %v10581 = vor.u32 %v10577, %v10580
      %v10582 = vrot.slane %v10581, 4
      %v10584 = vshll.u32 %v10527, 16
      %v10586 = vrot.slane %v10584, 5
      %v10587 = vsel %vm319, %v10582, %v10586
      %v10588 = vshrl.u32 %v10527, 16
      %v10590 = vrot.slane %v10588, 4
      %v10591 = vor.u32 %v10590, %v10586
      %v10592 = vrot.slane %v10591, 4
      %v10594 = vshll.u32 %v10528, 16
      %v10596 = vrot.slane %v10594, 5
      %v10597 = vsel %vm319, %v10592, %v10596
      %v10599 = vshrl.u32 %v10529, 16
      %v10601 = vrot.slane %v10599, 4
      %v10602 = vshll.u32 %v10529, 16
      %v10604 = vrot.slane %v10602, 5
      %v10605 = vor.u32 %v10601, %v10604
      %v10606 = vrot.slane %v10605, 4
      %v10608 = vshll.u32 %v10530, 16
      %v10610 = vrot.slane %v10608, 5
      %v10611 = vsel %vm319, %v10606, %v10610
      %v10612 = vshrl.u32 %v10530, 16
      %v10614 = vrot.slane %v10612, 4
      %v10615 = vor.u32 %v10614, %v10610
      %v10616 = vrot.slane %v10615, 4
      %v10618 = vshll.u32 %v10531, 16
      %v10620 = vrot.slane %v10618, 5
      %v10621 = vsel %vm319, %v10616, %v10620
      %v10623 = vshrl.u32 %v10532, 16
      %v10625 = vrot.slane %v10623, 4
      %v10626 = vshll.u32 %v10532, 16
      %v10628 = vrot.slane %v10626, 5
      %v10629 = vor.u32 %v10625, %v10628
      %v10630 = vrot.slane %v10629, 4
      %v10632 = vshll.u32 %v10533, 16
      %v10634 = vrot.slane %v10632, 5
      %v10635 = vsel %vm319, %v10630, %v10634
      %v10636 = vshrl.u32 %v10533, 16
      %v10638 = vrot.slane %v10636, 4
      %v10639 = vor.u32 %v10638, %v10634
      %v10640 = vrot.slane %v10639, 4
      %v10642 = vshll.u32 %v10534, 16
      %v10644 = vrot.slane %v10642, 5
      %v10645 = vsel %vm319, %v10640, %v10644
      %v10647 = vshrl.u32 %v10535, 16
      %v10649 = vrot.slane %v10647, 4
      %v10650 = vshll.u32 %v10535, 16
      %v10652 = vrot.slane %v10650, 5
      %v10653 = vor.u32 %v10649, %v10652
      %v10654 = vrot.slane %v10653, 4
      %v10656 = vshll.u32 %v10536, 16
      %v10658 = vrot.slane %v10656, 5
      %v10659 = vsel %vm319, %v10654, %v10658
      %v10660 = vshrl.u32 %v10536, 16
      %v10662 = vrot.slane %v10660, 4
      %v10663 = vor.u32 %v10662, %v10658
      %v10664 = vrot.slane %v10663, 4
      %v10666 = vshll.u32 %v10537, 16
      %v10668 = vrot.slane %v10666, 5
      %v10669 = vsel %vm319, %v10664, %v10668
      %v10671 = vshrl.u32 %v10538, 16
      %v10673 = vrot.slane %v10671, 4
      %v10674 = vshll.u32 %v10538, 16
      %v10676 = vrot.slane %v10674, 5
      %v10677 = vor.u32 %v10673, %v10676
      %v10678 = vrot.slane %v10677, 4
      %v10680 = vshll.u32 %v10539, 16
      %v10682 = vrot.slane %v10680, 5
      %v10683 = vsel %vm319, %v10678, %v10682
      %v10684 = vshrl.u32 %v10539, 16
      %v10686 = vrot.slane %v10684, 4
      %v10687 = vor.u32 %v10686, %v10682
      %v10688 = vrot.slane %v10687, 4
      %v10690 = vshll.u32 %v10540, 16
      %v10692 = vrot.slane %v10690, 5
      %v10693 = vsel %vm319, %v10688, %v10692
      %v10695 = vshrl.u32 %v10541, 16
      %v10697 = vrot.slane %v10695, 4
      %v10698 = vshll.u32 %v10541, 16
      %v10700 = vrot.slane %v10698, 5
      %v10701 = vor.u32 %v10697, %v10700
      %v10702 = vrot.slane %v10701, 4
      %v10704 = vshll.u32 %v10542, 16
      %v10706 = vrot.slane %v10704, 5
      %v10707 = vsel %vm319, %v10702, %v10706
      %v10708 = vshrl.u32 %v10542, 16
      %v10710 = vrot.slane %v10708, 4
      %v10711 = vor.u32 %v10710, %v10706
      %v10712 = vrot.slane %v10711, 4
      %v10714 = vshll.u32 %v10543, 16
      %v10716 = vrot.slane %v10714, 5
      %v10717 = vsel %vm319, %v10712, %v10716
      %v10719 = vshrl.u32 %v10544, 16
      %v10721 = vrot.slane %v10719, 4
      %v10722 = vshll.u32 %v10544, 16
      %v10724 = vrot.slane %v10722, 5
      %v10725 = vor.u32 %v10721, %v10724
      %v10726 = vrot.slane %v10725, 4
      %v10728 = vshll.u32 %v10545, 16
      %v10730 = vrot.slane %v10728, 5
      %v10731 = vsel %vm319, %v10726, %v10730
      %v10732 = vshrl.u32 %v10545, 16
      %v10734 = vrot.slane %v10732, 4
      %v10735 = vor.u32 %v10734, %v10730
      %v10736 = vrot.slane %v10735, 4
      %v10738 = vshll.u32 %v10546, 16
      %v10740 = vrot.slane %v10738, 5
      %v10741 = vsel %vm319, %v10736, %v10740
      %v10743 = vshrl.u32 %v10547, 16
      %v10745 = vrot.slane %v10743, 4
      %v10746 = vshll.u32 %v10547, 16
      %v10748 = vrot.slane %v10746, 5
      %v10749 = vor.u32 %v10745, %v10748
      %v10750 = vrot.slane %v10749, 4
      %v10752 = vshll.u32 %v10548, 16
      %v10754 = vrot.slane %v10752, 5
      %v10755 = vsel %vm319, %v10750, %v10754
      %v10756 = vshrl.u32 %v10548, 16
      %v10758 = vrot.slane %v10756, 4
      %v10759 = vor.u32 %v10758, %v10754
      %v10760 = vrot.slane %v10759, 4
      %v10762 = vshll.u32 %v10549, 16
      %v10764 = vrot.slane %v10762, 5
      %v10765 = vsel %vm319, %v10760, %v10764
      %v10767 = vshrl.u32 %v10550, 16
      %v10769 = vrot.slane %v10767, 4
      %v10770 = vshll.u32 %v10550, 16
      %v10772 = vrot.slane %v10770, 5
      %v10773 = vor.u32 %v10769, %v10772
      %v10774 = vrot.slane %v10773, 4
      %v10776 = vshll.u32 %v10551, 16
      %v10778 = vrot.slane %v10776, 5
      %v10779 = vsel %vm319, %v10774, %v10778
      %v10780 = vshrl.u32 %v10551, 16
      %v10782 = vrot.slane %v10780, 4
      %v10783 = vor.u32 %v10782, %v10778
      %v10784 = vrot.slane %v10783, 4
      %v10786 = vshll.u32 %v10552, 16
      %v10788 = vrot.slane %v10786, 5
      %v10789 = vsel %vm319, %v10784, %v10788
      %v10791 = vshrl.u32 %v10553, 16
      %v10793 = vrot.slane %v10791, 4
      %v10794 = vshll.u32 %v10553, 16
      %v10796 = vrot.slane %v10794, 5
      %v10797 = vor.u32 %v10793, %v10796
      %v10798 = vrot.slane %v10797, 4
      %v10800 = vshll.u32 %v10554, 16
      %v10802 = vrot.slane %v10800, 5
      %v10803 = vsel %vm319, %v10798, %v10802
      %v10804 = vshrl.u32 %v10554, 16
      %v10806 = vrot.slane %v10804, 4
      %v10807 = vor.u32 %v10806, %v10802
      %v10808 = vrot.slane %v10807, 4
      %v10810 = vshll.u32 %v10555, 16
      %v10812 = vrot.slane %v10810, 5
      %v10813 = vsel %vm319, %v10808, %v10812
      %v10815 = vshrl.u32 %v10556, 16
      %v10817 = vrot.slane %v10815, 4
      %v10818 = vshll.u32 %v10556, 16
      %v10820 = vrot.slane %v10818, 5
      %v10821 = vor.u32 %v10817, %v10820
      %v10822 = vrot.slane %v10821, 4
      %v10824 = vshll.u32 %v10557, 16
      %v10826 = vrot.slane %v10824, 5
      %v10827 = vsel %vm319, %v10822, %v10826
      %v10828 = vshrl.u32 %v10557, 16
      %v10830 = vrot.slane %v10828, 4
      %v10831 = vor.u32 %v10830, %v10826
      %v10832 = vrot.slane %v10831, 4
      %v10834 = vshll.u32 %v10558, 16
      %v10836 = vrot.slane %v10834, 5
      %v10837 = vsel %vm319, %v10832, %v10836
      %v10839 = vshrl.u32 %v10559, 16
      %v10841 = vrot.slane %v10839, 4
      %v10842 = vshll.u32 %v10559, 16
      %v10844 = vrot.slane %v10842, 5
      %v10845 = vor.u32 %v10841, %v10844
      %v10846 = vrot.slane %v10845, 4
      %v10848 = vshll.u32 %v10560, 16
      %v10850 = vrot.slane %v10848, 5
      %v10851 = vsel %vm319, %v10846, %v10850
      %v10852 = vshrl.u32 %v10560, 16
      %v10854 = vrot.slane %v10852, 4
      %v10855 = vor.u32 %v10854, %v10850
      %v10856 = vrot.slane %v10855, 4
      %v10858 = vshll.u32 %v10561, 16
      %v10860 = vrot.slane %v10858, 5
      %v10861 = vsel %vm319, %v10856, %v10860
      %v10863 = vshrl.u32 %v10562, 16
      %v10865 = vrot.slane %v10863, 4
      %v10866 = vshll.u32 %v10562, 16
      %v10868 = vrot.slane %v10866, 5
      %v10869 = vor.u32 %v10865, %v10868
      %v10870 = vrot.slane %v10869, 4
      %v10872 = vshll.u32 %v10563, 16
      %v10874 = vrot.slane %v10872, 5
      %v10875 = vsel %vm319, %v10870, %v10874
      %v10876 = vshrl.u32 %v10563, 16
      %v10878 = vrot.slane %v10876, 4
      %v10879 = vor.u32 %v10878, %v10874
      %v10880 = vrot.slane %v10879, 4
      %v10882 = vshll.u32 %v10564, 16
      %v10884 = vrot.slane %v10882, 5
      %v10885 = vsel %vm319, %v10880, %v10884
      %v10887 = vshrl.u32 %v10565, 16
      %v10889 = vrot.slane %v10887, 4
      %v10890 = vshll.u32 %v10565, 16
      %v10892 = vrot.slane %v10890, 5
      %v10893 = vor.u32 %v10889, %v10892
      %v10894 = vrot.slane %v10893, 4
      %v10896 = vshll.u32 %v10566, 16
      %v10898 = vrot.slane %v10896, 5
      %v10899 = vsel %vm319, %v10894, %v10898
      %v10900 = vshrl.u32 %v10566, 16
      %v10902 = vrot.slane %v10900, 4
      %v10903 = vor.u32 %v10902, %v10898
      %v10904 = vrot.slane %v10903, 4
      %v10906 = vshll.u32 %v10567, 16
      %v10908 = vrot.slane %v10906, 5
      %v10909 = vsel %vm319, %v10904, %v10908
      %v10911 = vshrl.u32 %v10568, 16
      %v10913 = vrot.slane %v10911, 4
      %v10914 = vshll.u32 %v10568, 16
      %v10916 = vrot.slane %v10914, 5
      %v10917 = vor.u32 %v10913, %v10916
      %v10918 = vrot.slane %v10917, 4
      %v10920 = vshll.u32 %v10569, 16
      %v10922 = vrot.slane %v10920, 5
      %v10923 = vsel %vm319, %v10918, %v10922
      %v10924 = vshrl.u32 %v10569, 16
      %v10926 = vrot.slane %v10924, 4
      %v10927 = vor.u32 %v10926, %v10922
      %v10928 = vrot.slane %v10927, 4
      %v10930 = vshll.u32 %v10570, 16
      %v10932 = vrot.slane %v10930, 5
      %v10933 = vsel %vm319, %v10928, %v10932
      %v10935 = vshrl.u32 %v10571, 16
      %v10937 = vrot.slane %v10935, 4
      %v10938 = vshll.u32 %v10571, 16
      %v10940 = vrot.slane %v10938, 5
      %v10941 = vor.u32 %v10937, %v10940
      %v10942 = vrot.slane %v10941, 4
      %v10944 = vshll.u32 %v10572, 16
      %v10946 = vrot.slane %v10944, 5
      %v10947 = vsel %vm319, %v10942, %v10946
      %v10948 = vshrl.u32 %v10572, 16
      %v10950 = vrot.slane %v10948, 4
      %v10951 = vor.u32 %v10950, %v10946
      %v10952 = vrot.slane %v10951, 4
      %v10954 = vshll.u32 %v10573, 16
      %v10956 = vrot.slane %v10954, 5
      %v10957 = vsel %vm319, %v10952, %v10956
      %v10958 = vld [vmem:[%s4] sm:$0xf]
      %v10959 = vld [vmem:[%s4 + $0x4] sm:$0xf]
      %v10960 = vld [vmem:[%s4 + $0x8] sm:$0xf]
      %v10961 = vld [vmem:[%s4 + $0xc] sm:$0xf]
      %v10962 = vld [vmem:[%s4 + $0x10] sm:$0xf]
      %v10963 = vld [vmem:[%s4 + $0x14] sm:$0xf]
      %v10964 = vld [vmem:[%s4 + $0x18] sm:$0xf]
      %v10965 = vld [vmem:[%s4 + $0x1c] sm:$0xf]
      %v10966 = vld [vmem:[%s4 + $0x20] sm:$0xf]
      %v10967 = vld [vmem:[%s4 + $0x24] sm:$0xf]
      %v10968 = vld [vmem:[%s4 + $0x28] sm:$0xf]
      %v10969 = vld [vmem:[%s4 + $0x2c] sm:$0xf]
      %v10970 = vld [vmem:[%s4 + $0x30] sm:$0xf]
      %v10971 = vld [vmem:[%s4 + $0x34] sm:$0xf]
      %v10972 = vld [vmem:[%s4 + $0x38] sm:$0xf]
      %v10973 = vld [vmem:[%s4 + $0x3c] sm:$0xf]
      %v10974 = vunpack.c.l.b16 %v10587
      %v10975 = vunpack.c.l.b16 %v10597
      %v10976 = vunpack.c.l.b16 %v10611
      %v10977 = vunpack.c.l.b16 %v10621
      %v10978 = vunpack.c.l.b16 %v10635
      %v10979 = vunpack.c.l.b16 %v10645
      %v10980 = vunpack.c.l.b16 %v10659
      %v10981 = vunpack.c.l.b16 %v10669
      %v10982 = vunpack.c.l.b16 %v10683
      %v10983 = vunpack.c.l.b16 %v10693
      %v10984 = vunpack.c.l.b16 %v10707
      %v10985 = vunpack.c.l.b16 %v10717
      %v10986 = vunpack.c.l.b16 %v10731
      %v10987 = vunpack.c.l.b16 %v10741
      %v10988 = vunpack.c.l.b16 %v10755
      %v10989 = vunpack.c.l.b16 %v10765
      %v10990 = vunpack.c.l.b16 %v10779
      %v10991 = vunpack.c.l.b16 %v10789
      %v10992 = vunpack.c.l.b16 %v10803
      %v10993 = vunpack.c.l.b16 %v10813
      %v10994 = vunpack.c.l.b16 %v10827
      %v10995 = vunpack.c.l.b16 %v10837
      %v10996 = vunpack.c.l.b16 %v10851
      %v10997 = vunpack.c.l.b16 %v10861
      %v10998 = vunpack.c.l.b16 %v10875
      %v10999 = vunpack.c.l.b16 %v10885
      %v11000 = vunpack.c.l.b16 %v10899
      %v11001 = vunpack.c.l.b16 %v10909
      %v11002 = vunpack.c.l.b16 %v10923
      %v11003 = vunpack.c.l.b16 %v10933
      %v11004 = vunpack.c.l.b16 %v10947
      %v11005 = vunpack.c.l.b16 %v10957
      %v11006 = vpack.c.b16 %v10975, %v10974
      %v11007 = vpack.c.b16 %v10977, %v10976
      %v11008 = vpack.c.b16 %v10979, %v10978
      %v11009 = vpack.c.b16 %v10981, %v10980
      %v11010 = vpack.c.b16 %v10983, %v10982
      %v11011 = vpack.c.b16 %v10985, %v10984
      %v11012 = vpack.c.b16 %v10987, %v10986
      %v11013 = vpack.c.b16 %v10989, %v10988
      %v11014 = vpack.c.b16 %v10991, %v10990
      %v11015 = vpack.c.b16 %v10993, %v10992
      %v11016 = vpack.c.b16 %v10995, %v10994
      %v11017 = vpack.c.b16 %v10997, %v10996
      %v11018 = vpack.c.b16 %v10999, %v10998
      %v11019 = vpack.c.b16 %v11001, %v11000
      %v11020 = vpack.c.b16 %v11003, %v11002
      %v11021 = vpack.c.b16 %v11005, %v11004
      %v11054 = vunpack.c.l.b16 %v10958
      %v11055 = vunpack.c.l.b16 %v10959
      %v11056 = vunpack.c.l.b16 %v10960
      %v11057 = vunpack.c.l.b16 %v10961
      %v11058 = vunpack.c.l.b16 %v10962
      %v11059 = vunpack.c.l.b16 %v10963
      %v11060 = vunpack.c.l.b16 %v10964
      %v11061 = vunpack.c.l.b16 %v10965
      %v11062 = vunpack.c.l.b16 %v10966
      %v11063 = vunpack.c.l.b16 %v10967
      %v11064 = vunpack.c.l.b16 %v10968
      %v11065 = vunpack.c.l.b16 %v10969
      %v11066 = vunpack.c.l.b16 %v10970
      %v11067 = vunpack.c.l.b16 %v10971
      %v11068 = vunpack.c.l.b16 %v10972
      %v11069 = vunpack.c.l.b16 %v10973
      %v11070 = vpack.c.b16 %v11055, %v11054
      %v11071 = vpack.c.b16 %v11057, %v11056
      %v11072 = vpack.c.b16 %v11059, %v11058
      %v11073 = vpack.c.b16 %v11061, %v11060
      %v11074 = vpack.c.b16 %v11063, %v11062
      %v11075 = vpack.c.b16 %v11065, %v11064
      %v11076 = vpack.c.b16 %v11067, %v11066
      %v11077 = vpack.c.b16 %v11069, %v11068
      %11086 = vmatprep.subr.bf16.mxu0 0
      %11087 = vmatpush1.bf16.msra.mxu0 %v11070
      %11088 = vmatprep.subr.bf16.mxu0 0
      %11089 = vmatpush1.bf16.msra.mxu0 %v11071
      %11090 = vmatprep.subr.bf16.mxu0 0
      %11091 = vmatpush1.bf16.msra.mxu0 %v11072
      %11092 = vmatprep.subr.bf16.mxu0 0
      %11093 = vmatpush1.bf16.msra.mxu0 %v11073
      %11094 = vmatprep.subr.bf16.mxu0 0
      %11095 = vmatpush1.bf16.msra.mxu0 %v11074
      %11096 = vmatprep.subr.bf16.mxu0 0
      %11097 = vmatpush1.bf16.msra.mxu0 %v11075
      %11098 = vmatprep.subr.bf16.mxu0 0
      %11099 = vmatpush1.bf16.msra.mxu0 %v11076
      %11100 = vmatprep.subr.bf16.mxu0 0
      %11101 = vmatpush1.bf16.msra.mxu0 %v11077
      %11102 = vmatprep.subr.bf16.mxu0 0
      %11103 = vmatpush1.bf16.msra.mxu0 0
      %11104 = vmatprep.subr.bf16.mxu0 0
      %11105 = vmatpush1.bf16.msra.mxu0 0
      %11106 = vmatprep.subr.bf16.mxu0 0
      %11107 = vmatpush1.bf16.msra.mxu0 0
      %11108 = vmatprep.subr.bf16.mxu0 0
      %11109 = vmatpush1.bf16.msra.mxu0 0
      %11110 = vmatprep.subr.bf16.mxu0 0
      %11111 = vmatpush1.bf16.msra.mxu0 0
      %11112 = vmatprep.subr.bf16.mxu0 0
      %11113 = vmatpush1.bf16.msra.mxu0 0
      %11114 = vmatprep.subr.bf16.mxu0 0
      %11115 = vmatpush1.bf16.msra.mxu0 0
      %11116 = vmatprep.subr.bf16.mxu0 0
      %11117 = vmatpush1.bf16.msra.mxu0 0
      %11118 = vmatprep.mubr.bf16.mxu0 0
      %11119 = vmatmul.mubr.bf16.gmra.mrb[0].mxu0 %v11006
      %v11120 = vpop.f32.mrb[0].mxu0
      %v11121 = vadd.f32 0.0, %v11120
      %v11122 = vpop.f32.mrb[0].mxu0
      %v11123 = vpop.f32.mrb[0].mxu0
      %v11124 = vadd.f32 0.0, %v11123
      %v11125 = vpop.f32.mrb[0].mxu0
      %11126 = vmatprep.mubr.bf16.mxu0 0
      %11127 = vmatmul.mubr.bf16.gmra.mrb[0].mxu0 %v11007
      %v11128 = vpop.f32.mrb[0].mxu0
      %v11129 = vadd.f32 0.0, %v11128
      %v11130 = vpop.f32.mrb[0].mxu0
      %v11131 = vpop.f32.mrb[0].mxu0
      %v11132 = vadd.f32 0.0, %v11131
      %v11133 = vpop.f32.mrb[0].mxu0
      %11134 = vmatprep.mubr.bf16.mxu0 0
      %11135 = vmatmul.mubr.bf16.gmra.mrb[0].mxu0 %v11008
      %v11136 = vpop.f32.mrb[0].mxu0
      %v11137 = vadd.f32 0.0, %v11136
      %v11138 = vpop.f32.mrb[0].mxu0
      %v11139 = vpop.f32.mrb[0].mxu0
      %v11140 = vadd.f32 0.0, %v11139
      %v11141 = vpop.f32.mrb[0].mxu0
      %11142 = vmatprep.mubr.bf16.mxu0 0
      %11143 = vmatmul.mubr.bf16.gmra.mrb[0].mxu0 %v11009
      %v11144 = vpop.f32.mrb[0].mxu0
      %v11145 = vadd.f32 0.0, %v11144
      %v11146 = vpop.f32.mrb[0].mxu0
      %v11147 = vpop.f32.mrb[0].mxu0
      %v11148 = vadd.f32 0.0, %v11147
      %v11149 = vpop.f32.mrb[0].mxu0
      %11150 = vmatprep.mubr.bf16.mxu0 0
      %11151 = vmatmul.mubr.bf16.gmra.mrb[0].mxu0 %v11010
      %v11152 = vpop.f32.mrb[0].mxu0
      %v11153 = vadd.f32 0.0, %v11152
      %v11154 = vpop.f32.mrb[0].mxu0
      %v11155 = vpop.f32.mrb[0].mxu0
      %v11156 = vadd.f32 0.0, %v11155
      %v11157 = vpop.f32.mrb[0].mxu0
      %11158 = vmatprep.mubr.bf16.mxu0 0
      %11159 = vmatmul.mubr.bf16.gmra.mrb[0].mxu0 %v11011
      %v11160 = vpop.f32.mrb[0].mxu0
      %v11161 = vadd.f32 0.0, %v11160
      %v11162 = vpop.f32.mrb[0].mxu0
      %v11163 = vpop.f32.mrb[0].mxu0
      %v11164 = vadd.f32 0.0, %v11163
      %v11165 = vpop.f32.mrb[0].mxu0
      %11166 = vmatprep.mubr.bf16.mxu0 0
      %11167 = vmatmul.mubr.bf16.gmra.mrb[0].mxu0 %v11012
      %v11168 = vpop.f32.mrb[0].mxu0
      %v11169 = vadd.f32 0.0, %v11168
      %v11170 = vpop.f32.mrb[0].mxu0
      %v11171 = vpop.f32.mrb[0].mxu0
      %v11172 = vadd.f32 0.0, %v11171
      %v11173 = vpop.f32.mrb[0].mxu0
      %11174 = vmatprep.mubr.bf16.mxu0 0
      %11175 = vmatmul.mubr.bf16.gmra.mrb[0].mxu0 %v11013
      %v11176 = vpop.f32.mrb[0].mxu0
      %v11177 = vadd.f32 0.0, %v11176
      %v11178 = vpop.f32.mrb[0].mxu0
      %v11179 = vpop.f32.mrb[0].mxu0
      %v11180 = vadd.f32 0.0, %v11179
      %v11181 = vpop.f32.mrb[0].mxu0
      %11182 = vmatprep.mubr.bf16.mxu0 0
      %11183 = vmatmul.mubr.bf16.gmra.mrb[0].mxu0 %v11014
      %v11184 = vpop.f32.mrb[0].mxu0
      %v11185 = vadd.f32 0.0, %v11184
      %v11186 = vpop.f32.mrb[0].mxu0
      %v11187 = vpop.f32.mrb[0].mxu0
      %v11188 = vadd.f32 0.0, %v11187
      %v11189 = vpop.f32.mrb[0].mxu0
      %11190 = vmatprep.mubr.bf16.mxu0 0
      %11191 = vmatmul.mubr.bf16.gmra.mrb[0].mxu0 %v11015
      %v11192 = vpop.f32.mrb[0].mxu0
      %v11193 = vadd.f32 0.0, %v11192
      %v11194 = vpop.f32.mrb[0].mxu0
      %v11195 = vpop.f32.mrb[0].mxu0
      %v11196 = vadd.f32 0.0, %v11195
      %v11197 = vpop.f32.mrb[0].mxu0
      %11198 = vmatprep.mubr.bf16.mxu0 0
      %11199 = vmatmul.mubr.bf16.gmra.mrb[0].mxu0 %v11016
      %v11200 = vpop.f32.mrb[0].mxu0
      %v11201 = vadd.f32 0.0, %v11200
      %v11202 = vpop.f32.mrb[0].mxu0
      %v11203 = vpop.f32.mrb[0].mxu0
      %v11204 = vadd.f32 0.0, %v11203
      %v11205 = vpop.f32.mrb[0].mxu0
      %11206 = vmatprep.mubr.bf16.mxu0 0
      %11207 = vmatmul.mubr.bf16.gmra.mrb[0].mxu0 %v11017
      %v11208 = vpop.f32.mrb[0].mxu0
      %v11209 = vadd.f32 0.0, %v11208
      %v11210 = vpop.f32.mrb[0].mxu0
      %v11211 = vpop.f32.mrb[0].mxu0
      %v11212 = vadd.f32 0.0, %v11211
      %v11213 = vpop.f32.mrb[0].mxu0
      %11214 = vmatprep.mubr.bf16.mxu0 0
      %11215 = vmatmul.mubr.bf16.gmra.mrb[0].mxu0 %v11018
      %v11216 = vpop.f32.mrb[0].mxu0
      %v11217 = vadd.f32 0.0, %v11216
      %v11218 = vpop.f32.mrb[0].mxu0
      %v11219 = vpop.f32.mrb[0].mxu0
      %v11220 = vadd.f32 0.0, %v11219
      %v11221 = vpop.f32.mrb[0].mxu0
      %11222 = vmatprep.mubr.bf16.mxu0 0
      %11223 = vmatmul.mubr.bf16.gmra.mrb[0].mxu0 %v11019
      %v11224 = vpop.f32.mrb[0].mxu0
      %v11225 = vadd.f32 0.0, %v11224
      %v11226 = vpop.f32.mrb[0].mxu0
      %v11227 = vpop.f32.mrb[0].mxu0
      %v11228 = vadd.f32 0.0, %v11227
      %v11229 = vpop.f32.mrb[0].mxu0
      %11230 = vmatprep.mubr.bf16.mxu0 0
      %11231 = vmatmul.mubr.bf16.gmra.mrb[0].mxu0 %v11020
      %v11232 = vpop.f32.mrb[0].mxu0
      %v11233 = vadd.f32 0.0, %v11232
      %v11234 = vpop.f32.mrb[0].mxu0
      %v11235 = vpop.f32.mrb[0].mxu0
      %v11236 = vadd.f32 0.0, %v11235
      %v11237 = vpop.f32.mrb[0].mxu0
      %11238 = vmatprep.mubr.bf16.mxu0 0
      %11239 = vmatmul.mubr.bf16.gmra.mrb[0].mxu0 %v11021
      %v11240 = vpop.f32.mrb[0].mxu0
      %v11241 = vadd.f32 0.0, %v11240
      %v11242 = vpop.f32.mrb[0].mxu0
      %v11243 = vpop.f32.mrb[0].mxu0
      %v11244 = vadd.f32 0.0, %v11243
      %v11245 = vpop.f32.mrb[0].mxu0
      %11246 = vdwg.mxu0
      %v11247 = vadd.f32 %v10494, %v11121
      %v11248 = vadd.f32 %v10495, %v11124
      %v11249 = vadd.f32 %v10496, %v11129
      %v11250 = vadd.f32 %v10497, %v11132
      %v11251 = vadd.f32 %v10498, %v11137
      %v11252 = vadd.f32 %v10499, %v11140
      %v11253 = vadd.f32 %v10500, %v11145
      %v11254 = vadd.f32 %v10501, %v11148
      %v11255 = vadd.f32 %v10502, %v11153
      %v11256 = vadd.f32 %v10503, %v11156
      %v11257 = vadd.f32 %v10504, %v11161
      %v11258 = vadd.f32 %v10505, %v11164
      %v11259 = vadd.f32 %v10506, %v11169
      %v11260 = vadd.f32 %v10507, %v11172
      %v11261 = vadd.f32 %v10508, %v11177
      %v11262 = vadd.f32 %v10509, %v11180
      %v11263 = vadd.f32 %v10510, %v11185
      %v11264 = vadd.f32 %v10511, %v11188
      %v11265 = vadd.f32 %v10512, %v11193
      %v11266 = vadd.f32 %v10513, %v11196
      %v11267 = vadd.f32 %v10514, %v11201
      %v11268 = vadd.f32 %v10515, %v11204
      %v11269 = vadd.f32 %v10516, %v11209
      %v11270 = vadd.f32 %v10517, %v11212
      %v11271 = vadd.f32 %v10518, %v11217
      %v11272 = vadd.f32 %v10519, %v11220
      %v11273 = vadd.f32 %v10520, %v11225
      %v11274 = vadd.f32 %v10521, %v11228
      %v11275 = vadd.f32 %v10522, %v11233
      %v11276 = vadd.f32 %v10523, %v11236
      %v11277 = vadd.f32 %v10524, %v11241
      %v11278 = vadd.f32 %v10525, %v11244
      %v11279 = vld [vmem:[%s5] sm:$0x1]
      %v11281 = vlaneseq
      %v11282 = vshrl.u32 %v11281, 7
      %v11283 = vsub.s32 0, %v11282
      %v11284 = vrot.slane %v11279, %v11283
      %v11286 = vadd.f32 %v11247, %v11284
      %v11287 = vadd.f32 %v11248, %v11284
      %v11288 = vadd.f32 %v11249, %v11284
      %v11289 = vadd.f32 %v11250, %v11284
      %v11290 = vadd.f32 %v11251, %v11284
      %v11291 = vadd.f32 %v11252, %v11284
      %v11292 = vadd.f32 %v11253, %v11284
      %v11293 = vadd.f32 %v11254, %v11284
      %v11294 = vadd.f32 %v11255, %v11284
      %v11295 = vadd.f32 %v11256, %v11284
      %v11296 = vadd.f32 %v11257, %v11284
      %v11297 = vadd.f32 %v11258, %v11284
      %v11298 = vadd.f32 %v11259, %v11284
      %v11299 = vadd.f32 %v11260, %v11284
      %v11300 = vadd.f32 %v11261, %v11284
      %v11301 = vadd.f32 %v11262, %v11284
      %v11302 = vadd.f32 %v11263, %v11284
      %v11303 = vadd.f32 %v11264, %v11284
      %v11304 = vadd.f32 %v11265, %v11284
      %v11305 = vadd.f32 %v11266, %v11284
      %v11306 = vadd.f32 %v11267, %v11284
      %v11307 = vadd.f32 %v11268, %v11284
      %v11308 = vadd.f32 %v11269, %v11284
      %v11309 = vadd.f32 %v11270, %v11284
      %v11310 = vadd.f32 %v11271, %v11284
      %v11311 = vadd.f32 %v11272, %v11284
      %v11312 = vadd.f32 %v11273, %v11284
      %v11313 = vadd.f32 %v11274, %v11284
      %v11314 = vadd.f32 %v11275, %v11284
      %v11315 = vadd.f32 %v11276, %v11284
      %v11316 = vadd.f32 %v11277, %v11284
      %v11317 = vadd.f32 %v11278, %v11284
      %v11318 = vmax.f32 %v11286, 0.0
      %v11319 = vmax.f32 %v11287, 0.0
      %v11320 = vmax.f32 %v11288, 0.0
      %v11321 = vmax.f32 %v11289, 0.0
      %v11322 = vmax.f32 %v11290, 0.0
      %v11323 = vmax.f32 %v11291, 0.0
      %v11324 = vmax.f32 %v11292, 0.0
      %v11325 = vmax.f32 %v11293, 0.0
      %v11326 = vmax.f32 %v11294, 0.0
      %v11327 = vmax.f32 %v11295, 0.0
      %v11328 = vmax.f32 %v11296, 0.0
      %v11329 = vmax.f32 %v11297, 0.0
      %v11330 = vmax.f32 %v11298, 0.0
      %v11331 = vmax.f32 %v11299, 0.0
      %v11332 = vmax.f32 %v11300, 0.0
      %v11333 = vmax.f32 %v11301, 0.0
      %v11334 = vmax.f32 %v11302, 0.0
      %v11335 = vmax.f32 %v11303, 0.0
      %v11336 = vmax.f32 %v11304, 0.0
      %v11337 = vmax.f32 %v11305, 0.0
      %v11338 = vmax.f32 %v11306, 0.0
      %v11339 = vmax.f32 %v11307, 0.0
      %v11340 = vmax.f32 %v11308, 0.0
      %v11341 = vmax.f32 %v11309, 0.0
      %v11342 = vmax.f32 %v11310, 0.0
      %v11343 = vmax.f32 %v11311, 0.0
      %v11344 = vmax.f32 %v11312, 0.0
      %v11345 = vmax.f32 %v11313, 0.0
      %v11346 = vmax.f32 %v11314, 0.0
      %v11347 = vmax.f32 %v11315, 0.0
      %v11348 = vmax.f32 %v11316, 0.0
      %v11349 = vmax.f32 %v11317, 0.0
      %11350 = vst [vmem:[%s251] sm:$0xff] %v11318
      %11351 = vst [vmem:[%s251 + $0x8] sm:$0xff] %v11319
      %11352 = vst [vmem:[%s251 + $0x10] sm:$0xff] %v11320
      %11353 = vst [vmem:[%s251 + $0x18] sm:$0xff] %v11321
      %11354 = vst [vmem:[%s251 + $0x20] sm:$0xff] %v11322
      %11355 = vst [vmem:[%s251 + $0x28] sm:$0xff] %v11323
      %11356 = vst [vmem:[%s251 + $0x30] sm:$0xff] %v11324
      %11357 = vst [vmem:[%s251 + $0x38] sm:$0xff] %v11325
      %11358 = vst [vmem:[%s251 + $0x40] sm:$0xff] %v11326
      %11359 = vst [vmem:[%s251 + $0x48] sm:$0xff] %v11327
      %11360 = vst [vmem:[%s251 + $0x50] sm:$0xff] %v11328
      %11361 = vst [vmem:[%s251 + $0x58] sm:$0xff] %v11329
      %11362 = vst [vmem:[%s251 + $0x60] sm:$0xff] %v11330
      %11363 = vst [vmem:[%s251 + $0x68] sm:$0xff] %v11331
      %11364 = vst [vmem:[%s251 + $0x70] sm:$0xff] %v11332
      %11365 = vst [vmem:[%s251 + $0x78] sm:$0xff] %v11333
      %11366 = vst [vmem:[%s251 + $0x80] sm:$0xff] %v11334
      %11367 = vst [vmem:[%s251 + $0x88] sm:$0xff] %v11335
      %11368 = vst [vmem:[%s251 + $0x90] sm:$0xff] %v11336
      %11369 = vst [vmem:[%s251 + $0x98] sm:$0xff] %v11337
      %11370 = vst [vmem:[%s251 + $0xa0] sm:$0xff] %v11338
      %11371 = vst [vmem:[%s251 + $0xa8] sm:$0xff] %v11339
      %11372 = vst [vmem:[%s251 + $0xb0] sm:$0xff] %v11340
      %11373 = vst [vmem:[%s251 + $0xb8] sm:$0xff] %v11341
      %11374 = vst [vmem:[%s251 + $0xc0] sm:$0xff] %v11342
      %11375 = vst [vmem:[%s251 + $0xc8] sm:$0xff] %v11343
      %11376 = vst [vmem:[%s251 + $0xd0] sm:$0xff] %v11344
      %11377 = vst [vmem:[%s251 + $0xd8] sm:$0xff] %v11345
      %11378 = vst [vmem:[%s251 + $0xe0] sm:$0xff] %v11346
      %11379 = vst [vmem:[%s251 + $0xe8] sm:$0xff] %v11347
      %11380 = vst [vmem:[%s251 + $0xf0] sm:$0xff] %v11348
      %11381 = vst [vmem:[%s251 + $0xf8] sm:$0xff] %v11349
      %p11382 = scmp.lt.s32.totalorder %s17, 1
      %s11383 = scalar_select %p11382, %s17, 1
      %s11384 = smul.addr %s11383, 32
      %s11385 = smul.addr %s11384, 8
      %s11386 = scalar_lea.vmem %s6, %s11385
      // Predicated region
      $region45: #{basic_block_forward.1} parent=43 // pred_check
        %p11387 = pneg %p166
      $region46: #{basic_block_forward.1} parent=43 // pred_check_branch
        %11389 = sbr.rel (%p11387) target = $region48
      $region47: #{basic_block_forward.1} parent=43 // pred_region
        _
      $region48: #{basic_block_forward.1} parent=43 // pred_fallthru
        _
    $region44: #{basic_block_forward.1} parent=5 // pred_fallthru
      _
    %p11390 = scmp.le.s32.totalorder 2, %s12
    // Predicated region
    $region49: #{basic_block_forward.1} parent=5 // pred_check
      %p11391 = pneg %p11390
    $region50: #{basic_block_forward.1} parent=5 // pred_check_branch
      %11393 = sbr.rel (%p11391) target = $region52
    $region51: #{basic_block_forward.1} parent=5 // pred_region
      %s11394 = ssub.s32 %s12, 2
      // Predicated region
      $region53: #{basic_block_forward.1} parent=51 // pred_check
        %p11395 = pneg %p172
      $region54: #{basic_block_forward.1} parent=51 // pred_check_branch
        %11397 = sbr.rel (%p11395) target = $region56
      $region55: #{basic_block_forward.1} parent=51 // pred_region
        %p11398 = scmp.lt.s32.totalorder %s18, 1
        %s11399 = scalar_select %p11398, %s18, 1
        %s11400 = smul.addr %s11399, 32
        %s11401 = smul.addr %s11400, 8
        %s11402 = scalar_lea.vmem %s6, %s11401
      $region56: #{basic_block_forward.1} parent=51 // pred_fallthru
        _
    $region52: #{basic_block_forward.1} parent=5 // pred_fallthru
      _
  $region6: #{basic_block_forward.1} parent=0 // loop_footer
    %s16 = sadd.s32 1, %s12
  $region7: #{basic_block_forward.1} parent=0 // loop_footer_branch
    %11 = sbr.rel target = $region3
  $region8: #{basic_block_forward.1} parent=0 // loop_exit
    _

</llo_original>
